<compile_context>
chip_gen: v7x
topology: tpu7x:2x2x1
jax: 0.10.0
libtpu: 0.0.40
codegen_flags: <defaults>
</compile_context>

<pallas_src>
import jax
import jax.numpy as jnp
from jax import lax
from jax.experimental import pallas as pl
from jax.experimental.pallas import tpu as pltpu


# ------------------------------ small helpers -------------------------------

_LANE = 128
_MIB = 1024 * 1024


def _round_up(x, m):
    return (x + m - 1) // m * m


def _vmem_limit_bytes(working_set_bytes):
    # 2x headroom over the estimated working set, floor at 32 MiB, stay well
    # below the smallest physical VMEM (64 MiB per TensorCore on v7x).
    return int(min(max(2 * working_set_bytes, 32 * _MIB), 56 * _MIB))


# ------------------------------ Pallas kernels -------------------------------

def _fused_block_kernel(x_ref, w1_ref, b1_ref, w2_ref, b2_ref, o_ref, y1_ref):
    """Whole BasicBlock for one image plane, im2col fused as shifted matmuls.

    x_ref : (H+2, W+2, C)   zero-padded input halo plane (mxu dtype)
    w1_ref: (9, C,  C1)     conv1 weight (BN1 scale folded), k = 3*ki + kj
    b1_ref: (1, C1)         BN1 bias (f32)
    w2_ref: (9, C1, C2)     conv2 weight (BN2 scale folded)
    b2_ref: (1, C2)         BN2 bias (f32)
    o_ref : (H*W, C2)       block output
    y1_ref: (H+2, W+2, C1)  f32 VMEM scratch: conv1 output with zero halo
    """
    hh, wh, cin = x_ref.shape
    h, w = hh - 2, wh - 2
    c1 = w1_ref.shape[2]
    mxu_dtype = x_ref.dtype

    # ---- conv1 (9 shifted matmuls) + BN1 bias + ReLU, f32 accumulation ----
    acc1 = None
    for k in range(9):
        ki, kj = divmod(k, 3)
        xs = x_ref[ki:ki + h, kj:kj + w, :].reshape(h * w, cin)
        d = jnp.dot(xs, w1_ref[k], preferred_element_type=jnp.float32)
        acc1 = d if acc1 is None else acc1 + d
    y1 = jnp.maximum(acc1 + b1_ref[...], 0.0)

    # y1 never leaves VMEM: place it inside a zero-haloed f32 scratch plane.
    # (Full zero each step keeps the border correct under megacore sharding;
    #  it is a tiny VMEM-only store.  f32 scratch avoids packed-sublane
    #  partial stores; only the conv2 MXU operand is cast down.)
    y1_ref[...] = jnp.zeros_like(y1_ref)
    y1_ref[1:h + 1, 1:w + 1, :] = y1.reshape(h, w, c1)

    # ---- conv2 + BN2 bias + identity residual + ReLU ----
    acc2 = None
    for k in range(9):
        ki, kj = divmod(k, 3)
        ys = y1_ref[ki:ki + h, kj:kj + w, :].reshape(h * w, c1).astype(mxu_dtype)
        d = jnp.dot(ys, w2_ref[k], preferred_element_type=jnp.float32)
        acc2 = d if acc2 is None else acc2 + d
    res = x_ref[1:h + 1, 1:w + 1, :].reshape(h * w, cin).astype(jnp.float32)
    o_ref[...] = jnp.maximum(acc2 + b2_ref[...] + res, 0.0).astype(o_ref.dtype)


def _conv_bn_relu_kernel(x_ref, w_ref, b_ref, o_ref):
    """Single conv3x3 + BN + ReLU (the block's `inter` path)."""
    hh, wh, cin = x_ref.shape
    h, w = hh - 2, wh - 2
    acc = None
    for k in range(9):
        ki, kj = divmod(k, 3)
        xs = x_ref[ki:ki + h, kj:kj + w, :].reshape(h * w, cin)
        d = jnp.dot(xs, w_ref[k], preferred_element_type=jnp.float32)
        acc = d if acc is None else acc + d
    o_ref[...] = jnp.maximum(acc + b_ref[...], 0.0).astype(o_ref.dtype)


# --------------------------------- wrappers ----------------------------------

def fused_basic_block(x_nhwc, w1_kio, b1, w2_kio, b2, *,
                      mxu_dtype=jnp.bfloat16, out_dtype=jnp.float32):
    """ReLU(conv3x3(ReLU(conv3x3(x)@BN1)) @BN2 + x), BN folded into (w, b)."""
    n, h, w, c = x_nhwc.shape
    _, _, c1 = w1_kio.shape
    _, _, c2 = w2_kio.shape
    assert w1_kio.shape[1] == c and w2_kio.shape[1] == c1
    assert c2 == c, "identity shortcut requires in_planes == planes"

    cp = _round_up(c, _LANE)
    c1p = _round_up(c1, _LANE)
    c2p = _round_up(c2, _LANE)
    halo = (h + 2) * (w + 2)
    itm = jnp.dtype(mxu_dtype).itemsize

    # Per-step VMEM working set (double-buffered streamed blocks + scratch +
    # live f32 accumulator).  Fail loudly instead of overflowing VMEM.
    ws = (2 * halo * cp * itm            # x halo plane (x2 buffers)
          + 2 * 9 * cp * c1p * itm       # w1
          + 2 * 9 * c1p * c2p * itm      # w2
          + 2 * (c1p + c2p) * 4          # biases
          + 2 * h * w * c2p * 4          # output block (x2 buffers)
          + halo * c1p * 4               # y1 f32 scratch
          + 2 * h * w * max(c1p, c2p) * 4)   # live accumulators
    if ws > 44 * _MIB:
        # TODO(synk): add a spatial row-tile grid axis (manual overlapping-halo
        # DMA) for image planes too large for a per-image VMEM tile.
        raise NotImplementedError(
            f"per-image working set {ws / 2**20:.1f} MiB exceeds VMEM budget")

    # One pad pass: spatial halo + channel pad to a lane multiple (inert:
    # padded weight rows/cols and biases are zero) + cast to the MXU dtype.
    xp = jnp.pad(x_nhwc, ((0, 0), (1, 1), (1, 1), (0, cp - c))).astype(mxu_dtype)
    w1p = jnp.pad(w1_kio, ((0, 0), (0, cp - c), (0, c1p - c1))).astype(mxu_dtype)
    w2p = jnp.pad(w2_kio, ((0, 0), (0, c1p - c1), (0, c2p - c2))).astype(mxu_dtype)
    b1p = jnp.pad(b1, (0, c1p - c1)).reshape(1, c1p).astype(jnp.float32)
    b2p = jnp.pad(b2, (0, c2p - c2)).reshape(1, c2p).astype(jnp.float32)

    out = pl.pallas_call(
        _fused_block_kernel,
        grid=(n,),   # one image plane per step; "parallel" -> v7x megacore
        in_specs=[
            pl.BlockSpec((None, h + 2, w + 2, cp), lambda i: (i, 0, 0, 0)),
            pl.BlockSpec((9, cp, c1p), lambda i: (0, 0, 0)),   # resident w1
            pl.BlockSpec((1, c1p), lambda i: (0, 0)),          # resident b1
            pl.BlockSpec((9, c1p, c2p), lambda i: (0, 0, 0)),  # resident w2
            pl.BlockSpec((1, c2p), lambda i: (0, 0)),          # resident b2
        ],
        out_specs=pl.BlockSpec((None, h * w, c2p), lambda i: (i, 0, 0)),
        out_shape=jax.ShapeDtypeStruct((n, h * w, c2p), out_dtype),
        scratch_shapes=[pltpu.VMEM((h + 2, w + 2, c1p), jnp.float32)],
        compiler_params=pltpu.CompilerParams(
            dimension_semantics=("parallel",),
            vmem_limit_bytes=_vmem_limit_bytes(ws)),
    )(xp, w1p, b1p, w2p, b2p)

    # Single channel-unpad slice at the block output (free reshape before it).
    return out.reshape(n, h, w, c2p)[..., :c2]


def conv3x3_bn_relu(x_nhwc, w_kio, bias, *,
                    mxu_dtype=jnp.bfloat16, out_dtype=jnp.float32):
    """ReLU(conv3x3(x) @ folded BN) -- the block's `inter` (part1-only) path."""
    n, h, w, c = x_nhwc.shape
    _, _, co = w_kio.shape
    assert w_kio.shape[1] == c

    cp = _round_up(c, _LANE)
    cop = _round_up(co, _LANE)
    halo = (h + 2) * (w + 2)
    itm = jnp.dtype(mxu_dtype).itemsize
    ws = (2 * halo * cp * itm + 2 * 9 * cp * cop * itm + 2 * cop * 4
          + 2 * h * w * cop * 4 + 2 * h * w * cop * 4)
    if ws > 44 * _MIB:
        raise NotImplementedError(
            f"per-image working set {ws / 2**20:.1f} MiB exceeds VMEM budget")

    xp = jnp.pad(x_nhwc, ((0, 0), (1, 1), (1, 1), (0, cp - c))).astype(mxu_dtype)
    wp = jnp.pad(w_kio, ((0, 0), (0, cp - c), (0, cop - co))).astype(mxu_dtype)
    bp = jnp.pad(bias, (0, cop - co)).reshape(1, cop).astype(jnp.float32)

    out = pl.pallas_call(
        _conv_bn_relu_kernel,
        grid=(n,),
        in_specs=[
            pl.BlockSpec((None, h + 2, w + 2, cp), lambda i: (i, 0, 0, 0)),
            pl.BlockSpec((9, cp, cop), lambda i: (0, 0, 0)),
            pl.BlockSpec((1, cop), lambda i: (0, 0)),
        ],
        out_specs=pl.BlockSpec((None, h * w, cop), lambda i: (i, 0, 0)),
        out_shape=jax.ShapeDtypeStruct((n, h * w, cop), out_dtype),
        compiler_params=pltpu.CompilerParams(
            dimension_semantics=("parallel",),
            vmem_limit_bytes=_vmem_limit_bytes(ws)),
    )(xp, wp, bp)
    return out.reshape(n, h, w, cop)[..., :co]


# --------------------------------- JAX glue ----------------------------------

def weight_to_kio(w_oihw):
    """PyTorch (C_out, C_in, 3, 3) -> (9, C_in, C_out), k = 3*ki + kj."""
    c_out, c_in = w_oihw.shape[0], w_oihw.shape[1]
    return jnp.transpose(w_oihw, (2, 3, 1, 0)).reshape(9, c_in, c_out)


def fold_bn(gamma, beta, mean, var, eps=1e-5):
    """Eval-mode BatchNorm folded to per-channel (scale, bias), both (C,)."""
    scale = gamma / jnp.sqrt(var + eps)
    bias = beta - mean * scale
    return scale, bias


# ------------------------------ Module mirror --------------------------------

class BasicBlock:
    """ResNet-18 BasicBlock (stride 1, identity shortcut) with idem/inter:
       part1: conv3x3 -> BN -> ReLU ; part2: conv3x3 -> BN -> (+x) -> ReLU.
       QuantReLU with bit=32 behaves as a standard ReLU."""
    expansion = 1

    def __init__(self, key, in_planes, planes):
        assert in_planes == planes, "identity shortcut requires equal planes"
        ks = jax.random.split(key, 10)
        fan1 = in_planes * 9
        fan2 = planes * 9
        # Kaiming-style deterministic init (nn.Conv2d(bias=False)).
        self.w1 = jax.random.normal(ks[0], (planes, in_planes, 3, 3),
                                    jnp.float32) * (2.0 / fan1) ** 0.5
        self.w2 = jax.random.normal(ks[1], (planes, planes, 3, 3),
                                    jnp.float32) * (2.0 / fan2) ** 0.5
        # BatchNorm parameters / running stats (eval-mode semantics).
        self.g1 = 0.5 + jax.random.uniform(ks[2], (planes,), jnp.float32)
        self.b1 = 0.1 * jax.random.normal(ks[3], (planes,), jnp.float32)
        self.m1 = 0.1 * jax.random.normal(ks[4], (planes,), jnp.float32)
        self.v1 = 0.5 + jax.random.uniform(ks[5], (planes,), jnp.float32)
        self.g2 = 0.5 + jax.random.uniform(ks[6], (planes,), jnp.float32)
        self.b2 = 0.1 * jax.random.normal(ks[7], (planes,), jnp.float32)
        self.m2 = 0.1 * jax.random.normal(ks[8], (planes,), jnp.float32)
        self.v2 = 0.5 + jax.random.uniform(ks[9], (planes,), jnp.float32)
        self.idem = False
        self.inter = False

    def __call__(self, x_nchw, *, mxu_dtype=jnp.bfloat16):
        if self.idem:
            return x_nchw
        x_nhwc = jnp.transpose(x_nchw, (0, 2, 3, 1))

        s1, b1 = fold_bn(self.g1, self.b1, self.m1, self.v1)
        w1k = weight_to_kio(self.w1) * s1[None, None, :]   # BN1 scale folded

        if self.inter:  # part1 (Oneway) only
            y1 = conv3x3_bn_relu(x_nhwc, w1k, b1, mxu_dtype=mxu_dtype)
            return jnp.transpose(y1, (0, 3, 1, 2))

        s2, b2 = fold_bn(self.g2, self.b2, self.m2, self.v2)
        w2k = weight_to_kio(self.w2) * s2[None, None, :]   # BN2 scale folded

        out = fused_basic_block(x_nhwc, w1k, b1, w2k, b2, mxu_dtype=mxu_dtype)
        return jnp.transpose(out, (0, 3, 1, 2))


# -------------------------------- Reference ----------------------------------

def _ref_basic_block(x, blk):
    def conv(x, w):
        return lax.conv_general_dilated(
            x, w, window_strides=(1, 1), padding="SAME",
            dimension_numbers=("NCHW", "OIHW", "NCHW"))

    def bn(x, g, b, m, v):
        s = g / jnp.sqrt(v + 1e-5)
        return x * s[None, :, None, None] + (b - m * s)[None, :, None, None]

    y1 = jax.nn.relu(bn(conv(x, blk.w1), blk.g1, blk.b1, blk.m1, blk.v1))
    out = jax.nn.relu(bn(conv(y1, blk.w2), blk.g2, blk.b2, blk.m2, blk.v2) + x)
    return y1, out


# ----------------------------------- Main ------------------------------------

if __name__ == "__main__":
    key = jax.random.PRNGKey(0)
    k_x, k_blk = jax.random.split(key)

    N, C, H, W = 2, 4, 16, 16
    x = jax.random.normal(k_x, (N, C, H, W), jnp.float32)

    block = BasicBlock(k_blk, in_planes=C, planes=C)
    ref_y1, ref_out = _ref_basic_block(x, block)
    ref_y1 = jax.block_until_ready(ref_y1)
    ref_out = jax.block_until_ready(ref_out)

    # Default path: bf16 streamed operands (native MXU), f32 accumulation.
    out = jax.block_until_ready(block(x))
    assert out.shape == (N, C, H, W)
    err = float(jnp.max(jnp.abs(out - ref_out)))
    assert jnp.allclose(out, ref_out, rtol=1e-1, atol=1e-1), f"bf16 max err {err}"

    # Full-f32 operand path, tight tolerance.
    out_f32 = jax.block_until_ready(block(x, mxu_dtype=jnp.float32))
    err = float(jnp.max(jnp.abs(out_f32 - ref_out)))
    assert jnp.allclose(out_f32, ref_out, rtol=1e-4, atol=1e-4), f"f32 max err {err}"

    # inter path (part1 only), f32 for a tight check.
    block.inter = True
    y1 = jax.block_until_ready(block(x, mxu_dtype=jnp.float32))
    assert jnp.allclose(y1, ref_y1, rtol=1e-4, atol=1e-4)
    block.inter = False

    # idem path (pure pass-through).
    block.idem = True
    assert jax.block_until_ready(block(x)).shape == x.shape
    block.idem = False

    print("KERNEL_OK")
</pallas_src>

<mosaic_0001>
module attributes {stable_mosaic.version = 11 : i64} {
  func.func @_fused_block_kernel(%arg0: i32, %arg1: memref<1x18x18x128xbf16, #tpu.memory_space<vmem>>, %arg2: memref<9x128x128xbf16, #tpu.memory_space<vmem>>, %arg3: memref<1x128xf32, #tpu.memory_space<vmem>>, %arg4: memref<9x128x128xbf16, #tpu.memory_space<vmem>>, %arg5: memref<1x128xf32, #tpu.memory_space<vmem>>, %arg6: memref<1x256x128xf32, #tpu.memory_space<vmem>>, %arg7: memref<18x18x128xf32, #tpu.memory_space<vmem>>) attributes {dimension_semantics = [#tpu.dimension_semantics<parallel>], iteration_bounds = array<i64: 2>, scalar_prefetch = 0 : i64, scratch_operands = 1 : i64, tpu.core_type = #tpu.core_type<tc>, window_params = [{transform_indices = @transform_0, window_bounds = array<i64: 1, 18, 18, 128>}, {pipeline_mode = #tpu.pipeline_mode<synchronous>, transform_indices = @transform_1, window_bounds = array<i64: 9, 128, 128>}, {pipeline_mode = #tpu.pipeline_mode<synchronous>, transform_indices = @transform_2, window_bounds = array<i64: 1, 128>}, {pipeline_mode = #tpu.pipeline_mode<synchronous>, transform_indices = @transform_3, window_bounds = array<i64: 9, 128, 128>}, {pipeline_mode = #tpu.pipeline_mode<synchronous>, transform_indices = @transform_4, window_bounds = array<i64: 1, 128>}, {transform_indices = @transform_5, window_bounds = array<i64: 1, 256, 128>}]} {
    %c0 = arith.constant 0 : index
    %c0_0 = arith.constant 0 : index
    %c0_1 = arith.constant 0 : index
    %c0_2 = arith.constant 0 : index
    %0 = vector.load %arg1[%c0, %c0_0, %c0_1, %c0_2] : memref<1x18x18x128xbf16, #tpu.memory_space<vmem>>, vector<1x16x16x128xbf16>
    %1 = vector.shape_cast %0 : vector<1x16x16x128xbf16> to vector<16x16x128xbf16>
    %2 = vector.shape_cast %1 : vector<16x16x128xbf16> to vector<256x128xbf16>
    %c0_3 = arith.constant 0 : index
    %c0_4 = arith.constant 0 : index
    %c0_5 = arith.constant 0 : index
    %3 = vector.load %arg2[%c0_3, %c0_4, %c0_5] : memref<9x128x128xbf16, #tpu.memory_space<vmem>>, vector<1x128x128xbf16>
    %4 = vector.shape_cast %3 : vector<1x128x128xbf16> to vector<128x128xbf16>
    %cst = arith.constant dense<0.000000e+00> : vector<256x128xf32>
    %5 = tpu.matmul %2, %4, %cst {dimension_numbers = #tpu.dot_dimension_numbers<[1], [0], [0], [1], [0, 0, 1, 1], [], []>} : vector<256x128xbf16>, vector<128x128xbf16>, vector<256x128xf32> -> vector<256x128xf32>
    %c0_6 = arith.constant 0 : index
    %c0_7 = arith.constant 0 : index
    %c1 = arith.constant 1 : index
    %c0_8 = arith.constant 0 : index
    %6 = vector.load %arg1[%c0_6, %c0_7, %c1, %c0_8] : memref<1x18x18x128xbf16, #tpu.memory_space<vmem>>, vector<1x16x16x128xbf16>
    %7 = vector.shape_cast %6 : vector<1x16x16x128xbf16> to vector<16x16x128xbf16>
    %8 = vector.shape_cast %7 : vector<16x16x128xbf16> to vector<256x128xbf16>
    %c1_9 = arith.constant 1 : index
    %c0_10 = arith.constant 0 : index
    %c0_11 = arith.constant 0 : index
    %9 = vector.load %arg2[%c1_9, %c0_10, %c0_11] : memref<9x128x128xbf16, #tpu.memory_space<vmem>>, vector<1x128x128xbf16>
    %10 = vector.shape_cast %9 : vector<1x128x128xbf16> to vector<128x128xbf16>
    %cst_12 = arith.constant dense<0.000000e+00> : vector<256x128xf32>
    %11 = tpu.matmul %8, %10, %cst_12 {dimension_numbers = #tpu.dot_dimension_numbers<[1], [0], [0], [1], [0, 0, 1, 1], [], []>} : vector<256x128xbf16>, vector<128x128xbf16>, vector<256x128xf32> -> vector<256x128xf32>
    %12 = arith.addf %5, %11 : vector<256x128xf32>
    %c0_13 = arith.constant 0 : index
    %c0_14 = arith.constant 0 : index
    %c2 = arith.constant 2 : index
    %c0_15 = arith.constant 0 : index
    %13 = vector.load %arg1[%c0_13, %c0_14, %c2, %c0_15] : memref<1x18x18x128xbf16, #tpu.memory_space<vmem>>, vector<1x16x16x128xbf16>
    %14 = vector.shape_cast %13 : vector<1x16x16x128xbf16> to vector<16x16x128xbf16>
    %15 = vector.shape_cast %14 : vector<16x16x128xbf16> to vector<256x128xbf16>
    %c2_16 = arith.constant 2 : index
    %c0_17 = arith.constant 0 : index
    %c0_18 = arith.constant 0 : index
    %16 = vector.load %arg2[%c2_16, %c0_17, %c0_18] : memref<9x128x128xbf16, #tpu.memory_space<vmem>>, vector<1x128x128xbf16>
    %17 = vector.shape_cast %16 : vector<1x128x128xbf16> to vector<128x128xbf16>
    %cst_19 = arith.constant dense<0.000000e+00> : vector<256x128xf32>
    %18 = tpu.matmul %15, %17, %cst_19 {dimension_numbers = #tpu.dot_dimension_numbers<[1], [0], [0], [1], [0, 0, 1, 1], [], []>} : vector<256x128xbf16>, vector<128x128xbf16>, vector<256x128xf32> -> vector<256x128xf32>
    %19 = arith.addf %12, %18 : vector<256x128xf32>
    %c0_20 = arith.constant 0 : index
    %c1_21 = arith.constant 1 : index
    %c0_22 = arith.constant 0 : index
    %c0_23 = arith.constant 0 : index
    %20 = vector.load %arg1[%c0_20, %c1_21, %c0_22, %c0_23] : memref<1x18x18x128xbf16, #tpu.memory_space<vmem>>, vector<1x16x16x128xbf16>
    %21 = vector.shape_cast %20 : vector<1x16x16x128xbf16> to vector<16x16x128xbf16>
    %22 = vector.shape_cast %21 : vector<16x16x128xbf16> to vector<256x128xbf16>
    %c3 = arith.constant 3 : index
    %c0_24 = arith.constant 0 : index
    %c0_25 = arith.constant 0 : index
    %23 = vector.load %arg2[%c3, %c0_24, %c0_25] : memref<9x128x128xbf16, #tpu.memory_space<vmem>>, vector<1x128x128xbf16>
    %24 = vector.shape_cast %23 : vector<1x128x128xbf16> to vector<128x128xbf16>
    %cst_26 = arith.constant dense<0.000000e+00> : vector<256x128xf32>
    %25 = tpu.matmul %22, %24, %cst_26 {dimension_numbers = #tpu.dot_dimension_numbers<[1], [0], [0], [1], [0, 0, 1, 1], [], []>} : vector<256x128xbf16>, vector<128x128xbf16>, vector<256x128xf32> -> vector<256x128xf32>
    %26 = arith.addf %19, %25 : vector<256x128xf32>
    %c0_27 = arith.constant 0 : index
    %c1_28 = arith.constant 1 : index
    %c1_29 = arith.constant 1 : index
    %c0_30 = arith.constant 0 : index
    %27 = vector.load %arg1[%c0_27, %c1_28, %c1_29, %c0_30] : memref<1x18x18x128xbf16, #tpu.memory_space<vmem>>, vector<1x16x16x128xbf16>
    %28 = vector.shape_cast %27 : vector<1x16x16x128xbf16> to vector<16x16x128xbf16>
    %29 = vector.shape_cast %28 : vector<16x16x128xbf16> to vector<256x128xbf16>
    %c4 = arith.constant 4 : index
    %c0_31 = arith.constant 0 : index
    %c0_32 = arith.constant 0 : index
    %30 = vector.load %arg2[%c4, %c0_31, %c0_32] : memref<9x128x128xbf16, #tpu.memory_space<vmem>>, vector<1x128x128xbf16>
    %31 = vector.shape_cast %30 : vector<1x128x128xbf16> to vector<128x128xbf16>
    %cst_33 = arith.constant dense<0.000000e+00> : vector<256x128xf32>
    %32 = tpu.matmul %29, %31, %cst_33 {dimension_numbers = #tpu.dot_dimension_numbers<[1], [0], [0], [1], [0, 0, 1, 1], [], []>} : vector<256x128xbf16>, vector<128x128xbf16>, vector<256x128xf32> -> vector<256x128xf32>
    %33 = arith.addf %26, %32 : vector<256x128xf32>
    %c0_34 = arith.constant 0 : index
    %c1_35 = arith.constant 1 : index
    %c2_36 = arith.constant 2 : index
    %c0_37 = arith.constant 0 : index
    %34 = vector.load %arg1[%c0_34, %c1_35, %c2_36, %c0_37] : memref<1x18x18x128xbf16, #tpu.memory_space<vmem>>, vector<1x16x16x128xbf16>
    %35 = vector.shape_cast %34 : vector<1x16x16x128xbf16> to vector<16x16x128xbf16>
    %36 = vector.shape_cast %35 : vector<16x16x128xbf16> to vector<256x128xbf16>
    %c5 = arith.constant 5 : index
    %c0_38 = arith.constant 0 : index
    %c0_39 = arith.constant 0 : index
    %37 = vector.load %arg2[%c5, %c0_38, %c0_39] : memref<9x128x128xbf16, #tpu.memory_space<vmem>>, vector<1x128x128xbf16>
    %38 = vector.shape_cast %37 : vector<1x128x128xbf16> to vector<128x128xbf16>
    %cst_40 = arith.constant dense<0.000000e+00> : vector<256x128xf32>
    %39 = tpu.matmul %36, %38, %cst_40 {dimension_numbers = #tpu.dot_dimension_numbers<[1], [0], [0], [1], [0, 0, 1, 1], [], []>} : vector<256x128xbf16>, vector<128x128xbf16>, vector<256x128xf32> -> vector<256x128xf32>
    %40 = arith.addf %33, %39 : vector<256x128xf32>
    %c0_41 = arith.constant 0 : index
    %c2_42 = arith.constant 2 : index
    %c0_43 = arith.constant 0 : index
    %c0_44 = arith.constant 0 : index
    %41 = vector.load %arg1[%c0_41, %c2_42, %c0_43, %c0_44] : memref<1x18x18x128xbf16, #tpu.memory_space<vmem>>, vector<1x16x16x128xbf16>
    %42 = vector.shape_cast %41 : vector<1x16x16x128xbf16> to vector<16x16x128xbf16>
    %43 = vector.shape_cast %42 : vector<16x16x128xbf16> to vector<256x128xbf16>
    %c6 = arith.constant 6 : index
    %c0_45 = arith.constant 0 : index
    %c0_46 = arith.constant 0 : index
    %44 = vector.load %arg2[%c6, %c0_45, %c0_46] : memref<9x128x128xbf16, #tpu.memory_space<vmem>>, vector<1x128x128xbf16>
    %45 = vector.shape_cast %44 : vector<1x128x128xbf16> to vector<128x128xbf16>
    %cst_47 = arith.constant dense<0.000000e+00> : vector<256x128xf32>
    %46 = tpu.matmul %43, %45, %cst_47 {dimension_numbers = #tpu.dot_dimension_numbers<[1], [0], [0], [1], [0, 0, 1, 1], [], []>} : vector<256x128xbf16>, vector<128x128xbf16>, vector<256x128xf32> -> vector<256x128xf32>
    %47 = arith.addf %40, %46 : vector<256x128xf32>
    %c0_48 = arith.constant 0 : index
    %c2_49 = arith.constant 2 : index
    %c1_50 = arith.constant 1 : index
    %c0_51 = arith.constant 0 : index
    %48 = vector.load %arg1[%c0_48, %c2_49, %c1_50, %c0_51] : memref<1x18x18x128xbf16, #tpu.memory_space<vmem>>, vector<1x16x16x128xbf16>
    %49 = vector.shape_cast %48 : vector<1x16x16x128xbf16> to vector<16x16x128xbf16>
    %50 = vector.shape_cast %49 : vector<16x16x128xbf16> to vector<256x128xbf16>
    %c7 = arith.constant 7 : index
    %c0_52 = arith.constant 0 : index
    %c0_53 = arith.constant 0 : index
    %51 = vector.load %arg2[%c7, %c0_52, %c0_53] : memref<9x128x128xbf16, #tpu.memory_space<vmem>>, vector<1x128x128xbf16>
    %52 = vector.shape_cast %51 : vector<1x128x128xbf16> to vector<128x128xbf16>
    %cst_54 = arith.constant dense<0.000000e+00> : vector<256x128xf32>
    %53 = tpu.matmul %50, %52, %cst_54 {dimension_numbers = #tpu.dot_dimension_numbers<[1], [0], [0], [1], [0, 0, 1, 1], [], []>} : vector<256x128xbf16>, vector<128x128xbf16>, vector<256x128xf32> -> vector<256x128xf32>
    %54 = arith.addf %47, %53 : vector<256x128xf32>
    %c0_55 = arith.constant 0 : index
    %c2_56 = arith.constant 2 : index
    %c2_57 = arith.constant 2 : index
    %c0_58 = arith.constant 0 : index
    %55 = vector.load %arg1[%c0_55, %c2_56, %c2_57, %c0_58] : memref<1x18x18x128xbf16, #tpu.memory_space<vmem>>, vector<1x16x16x128xbf16>
    %56 = vector.shape_cast %55 : vector<1x16x16x128xbf16> to vector<16x16x128xbf16>
    %57 = vector.shape_cast %56 : vector<16x16x128xbf16> to vector<256x128xbf16>
    %c8 = arith.constant 8 : index
    %c0_59 = arith.constant 0 : index
    %c0_60 = arith.constant 0 : index
    %58 = vector.load %arg2[%c8, %c0_59, %c0_60] : memref<9x128x128xbf16, #tpu.memory_space<vmem>>, vector<1x128x128xbf16>
    %59 = vector.shape_cast %58 : vector<1x128x128xbf16> to vector<128x128xbf16>
    %cst_61 = arith.constant dense<0.000000e+00> : vector<256x128xf32>
    %60 = tpu.matmul %57, %59, %cst_61 {dimension_numbers = #tpu.dot_dimension_numbers<[1], [0], [0], [1], [0, 0, 1, 1], [], []>} : vector<256x128xbf16>, vector<128x128xbf16>, vector<256x128xf32> -> vector<256x128xf32>
    %61 = arith.addf %54, %60 : vector<256x128xf32>
    %c0_62 = arith.constant 0 : index
    %c0_63 = arith.constant 0 : index
    %62 = vector.load %arg3[%c0_62, %c0_63] : memref<1x128xf32, #tpu.memory_space<vmem>>, vector<1x128xf32>
    %63 = vector.broadcast %62 : vector<1x128xf32> to vector<256x128xf32>
    %64 = arith.addf %61, %63 : vector<256x128xf32>
    %cst_64 = arith.constant 0.000000e+00 : f32
    %65 = vector.broadcast %cst_64 : f32 to vector<256x128xf32>
    %66 = arith.maximumf %64, %65 : vector<256x128xf32>
    %cst_65 = arith.constant 0.000000e+00 : f32
    %67 = vector.broadcast %cst_65 : f32 to vector<18x18x128xf32>
    %c0_66 = arith.constant 0 : index
    %c0_67 = arith.constant 0 : index
    %c0_68 = arith.constant 0 : index
    %68 = vector.load %arg7[%c0_66, %c0_67, %c0_68] : memref<18x18x128xf32, #tpu.memory_space<vmem>>, vector<18x18x128xf32>
    tpu.vector_store %arg7[%c0_66, %c0_67, %c0_68], %67 {strides = array<i32>} : memref<18x18x128xf32, #tpu.memory_space<vmem>>, vector<18x18x128xf32>,
    %69 = vector.shape_cast %66 : vector<256x128xf32> to vector<16x16x128xf32>
    %c1_69 = arith.constant 1 : index
    %c1_70 = arith.constant 1 : index
    %c0_71 = arith.constant 0 : index
    %70 = vector.load %arg7[%c1_69, %c1_70, %c0_71] : memref<18x18x128xf32, #tpu.memory_space<vmem>>, vector<16x16x128xf32>
    tpu.vector_store %arg7[%c1_69, %c1_70, %c0_71], %69 {strides = array<i32>} : memref<18x18x128xf32, #tpu.memory_space<vmem>>, vector<16x16x128xf32>,
    %c0_72 = arith.constant 0 : index
    %c0_73 = arith.constant 0 : index
    %c0_74 = arith.constant 0 : index
    %71 = vector.load %arg7[%c0_72, %c0_73, %c0_74] : memref<18x18x128xf32, #tpu.memory_space<vmem>>, vector<16x16x128xf32>
    %72 = vector.shape_cast %71 : vector<16x16x128xf32> to vector<256x128xf32>
    %73 = arith.truncf %72 : vector<256x128xf32> to vector<256x128xbf16>
    %c0_75 = arith.constant 0 : index
    %c0_76 = arith.constant 0 : index
    %c0_77 = arith.constant 0 : index
    %74 = vector.load %arg4[%c0_75, %c0_76, %c0_77] : memref<9x128x128xbf16, #tpu.memory_space<vmem>>, vector<1x128x128xbf16>
    %75 = vector.shape_cast %74 : vector<1x128x128xbf16> to vector<128x128xbf16>
    %cst_78 = arith.constant dense<0.000000e+00> : vector<256x128xf32>
    %76 = tpu.matmul %73, %75, %cst_78 {dimension_numbers = #tpu.dot_dimension_numbers<[1], [0], [0], [1], [0, 0, 1, 1], [], []>} : vector<256x128xbf16>, vector<128x128xbf16>, vector<256x128xf32> -> vector<256x128xf32>
    %c0_79 = arith.constant 0 : index
    %c1_80 = arith.constant 1 : index
    %c0_81 = arith.constant 0 : index
    %77 = vector.load %arg7[%c0_79, %c1_80, %c0_81] : memref<18x18x128xf32, #tpu.memory_space<vmem>>, vector<16x16x128xf32>
    %78 = vector.shape_cast %77 : vector<16x16x128xf32> to vector<256x128xf32>
    %79 = arith.truncf %78 : vector<256x128xf32> to vector<256x128xbf16>
    %c1_82 = arith.constant 1 : index
    %c0_83 = arith.constant 0 : index
    %c0_84 = arith.constant 0 : index
    %80 = vector.load %arg4[%c1_82, %c0_83, %c0_84] : memref<9x128x128xbf16, #tpu.memory_space<vmem>>, vector<1x128x128xbf16>
    %81 = vector.shape_cast %80 : vector<1x128x128xbf16> to vector<128x128xbf16>
    %cst_85 = arith.constant dense<0.000000e+00> : vector<256x128xf32>
    %82 = tpu.matmul %79, %81, %cst_85 {dimension_numbers = #tpu.dot_dimension_numbers<[1], [0], [0], [1], [0, 0, 1, 1], [], []>} : vector<256x128xbf16>, vector<128x128xbf16>, vector<256x128xf32> -> vector<256x128xf32>
    %83 = arith.addf %76, %82 : vector<256x128xf32>
    %c0_86 = arith.constant 0 : index
    %c2_87 = arith.constant 2 : index
    %c0_88 = arith.constant 0 : index
    %84 = vector.load %arg7[%c0_86, %c2_87, %c0_88] : memref<18x18x128xf32, #tpu.memory_space<vmem>>, vector<16x16x128xf32>
    %85 = vector.shape_cast %84 : vector<16x16x128xf32> to vector<256x128xf32>
    %86 = arith.truncf %85 : vector<256x128xf32> to vector<256x128xbf16>
    %c2_89 = arith.constant 2 : index
    %c0_90 = arith.constant 0 : index
    %c0_91 = arith.constant 0 : index
    %87 = vector.load %arg4[%c2_89, %c0_90, %c0_91] : memref<9x128x128xbf16, #tpu.memory_space<vmem>>, vector<1x128x128xbf16>
    %88 = vector.shape_cast %87 : vector<1x128x128xbf16> to vector<128x128xbf16>
    %cst_92 = arith.constant dense<0.000000e+00> : vector<256x128xf32>
    %89 = tpu.matmul %86, %88, %cst_92 {dimension_numbers = #tpu.dot_dimension_numbers<[1], [0], [0], [1], [0, 0, 1, 1], [], []>} : vector<256x128xbf16>, vector<128x128xbf16>, vector<256x128xf32> -> vector<256x128xf32>
    %90 = arith.addf %83, %89 : vector<256x128xf32>
    %c1_93 = arith.constant 1 : index
    %c0_94 = arith.constant 0 : index
    %c0_95 = arith.constant 0 : index
    %91 = vector.load %arg7[%c1_93, %c0_94, %c0_95] : memref<18x18x128xf32, #tpu.memory_space<vmem>>, vector<16x16x128xf32>
    %92 = vector.shape_cast %91 : vector<16x16x128xf32> to vector<256x128xf32>
    %93 = arith.truncf %92 : vector<256x128xf32> to vector<256x128xbf16>
    %c3_96 = arith.constant 3 : index
    %c0_97 = arith.constant 0 : index
    %c0_98 = arith.constant 0 : index
    %94 = vector.load %arg4[%c3_96, %c0_97, %c0_98] : memref<9x128x128xbf16, #tpu.memory_space<vmem>>, vector<1x128x128xbf16>
    %95 = vector.shape_cast %94 : vector<1x128x128xbf16> to vector<128x128xbf16>
    %cst_99 = arith.constant dense<0.000000e+00> : vector<256x128xf32>
    %96 = tpu.matmul %93, %95, %cst_99 {dimension_numbers = #tpu.dot_dimension_numbers<[1], [0], [0], [1], [0, 0, 1, 1], [], []>} : vector<256x128xbf16>, vector<128x128xbf16>, vector<256x128xf32> -> vector<256x128xf32>
    %97 = arith.addf %90, %96 : vector<256x128xf32>
    %c1_100 = arith.constant 1 : index
    %c1_101 = arith.constant 1 : index
    %c0_102 = arith.constant 0 : index
    %98 = vector.load %arg7[%c1_100, %c1_101, %c0_102] : memref<18x18x128xf32, #tpu.memory_space<vmem>>, vector<16x16x128xf32>
    %99 = vector.shape_cast %98 : vector<16x16x128xf32> to vector<256x128xf32>
    %100 = arith.truncf %99 : vector<256x128xf32> to vector<256x128xbf16>
    %c4_103 = arith.constant 4 : index
    %c0_104 = arith.constant 0 : index
    %c0_105 = arith.constant 0 : index
    %101 = vector.load %arg4[%c4_103, %c0_104, %c0_105] : memref<9x128x128xbf16, #tpu.memory_space<vmem>>, vector<1x128x128xbf16>
    %102 = vector.shape_cast %101 : vector<1x128x128xbf16> to vector<128x128xbf16>
    %cst_106 = arith.constant dense<0.000000e+00> : vector<256x128xf32>
    %103 = tpu.matmul %100, %102, %cst_106 {dimension_numbers = #tpu.dot_dimension_numbers<[1], [0], [0], [1], [0, 0, 1, 1], [], []>} : vector<256x128xbf16>, vector<128x128xbf16>, vector<256x128xf32> -> vector<256x128xf32>
    %104 = arith.addf %97, %103 : vector<256x128xf32>
    %c1_107 = arith.constant 1 : index
    %c2_108 = arith.constant 2 : index
    %c0_109 = arith.constant 0 : index
    %105 = vector.load %arg7[%c1_107, %c2_108, %c0_109] : memref<18x18x128xf32, #tpu.memory_space<vmem>>, vector<16x16x128xf32>
    %106 = vector.shape_cast %105 : vector<16x16x128xf32> to vector<256x128xf32>
    %107 = arith.truncf %106 : vector<256x128xf32> to vector<256x128xbf16>
    %c5_110 = arith.constant 5 : index
    %c0_111 = arith.constant 0 : index
    %c0_112 = arith.constant 0 : index
    %108 = vector.load %arg4[%c5_110, %c0_111, %c0_112] : memref<9x128x128xbf16, #tpu.memory_space<vmem>>, vector<1x128x128xbf16>
    %109 = vector.shape_cast %108 : vector<1x128x128xbf16> to vector<128x128xbf16>
    %cst_113 = arith.constant dense<0.000000e+00> : vector<256x128xf32>
    %110 = tpu.matmul %107, %109, %cst_113 {dimension_numbers = #tpu.dot_dimension_numbers<[1], [0], [0], [1], [0, 0, 1, 1], [], []>} : vector<256x128xbf16>, vector<128x128xbf16>, vector<256x128xf32> -> vector<256x128xf32>
    %111 = arith.addf %104, %110 : vector<256x128xf32>
    %c2_114 = arith.constant 2 : index
    %c0_115 = arith.constant 0 : index
    %c0_116 = arith.constant 0 : index
    %112 = vector.load %arg7[%c2_114, %c0_115, %c0_116] : memref<18x18x128xf32, #tpu.memory_space<vmem>>, vector<16x16x128xf32>
    %113 = vector.shape_cast %112 : vector<16x16x128xf32> to vector<256x128xf32>
    %114 = arith.truncf %113 : vector<256x128xf32> to vector<256x128xbf16>
    %c6_117 = arith.constant 6 : index
    %c0_118 = arith.constant 0 : index
    %c0_119 = arith.constant 0 : index
    %115 = vector.load %arg4[%c6_117, %c0_118, %c0_119] : memref<9x128x128xbf16, #tpu.memory_space<vmem>>, vector<1x128x128xbf16>
    %116 = vector.shape_cast %115 : vector<1x128x128xbf16> to vector<128x128xbf16>
    %cst_120 = arith.constant dense<0.000000e+00> : vector<256x128xf32>
    %117 = tpu.matmul %114, %116, %cst_120 {dimension_numbers = #tpu.dot_dimension_numbers<[1], [0], [0], [1], [0, 0, 1, 1], [], []>} : vector<256x128xbf16>, vector<128x128xbf16>, vector<256x128xf32> -> vector<256x128xf32>
    %118 = arith.addf %111, %117 : vector<256x128xf32>
    %c2_121 = arith.constant 2 : index
    %c1_122 = arith.constant 1 : index
    %c0_123 = arith.constant 0 : index
    %119 = vector.load %arg7[%c2_121, %c1_122, %c0_123] : memref<18x18x128xf32, #tpu.memory_space<vmem>>, vector<16x16x128xf32>
    %120 = vector.shape_cast %119 : vector<16x16x128xf32> to vector<256x128xf32>
    %121 = arith.truncf %120 : vector<256x128xf32> to vector<256x128xbf16>
    %c7_124 = arith.constant 7 : index
    %c0_125 = arith.constant 0 : index
    %c0_126 = arith.constant 0 : index
    %122 = vector.load %arg4[%c7_124, %c0_125, %c0_126] : memref<9x128x128xbf16, #tpu.memory_space<vmem>>, vector<1x128x128xbf16>
    %123 = vector.shape_cast %122 : vector<1x128x128xbf16> to vector<128x128xbf16>
    %cst_127 = arith.constant dense<0.000000e+00> : vector<256x128xf32>
    %124 = tpu.matmul %121, %123, %cst_127 {dimension_numbers = #tpu.dot_dimension_numbers<[1], [0], [0], [1], [0, 0, 1, 1], [], []>} : vector<256x128xbf16>, vector<128x128xbf16>, vector<256x128xf32> -> vector<256x128xf32>
    %125 = arith.addf %118, %124 : vector<256x128xf32>
    %c2_128 = arith.constant 2 : index
    %c2_129 = arith.constant 2 : index
    %c0_130 = arith.constant 0 : index
    %126 = vector.load %arg7[%c2_128, %c2_129, %c0_130] : memref<18x18x128xf32, #tpu.memory_space<vmem>>, vector<16x16x128xf32>
    %127 = vector.shape_cast %126 : vector<16x16x128xf32> to vector<256x128xf32>
    %128 = arith.truncf %127 : vector<256x128xf32> to vector<256x128xbf16>
    %c8_131 = arith.constant 8 : index
    %c0_132 = arith.constant 0 : index
    %c0_133 = arith.constant 0 : index
    %129 = vector.load %arg4[%c8_131, %c0_132, %c0_133] : memref<9x128x128xbf16, #tpu.memory_space<vmem>>, vector<1x128x128xbf16>
    %130 = vector.shape_cast %129 : vector<1x128x128xbf16> to vector<128x128xbf16>
    %cst_134 = arith.constant dense<0.000000e+00> : vector<256x128xf32>
    %131 = tpu.matmul %128, %130, %cst_134 {dimension_numbers = #tpu.dot_dimension_numbers<[1], [0], [0], [1], [0, 0, 1, 1], [], []>} : vector<256x128xbf16>, vector<128x128xbf16>, vector<256x128xf32> -> vector<256x128xf32>
    %132 = arith.addf %125, %131 : vector<256x128xf32>
    %c0_135 = arith.constant 0 : index
    %c1_136 = arith.constant 1 : index
    %c1_137 = arith.constant 1 : index
    %c0_138 = arith.constant 0 : index
    %133 = vector.load %arg1[%c0_135, %c1_136, %c1_137, %c0_138] : memref<1x18x18x128xbf16, #tpu.memory_space<vmem>>, vector<1x16x16x128xbf16>
    %134 = vector.shape_cast %133 : vector<1x16x16x128xbf16> to vector<16x16x128xbf16>
    %135 = vector.shape_cast %134 : vector<16x16x128xbf16> to vector<256x128xbf16>
    %136 = arith.extf %135 : vector<256x128xbf16> to vector<256x128xf32>
    %c0_139 = arith.constant 0 : index
    %c0_140 = arith.constant 0 : index
    %137 = vector.load %arg5[%c0_139, %c0_140] : memref<1x128xf32, #tpu.memory_space<vmem>>, vector<1x128xf32>
    %138 = vector.broadcast %137 : vector<1x128xf32> to vector<256x128xf32>
    %139 = arith.addf %132, %138 : vector<256x128xf32>
    %140 = arith.addf %139, %136 : vector<256x128xf32>
    %cst_141 = arith.constant 0.000000e+00 : f32
    %141 = vector.broadcast %cst_141 : f32 to vector<256x128xf32>
    %142 = arith.maximumf %140, %141 : vector<256x128xf32>
    %c0_142 = arith.constant 0 : index
    %c0_143 = arith.constant 0 : index
    %c0_144 = arith.constant 0 : index
    %143 = vector.load %arg6[%c0_142, %c0_143, %c0_144] : memref<1x256x128xf32, #tpu.memory_space<vmem>>, vector<1x256x128xf32>
    %144 = vector.shape_cast %143 : vector<1x256x128xf32> to vector<256x128xf32>
    %145 = vector.shape_cast %142 : vector<256x128xf32> to vector<1x256x128xf32>
    tpu.vector_store %arg6[%c0_142, %c0_143, %c0_144], %145 {strides = array<i32>} : memref<1x256x128xf32, #tpu.memory_space<vmem>>, vector<1x256x128xf32>,
    return
  }
  func.func @transform_0(%arg0: i32) -> (i32, i32, i32, i32) {
    %c0_i32 = arith.constant 0 : i32
    %c0_i32_0 = arith.constant 0 : i32
    %c0_i32_1 = arith.constant 0 : i32
    %c0_i32_2 = arith.constant 0 : i32
    return %arg0, %c0_i32, %c0_i32_0, %c0_i32_1 : i32, i32, i32, i32
  }
  func.func @transform_1(%arg0: i32) -> (i32, i32, i32) {
    %c0_i32 = arith.constant 0 : i32
    %c0_i32_0 = arith.constant 0 : i32
    %c0_i32_1 = arith.constant 0 : i32
    %c0_i32_2 = arith.constant 0 : i32
    return %c0_i32, %c0_i32_0, %c0_i32_1 : i32, i32, i32
  }
  func.func @transform_2(%arg0: i32) -> (i32, i32) {
    %c0_i32 = arith.constant 0 : i32
    %c0_i32_0 = arith.constant 0 : i32
    %c0_i32_1 = arith.constant 0 : i32
    return %c0_i32, %c0_i32_0 : i32, i32
  }
  func.func @transform_3(%arg0: i32) -> (i32, i32, i32) {
    %c0_i32 = arith.constant 0 : i32
    %c0_i32_0 = arith.constant 0 : i32
    %c0_i32_1 = arith.constant 0 : i32
    %c0_i32_2 = arith.constant 0 : i32
    return %c0_i32, %c0_i32_0, %c0_i32_1 : i32, i32, i32
  }
  func.func @transform_4(%arg0: i32) -> (i32, i32) {
    %c0_i32 = arith.constant 0 : i32
    %c0_i32_0 = arith.constant 0 : i32
    %c0_i32_1 = arith.constant 0 : i32
    return %c0_i32, %c0_i32_0 : i32, i32
  }
  func.func @transform_5(%arg0: i32) -> (i32, i32, i32) {
    %c0_i32 = arith.constant 0 : i32
    %c0_i32_0 = arith.constant 0 : i32
    %c0_i32_1 = arith.constant 0 : i32
    return %arg0, %c0_i32, %c0_i32_0 : i32, i32, i32
  }
}

</mosaic_0001>

<llo_original>
// kernel: tpu_custom_call.1
$region0: #{tpu_custom_call.1}
  #allocation0 [shape = 'u32[]', space=smem, size = 0x4, offset = 0x4, fixed_abs, tag = 'smem constant byte address 0x4 - core index']
  #allocation1 [shape = 'u32[144,128]{1,0:T(1,128)}', space=vmem, size = 0x12000, scoped, tag = 'internal scratch']
  #allocation2 [shape = 'f32[18,18,128]{2,1,0:T(8,128)}', space=vmem, size = 0x36000, scoped, tag = 'scratch operand']
  %s0 = inlined_call_operand.vmem [shape: bf16[2,18,18,128], index: 0, kind: input, shape index: {}]
  %s1 = inlined_call_operand.vmem [shape: bf16[9,128,128], index: 1, kind: input, shape index: {}]
  %s2 = inlined_call_operand.vmem [shape: f32[1,128], index: 2, kind: input, shape index: {}]
  %s3 = inlined_call_operand.hbm [shape: bf16[9,128,128], index: 3, kind: input, shape index: {}]
  %s4 = inlined_call_operand.vmem [shape: f32[1,128], index: 4, kind: input, shape index: {}]
  %s5 = inlined_call_operand.hbm [shape: f32[2,256,128], index: 5, kind: output, shape index: {}]
  %s6 = sld [smem:[#allocation0]]
  $region57: #{tpu_custom_call.1} parent=0
    _
  %s8 = ssub.s32 1, %s6
  %s9 = scalar_select 0, %s8, %s6
  $region1: #{tpu_custom_call.1} parent=0
    #allocation3 [shape = 'u8[294912]{0}', space=vmem, size = 0x48000, scoped, tag = 'input window, operand 3, single buffered']
    #allocation4 [shape = 's32[2]{0}', space=sflag, size = 0x8, scoped, tag = 'scoped memory for tpu_custom_call.1']
    #allocation5 [shape = 's32[2]{0}', space=sflag, size = 0x8, scoped, tag = 'scoped memory for tpu_custom_call.1']
    #allocation6 [shape = 'u8[262144]{0}', space=vmem, size = 0x40000, scoped, tag = 'output window, operand 0']
    %10 = vsyncpa [#allocation4], 0
    %11 = vsyncpa [#allocation5], 0
    %s12 = scalar_lea.sflag [#allocation5], 1
    %13 = vsyncpa %s12, 0
    loop: start=0, step=1, limit=4
    $region2: #{tpu_custom_call.1} parent=1 // loop_pre_header
      _
    $region3: #{tpu_custom_call.1} parent=1 // loop_header
      %s15 = sphi 0, %s19
      %p16 = scmp.ge.s32.totalorder %s15, 4
      %s25 = sphi 0, %s27
      %s28 = sphi 0, %s25
      %s29 = sphi 0, %s28
      %s45 = sphi 0, %s29
      %s49 = sphi 0, %s49
      %s51 = sphi 0, %s49
      %s52 = sphi 0, %s51
      %s66 = sphi 0, %s52
      %s70 = sphi 0, %s70
      %s72 = sphi 0, %s70
      %s73 = sphi 0, %s72
      %s87 = sphi 0, %s73
      %s91 = sphi 0, %s91
      %s93 = sphi 0, %s91
      %s94 = sphi 0, %s93
      %s108 = sphi 0, %s94
      %s112 = sphi 0, %s112
      %s114 = sphi 0, %s112
      %s115 = sphi 0, %s114
      %s129 = sphi 0, %s115
      %s135 = sphi 0, %s137
      %s138 = sphi 0, %s135
      %s139 = sphi 0, %s138
      %s155 = sphi 0, %s139
    $region4: #{tpu_custom_call.1} parent=1 // loop_header_branch
      %18 = sbr.rel (%p16) target = $region8
    $region5: #{tpu_custom_call.1} parent=1 // loop_body
      %s20 = ssub.s32 %s15, 1
      %s21 = ssub.s32 %s15, 2
      %s22 = sadd.s32 %s15, 1
      %s23 = ssub.s32 %s15, %s22
      %p24 = scmp.eq.s32.totalorder %s23, 0
      %s26 = sadd.s32 %s25, 1
      %s27 = scalar_select %p24, %s25, %s26
      %p30 = pneg %p24
      %p31 = scmp.eq.s32.totalorder %s15, 1
      %p32 = por %p30, %p31
      %p33 = scmp.ne.s32.totalorder %s25, %s28
      %p34 = scmp.eq.s32.totalorder %s15, 0
      %p35 = por %p33, %p34
      %p36 = scmp.ne.s32.totalorder %s25, %s28
      %p37 = scmp.eq.s32.totalorder %s20, 1
      %p38 = por %p36, %p37
      %p39 = scmp.ne.s32.totalorder %s28, %s29
      %p40 = scmp.eq.s32.totalorder %s20, 0
      %p41 = por %p39, %p40
      %p42 = scmp.ne.s32.totalorder %s28, %s29
      %p43 = scmp.eq.s32.totalorder %s21, 1
      %p44 = por %p42, %p43
      %p46 = scmp.ne.s32.totalorder %s29, %s45
      %p47 = scmp.eq.s32.totalorder %s21, 0
      %p48 = por %p46, %p47
      %s50 = sadd.s32 %s49, 1
      %p53 = scmp.eq.s32.totalorder %s15, 1
      %p54 = scmp.ne.s32.totalorder %s49, %s51
      %p55 = scmp.eq.s32.totalorder %s15, 0
      %p56 = por %p54, %p55
      %p57 = scmp.ne.s32.totalorder %s49, %s51
      %p58 = scmp.eq.s32.totalorder %s20, 1
      %p59 = por %p57, %p58
      %p60 = scmp.ne.s32.totalorder %s51, %s52
      %p61 = scmp.eq.s32.totalorder %s20, 0
      %p62 = por %p60, %p61
      %p63 = scmp.ne.s32.totalorder %s51, %s52
      %p64 = scmp.eq.s32.totalorder %s21, 1
      %p65 = por %p63, %p64
      %p67 = scmp.ne.s32.totalorder %s52, %s66
      %p68 = scmp.eq.s32.totalorder %s21, 0
      %p69 = por %p67, %p68
      %s71 = sadd.s32 %s70, 1
      %p74 = scmp.eq.s32.totalorder %s15, 1
      %p75 = scmp.ne.s32.totalorder %s70, %s72
      %p76 = scmp.eq.s32.totalorder %s15, 0
      %p77 = por %p75, %p76
      %p78 = scmp.ne.s32.totalorder %s70, %s72
      %p79 = scmp.eq.s32.totalorder %s20, 1
      %p80 = por %p78, %p79
      %p81 = scmp.ne.s32.totalorder %s72, %s73
      %p82 = scmp.eq.s32.totalorder %s20, 0
      %p83 = por %p81, %p82
      %p84 = scmp.ne.s32.totalorder %s72, %s73
      %p85 = scmp.eq.s32.totalorder %s21, 1
      %p86 = por %p84, %p85
      %p88 = scmp.ne.s32.totalorder %s73, %s87
      %p89 = scmp.eq.s32.totalorder %s21, 0
      %p90 = por %p88, %p89
      %s92 = sadd.s32 %s91, 1
      %p95 = scmp.eq.s32.totalorder %s15, 1
      %p96 = scmp.ne.s32.totalorder %s91, %s93
      %p97 = scmp.eq.s32.totalorder %s15, 0
      %p98 = por %p96, %p97
      %p99 = scmp.ne.s32.totalorder %s91, %s93
      %p100 = scmp.eq.s32.totalorder %s20, 1
      %p101 = por %p99, %p100
      %p102 = scmp.ne.s32.totalorder %s93, %s94
      %p103 = scmp.eq.s32.totalorder %s20, 0
      %p104 = por %p102, %p103
      %p105 = scmp.ne.s32.totalorder %s93, %s94
      %p106 = scmp.eq.s32.totalorder %s21, 1
      %p107 = por %p105, %p106
      %p109 = scmp.ne.s32.totalorder %s94, %s108
      %p110 = scmp.eq.s32.totalorder %s21, 0
      %p111 = por %p109, %p110
      %s113 = sadd.s32 %s112, 1
      %p116 = scmp.eq.s32.totalorder %s15, 1
      %p117 = scmp.ne.s32.totalorder %s112, %s114
      %p118 = scmp.eq.s32.totalorder %s15, 0
      %p119 = por %p117, %p118
      %p120 = scmp.ne.s32.totalorder %s112, %s114
      %p121 = scmp.eq.s32.totalorder %s20, 1
      %p122 = por %p120, %p121
      %p123 = scmp.ne.s32.totalorder %s114, %s115
      %p124 = scmp.eq.s32.totalorder %s20, 0
      %p125 = por %p123, %p124
      %p126 = scmp.ne.s32.totalorder %s114, %s115
      %p127 = scmp.eq.s32.totalorder %s21, 1
      %p128 = por %p126, %p127
      %p130 = scmp.ne.s32.totalorder %s115, %s129
      %p131 = scmp.eq.s32.totalorder %s21, 0
      %p132 = por %p130, %p131
      %s133 = ssub.s32 %s15, %s22
      %p134 = scmp.eq.s32.totalorder %s133, 0
      %s136 = sadd.s32 %s135, 1
      %s137 = scalar_select %p134, %s135, %s136
      %p140 = pneg %p134
      %p141 = scmp.eq.s32.totalorder %s15, 1
      %p142 = por %p140, %p141
      %p143 = scmp.ne.s32.totalorder %s135, %s138
      %p144 = scmp.eq.s32.totalorder %s15, 0
      %p145 = por %p143, %p144
      %p146 = scmp.ne.s32.totalorder %s135, %s138
      %p147 = scmp.eq.s32.totalorder %s20, 1
      %p148 = por %p146, %p147
      %p149 = scmp.ne.s32.totalorder %s138, %s139
      %p150 = scmp.eq.s32.totalorder %s20, 0
      %p151 = por %p149, %p150
      %p152 = scmp.ne.s32.totalorder %s138, %s139
      %p153 = scmp.eq.s32.totalorder %s21, 1
      %p154 = por %p152, %p153
      %p156 = scmp.ne.s32.totalorder %s139, %s155
      %p157 = scmp.eq.s32.totalorder %s21, 0
      %p158 = por %p156, %p157
      %p159 = scmp.le.s32.totalorder 1, %s15
      %p160 = scmp.lt.s32.totalorder %s15, 3
      %p161 = pnand %p159, %p160
      %p162 = pneg %p161
      // Predicated region
      $region9: #{tpu_custom_call.1} parent=5 // pred_check
        _
      $region10: #{tpu_custom_call.1} parent=5 // pred_check_branch
        %164 = sbr.rel (%p161) target = $region12
      $region11: #{tpu_custom_call.1} parent=5 // pred_region
        %s165 = ssub.s32 %s15, 1
        // Predicated region
        $region13: #{tpu_custom_call.1} parent=11 // pred_check
          %p166 = pneg %p62
        $region14: #{tpu_custom_call.1} parent=11 // pred_check_branch
          %168 = sbr.rel (%p166) target = $region16
        $region15: #{tpu_custom_call.1} parent=11 // pred_region
          _
        $region16: #{tpu_custom_call.1} parent=11 // pred_fallthru
          _
        // Predicated region
        $region17: #{tpu_custom_call.1} parent=11 // pred_check
          %p169 = pneg %p83
        $region18: #{tpu_custom_call.1} parent=11 // pred_check_branch
          %171 = sbr.rel (%p169) target = $region20
        $region19: #{tpu_custom_call.1} parent=11 // pred_region
          _
        $region20: #{tpu_custom_call.1} parent=11 // pred_fallthru
          _
        // Predicated region
        $region21: #{tpu_custom_call.1} parent=11 // pred_check
          %p172 = pneg %p104
        $region22: #{tpu_custom_call.1} parent=11 // pred_check_branch
          %174 = sbr.rel (%p172) target = $region24
        $region23: #{tpu_custom_call.1} parent=11 // pred_region
          %s176 = ssub.s32 9216, 9216
          %177 = vsyncadd [#allocation4], %s176
          %s178 = sshll.u32 [#allocation3], 4
          %s179 = int_to_ptr.vmem [resolvable:$true] %s178
          %184 = dma.hbm_to_vmem [thread:$0]  %s3, 9216, %s179, [#allocation4], 64, 64, 4
        $region24: #{tpu_custom_call.1} parent=11 // pred_fallthru
          _
        // Predicated region
        $region25: #{tpu_custom_call.1} parent=11 // pred_check
          %p185 = pneg %p125
        $region26: #{tpu_custom_call.1} parent=11 // pred_check_branch
          %187 = sbr.rel (%p185) target = $region28
        $region27: #{tpu_custom_call.1} parent=11 // pred_region
          _
        $region28: #{tpu_custom_call.1} parent=11 // pred_fallthru
          _
      $region12: #{tpu_custom_call.1} parent=5 // pred_fallthru
        _
      %p188 = scmp.lt.s32.totalorder %s15, 2
      // Predicated region
      $region29: #{tpu_custom_call.1} parent=5 // pred_check
        %p189 = pneg %p188
      $region30: #{tpu_custom_call.1} parent=5 // pred_check_branch
        %191 = sbr.rel (%p189) target = $region32
      $region31: #{tpu_custom_call.1} parent=5 // pred_region
        // Predicated region
        $region33: #{tpu_custom_call.1} parent=31 // pred_check
          %p192 = pneg %p35
        $region34: #{tpu_custom_call.1} parent=31 // pred_check_branch
          %194 = sbr.rel (%p192) target = $region36
        $region35: #{tpu_custom_call.1} parent=31 // pred_region
          %p195 = scmp.lt.s32.totalorder %s15, 1
          %s196 = scalar_select %p195, %s15, 1
          %s197 = smul.addr %s196, 54
          %s198 = smul.addr %s197, 4
          %s199 = scalar_lea.vmem %s0, %s198
        $region36: #{tpu_custom_call.1} parent=31 // pred_fallthru
          _
      $region32: #{tpu_custom_call.1} parent=5 // pred_fallthru
        _
      %p200 = scmp.le.s32.totalorder 1, %s15
      %p201 = scmp.lt.s32.totalorder %s15, 3
      %p202 = pnand %p200, %p201
      %p203 = pneg %p202
      // Predicated region
      $region37: #{tpu_custom_call.1} parent=5 // pred_check
        _
      $region38: #{tpu_custom_call.1} parent=5 // pred_check_branch
        %205 = sbr.rel (%p202) target = $region40
      $region39: #{tpu_custom_call.1} parent=5 // pred_region
        %s206 = ssub.s32 %s15, 1
        // Predicated region
        $region41: #{tpu_custom_call.1} parent=39 // pred_check
          %p207 = pneg %p104
        $region42: #{tpu_custom_call.1} parent=39 // pred_check_branch
          %209 = sbr.rel (%p207) target = $region44
        $region43: #{tpu_custom_call.1} parent=39 // pred_region
          %210 = dma.done [#allocation4], 9216
        $region44: #{tpu_custom_call.1} parent=39 // pred_fallthru
          _
        %p211 = scmp.lt.s32.totalorder %s20, 1
        %s212 = scalar_select %p211, %s20, 1
        %s213 = smul.addr %s212, 54
        %s214 = smul.addr %s213, 4
        %s215 = scalar_lea.vmem %s0, %s214
        %p216 = pneg %p41
        %p217 = pneg %p38
        %p218 = pneg %p62
        %p219 = pneg %p59
        %p220 = pneg %p83
        %p221 = pneg %p80
        %p222 = pneg %p104
        %p223 = pneg %p101
        %p224 = pneg %p125
        %p225 = pneg %p122
        %p226 = pneg %p151
        %p227 = pneg %p148
        %s228 = sand.u32 %s138, 1
        %s229 = scalar_lea.sflag [#allocation5], %s228
        %s230 = sand.u32 %s138, 1
        %s231 = smul.addr %s230, 256
        %s232 = scalar_lea.vmem [#allocation6], %s231
        %p233 = scmp.lt.s32.totalorder %s20, 1
        %s234 = scalar_select %p233, %s20, 1
        %s235 = smul.addr %s234, 54
        %s236 = smul.addr %s235, 4
        %s237 = scalar_lea.vmem %s0, %s236
        %v239 = vld [vmem:[%s237] sm:$0xf]
        %v240 = vld [vmem:[%s237 + $0x4] sm:$0xf]
        %v241 = vld [vmem:[%s237 + $0xc] sm:$0xf]
        %v242 = vld [vmem:[%s237 + $0x10] sm:$0xf]
        %v243 = vld [vmem:[%s237 + $0x18] sm:$0xf]
        %v244 = vld [vmem:[%s237 + $0x1c] sm:$0xf]
        %v245 = vld [vmem:[%s237 + $0x24] sm:$0xf]
        %v246 = vld [vmem:[%s237 + $0x28] sm:$0xf]
        %v247 = vld [vmem:[%s237 + $0x30] sm:$0xf]
        %v248 = vld [vmem:[%s237 + $0x34] sm:$0xf]
        %v249 = vld [vmem:[%s237 + $0x3c] sm:$0xf]
        %v250 = vld [vmem:[%s237 + $0x40] sm:$0xf]
        %v251 = vld [vmem:[%s237 + $0x48] sm:$0xf]
        %v252 = vld [vmem:[%s237 + $0x4c] sm:$0xf]
        %v253 = vld [vmem:[%s237 + $0x54] sm:$0xf]
        %v254 = vld [vmem:[%s237 + $0x58] sm:$0xf]
        %v255 = vld [vmem:[%s237 + $0x60] sm:$0xf]
        %v256 = vld [vmem:[%s237 + $0x64] sm:$0xf]
        %v257 = vld [vmem:[%s237 + $0x6c] sm:$0xf]
        %v258 = vld [vmem:[%s237 + $0x70] sm:$0xf]
        %v259 = vld [vmem:[%s237 + $0x78] sm:$0xf]
        %v260 = vld [vmem:[%s237 + $0x7c] sm:$0xf]
        %v261 = vld [vmem:[%s237 + $0x84] sm:$0xf]
        %v262 = vld [vmem:[%s237 + $0x88] sm:$0xf]
        %v263 = vld [vmem:[%s237 + $0x90] sm:$0xf]
        %v264 = vld [vmem:[%s237 + $0x94] sm:$0xf]
        %v265 = vld [vmem:[%s237 + $0x9c] sm:$0xf]
        %v266 = vld [vmem:[%s237 + $0xa0] sm:$0xf]
        %v267 = vld [vmem:[%s237 + $0xa8] sm:$0xf]
        %v268 = vld [vmem:[%s237 + $0xac] sm:$0xf]
        %v269 = vld [vmem:[%s237 + $0xb4] sm:$0xf]
        %v270 = vld [vmem:[%s237 + $0xb8] sm:$0xf]
        %v271 = vld [vmem:[%s1] sm:$0xf]
        %v272 = vld [vmem:[%s1 + $0x4] sm:$0xf]
        %v273 = vld [vmem:[%s1 + $0x8] sm:$0xf]
        %v274 = vld [vmem:[%s1 + $0xc] sm:$0xf]
        %v275 = vld [vmem:[%s1 + $0x10] sm:$0xf]
        %v276 = vld [vmem:[%s1 + $0x14] sm:$0xf]
        %v277 = vld [vmem:[%s1 + $0x18] sm:$0xf]
        %v278 = vld [vmem:[%s1 + $0x1c] sm:$0xf]
        %v279 = vld [vmem:[%s1 + $0x20] sm:$0xf]
        %v280 = vld [vmem:[%s1 + $0x24] sm:$0xf]
        %v281 = vld [vmem:[%s1 + $0x28] sm:$0xf]
        %v282 = vld [vmem:[%s1 + $0x2c] sm:$0xf]
        %v283 = vld [vmem:[%s1 + $0x30] sm:$0xf]
        %v284 = vld [vmem:[%s1 + $0x34] sm:$0xf]
        %v285 = vld [vmem:[%s1 + $0x38] sm:$0xf]
        %v286 = vld [vmem:[%s1 + $0x3c] sm:$0xf]
        %v287 = vld [vmem:[%s237 + $0x8] sm:$0x1]
        %v288 = vld [vmem:[%s237 + $0x14] sm:$0x1]
        %v289 = vld [vmem:[%s237 + $0x20] sm:$0x1]
        %v290 = vld [vmem:[%s237 + $0x2c] sm:$0x1]
        %v291 = vld [vmem:[%s237 + $0x38] sm:$0x1]
        %v292 = vld [vmem:[%s237 + $0x44] sm:$0x1]
        %v293 = vld [vmem:[%s237 + $0x50] sm:$0x1]
        %v294 = vld [vmem:[%s237 + $0x5c] sm:$0x1]
        %v295 = vld [vmem:[%s237 + $0x68] sm:$0x1]
        %v296 = vld [vmem:[%s237 + $0x74] sm:$0x1]
        %v297 = vld [vmem:[%s237 + $0x80] sm:$0x1]
        %v298 = vld [vmem:[%s237 + $0x8c] sm:$0x1]
        %v299 = vld [vmem:[%s237 + $0x98] sm:$0x1]
        %v300 = vld [vmem:[%s237 + $0xa4] sm:$0x1]
        %v301 = vld [vmem:[%s237 + $0xb0] sm:$0x1]
        %v302 = vld [vmem:[%s237 + $0xbc] sm:$0x1]
        %vm303 = vsmask.f32 3328
        %vm304 = vsmask.f32 7440
        %vm305 = vmor %vm303, %vm304
        %v307 = vshrl.u32 %v239, 16
        %v309 = vrot.slane %v307, 4
        %v310 = vshll.u32 %v239, 16
        %v312 = vrot.slane %v310, 5
        %v313 = vor.u32 %v309, %v312
        %v314 = vrot.slane %v313, 4
        %v316 = vshll.u32 %v240, 16
        %v318 = vrot.slane %v316, 5
        %v319 = vsel %vm305, %v314, %v318
        %v320 = vshrl.u32 %v240, 16
        %v322 = vrot.slane %v320, 4
        %v323 = vor.u32 %v322, %v318
        %v324 = vrot.slane %v323, 4
        %v326 = vshll.u32 %v287, 16
        %v328 = vrot.slane %v326, 5
        %v329 = vsel %vm305, %v324, %v328
        %v331 = vshrl.u32 %v241, 16
        %v333 = vrot.slane %v331, 4
        %v334 = vshll.u32 %v241, 16
        %v336 = vrot.slane %v334, 5
        %v337 = vor.u32 %v333, %v336
        %v338 = vrot.slane %v337, 4
        %v340 = vshll.u32 %v242, 16
        %v342 = vrot.slane %v340, 5
        %v343 = vsel %vm305, %v338, %v342
        %v344 = vshrl.u32 %v242, 16
        %v346 = vrot.slane %v344, 4
        %v347 = vor.u32 %v346, %v342
        %v348 = vrot.slane %v347, 4
        %v350 = vshll.u32 %v288, 16
        %v352 = vrot.slane %v350, 5
        %v353 = vsel %vm305, %v348, %v352
        %v355 = vshrl.u32 %v243, 16
        %v357 = vrot.slane %v355, 4
        %v358 = vshll.u32 %v243, 16
        %v360 = vrot.slane %v358, 5
        %v361 = vor.u32 %v357, %v360
        %v362 = vrot.slane %v361, 4
        %v364 = vshll.u32 %v244, 16
        %v366 = vrot.slane %v364, 5
        %v367 = vsel %vm305, %v362, %v366
        %v368 = vshrl.u32 %v244, 16
        %v370 = vrot.slane %v368, 4
        %v371 = vor.u32 %v370, %v366
        %v372 = vrot.slane %v371, 4
        %v374 = vshll.u32 %v289, 16
        %v376 = vrot.slane %v374, 5
        %v377 = vsel %vm305, %v372, %v376
        %v379 = vshrl.u32 %v245, 16
        %v381 = vrot.slane %v379, 4
        %v382 = vshll.u32 %v245, 16
        %v384 = vrot.slane %v382, 5
        %v385 = vor.u32 %v381, %v384
        %v386 = vrot.slane %v385, 4
        %v388 = vshll.u32 %v246, 16
        %v390 = vrot.slane %v388, 5
        %v391 = vsel %vm305, %v386, %v390
        %v392 = vshrl.u32 %v246, 16
        %v394 = vrot.slane %v392, 4
        %v395 = vor.u32 %v394, %v390
        %v396 = vrot.slane %v395, 4
        %v398 = vshll.u32 %v290, 16
        %v400 = vrot.slane %v398, 5
        %v401 = vsel %vm305, %v396, %v400
        %v403 = vshrl.u32 %v247, 16
        %v405 = vrot.slane %v403, 4
        %v406 = vshll.u32 %v247, 16
        %v408 = vrot.slane %v406, 5
        %v409 = vor.u32 %v405, %v408
        %v410 = vrot.slane %v409, 4
        %v412 = vshll.u32 %v248, 16
        %v414 = vrot.slane %v412, 5
        %v415 = vsel %vm305, %v410, %v414
        %v416 = vshrl.u32 %v248, 16
        %v418 = vrot.slane %v416, 4
        %v419 = vor.u32 %v418, %v414
        %v420 = vrot.slane %v419, 4
        %v422 = vshll.u32 %v291, 16
        %v424 = vrot.slane %v422, 5
        %v425 = vsel %vm305, %v420, %v424
        %v427 = vshrl.u32 %v249, 16
        %v429 = vrot.slane %v427, 4
        %v430 = vshll.u32 %v249, 16
        %v432 = vrot.slane %v430, 5
        %v433 = vor.u32 %v429, %v432
        %v434 = vrot.slane %v433, 4
        %v436 = vshll.u32 %v250, 16
        %v438 = vrot.slane %v436, 5
        %v439 = vsel %vm305, %v434, %v438
        %v440 = vshrl.u32 %v250, 16
        %v442 = vrot.slane %v440, 4
        %v443 = vor.u32 %v442, %v438
        %v444 = vrot.slane %v443, 4
        %v446 = vshll.u32 %v292, 16
        %v448 = vrot.slane %v446, 5
        %v449 = vsel %vm305, %v444, %v448
        %v451 = vshrl.u32 %v251, 16
        %v453 = vrot.slane %v451, 4
        %v454 = vshll.u32 %v251, 16
        %v456 = vrot.slane %v454, 5
        %v457 = vor.u32 %v453, %v456
        %v458 = vrot.slane %v457, 4
        %v460 = vshll.u32 %v252, 16
        %v462 = vrot.slane %v460, 5
        %v463 = vsel %vm305, %v458, %v462
        %v464 = vshrl.u32 %v252, 16
        %v466 = vrot.slane %v464, 4
        %v467 = vor.u32 %v466, %v462
        %v468 = vrot.slane %v467, 4
        %v470 = vshll.u32 %v293, 16
        %v472 = vrot.slane %v470, 5
        %v473 = vsel %vm305, %v468, %v472
        %v475 = vshrl.u32 %v253, 16
        %v477 = vrot.slane %v475, 4
        %v478 = vshll.u32 %v253, 16
        %v480 = vrot.slane %v478, 5
        %v481 = vor.u32 %v477, %v480
        %v482 = vrot.slane %v481, 4
        %v484 = vshll.u32 %v254, 16
        %v486 = vrot.slane %v484, 5
        %v487 = vsel %vm305, %v482, %v486
        %v488 = vshrl.u32 %v254, 16
        %v490 = vrot.slane %v488, 4
        %v491 = vor.u32 %v490, %v486
        %v492 = vrot.slane %v491, 4
        %v494 = vshll.u32 %v294, 16
        %v496 = vrot.slane %v494, 5
        %v497 = vsel %vm305, %v492, %v496
        %v499 = vshrl.u32 %v255, 16
        %v501 = vrot.slane %v499, 4
        %v502 = vshll.u32 %v255, 16
        %v504 = vrot.slane %v502, 5
        %v505 = vor.u32 %v501, %v504
        %v506 = vrot.slane %v505, 4
        %v508 = vshll.u32 %v256, 16
        %v510 = vrot.slane %v508, 5
        %v511 = vsel %vm305, %v506, %v510
        %v512 = vshrl.u32 %v256, 16
        %v514 = vrot.slane %v512, 4
        %v515 = vor.u32 %v514, %v510
        %v516 = vrot.slane %v515, 4
        %v518 = vshll.u32 %v295, 16
        %v520 = vrot.slane %v518, 5
        %v521 = vsel %vm305, %v516, %v520
        %v523 = vshrl.u32 %v257, 16
        %v525 = vrot.slane %v523, 4
        %v526 = vshll.u32 %v257, 16
        %v528 = vrot.slane %v526, 5
        %v529 = vor.u32 %v525, %v528
        %v530 = vrot.slane %v529, 4
        %v532 = vshll.u32 %v258, 16
        %v534 = vrot.slane %v532, 5
        %v535 = vsel %vm305, %v530, %v534
        %v536 = vshrl.u32 %v258, 16
        %v538 = vrot.slane %v536, 4
        %v539 = vor.u32 %v538, %v534
        %v540 = vrot.slane %v539, 4
        %v542 = vshll.u32 %v296, 16
        %v544 = vrot.slane %v542, 5
        %v545 = vsel %vm305, %v540, %v544
        %v547 = vshrl.u32 %v259, 16
        %v549 = vrot.slane %v547, 4
        %v550 = vshll.u32 %v259, 16
        %v552 = vrot.slane %v550, 5
        %v553 = vor.u32 %v549, %v552
        %v554 = vrot.slane %v553, 4
        %v556 = vshll.u32 %v260, 16
        %v558 = vrot.slane %v556, 5
        %v559 = vsel %vm305, %v554, %v558
        %v560 = vshrl.u32 %v260, 16
        %v562 = vrot.slane %v560, 4
        %v563 = vor.u32 %v562, %v558
        %v564 = vrot.slane %v563, 4
        %v566 = vshll.u32 %v297, 16
        %v568 = vrot.slane %v566, 5
        %v569 = vsel %vm305, %v564, %v568
        %v571 = vshrl.u32 %v261, 16
        %v573 = vrot.slane %v571, 4
        %v574 = vshll.u32 %v261, 16
        %v576 = vrot.slane %v574, 5
        %v577 = vor.u32 %v573, %v576
        %v578 = vrot.slane %v577, 4
        %v580 = vshll.u32 %v262, 16
        %v582 = vrot.slane %v580, 5
        %v583 = vsel %vm305, %v578, %v582
        %v584 = vshrl.u32 %v262, 16
        %v586 = vrot.slane %v584, 4
        %v587 = vor.u32 %v586, %v582
        %v588 = vrot.slane %v587, 4
        %v590 = vshll.u32 %v298, 16
        %v592 = vrot.slane %v590, 5
        %v593 = vsel %vm305, %v588, %v592
        %v595 = vshrl.u32 %v263, 16
        %v597 = vrot.slane %v595, 4
        %v598 = vshll.u32 %v263, 16
        %v600 = vrot.slane %v598, 5
        %v601 = vor.u32 %v597, %v600
        %v602 = vrot.slane %v601, 4
        %v604 = vshll.u32 %v264, 16
        %v606 = vrot.slane %v604, 5
        %v607 = vsel %vm305, %v602, %v606
        %v608 = vshrl.u32 %v264, 16
        %v610 = vrot.slane %v608, 4
        %v611 = vor.u32 %v610, %v606
        %v612 = vrot.slane %v611, 4
        %v614 = vshll.u32 %v299, 16
        %v616 = vrot.slane %v614, 5
        %v617 = vsel %vm305, %v612, %v616
        %v619 = vshrl.u32 %v265, 16
        %v621 = vrot.slane %v619, 4
        %v622 = vshll.u32 %v265, 16
        %v624 = vrot.slane %v622, 5
        %v625 = vor.u32 %v621, %v624
        %v626 = vrot.slane %v625, 4
        %v628 = vshll.u32 %v266, 16
        %v630 = vrot.slane %v628, 5
        %v631 = vsel %vm305, %v626, %v630
        %v632 = vshrl.u32 %v266, 16
        %v634 = vrot.slane %v632, 4
        %v635 = vor.u32 %v634, %v630
        %v636 = vrot.slane %v635, 4
        %v638 = vshll.u32 %v300, 16
        %v640 = vrot.slane %v638, 5
        %v641 = vsel %vm305, %v636, %v640
        %v643 = vshrl.u32 %v267, 16
        %v645 = vrot.slane %v643, 4
        %v646 = vshll.u32 %v267, 16
        %v648 = vrot.slane %v646, 5
        %v649 = vor.u32 %v645, %v648
        %v650 = vrot.slane %v649, 4
        %v652 = vshll.u32 %v268, 16
        %v654 = vrot.slane %v652, 5
        %v655 = vsel %vm305, %v650, %v654
        %v656 = vshrl.u32 %v268, 16
        %v658 = vrot.slane %v656, 4
        %v659 = vor.u32 %v658, %v654
        %v660 = vrot.slane %v659, 4
        %v662 = vshll.u32 %v301, 16
        %v664 = vrot.slane %v662, 5
        %v665 = vsel %vm305, %v660, %v664
        %v667 = vshrl.u32 %v269, 16
        %v669 = vrot.slane %v667, 4
        %v670 = vshll.u32 %v269, 16
        %v672 = vrot.slane %v670, 5
        %v673 = vor.u32 %v669, %v672
        %v674 = vrot.slane %v673, 4
        %v676 = vshll.u32 %v270, 16
        %v678 = vrot.slane %v676, 5
        %v679 = vsel %vm305, %v674, %v678
        %v680 = vshrl.u32 %v270, 16
        %v682 = vrot.slane %v680, 4
        %v683 = vor.u32 %v682, %v678
        %v684 = vrot.slane %v683, 4
        %v686 = vshll.u32 %v302, 16
        %v688 = vrot.slane %v686, 5
        %v689 = vsel %vm305, %v684, %v688
        %s690 = scalar_lea.vmem %s1, 64
        %v691 = vld [vmem:[%s690] sm:$0xf]
        %v692 = vld [vmem:[%s690 + $0x4] sm:$0xf]
        %v693 = vld [vmem:[%s690 + $0x8] sm:$0xf]
        %v694 = vld [vmem:[%s690 + $0xc] sm:$0xf]
        %v695 = vld [vmem:[%s690 + $0x10] sm:$0xf]
        %v696 = vld [vmem:[%s690 + $0x14] sm:$0xf]
        %v697 = vld [vmem:[%s690 + $0x18] sm:$0xf]
        %v698 = vld [vmem:[%s690 + $0x1c] sm:$0xf]
        %v699 = vld [vmem:[%s690 + $0x20] sm:$0xf]
        %v700 = vld [vmem:[%s690 + $0x24] sm:$0xf]
        %v701 = vld [vmem:[%s690 + $0x28] sm:$0xf]
        %v702 = vld [vmem:[%s690 + $0x2c] sm:$0xf]
        %v703 = vld [vmem:[%s690 + $0x30] sm:$0xf]
        %v704 = vld [vmem:[%s690 + $0x34] sm:$0xf]
        %v705 = vld [vmem:[%s690 + $0x38] sm:$0xf]
        %v706 = vld [vmem:[%s690 + $0x3c] sm:$0xf]
        %v707 = vunpack.c.l.b16 %v319
        %v708 = vunpack.c.l.b16 %v329
        %v709 = vunpack.c.l.b16 %v343
        %v710 = vunpack.c.l.b16 %v353
        %v711 = vunpack.c.l.b16 %v367
        %v712 = vunpack.c.l.b16 %v377
        %v713 = vunpack.c.l.b16 %v391
        %v714 = vunpack.c.l.b16 %v401
        %v715 = vunpack.c.l.b16 %v415
        %v716 = vunpack.c.l.b16 %v425
        %v717 = vunpack.c.l.b16 %v439
        %v718 = vunpack.c.l.b16 %v449
        %v719 = vunpack.c.l.b16 %v463
        %v720 = vunpack.c.l.b16 %v473
        %v721 = vunpack.c.l.b16 %v487
        %v722 = vunpack.c.l.b16 %v497
        %v723 = vunpack.c.l.b16 %v511
        %v724 = vunpack.c.l.b16 %v521
        %v725 = vunpack.c.l.b16 %v535
        %v726 = vunpack.c.l.b16 %v545
        %v727 = vunpack.c.l.b16 %v559
        %v728 = vunpack.c.l.b16 %v569
        %v729 = vunpack.c.l.b16 %v583
        %v730 = vunpack.c.l.b16 %v593
        %v731 = vunpack.c.l.b16 %v607
        %v732 = vunpack.c.l.b16 %v617
        %v733 = vunpack.c.l.b16 %v631
        %v734 = vunpack.c.l.b16 %v641
        %v735 = vunpack.c.l.b16 %v655
        %v736 = vunpack.c.l.b16 %v665
        %v737 = vunpack.c.l.b16 %v679
        %v738 = vunpack.c.l.b16 %v689
        %v739 = vpack.c.b16 %v708, %v707
        %v740 = vpack.c.b16 %v710, %v709
        %v741 = vpack.c.b16 %v712, %v711
        %v742 = vpack.c.b16 %v714, %v713
        %v743 = vpack.c.b16 %v716, %v715
        %v744 = vpack.c.b16 %v718, %v717
        %v745 = vpack.c.b16 %v720, %v719
        %v746 = vpack.c.b16 %v722, %v721
        %v747 = vpack.c.b16 %v724, %v723
        %v748 = vpack.c.b16 %v726, %v725
        %v749 = vpack.c.b16 %v728, %v727
        %v750 = vpack.c.b16 %v730, %v729
        %v751 = vpack.c.b16 %v732, %v731
        %v752 = vpack.c.b16 %v734, %v733
        %v753 = vpack.c.b16 %v736, %v735
        %v754 = vpack.c.b16 %v738, %v737
        %v787 = vunpack.c.l.b16 %v691
        %v788 = vunpack.c.l.b16 %v692
        %v789 = vunpack.c.l.b16 %v693
        %v790 = vunpack.c.l.b16 %v694
        %v791 = vunpack.c.l.b16 %v695
        %v792 = vunpack.c.l.b16 %v696
        %v793 = vunpack.c.l.b16 %v697
        %v794 = vunpack.c.l.b16 %v698
        %v795 = vunpack.c.l.b16 %v699
        %v796 = vunpack.c.l.b16 %v700
        %v797 = vunpack.c.l.b16 %v701
        %v798 = vunpack.c.l.b16 %v702
        %v799 = vunpack.c.l.b16 %v703
        %v800 = vunpack.c.l.b16 %v704
        %v801 = vunpack.c.l.b16 %v705
        %v802 = vunpack.c.l.b16 %v706
        %v803 = vpack.c.b16 %v788, %v787
        %v804 = vpack.c.b16 %v790, %v789
        %v805 = vpack.c.b16 %v792, %v791
        %v806 = vpack.c.b16 %v794, %v793
        %v807 = vpack.c.b16 %v796, %v795
        %v808 = vpack.c.b16 %v798, %v797
        %v809 = vpack.c.b16 %v800, %v799
        %v810 = vpack.c.b16 %v802, %v801
        %819 = vmatprep.subr.bf16.mxu0 0
        %820 = vmatpush1.bf16.msra.mxu0 %v803
        %821 = vmatprep.subr.bf16.mxu0 0
        %822 = vmatpush1.bf16.msra.mxu0 %v804
        %823 = vmatprep.subr.bf16.mxu0 0
        %824 = vmatpush1.bf16.msra.mxu0 %v805
        %825 = vmatprep.subr.bf16.mxu0 0
        %826 = vmatpush1.bf16.msra.mxu0 %v806
        %827 = vmatprep.subr.bf16.mxu0 0
        %828 = vmatpush1.bf16.msra.mxu0 %v807
        %829 = vmatprep.subr.bf16.mxu0 0
        %830 = vmatpush1.bf16.msra.mxu0 %v808
        %831 = vmatprep.subr.bf16.mxu0 0
        %832 = vmatpush1.bf16.msra.mxu0 %v809
        %833 = vmatprep.subr.bf16.mxu0 0
        %834 = vmatpush1.bf16.msra.mxu0 %v810
        %835 = vmatprep.subr.bf16.mxu0 0
        %836 = vmatpush1.bf16.msra.mxu0 0
        %837 = vmatprep.subr.bf16.mxu0 0
        %838 = vmatpush1.bf16.msra.mxu0 0
        %839 = vmatprep.subr.bf16.mxu0 0
        %840 = vmatpush1.bf16.msra.mxu0 0
        %841 = vmatprep.subr.bf16.mxu0 0
        %842 = vmatpush1.bf16.msra.mxu0 0
        %843 = vmatprep.subr.bf16.mxu0 0
        %844 = vmatpush1.bf16.msra.mxu0 0
        %845 = vmatprep.subr.bf16.mxu0 0
        %846 = vmatpush1.bf16.msra.mxu0 0
        %847 = vmatprep.subr.bf16.mxu0 0
        %848 = vmatpush1.bf16.msra.mxu0 0
        %849 = vmatprep.subr.bf16.mxu0 0
        %850 = vmatpush1.bf16.msra.mxu0 0
        %851 = vmatprep.mubr.bf16.mxu0 0
        %852 = vmatmul.mubr.bf16.gmra.mrb[0].mxu0 %v739
        %v853 = vpop.f32.mrb[0].mxu0
        %v854 = vadd.f32 0.0, %v853
        %v855 = vpop.f32.mrb[0].mxu0
        %v856 = vpop.f32.mrb[0].mxu0
        %v857 = vadd.f32 0.0, %v856
        %v858 = vpop.f32.mrb[0].mxu0
        %859 = vmatprep.mubr.bf16.mxu0 0
        %860 = vmatmul.mubr.bf16.gmra.mrb[0].mxu0 %v740
        %v861 = vpop.f32.mrb[0].mxu0
        %v862 = vadd.f32 0.0, %v861
        %v863 = vpop.f32.mrb[0].mxu0
        %v864 = vpop.f32.mrb[0].mxu0
        %v865 = vadd.f32 0.0, %v864
        %v866 = vpop.f32.mrb[0].mxu0
        %867 = vmatprep.mubr.bf16.mxu0 0
        %868 = vmatmul.mubr.bf16.gmra.mrb[0].mxu0 %v741
        %v869 = vpop.f32.mrb[0].mxu0
        %v870 = vadd.f32 0.0, %v869
        %v871 = vpop.f32.mrb[0].mxu0
        %v872 = vpop.f32.mrb[0].mxu0
        %v873 = vadd.f32 0.0, %v872
        %v874 = vpop.f32.mrb[0].mxu0
        %875 = vmatprep.mubr.bf16.mxu0 0
        %876 = vmatmul.mubr.bf16.gmra.mrb[0].mxu0 %v742
        %v877 = vpop.f32.mrb[0].mxu0
        %v878 = vadd.f32 0.0, %v877
        %v879 = vpop.f32.mrb[0].mxu0
        %v880 = vpop.f32.mrb[0].mxu0
        %v881 = vadd.f32 0.0, %v880
        %v882 = vpop.f32.mrb[0].mxu0
        %883 = vmatprep.mubr.bf16.mxu0 0
        %884 = vmatmul.mubr.bf16.gmra.mrb[0].mxu0 %v743
        %v885 = vpop.f32.mrb[0].mxu0
        %v886 = vadd.f32 0.0, %v885
        %v887 = vpop.f32.mrb[0].mxu0
        %v888 = vpop.f32.mrb[0].mxu0
        %v889 = vadd.f32 0.0, %v888
        %v890 = vpop.f32.mrb[0].mxu0
        %891 = vmatprep.mubr.bf16.mxu0 0
        %892 = vmatmul.mubr.bf16.gmra.mrb[0].mxu0 %v744
        %v893 = vpop.f32.mrb[0].mxu0
        %v894 = vadd.f32 0.0, %v893
        %v895 = vpop.f32.mrb[0].mxu0
        %v896 = vpop.f32.mrb[0].mxu0
        %v897 = vadd.f32 0.0, %v896
        %v898 = vpop.f32.mrb[0].mxu0
        %899 = vmatprep.mubr.bf16.mxu0 0
        %900 = vmatmul.mubr.bf16.gmra.mrb[0].mxu0 %v745
        %v901 = vpop.f32.mrb[0].mxu0
        %v902 = vadd.f32 0.0, %v901
        %v903 = vpop.f32.mrb[0].mxu0
        %v904 = vpop.f32.mrb[0].mxu0
        %v905 = vadd.f32 0.0, %v904
        %v906 = vpop.f32.mrb[0].mxu0
        %907 = vmatprep.mubr.bf16.mxu0 0
        %908 = vmatmul.mubr.bf16.gmra.mrb[0].mxu0 %v746
        %v909 = vpop.f32.mrb[0].mxu0
        %v910 = vadd.f32 0.0, %v909
        %v911 = vpop.f32.mrb[0].mxu0
        %v912 = vpop.f32.mrb[0].mxu0
        %v913 = vadd.f32 0.0, %v912
        %v914 = vpop.f32.mrb[0].mxu0
        %915 = vmatprep.mubr.bf16.mxu0 0
        %916 = vmatmul.mubr.bf16.gmra.mrb[0].mxu0 %v747
        %v917 = vpop.f32.mrb[0].mxu0
        %v918 = vadd.f32 0.0, %v917
        %v919 = vpop.f32.mrb[0].mxu0
        %v920 = vpop.f32.mrb[0].mxu0
        %v921 = vadd.f32 0.0, %v920
        %v922 = vpop.f32.mrb[0].mxu0
        %923 = vmatprep.mubr.bf16.mxu0 0
        %924 = vmatmul.mubr.bf16.gmra.mrb[0].mxu0 %v748
        %v925 = vpop.f32.mrb[0].mxu0
        %v926 = vadd.f32 0.0, %v925
        %v927 = vpop.f32.mrb[0].mxu0
        %v928 = vpop.f32.mrb[0].mxu0
        %v929 = vadd.f32 0.0, %v928
        %v930 = vpop.f32.mrb[0].mxu0
        %931 = vmatprep.mubr.bf16.mxu0 0
        %932 = vmatmul.mubr.bf16.gmra.mrb[0].mxu0 %v749
        %v933 = vpop.f32.mrb[0].mxu0
        %v934 = vadd.f32 0.0, %v933
        %v935 = vpop.f32.mrb[0].mxu0
        %v936 = vpop.f32.mrb[0].mxu0
        %v937 = vadd.f32 0.0, %v936
        %v938 = vpop.f32.mrb[0].mxu0
        %939 = vmatprep.mubr.bf16.mxu0 0
        %940 = vmatmul.mubr.bf16.gmra.mrb[0].mxu0 %v750
        %v941 = vpop.f32.mrb[0].mxu0
        %v942 = vadd.f32 0.0, %v941
        %v943 = vpop.f32.mrb[0].mxu0
        %v944 = vpop.f32.mrb[0].mxu0
        %v945 = vadd.f32 0.0, %v944
        %v946 = vpop.f32.mrb[0].mxu0
        %947 = vmatprep.mubr.bf16.mxu0 0
        %948 = vmatmul.mubr.bf16.gmra.mrb[0].mxu0 %v751
        %v949 = vpop.f32.mrb[0].mxu0
        %v950 = vadd.f32 0.0, %v949
        %v951 = vpop.f32.mrb[0].mxu0
        %v952 = vpop.f32.mrb[0].mxu0
        %v953 = vadd.f32 0.0, %v952
        %v954 = vpop.f32.mrb[0].mxu0
        %955 = vmatprep.mubr.bf16.mxu0 0
        %956 = vmatmul.mubr.bf16.gmra.mrb[0].mxu0 %v752
        %v957 = vpop.f32.mrb[0].mxu0
        %v958 = vadd.f32 0.0, %v957
        %v959 = vpop.f32.mrb[0].mxu0
        %v960 = vpop.f32.mrb[0].mxu0
        %v961 = vadd.f32 0.0, %v960
        %v962 = vpop.f32.mrb[0].mxu0
        %963 = vmatprep.mubr.bf16.mxu0 0
        %964 = vmatmul.mubr.bf16.gmra.mrb[0].mxu0 %v753
        %v965 = vpop.f32.mrb[0].mxu0
        %v966 = vadd.f32 0.0, %v965
        %v967 = vpop.f32.mrb[0].mxu0
        %v968 = vpop.f32.mrb[0].mxu0
        %v969 = vadd.f32 0.0, %v968
        %v970 = vpop.f32.mrb[0].mxu0
        %971 = vmatprep.mubr.bf16.mxu0 0
        %972 = vmatmul.mubr.bf16.gmra.mrb[0].mxu0 %v754
        %v973 = vpop.f32.mrb[0].mxu0
        %v974 = vadd.f32 0.0, %v973
        %v975 = vpop.f32.mrb[0].mxu0
        %v976 = vpop.f32.mrb[0].mxu0
        %v977 = vadd.f32 0.0, %v976
        %v978 = vpop.f32.mrb[0].mxu0
        %979 = vdwg.mxu0
        %v1012 = vunpack.c.l.b16 %v239
        %v1013 = vunpack.c.l.b16 %v240
        %v1014 = vunpack.c.l.b16 %v241
        %v1015 = vunpack.c.l.b16 %v242
        %v1016 = vunpack.c.l.b16 %v243
        %v1017 = vunpack.c.l.b16 %v244
        %v1018 = vunpack.c.l.b16 %v245
        %v1019 = vunpack.c.l.b16 %v246
        %v1020 = vunpack.c.l.b16 %v247
        %v1021 = vunpack.c.l.b16 %v248
        %v1022 = vunpack.c.l.b16 %v249
        %v1023 = vunpack.c.l.b16 %v250
        %v1024 = vunpack.c.l.b16 %v251
        %v1025 = vunpack.c.l.b16 %v252
        %v1026 = vunpack.c.l.b16 %v253
        %v1027 = vunpack.c.l.b16 %v254
        %v1028 = vunpack.c.l.b16 %v255
        %v1029 = vunpack.c.l.b16 %v256
        %v1030 = vunpack.c.l.b16 %v257
        %v1031 = vunpack.c.l.b16 %v258
        %v1032 = vunpack.c.l.b16 %v259
        %v1033 = vunpack.c.l.b16 %v260
        %v1034 = vunpack.c.l.b16 %v261
        %v1035 = vunpack.c.l.b16 %v262
        %v1036 = vunpack.c.l.b16 %v263
        %v1037 = vunpack.c.l.b16 %v264
        %v1038 = vunpack.c.l.b16 %v265
        %v1039 = vunpack.c.l.b16 %v266
        %v1040 = vunpack.c.l.b16 %v267
        %v1041 = vunpack.c.l.b16 %v268
        %v1042 = vunpack.c.l.b16 %v269
        %v1043 = vunpack.c.l.b16 %v270
        %v1044 = vpack.c.b16 %v1013, %v1012
        %v1045 = vpack.c.b16 %v1015, %v1014
        %v1046 = vpack.c.b16 %v1017, %v1016
        %v1047 = vpack.c.b16 %v1019, %v1018
        %v1048 = vpack.c.b16 %v1021, %v1020
        %v1049 = vpack.c.b16 %v1023, %v1022
        %v1050 = vpack.c.b16 %v1025, %v1024
        %v1051 = vpack.c.b16 %v1027, %v1026
        %v1052 = vpack.c.b16 %v1029, %v1028
        %v1053 = vpack.c.b16 %v1031, %v1030
        %v1054 = vpack.c.b16 %v1033, %v1032
        %v1055 = vpack.c.b16 %v1035, %v1034
        %v1056 = vpack.c.b16 %v1037, %v1036
        %v1057 = vpack.c.b16 %v1039, %v1038
        %v1058 = vpack.c.b16 %v1041, %v1040
        %v1059 = vpack.c.b16 %v1043, %v1042
        %v1092 = vunpack.c.l.b16 %v271
        %v1093 = vunpack.c.l.b16 %v272
        %v1094 = vunpack.c.l.b16 %v273
        %v1095 = vunpack.c.l.b16 %v274
        %v1096 = vunpack.c.l.b16 %v275
        %v1097 = vunpack.c.l.b16 %v276
        %v1098 = vunpack.c.l.b16 %v277
        %v1099 = vunpack.c.l.b16 %v278
        %v1100 = vunpack.c.l.b16 %v279
        %v1101 = vunpack.c.l.b16 %v280
        %v1102 = vunpack.c.l.b16 %v281
        %v1103 = vunpack.c.l.b16 %v282
        %v1104 = vunpack.c.l.b16 %v283
        %v1105 = vunpack.c.l.b16 %v284
        %v1106 = vunpack.c.l.b16 %v285
        %v1107 = vunpack.c.l.b16 %v286
        %v1108 = vpack.c.b16 %v1093, %v1092
        %v1109 = vpack.c.b16 %v1095, %v1094
        %v1110 = vpack.c.b16 %v1097, %v1096
        %v1111 = vpack.c.b16 %v1099, %v1098
        %v1112 = vpack.c.b16 %v1101, %v1100
        %v1113 = vpack.c.b16 %v1103, %v1102
        %v1114 = vpack.c.b16 %v1105, %v1104
        %v1115 = vpack.c.b16 %v1107, %v1106
        %1124 = vmatprep.subr.bf16.mxu0 0
        %1125 = vmatpush1.bf16.msra.mxu0 %v1108
        %1126 = vmatprep.subr.bf16.mxu0 0
        %1127 = vmatpush1.bf16.msra.mxu0 %v1109
        %1128 = vmatprep.subr.bf16.mxu0 0
        %1129 = vmatpush1.bf16.msra.mxu0 %v1110
        %1130 = vmatprep.subr.bf16.mxu0 0
        %1131 = vmatpush1.bf16.msra.mxu0 %v1111
        %1132 = vmatprep.subr.bf16.mxu0 0
        %1133 = vmatpush1.bf16.msra.mxu0 %v1112
        %1134 = vmatprep.subr.bf16.mxu0 0
        %1135 = vmatpush1.bf16.msra.mxu0 %v1113
        %1136 = vmatprep.subr.bf16.mxu0 0
        %1137 = vmatpush1.bf16.msra.mxu0 %v1114
        %1138 = vmatprep.subr.bf16.mxu0 0
        %1139 = vmatpush1.bf16.msra.mxu0 %v1115
        %1140 = vmatprep.subr.bf16.mxu0 0
        %1141 = vmatpush1.bf16.msra.mxu0 0
        %1142 = vmatprep.subr.bf16.mxu0 0
        %1143 = vmatpush1.bf16.msra.mxu0 0
        %1144 = vmatprep.subr.bf16.mxu0 0
        %1145 = vmatpush1.bf16.msra.mxu0 0
        %1146 = vmatprep.subr.bf16.mxu0 0
        %1147 = vmatpush1.bf16.msra.mxu0 0
        %1148 = vmatprep.subr.bf16.mxu0 0
        %1149 = vmatpush1.bf16.msra.mxu0 0
        %1150 = vmatprep.subr.bf16.mxu0 0
        %1151 = vmatpush1.bf16.msra.mxu0 0
        %1152 = vmatprep.subr.bf16.mxu0 0
        %1153 = vmatpush1.bf16.msra.mxu0 0
        %1154 = vmatprep.subr.bf16.mxu0 0
        %1155 = vmatpush1.bf16.msra.mxu0 0
        %1156 = vmatprep.mubr.bf16.mxu0 0
        %1157 = vmatmul.mubr.bf16.gmra.mrb[0].mxu0 %v1044
        %v1158 = vpop.f32.mrb[0].mxu0
        %v1159 = vadd.f32 %v854, %v1158
        %v1160 = vpop.f32.mrb[0].mxu0
        %v1161 = vpop.f32.mrb[0].mxu0
        %v1162 = vadd.f32 %v857, %v1161
        %v1163 = vpop.f32.mrb[0].mxu0
        %1164 = vmatprep.mubr.bf16.mxu0 0
        %1165 = vmatmul.mubr.bf16.gmra.mrb[0].mxu0 %v1045
        %v1166 = vpop.f32.mrb[0].mxu0
        %v1167 = vadd.f32 %v862, %v1166
        %v1168 = vpop.f32.mrb[0].mxu0
        %v1169 = vpop.f32.mrb[0].mxu0
        %v1170 = vadd.f32 %v865, %v1169
        %v1171 = vpop.f32.mrb[0].mxu0
        %1172 = vmatprep.mubr.bf16.mxu0 0
        %1173 = vmatmul.mubr.bf16.gmra.mrb[0].mxu0 %v1046
        %v1174 = vpop.f32.mrb[0].mxu0
        %v1175 = vadd.f32 %v870, %v1174
        %v1176 = vpop.f32.mrb[0].mxu0
        %v1177 = vpop.f32.mrb[0].mxu0
        %v1178 = vadd.f32 %v873, %v1177
        %v1179 = vpop.f32.mrb[0].mxu0
        %1180 = vmatprep.mubr.bf16.mxu0 0
        %1181 = vmatmul.mubr.bf16.gmra.mrb[0].mxu0 %v1047
        %v1182 = vpop.f32.mrb[0].mxu0
        %v1183 = vadd.f32 %v878, %v1182
        %v1184 = vpop.f32.mrb[0].mxu0
        %v1185 = vpop.f32.mrb[0].mxu0
        %v1186 = vadd.f32 %v881, %v1185
        %v1187 = vpop.f32.mrb[0].mxu0
        %1188 = vmatprep.mubr.bf16.mxu0 0
        %1189 = vmatmul.mubr.bf16.gmra.mrb[0].mxu0 %v1048
        %v1190 = vpop.f32.mrb[0].mxu0
        %v1191 = vadd.f32 %v886, %v1190
        %v1192 = vpop.f32.mrb[0].mxu0
        %v1193 = vpop.f32.mrb[0].mxu0
        %v1194 = vadd.f32 %v889, %v1193
        %v1195 = vpop.f32.mrb[0].mxu0
        %1196 = vmatprep.mubr.bf16.mxu0 0
        %1197 = vmatmul.mubr.bf16.gmra.mrb[0].mxu0 %v1049
        %v1198 = vpop.f32.mrb[0].mxu0
        %v1199 = vadd.f32 %v894, %v1198
        %v1200 = vpop.f32.mrb[0].mxu0
        %v1201 = vpop.f32.mrb[0].mxu0
        %v1202 = vadd.f32 %v897, %v1201
        %v1203 = vpop.f32.mrb[0].mxu0
        %1204 = vmatprep.mubr.bf16.mxu0 0
        %1205 = vmatmul.mubr.bf16.gmra.mrb[0].mxu0 %v1050
        %v1206 = vpop.f32.mrb[0].mxu0
        %v1207 = vadd.f32 %v902, %v1206
        %v1208 = vpop.f32.mrb[0].mxu0
        %v1209 = vpop.f32.mrb[0].mxu0
        %v1210 = vadd.f32 %v905, %v1209
        %v1211 = vpop.f32.mrb[0].mxu0
        %1212 = vmatprep.mubr.bf16.mxu0 0
        %1213 = vmatmul.mubr.bf16.gmra.mrb[0].mxu0 %v1051
        %v1214 = vpop.f32.mrb[0].mxu0
        %v1215 = vadd.f32 %v910, %v1214
        %v1216 = vpop.f32.mrb[0].mxu0
        %v1217 = vpop.f32.mrb[0].mxu0
        %v1218 = vadd.f32 %v913, %v1217
        %v1219 = vpop.f32.mrb[0].mxu0
        %1220 = vmatprep.mubr.bf16.mxu0 0
        %1221 = vmatmul.mubr.bf16.gmra.mrb[0].mxu0 %v1052
        %v1222 = vpop.f32.mrb[0].mxu0
        %v1223 = vadd.f32 %v918, %v1222
        %v1224 = vpop.f32.mrb[0].mxu0
        %v1225 = vpop.f32.mrb[0].mxu0
        %v1226 = vadd.f32 %v921, %v1225
        %v1227 = vpop.f32.mrb[0].mxu0
        %1228 = vmatprep.mubr.bf16.mxu0 0
        %1229 = vmatmul.mubr.bf16.gmra.mrb[0].mxu0 %v1053
        %v1230 = vpop.f32.mrb[0].mxu0
        %v1231 = vadd.f32 %v926, %v1230
        %v1232 = vpop.f32.mrb[0].mxu0
        %v1233 = vpop.f32.mrb[0].mxu0
        %v1234 = vadd.f32 %v929, %v1233
        %v1235 = vpop.f32.mrb[0].mxu0
        %1236 = vmatprep.mubr.bf16.mxu0 0
        %1237 = vmatmul.mubr.bf16.gmra.mrb[0].mxu0 %v1054
        %v1238 = vpop.f32.mrb[0].mxu0
        %v1239 = vadd.f32 %v934, %v1238
        %v1240 = vpop.f32.mrb[0].mxu0
        %v1241 = vpop.f32.mrb[0].mxu0
        %v1242 = vadd.f32 %v937, %v1241
        %v1243 = vpop.f32.mrb[0].mxu0
        %1244 = vmatprep.mubr.bf16.mxu0 0
        %1245 = vmatmul.mubr.bf16.gmra.mrb[0].mxu0 %v1055
        %v1246 = vpop.f32.mrb[0].mxu0
        %v1247 = vadd.f32 %v942, %v1246
        %v1248 = vpop.f32.mrb[0].mxu0
        %v1249 = vpop.f32.mrb[0].mxu0
        %v1250 = vadd.f32 %v945, %v1249
        %v1251 = vpop.f32.mrb[0].mxu0
        %1252 = vmatprep.mubr.bf16.mxu0 0
        %1253 = vmatmul.mubr.bf16.gmra.mrb[0].mxu0 %v1056
        %v1254 = vpop.f32.mrb[0].mxu0
        %v1255 = vadd.f32 %v950, %v1254
        %v1256 = vpop.f32.mrb[0].mxu0
        %v1257 = vpop.f32.mrb[0].mxu0
        %v1258 = vadd.f32 %v953, %v1257
        %v1259 = vpop.f32.mrb[0].mxu0
        %1260 = vmatprep.mubr.bf16.mxu0 0
        %1261 = vmatmul.mubr.bf16.gmra.mrb[0].mxu0 %v1057
        %v1262 = vpop.f32.mrb[0].mxu0
        %v1263 = vadd.f32 %v958, %v1262
        %v1264 = vpop.f32.mrb[0].mxu0
        %v1265 = vpop.f32.mrb[0].mxu0
        %v1266 = vadd.f32 %v961, %v1265
        %v1267 = vpop.f32.mrb[0].mxu0
        %1268 = vmatprep.mubr.bf16.mxu0 0
        %1269 = vmatmul.mubr.bf16.gmra.mrb[0].mxu0 %v1058
        %v1270 = vpop.f32.mrb[0].mxu0
        %v1271 = vadd.f32 %v966, %v1270
        %v1272 = vpop.f32.mrb[0].mxu0
        %v1273 = vpop.f32.mrb[0].mxu0
        %v1274 = vadd.f32 %v969, %v1273
        %v1275 = vpop.f32.mrb[0].mxu0
        %1276 = vmatprep.mubr.bf16.mxu0 0
        %1277 = vmatmul.mubr.bf16.gmra.mrb[0].mxu0 %v1059
        %v1278 = vpop.f32.mrb[0].mxu0
        %v1279 = vadd.f32 %v974, %v1278
        %v1280 = vpop.f32.mrb[0].mxu0
        %v1281 = vpop.f32.mrb[0].mxu0
        %v1282 = vadd.f32 %v977, %v1281
        %v1283 = vpop.f32.mrb[0].mxu0
        %1284 = vdwg.mxu0
        %v1285 = vld [vmem:[%s237] sm:$0xe]
        %v1286 = vld [vmem:[%s237 + $0xc] sm:$0xe]
        %v1287 = vld [vmem:[%s237 + $0x18] sm:$0xe]
        %v1288 = vld [vmem:[%s237 + $0x24] sm:$0xe]
        %v1289 = vld [vmem:[%s237 + $0x30] sm:$0xe]
        %v1290 = vld [vmem:[%s237 + $0x3c] sm:$0xe]
        %v1291 = vld [vmem:[%s237 + $0x48] sm:$0xe]
        %v1292 = vld [vmem:[%s237 + $0x54] sm:$0xe]
        %v1293 = vld [vmem:[%s237 + $0x60] sm:$0xe]
        %v1294 = vld [vmem:[%s237 + $0x6c] sm:$0xe]
        %v1295 = vld [vmem:[%s237 + $0x78] sm:$0xe]
        %v1296 = vld [vmem:[%s237 + $0x84] sm:$0xe]
        %v1297 = vld [vmem:[%s237 + $0x90] sm:$0xe]
        %v1298 = vld [vmem:[%s237 + $0x9c] sm:$0xe]
        %v1299 = vld [vmem:[%s237 + $0xa8] sm:$0xe]
        %v1300 = vld [vmem:[%s237 + $0xb4] sm:$0xe]
        %vm1333 = vcmask 1042432
        %vm1334 = vcmask 1046532
        %vm1335 = vmor %vm1333, %vm1334
        %v1336 = vrot.slane %v1285, 5
        %v1337 = vrot.slane %v1336, 4
        %v1338 = vrot.slane %v240, 5
        %v1339 = vsel %vm1335, %v1337, %v1338
        %v1340 = vrot.slane %v1338, 4
        %v1341 = vrot.slane %v287, 5
        %v1342 = vsel %vm1335, %v1340, %v1341
        %v1343 = vrot.slane %v1286, 5
        %v1344 = vrot.slane %v1343, 4
        %v1345 = vrot.slane %v242, 5
        %v1346 = vsel %vm1335, %v1344, %v1345
        %v1347 = vrot.slane %v1345, 4
        %v1348 = vrot.slane %v288, 5
        %v1349 = vsel %vm1335, %v1347, %v1348
        %v1350 = vrot.slane %v1287, 5
        %v1351 = vrot.slane %v1350, 4
        %v1352 = vrot.slane %v244, 5
        %v1353 = vsel %vm1335, %v1351, %v1352
        %v1354 = vrot.slane %v1352, 4
        %v1355 = vrot.slane %v289, 5
        %v1356 = vsel %vm1335, %v1354, %v1355
        %v1357 = vrot.slane %v1288, 5
        %v1358 = vrot.slane %v1357, 4
        %v1359 = vrot.slane %v246, 5
        %v1360 = vsel %vm1335, %v1358, %v1359
        %v1361 = vrot.slane %v1359, 4
        %v1362 = vrot.slane %v290, 5
        %v1363 = vsel %vm1335, %v1361, %v1362
        %v1364 = vrot.slane %v1289, 5
        %v1365 = vrot.slane %v1364, 4
        %v1366 = vrot.slane %v248, 5
        %v1367 = vsel %vm1335, %v1365, %v1366
        %v1368 = vrot.slane %v1366, 4
        %v1369 = vrot.slane %v291, 5
        %v1370 = vsel %vm1335, %v1368, %v1369
        %v1371 = vrot.slane %v1290, 5
        %v1372 = vrot.slane %v1371, 4
        %v1373 = vrot.slane %v250, 5
        %v1374 = vsel %vm1335, %v1372, %v1373
        %v1375 = vrot.slane %v1373, 4
        %v1376 = vrot.slane %v292, 5
        %v1377 = vsel %vm1335, %v1375, %v1376
        %v1378 = vrot.slane %v1291, 5
        %v1379 = vrot.slane %v1378, 4
        %v1380 = vrot.slane %v252, 5
        %v1381 = vsel %vm1335, %v1379, %v1380
        %v1382 = vrot.slane %v1380, 4
        %v1383 = vrot.slane %v293, 5
        %v1384 = vsel %vm1335, %v1382, %v1383
        %v1385 = vrot.slane %v1292, 5
        %v1386 = vrot.slane %v1385, 4
        %v1387 = vrot.slane %v254, 5
        %v1388 = vsel %vm1335, %v1386, %v1387
        %v1389 = vrot.slane %v1387, 4
        %v1390 = vrot.slane %v294, 5
        %v1391 = vsel %vm1335, %v1389, %v1390
        %v1392 = vrot.slane %v1293, 5
        %v1393 = vrot.slane %v1392, 4
        %v1394 = vrot.slane %v256, 5
        %v1395 = vsel %vm1335, %v1393, %v1394
        %v1396 = vrot.slane %v1394, 4
        %v1397 = vrot.slane %v295, 5
        %v1398 = vsel %vm1335, %v1396, %v1397
        %v1399 = vrot.slane %v1294, 5
        %v1400 = vrot.slane %v1399, 4
        %v1401 = vrot.slane %v258, 5
        %v1402 = vsel %vm1335, %v1400, %v1401
        %v1403 = vrot.slane %v1401, 4
        %v1404 = vrot.slane %v296, 5
        %v1405 = vsel %vm1335, %v1403, %v1404
        %v1406 = vrot.slane %v1295, 5
        %v1407 = vrot.slane %v1406, 4
        %v1408 = vrot.slane %v260, 5
        %v1409 = vsel %vm1335, %v1407, %v1408
        %v1410 = vrot.slane %v1408, 4
        %v1411 = vrot.slane %v297, 5
        %v1412 = vsel %vm1335, %v1410, %v1411
        %v1413 = vrot.slane %v1296, 5
        %v1414 = vrot.slane %v1413, 4
        %v1415 = vrot.slane %v262, 5
        %v1416 = vsel %vm1335, %v1414, %v1415
        %v1417 = vrot.slane %v1415, 4
        %v1418 = vrot.slane %v298, 5
        %v1419 = vsel %vm1335, %v1417, %v1418
        %v1420 = vrot.slane %v1297, 5
        %v1421 = vrot.slane %v1420, 4
        %v1422 = vrot.slane %v264, 5
        %v1423 = vsel %vm1335, %v1421, %v1422
        %v1424 = vrot.slane %v1422, 4
        %v1425 = vrot.slane %v299, 5
        %v1426 = vsel %vm1335, %v1424, %v1425
        %v1427 = vrot.slane %v1298, 5
        %v1428 = vrot.slane %v1427, 4
        %v1429 = vrot.slane %v266, 5
        %v1430 = vsel %vm1335, %v1428, %v1429
        %v1431 = vrot.slane %v1429, 4
        %v1432 = vrot.slane %v300, 5
        %v1433 = vsel %vm1335, %v1431, %v1432
        %v1434 = vrot.slane %v1299, 5
        %v1435 = vrot.slane %v1434, 4
        %v1436 = vrot.slane %v268, 5
        %v1437 = vsel %vm1335, %v1435, %v1436
        %v1438 = vrot.slane %v1436, 4
        %v1439 = vrot.slane %v301, 5
        %v1440 = vsel %vm1335, %v1438, %v1439
        %v1441 = vrot.slane %v1300, 5
        %v1442 = vrot.slane %v1441, 4
        %v1443 = vrot.slane %v270, 5
        %v1444 = vsel %vm1335, %v1442, %v1443
        %v1445 = vrot.slane %v1443, 4
        %v1446 = vrot.slane %v302, 5
        %v1447 = vsel %vm1335, %v1445, %v1446
        %s1448 = scalar_lea.vmem %s1, 128
        %v1449 = vld [vmem:[%s1448] sm:$0xf]
        %v1450 = vld [vmem:[%s1448 + $0x4] sm:$0xf]
        %v1451 = vld [vmem:[%s1448 + $0x8] sm:$0xf]
        %v1452 = vld [vmem:[%s1448 + $0xc] sm:$0xf]
        %v1453 = vld [vmem:[%s1448 + $0x10] sm:$0xf]
        %v1454 = vld [vmem:[%s1448 + $0x14] sm:$0xf]
        %v1455 = vld [vmem:[%s1448 + $0x18] sm:$0xf]
        %v1456 = vld [vmem:[%s1448 + $0x1c] sm:$0xf]
        %v1457 = vld [vmem:[%s1448 + $0x20] sm:$0xf]
        %v1458 = vld [vmem:[%s1448 + $0x24] sm:$0xf]
        %v1459 = vld [vmem:[%s1448 + $0x28] sm:$0xf]
        %v1460 = vld [vmem:[%s1448 + $0x2c] sm:$0xf]
        %v1461 = vld [vmem:[%s1448 + $0x30] sm:$0xf]
        %v1462 = vld [vmem:[%s1448 + $0x34] sm:$0xf]
        %v1463 = vld [vmem:[%s1448 + $0x38] sm:$0xf]
        %v1464 = vld [vmem:[%s1448 + $0x3c] sm:$0xf]
        %v1465 = vunpack.c.l.b16 %v1339
        %v1466 = vunpack.c.l.b16 %v1342
        %v1467 = vunpack.c.l.b16 %v1346
        %v1468 = vunpack.c.l.b16 %v1349
        %v1469 = vunpack.c.l.b16 %v1353
        %v1470 = vunpack.c.l.b16 %v1356
        %v1471 = vunpack.c.l.b16 %v1360
        %v1472 = vunpack.c.l.b16 %v1363
        %v1473 = vunpack.c.l.b16 %v1367
        %v1474 = vunpack.c.l.b16 %v1370
        %v1475 = vunpack.c.l.b16 %v1374
        %v1476 = vunpack.c.l.b16 %v1377
        %v1477 = vunpack.c.l.b16 %v1381
        %v1478 = vunpack.c.l.b16 %v1384
        %v1479 = vunpack.c.l.b16 %v1388
        %v1480 = vunpack.c.l.b16 %v1391
        %v1481 = vunpack.c.l.b16 %v1395
        %v1482 = vunpack.c.l.b16 %v1398
        %v1483 = vunpack.c.l.b16 %v1402
        %v1484 = vunpack.c.l.b16 %v1405
        %v1485 = vunpack.c.l.b16 %v1409
        %v1486 = vunpack.c.l.b16 %v1412
        %v1487 = vunpack.c.l.b16 %v1416
        %v1488 = vunpack.c.l.b16 %v1419
        %v1489 = vunpack.c.l.b16 %v1423
        %v1490 = vunpack.c.l.b16 %v1426
        %v1491 = vunpack.c.l.b16 %v1430
        %v1492 = vunpack.c.l.b16 %v1433
        %v1493 = vunpack.c.l.b16 %v1437
        %v1494 = vunpack.c.l.b16 %v1440
        %v1495 = vunpack.c.l.b16 %v1444
        %v1496 = vunpack.c.l.b16 %v1447
        %v1497 = vpack.c.b16 %v1466, %v1465
        %v1498 = vpack.c.b16 %v1468, %v1467
        %v1499 = vpack.c.b16 %v1470, %v1469
        %v1500 = vpack.c.b16 %v1472, %v1471
        %v1501 = vpack.c.b16 %v1474, %v1473
        %v1502 = vpack.c.b16 %v1476, %v1475
        %v1503 = vpack.c.b16 %v1478, %v1477
        %v1504 = vpack.c.b16 %v1480, %v1479
        %v1505 = vpack.c.b16 %v1482, %v1481
        %v1506 = vpack.c.b16 %v1484, %v1483
        %v1507 = vpack.c.b16 %v1486, %v1485
        %v1508 = vpack.c.b16 %v1488, %v1487
        %v1509 = vpack.c.b16 %v1490, %v1489
        %v1510 = vpack.c.b16 %v1492, %v1491
        %v1511 = vpack.c.b16 %v1494, %v1493
        %v1512 = vpack.c.b16 %v1496, %v1495
        %v1545 = vunpack.c.l.b16 %v1449
        %v1546 = vunpack.c.l.b16 %v1450
        %v1547 = vunpack.c.l.b16 %v1451
        %v1548 = vunpack.c.l.b16 %v1452
        %v1549 = vunpack.c.l.b16 %v1453
        %v1550 = vunpack.c.l.b16 %v1454
        %v1551 = vunpack.c.l.b16 %v1455
        %v1552 = vunpack.c.l.b16 %v1456
        %v1553 = vunpack.c.l.b16 %v1457
        %v1554 = vunpack.c.l.b16 %v1458
        %v1555 = vunpack.c.l.b16 %v1459
        %v1556 = vunpack.c.l.b16 %v1460
        %v1557 = vunpack.c.l.b16 %v1461
        %v1558 = vunpack.c.l.b16 %v1462
        %v1559 = vunpack.c.l.b16 %v1463
        %v1560 = vunpack.c.l.b16 %v1464
        %v1561 = vpack.c.b16 %v1546, %v1545
        %v1562 = vpack.c.b16 %v1548, %v1547
        %v1563 = vpack.c.b16 %v1550, %v1549
        %v1564 = vpack.c.b16 %v1552, %v1551
        %v1565 = vpack.c.b16 %v1554, %v1553
        %v1566 = vpack.c.b16 %v1556, %v1555
        %v1567 = vpack.c.b16 %v1558, %v1557
        %v1568 = vpack.c.b16 %v1560, %v1559
        %1577 = vmatprep.subr.bf16.mxu0 0
        %1578 = vmatpush1.bf16.msra.mxu0 %v1561
        %1579 = vmatprep.subr.bf16.mxu0 0
        %1580 = vmatpush1.bf16.msra.mxu0 %v1562
        %1581 = vmatprep.subr.bf16.mxu0 0
        %1582 = vmatpush1.bf16.msra.mxu0 %v1563
        %1583 = vmatprep.subr.bf16.mxu0 0
        %1584 = vmatpush1.bf16.msra.mxu0 %v1564
        %1585 = vmatprep.subr.bf16.mxu0 0
        %1586 = vmatpush1.bf16.msra.mxu0 %v1565
        %1587 = vmatprep.subr.bf16.mxu0 0
        %1588 = vmatpush1.bf16.msra.mxu0 %v1566
        %1589 = vmatprep.subr.bf16.mxu0 0
        %1590 = vmatpush1.bf16.msra.mxu0 %v1567
        %1591 = vmatprep.subr.bf16.mxu0 0
        %1592 = vmatpush1.bf16.msra.mxu0 %v1568
        %1593 = vmatprep.subr.bf16.mxu0 0
        %1594 = vmatpush1.bf16.msra.mxu0 0
        %1595 = vmatprep.subr.bf16.mxu0 0
        %1596 = vmatpush1.bf16.msra.mxu0 0
        %1597 = vmatprep.subr.bf16.mxu0 0
        %1598 = vmatpush1.bf16.msra.mxu0 0
        %1599 = vmatprep.subr.bf16.mxu0 0
        %1600 = vmatpush1.bf16.msra.mxu0 0
        %1601 = vmatprep.subr.bf16.mxu0 0
        %1602 = vmatpush1.bf16.msra.mxu0 0
        %1603 = vmatprep.subr.bf16.mxu0 0
        %1604 = vmatpush1.bf16.msra.mxu0 0
        %1605 = vmatprep.subr.bf16.mxu0 0
        %1606 = vmatpush1.bf16.msra.mxu0 0
        %1607 = vmatprep.subr.bf16.mxu0 0
        %1608 = vmatpush1.bf16.msra.mxu0 0
        %1609 = vmatprep.mubr.bf16.mxu0 0
        %1610 = vmatmul.mubr.bf16.gmra.mrb[0].mxu0 %v1497
        %v1611 = vpop.f32.mrb[0].mxu0
        %v1612 = vadd.f32 0.0, %v1611
        %v1613 = vpop.f32.mrb[0].mxu0
        %v1614 = vpop.f32.mrb[0].mxu0
        %v1615 = vadd.f32 0.0, %v1614
        %v1616 = vpop.f32.mrb[0].mxu0
        %1617 = vmatprep.mubr.bf16.mxu0 0
        %1618 = vmatmul.mubr.bf16.gmra.mrb[0].mxu0 %v1498
        %v1619 = vpop.f32.mrb[0].mxu0
        %v1620 = vadd.f32 0.0, %v1619
        %v1621 = vpop.f32.mrb[0].mxu0
        %v1622 = vpop.f32.mrb[0].mxu0
        %v1623 = vadd.f32 0.0, %v1622
        %v1624 = vpop.f32.mrb[0].mxu0
        %1625 = vmatprep.mubr.bf16.mxu0 0
        %1626 = vmatmul.mubr.bf16.gmra.mrb[0].mxu0 %v1499
        %v1627 = vpop.f32.mrb[0].mxu0
        %v1628 = vadd.f32 0.0, %v1627
        %v1629 = vpop.f32.mrb[0].mxu0
        %v1630 = vpop.f32.mrb[0].mxu0
        %v1631 = vadd.f32 0.0, %v1630
        %v1632 = vpop.f32.mrb[0].mxu0
        %1633 = vmatprep.mubr.bf16.mxu0 0
        %1634 = vmatmul.mubr.bf16.gmra.mrb[0].mxu0 %v1500
        %v1635 = vpop.f32.mrb[0].mxu0
        %v1636 = vadd.f32 0.0, %v1635
        %v1637 = vpop.f32.mrb[0].mxu0
        %v1638 = vpop.f32.mrb[0].mxu0
        %v1639 = vadd.f32 0.0, %v1638
        %v1640 = vpop.f32.mrb[0].mxu0
        %1641 = vmatprep.mubr.bf16.mxu0 0
        %1642 = vmatmul.mubr.bf16.gmra.mrb[0].mxu0 %v1501
        %v1643 = vpop.f32.mrb[0].mxu0
        %v1644 = vadd.f32 0.0, %v1643
        %v1645 = vpop.f32.mrb[0].mxu0
        %v1646 = vpop.f32.mrb[0].mxu0
        %v1647 = vadd.f32 0.0, %v1646
        %v1648 = vpop.f32.mrb[0].mxu0
        %1649 = vmatprep.mubr.bf16.mxu0 0
        %1650 = vmatmul.mubr.bf16.gmra.mrb[0].mxu0 %v1502
        %v1651 = vpop.f32.mrb[0].mxu0
        %v1652 = vadd.f32 0.0, %v1651
        %v1653 = vpop.f32.mrb[0].mxu0
        %v1654 = vpop.f32.mrb[0].mxu0
        %v1655 = vadd.f32 0.0, %v1654
        %v1656 = vpop.f32.mrb[0].mxu0
        %1657 = vmatprep.mubr.bf16.mxu0 0
        %1658 = vmatmul.mubr.bf16.gmra.mrb[0].mxu0 %v1503
        %v1659 = vpop.f32.mrb[0].mxu0
        %v1660 = vadd.f32 0.0, %v1659
        %v1661 = vpop.f32.mrb[0].mxu0
        %v1662 = vpop.f32.mrb[0].mxu0
        %v1663 = vadd.f32 0.0, %v1662
        %v1664 = vpop.f32.mrb[0].mxu0
        %1665 = vmatprep.mubr.bf16.mxu0 0
        %1666 = vmatmul.mubr.bf16.gmra.mrb[0].mxu0 %v1504
        %v1667 = vpop.f32.mrb[0].mxu0
        %v1668 = vadd.f32 0.0, %v1667
        %v1669 = vpop.f32.mrb[0].mxu0
        %v1670 = vpop.f32.mrb[0].mxu0
        %v1671 = vadd.f32 0.0, %v1670
        %v1672 = vpop.f32.mrb[0].mxu0
        %1673 = vmatprep.mubr.bf16.mxu0 0
        %1674 = vmatmul.mubr.bf16.gmra.mrb[0].mxu0 %v1505
        %v1675 = vpop.f32.mrb[0].mxu0
        %v1676 = vadd.f32 0.0, %v1675
        %v1677 = vpop.f32.mrb[0].mxu0
        %v1678 = vpop.f32.mrb[0].mxu0
        %v1679 = vadd.f32 0.0, %v1678
        %v1680 = vpop.f32.mrb[0].mxu0
        %1681 = vmatprep.mubr.bf16.mxu0 0
        %1682 = vmatmul.mubr.bf16.gmra.mrb[0].mxu0 %v1506
        %v1683 = vpop.f32.mrb[0].mxu0
        %v1684 = vadd.f32 0.0, %v1683
        %v1685 = vpop.f32.mrb[0].mxu0
        %v1686 = vpop.f32.mrb[0].mxu0
        %v1687 = vadd.f32 0.0, %v1686
        %v1688 = vpop.f32.mrb[0].mxu0
        %1689 = vmatprep.mubr.bf16.mxu0 0
        %1690 = vmatmul.mubr.bf16.gmra.mrb[0].mxu0 %v1507
        %v1691 = vpop.f32.mrb[0].mxu0
        %v1692 = vadd.f32 0.0, %v1691
        %v1693 = vpop.f32.mrb[0].mxu0
        %v1694 = vpop.f32.mrb[0].mxu0
        %v1695 = vadd.f32 0.0, %v1694
        %v1696 = vpop.f32.mrb[0].mxu0
        %1697 = vmatprep.mubr.bf16.mxu0 0
        %1698 = vmatmul.mubr.bf16.gmra.mrb[0].mxu0 %v1508
        %v1699 = vpop.f32.mrb[0].mxu0
        %v1700 = vadd.f32 0.0, %v1699
        %v1701 = vpop.f32.mrb[0].mxu0
        %v1702 = vpop.f32.mrb[0].mxu0
        %v1703 = vadd.f32 0.0, %v1702
        %v1704 = vpop.f32.mrb[0].mxu0
        %1705 = vmatprep.mubr.bf16.mxu0 0
        %1706 = vmatmul.mubr.bf16.gmra.mrb[0].mxu0 %v1509
        %v1707 = vpop.f32.mrb[0].mxu0
        %v1708 = vadd.f32 0.0, %v1707
        %v1709 = vpop.f32.mrb[0].mxu0
        %v1710 = vpop.f32.mrb[0].mxu0
        %v1711 = vadd.f32 0.0, %v1710
        %v1712 = vpop.f32.mrb[0].mxu0
        %1713 = vmatprep.mubr.bf16.mxu0 0
        %1714 = vmatmul.mubr.bf16.gmra.mrb[0].mxu0 %v1510
        %v1715 = vpop.f32.mrb[0].mxu0
        %v1716 = vadd.f32 0.0, %v1715
        %v1717 = vpop.f32.mrb[0].mxu0
        %v1718 = vpop.f32.mrb[0].mxu0
        %v1719 = vadd.f32 0.0, %v1718
        %v1720 = vpop.f32.mrb[0].mxu0
        %1721 = vmatprep.mubr.bf16.mxu0 0
        %1722 = vmatmul.mubr.bf16.gmra.mrb[0].mxu0 %v1511
        %v1723 = vpop.f32.mrb[0].mxu0
        %v1724 = vadd.f32 0.0, %v1723
        %v1725 = vpop.f32.mrb[0].mxu0
        %v1726 = vpop.f32.mrb[0].mxu0
        %v1727 = vadd.f32 0.0, %v1726
        %v1728 = vpop.f32.mrb[0].mxu0
        %1729 = vmatprep.mubr.bf16.mxu0 0
        %1730 = vmatmul.mubr.bf16.gmra.mrb[0].mxu0 %v1512
        %v1731 = vpop.f32.mrb[0].mxu0
        %v1732 = vadd.f32 0.0, %v1731
        %v1733 = vpop.f32.mrb[0].mxu0
        %v1734 = vpop.f32.mrb[0].mxu0
        %v1735 = vadd.f32 0.0, %v1734
        %v1736 = vpop.f32.mrb[0].mxu0
        %1737 = vdwg.mxu0
        %v1738 = vadd.f32 %v1159, %v1612
        %v1739 = vadd.f32 %v1162, %v1615
        %v1740 = vadd.f32 %v1167, %v1620
        %v1741 = vadd.f32 %v1170, %v1623
        %v1742 = vadd.f32 %v1175, %v1628
        %v1743 = vadd.f32 %v1178, %v1631
        %v1744 = vadd.f32 %v1183, %v1636
        %v1745 = vadd.f32 %v1186, %v1639
        %v1746 = vadd.f32 %v1191, %v1644
        %v1747 = vadd.f32 %v1194, %v1647
        %v1748 = vadd.f32 %v1199, %v1652
        %v1749 = vadd.f32 %v1202, %v1655
        %v1750 = vadd.f32 %v1207, %v1660
        %v1751 = vadd.f32 %v1210, %v1663
        %v1752 = vadd.f32 %v1215, %v1668
        %v1753 = vadd.f32 %v1218, %v1671
        %v1754 = vadd.f32 %v1223, %v1676
        %v1755 = vadd.f32 %v1226, %v1679
        %v1756 = vadd.f32 %v1231, %v1684
        %v1757 = vadd.f32 %v1234, %v1687
        %v1758 = vadd.f32 %v1239, %v1692
        %v1759 = vadd.f32 %v1242, %v1695
        %v1760 = vadd.f32 %v1247, %v1700
        %v1761 = vadd.f32 %v1250, %v1703
        %v1762 = vadd.f32 %v1255, %v1708
        %v1763 = vadd.f32 %v1258, %v1711
        %v1764 = vadd.f32 %v1263, %v1716
        %v1765 = vadd.f32 %v1266, %v1719
        %v1766 = vadd.f32 %v1271, %v1724
        %v1767 = vadd.f32 %v1274, %v1727
        %v1768 = vadd.f32 %v1279, %v1732
        %v1769 = vadd.f32 %v1282, %v1735
        %s1770 = scalar_lea.vmem %s237, 12
        %v1771 = vld [vmem:[%s1770] sm:$0xf]
        %v1772 = vld [vmem:[%s1770 + $0x4] sm:$0xf]
        %v1773 = vld [vmem:[%s1770 + $0xc] sm:$0xf]
        %v1774 = vld [vmem:[%s1770 + $0x10] sm:$0xf]
        %v1775 = vld [vmem:[%s1770 + $0x18] sm:$0xf]
        %v1776 = vld [vmem:[%s1770 + $0x1c] sm:$0xf]
        %v1777 = vld [vmem:[%s1770 + $0x24] sm:$0xf]
        %v1778 = vld [vmem:[%s1770 + $0x28] sm:$0xf]
        %v1779 = vld [vmem:[%s1770 + $0x30] sm:$0xf]
        %v1780 = vld [vmem:[%s1770 + $0x34] sm:$0xf]
        %v1781 = vld [vmem:[%s1770 + $0x3c] sm:$0xf]
        %v1782 = vld [vmem:[%s1770 + $0x40] sm:$0xf]
        %v1783 = vld [vmem:[%s1770 + $0x48] sm:$0xf]
        %v1784 = vld [vmem:[%s1770 + $0x4c] sm:$0xf]
        %v1785 = vld [vmem:[%s1770 + $0x54] sm:$0xf]
        %v1786 = vld [vmem:[%s1770 + $0x58] sm:$0xf]
        %v1787 = vld [vmem:[%s1770 + $0x60] sm:$0xf]
        %v1788 = vld [vmem:[%s1770 + $0x64] sm:$0xf]
        %v1789 = vld [vmem:[%s1770 + $0x6c] sm:$0xf]
        %v1790 = vld [vmem:[%s1770 + $0x70] sm:$0xf]
        %v1791 = vld [vmem:[%s1770 + $0x78] sm:$0xf]
        %v1792 = vld [vmem:[%s1770 + $0x7c] sm:$0xf]
        %v1793 = vld [vmem:[%s1770 + $0x84] sm:$0xf]
        %v1794 = vld [vmem:[%s1770 + $0x88] sm:$0xf]
        %v1795 = vld [vmem:[%s1770 + $0x90] sm:$0xf]
        %v1796 = vld [vmem:[%s1770 + $0x94] sm:$0xf]
        %v1797 = vld [vmem:[%s1770 + $0x9c] sm:$0xf]
        %v1798 = vld [vmem:[%s1770 + $0xa0] sm:$0xf]
        %v1799 = vld [vmem:[%s1770 + $0xa8] sm:$0xf]
        %v1800 = vld [vmem:[%s1770 + $0xac] sm:$0xf]
        %v1801 = vld [vmem:[%s1770 + $0xb4] sm:$0xf]
        %v1802 = vld [vmem:[%s1770 + $0xb8] sm:$0xf]
        %s1803 = scalar_lea.vmem %s1, 192
        %v1804 = vld [vmem:[%s1803] sm:$0xf]
        %v1805 = vld [vmem:[%s1803 + $0x4] sm:$0xf]
        %v1806 = vld [vmem:[%s1803 + $0x8] sm:$0xf]
        %v1807 = vld [vmem:[%s1803 + $0xc] sm:$0xf]
        %v1808 = vld [vmem:[%s1803 + $0x10] sm:$0xf]
        %v1809 = vld [vmem:[%s1803 + $0x14] sm:$0xf]
        %v1810 = vld [vmem:[%s1803 + $0x18] sm:$0xf]
        %v1811 = vld [vmem:[%s1803 + $0x1c] sm:$0xf]
        %v1812 = vld [vmem:[%s1803 + $0x20] sm:$0xf]
        %v1813 = vld [vmem:[%s1803 + $0x24] sm:$0xf]
        %v1814 = vld [vmem:[%s1803 + $0x28] sm:$0xf]
        %v1815 = vld [vmem:[%s1803 + $0x2c] sm:$0xf]
        %v1816 = vld [vmem:[%s1803 + $0x30] sm:$0xf]
        %v1817 = vld [vmem:[%s1803 + $0x34] sm:$0xf]
        %v1818 = vld [vmem:[%s1803 + $0x38] sm:$0xf]
        %v1819 = vld [vmem:[%s1803 + $0x3c] sm:$0xf]
        %v1852 = vunpack.c.l.b16 %v1771
        %v1853 = vunpack.c.l.b16 %v1772
        %v1854 = vunpack.c.l.b16 %v1773
        %v1855 = vunpack.c.l.b16 %v1774
        %v1856 = vunpack.c.l.b16 %v1775
        %v1857 = vunpack.c.l.b16 %v1776
        %v1858 = vunpack.c.l.b16 %v1777
        %v1859 = vunpack.c.l.b16 %v1778
        %v1860 = vunpack.c.l.b16 %v1779
        %v1861 = vunpack.c.l.b16 %v1780
        %v1862 = vunpack.c.l.b16 %v1781
        %v1863 = vunpack.c.l.b16 %v1782
        %v1864 = vunpack.c.l.b16 %v1783
        %v1865 = vunpack.c.l.b16 %v1784
        %v1866 = vunpack.c.l.b16 %v1785
        %v1867 = vunpack.c.l.b16 %v1786
        %v1868 = vunpack.c.l.b16 %v1787
        %v1869 = vunpack.c.l.b16 %v1788
        %v1870 = vunpack.c.l.b16 %v1789
        %v1871 = vunpack.c.l.b16 %v1790
        %v1872 = vunpack.c.l.b16 %v1791
        %v1873 = vunpack.c.l.b16 %v1792
        %v1874 = vunpack.c.l.b16 %v1793
        %v1875 = vunpack.c.l.b16 %v1794
        %v1876 = vunpack.c.l.b16 %v1795
        %v1877 = vunpack.c.l.b16 %v1796
        %v1878 = vunpack.c.l.b16 %v1797
        %v1879 = vunpack.c.l.b16 %v1798
        %v1880 = vunpack.c.l.b16 %v1799
        %v1881 = vunpack.c.l.b16 %v1800
        %v1882 = vunpack.c.l.b16 %v1801
        %v1883 = vunpack.c.l.b16 %v1802
        %v1884 = vpack.c.b16 %v1853, %v1852
        %v1885 = vpack.c.b16 %v1855, %v1854
        %v1886 = vpack.c.b16 %v1857, %v1856
        %v1887 = vpack.c.b16 %v1859, %v1858
        %v1888 = vpack.c.b16 %v1861, %v1860
        %v1889 = vpack.c.b16 %v1863, %v1862
        %v1890 = vpack.c.b16 %v1865, %v1864
        %v1891 = vpack.c.b16 %v1867, %v1866
        %v1892 = vpack.c.b16 %v1869, %v1868
        %v1893 = vpack.c.b16 %v1871, %v1870
        %v1894 = vpack.c.b16 %v1873, %v1872
        %v1895 = vpack.c.b16 %v1875, %v1874
        %v1896 = vpack.c.b16 %v1877, %v1876
        %v1897 = vpack.c.b16 %v1879, %v1878
        %v1898 = vpack.c.b16 %v1881, %v1880
        %v1899 = vpack.c.b16 %v1883, %v1882
        %v1932 = vunpack.c.l.b16 %v1804
        %v1933 = vunpack.c.l.b16 %v1805
        %v1934 = vunpack.c.l.b16 %v1806
        %v1935 = vunpack.c.l.b16 %v1807
        %v1936 = vunpack.c.l.b16 %v1808
        %v1937 = vunpack.c.l.b16 %v1809
        %v1938 = vunpack.c.l.b16 %v1810
        %v1939 = vunpack.c.l.b16 %v1811
        %v1940 = vunpack.c.l.b16 %v1812
        %v1941 = vunpack.c.l.b16 %v1813
        %v1942 = vunpack.c.l.b16 %v1814
        %v1943 = vunpack.c.l.b16 %v1815
        %v1944 = vunpack.c.l.b16 %v1816
        %v1945 = vunpack.c.l.b16 %v1817
        %v1946 = vunpack.c.l.b16 %v1818
        %v1947 = vunpack.c.l.b16 %v1819
        %v1948 = vpack.c.b16 %v1933, %v1932
        %v1949 = vpack.c.b16 %v1935, %v1934
        %v1950 = vpack.c.b16 %v1937, %v1936
        %v1951 = vpack.c.b16 %v1939, %v1938
        %v1952 = vpack.c.b16 %v1941, %v1940
        %v1953 = vpack.c.b16 %v1943, %v1942
        %v1954 = vpack.c.b16 %v1945, %v1944
        %v1955 = vpack.c.b16 %v1947, %v1946
        %1964 = vmatprep.subr.bf16.mxu0 0
        %1965 = vmatpush1.bf16.msra.mxu0 %v1948
        %1966 = vmatprep.subr.bf16.mxu0 0
        %1967 = vmatpush1.bf16.msra.mxu0 %v1949
        %1968 = vmatprep.subr.bf16.mxu0 0
        %1969 = vmatpush1.bf16.msra.mxu0 %v1950
        %1970 = vmatprep.subr.bf16.mxu0 0
        %1971 = vmatpush1.bf16.msra.mxu0 %v1951
        %1972 = vmatprep.subr.bf16.mxu0 0
        %1973 = vmatpush1.bf16.msra.mxu0 %v1952
        %1974 = vmatprep.subr.bf16.mxu0 0
        %1975 = vmatpush1.bf16.msra.mxu0 %v1953
        %1976 = vmatprep.subr.bf16.mxu0 0
        %1977 = vmatpush1.bf16.msra.mxu0 %v1954
        %1978 = vmatprep.subr.bf16.mxu0 0
        %1979 = vmatpush1.bf16.msra.mxu0 %v1955
        %1980 = vmatprep.subr.bf16.mxu0 0
        %1981 = vmatpush1.bf16.msra.mxu0 0
        %1982 = vmatprep.subr.bf16.mxu0 0
        %1983 = vmatpush1.bf16.msra.mxu0 0
        %1984 = vmatprep.subr.bf16.mxu0 0
        %1985 = vmatpush1.bf16.msra.mxu0 0
        %1986 = vmatprep.subr.bf16.mxu0 0
        %1987 = vmatpush1.bf16.msra.mxu0 0
        %1988 = vmatprep.subr.bf16.mxu0 0
        %1989 = vmatpush1.bf16.msra.mxu0 0
        %1990 = vmatprep.subr.bf16.mxu0 0
        %1991 = vmatpush1.bf16.msra.mxu0 0
        %1992 = vmatprep.subr.bf16.mxu0 0
        %1993 = vmatpush1.bf16.msra.mxu0 0
        %1994 = vmatprep.subr.bf16.mxu0 0
        %1995 = vmatpush1.bf16.msra.mxu0 0
        %1996 = vmatprep.mubr.bf16.mxu0 0
        %1997 = vmatmul.mubr.bf16.gmra.mrb[0].mxu0 %v1884
        %v1998 = vpop.f32.mrb[0].mxu0
        %v1999 = vadd.f32 0.0, %v1998
        %v2000 = vpop.f32.mrb[0].mxu0
        %v2001 = vpop.f32.mrb[0].mxu0
        %v2002 = vadd.f32 0.0, %v2001
        %v2003 = vpop.f32.mrb[0].mxu0
        %2004 = vmatprep.mubr.bf16.mxu0 0
        %2005 = vmatmul.mubr.bf16.gmra.mrb[0].mxu0 %v1885
        %v2006 = vpop.f32.mrb[0].mxu0
        %v2007 = vadd.f32 0.0, %v2006
        %v2008 = vpop.f32.mrb[0].mxu0
        %v2009 = vpop.f32.mrb[0].mxu0
        %v2010 = vadd.f32 0.0, %v2009
        %v2011 = vpop.f32.mrb[0].mxu0
        %2012 = vmatprep.mubr.bf16.mxu0 0
        %2013 = vmatmul.mubr.bf16.gmra.mrb[0].mxu0 %v1886
        %v2014 = vpop.f32.mrb[0].mxu0
        %v2015 = vadd.f32 0.0, %v2014
        %v2016 = vpop.f32.mrb[0].mxu0
        %v2017 = vpop.f32.mrb[0].mxu0
        %v2018 = vadd.f32 0.0, %v2017
        %v2019 = vpop.f32.mrb[0].mxu0
        %2020 = vmatprep.mubr.bf16.mxu0 0
        %2021 = vmatmul.mubr.bf16.gmra.mrb[0].mxu0 %v1887
        %v2022 = vpop.f32.mrb[0].mxu0
        %v2023 = vadd.f32 0.0, %v2022
        %v2024 = vpop.f32.mrb[0].mxu0
        %v2025 = vpop.f32.mrb[0].mxu0
        %v2026 = vadd.f32 0.0, %v2025
        %v2027 = vpop.f32.mrb[0].mxu0
        %2028 = vmatprep.mubr.bf16.mxu0 0
        %2029 = vmatmul.mubr.bf16.gmra.mrb[0].mxu0 %v1888
        %v2030 = vpop.f32.mrb[0].mxu0
        %v2031 = vadd.f32 0.0, %v2030
        %v2032 = vpop.f32.mrb[0].mxu0
        %v2033 = vpop.f32.mrb[0].mxu0
        %v2034 = vadd.f32 0.0, %v2033
        %v2035 = vpop.f32.mrb[0].mxu0
        %2036 = vmatprep.mubr.bf16.mxu0 0
        %2037 = vmatmul.mubr.bf16.gmra.mrb[0].mxu0 %v1889
        %v2038 = vpop.f32.mrb[0].mxu0
        %v2039 = vadd.f32 0.0, %v2038
        %v2040 = vpop.f32.mrb[0].mxu0
        %v2041 = vpop.f32.mrb[0].mxu0
        %v2042 = vadd.f32 0.0, %v2041
        %v2043 = vpop.f32.mrb[0].mxu0
        %2044 = vmatprep.mubr.bf16.mxu0 0
        %2045 = vmatmul.mubr.bf16.gmra.mrb[0].mxu0 %v1890
        %v2046 = vpop.f32.mrb[0].mxu0
        %v2047 = vadd.f32 0.0, %v2046
        %v2048 = vpop.f32.mrb[0].mxu0
        %v2049 = vpop.f32.mrb[0].mxu0
        %v2050 = vadd.f32 0.0, %v2049
        %v2051 = vpop.f32.mrb[0].mxu0
        %2052 = vmatprep.mubr.bf16.mxu0 0
        %2053 = vmatmul.mubr.bf16.gmra.mrb[0].mxu0 %v1891
        %v2054 = vpop.f32.mrb[0].mxu0
        %v2055 = vadd.f32 0.0, %v2054
        %v2056 = vpop.f32.mrb[0].mxu0
        %v2057 = vpop.f32.mrb[0].mxu0
        %v2058 = vadd.f32 0.0, %v2057
        %v2059 = vpop.f32.mrb[0].mxu0
        %2060 = vmatprep.mubr.bf16.mxu0 0
        %2061 = vmatmul.mubr.bf16.gmra.mrb[0].mxu0 %v1892
        %v2062 = vpop.f32.mrb[0].mxu0
        %v2063 = vadd.f32 0.0, %v2062
        %v2064 = vpop.f32.mrb[0].mxu0
        %v2065 = vpop.f32.mrb[0].mxu0
        %v2066 = vadd.f32 0.0, %v2065
        %v2067 = vpop.f32.mrb[0].mxu0
        %2068 = vmatprep.mubr.bf16.mxu0 0
        %2069 = vmatmul.mubr.bf16.gmra.mrb[0].mxu0 %v1893
        %v2070 = vpop.f32.mrb[0].mxu0
        %v2071 = vadd.f32 0.0, %v2070
        %v2072 = vpop.f32.mrb[0].mxu0
        %v2073 = vpop.f32.mrb[0].mxu0
        %v2074 = vadd.f32 0.0, %v2073
        %v2075 = vpop.f32.mrb[0].mxu0
        %2076 = vmatprep.mubr.bf16.mxu0 0
        %2077 = vmatmul.mubr.bf16.gmra.mrb[0].mxu0 %v1894
        %v2078 = vpop.f32.mrb[0].mxu0
        %v2079 = vadd.f32 0.0, %v2078
        %v2080 = vpop.f32.mrb[0].mxu0
        %v2081 = vpop.f32.mrb[0].mxu0
        %v2082 = vadd.f32 0.0, %v2081
        %v2083 = vpop.f32.mrb[0].mxu0
        %2084 = vmatprep.mubr.bf16.mxu0 0
        %2085 = vmatmul.mubr.bf16.gmra.mrb[0].mxu0 %v1895
        %v2086 = vpop.f32.mrb[0].mxu0
        %v2087 = vadd.f32 0.0, %v2086
        %v2088 = vpop.f32.mrb[0].mxu0
        %v2089 = vpop.f32.mrb[0].mxu0
        %v2090 = vadd.f32 0.0, %v2089
        %v2091 = vpop.f32.mrb[0].mxu0
        %2092 = vmatprep.mubr.bf16.mxu0 0
        %2093 = vmatmul.mubr.bf16.gmra.mrb[0].mxu0 %v1896
        %v2094 = vpop.f32.mrb[0].mxu0
        %v2095 = vadd.f32 0.0, %v2094
        %v2096 = vpop.f32.mrb[0].mxu0
        %v2097 = vpop.f32.mrb[0].mxu0
        %v2098 = vadd.f32 0.0, %v2097
        %v2099 = vpop.f32.mrb[0].mxu0
        %2100 = vmatprep.mubr.bf16.mxu0 0
        %2101 = vmatmul.mubr.bf16.gmra.mrb[0].mxu0 %v1897
        %v2102 = vpop.f32.mrb[0].mxu0
        %v2103 = vadd.f32 0.0, %v2102
        %v2104 = vpop.f32.mrb[0].mxu0
        %v2105 = vpop.f32.mrb[0].mxu0
        %v2106 = vadd.f32 0.0, %v2105
        %v2107 = vpop.f32.mrb[0].mxu0
        %2108 = vmatprep.mubr.bf16.mxu0 0
        %2109 = vmatmul.mubr.bf16.gmra.mrb[0].mxu0 %v1898
        %v2110 = vpop.f32.mrb[0].mxu0
        %v2111 = vadd.f32 0.0, %v2110
        %v2112 = vpop.f32.mrb[0].mxu0
        %v2113 = vpop.f32.mrb[0].mxu0
        %v2114 = vadd.f32 0.0, %v2113
        %v2115 = vpop.f32.mrb[0].mxu0
        %2116 = vmatprep.mubr.bf16.mxu0 0
        %2117 = vmatmul.mubr.bf16.gmra.mrb[0].mxu0 %v1899
        %v2118 = vpop.f32.mrb[0].mxu0
        %v2119 = vadd.f32 0.0, %v2118
        %v2120 = vpop.f32.mrb[0].mxu0
        %v2121 = vpop.f32.mrb[0].mxu0
        %v2122 = vadd.f32 0.0, %v2121
        %v2123 = vpop.f32.mrb[0].mxu0
        %2124 = vdwg.mxu0
        %v2125 = vadd.f32 %v1738, %v1999
        %v2126 = vadd.f32 %v1739, %v2002
        %v2127 = vadd.f32 %v1740, %v2007
        %v2128 = vadd.f32 %v1741, %v2010
        %v2129 = vadd.f32 %v1742, %v2015
        %v2130 = vadd.f32 %v1743, %v2018
        %v2131 = vadd.f32 %v1744, %v2023
        %v2132 = vadd.f32 %v1745, %v2026
        %v2133 = vadd.f32 %v1746, %v2031
        %v2134 = vadd.f32 %v1747, %v2034
        %v2135 = vadd.f32 %v1748, %v2039
        %v2136 = vadd.f32 %v1749, %v2042
        %v2137 = vadd.f32 %v1750, %v2047
        %v2138 = vadd.f32 %v1751, %v2050
        %v2139 = vadd.f32 %v1752, %v2055
        %v2140 = vadd.f32 %v1753, %v2058
        %v2141 = vadd.f32 %v1754, %v2063
        %v2142 = vadd.f32 %v1755, %v2066
        %v2143 = vadd.f32 %v1756, %v2071
        %v2144 = vadd.f32 %v1757, %v2074
        %v2145 = vadd.f32 %v1758, %v2079
        %v2146 = vadd.f32 %v1759, %v2082
        %v2147 = vadd.f32 %v1760, %v2087
        %v2148 = vadd.f32 %v1761, %v2090
        %v2149 = vadd.f32 %v1762, %v2095
        %v2150 = vadd.f32 %v1763, %v2098
        %v2151 = vadd.f32 %v1764, %v2103
        %v2152 = vadd.f32 %v1765, %v2106
        %v2153 = vadd.f32 %v1766, %v2111
        %v2154 = vadd.f32 %v1767, %v2114
        %v2155 = vadd.f32 %v1768, %v2119
        %v2156 = vadd.f32 %v1769, %v2122
        %v2157 = vld [vmem:[%s1770] sm:$0xf]
        %v2158 = vld [vmem:[%s1770 + $0x4] sm:$0xf]
        %v2159 = vld [vmem:[%s1770 + $0x8] sm:$0x1]
        %v2160 = vld [vmem:[%s1770 + $0xc] sm:$0xf]
        %v2161 = vld [vmem:[%s1770 + $0x10] sm:$0xf]
        %v2162 = vld [vmem:[%s1770 + $0x14] sm:$0x1]
        %v2163 = vld [vmem:[%s1770 + $0x18] sm:$0xf]
        %v2164 = vld [vmem:[%s1770 + $0x1c] sm:$0xf]
        %v2165 = vld [vmem:[%s1770 + $0x20] sm:$0x1]
        %v2166 = vld [vmem:[%s1770 + $0x24] sm:$0xf]
        %v2167 = vld [vmem:[%s1770 + $0x28] sm:$0xf]
        %v2168 = vld [vmem:[%s1770 + $0x2c] sm:$0x1]
        %v2169 = vld [vmem:[%s1770 + $0x30] sm:$0xf]
        %v2170 = vld [vmem:[%s1770 + $0x34] sm:$0xf]
        %v2171 = vld [vmem:[%s1770 + $0x38] sm:$0x1]
        %v2172 = vld [vmem:[%s1770 + $0x3c] sm:$0xf]
        %v2173 = vld [vmem:[%s1770 + $0x40] sm:$0xf]
        %v2174 = vld [vmem:[%s1770 + $0x44] sm:$0x1]
        %v2175 = vld [vmem:[%s1770 + $0x48] sm:$0xf]
        %v2176 = vld [vmem:[%s1770 + $0x4c] sm:$0xf]
        %v2177 = vld [vmem:[%s1770 + $0x50] sm:$0x1]
        %v2178 = vld [vmem:[%s1770 + $0x54] sm:$0xf]
        %v2179 = vld [vmem:[%s1770 + $0x58] sm:$0xf]
        %v2180 = vld [vmem:[%s1770 + $0x5c] sm:$0x1]
        %v2181 = vld [vmem:[%s1770 + $0x60] sm:$0xf]
        %v2182 = vld [vmem:[%s1770 + $0x64] sm:$0xf]
        %v2183 = vld [vmem:[%s1770 + $0x68] sm:$0x1]
        %v2184 = vld [vmem:[%s1770 + $0x6c] sm:$0xf]
        %v2185 = vld [vmem:[%s1770 + $0x70] sm:$0xf]
        %v2186 = vld [vmem:[%s1770 + $0x74] sm:$0x1]
        %v2187 = vld [vmem:[%s1770 + $0x78] sm:$0xf]
        %v2188 = vld [vmem:[%s1770 + $0x7c] sm:$0xf]
        %v2189 = vld [vmem:[%s1770 + $0x80] sm:$0x1]
        %v2190 = vld [vmem:[%s1770 + $0x84] sm:$0xf]
        %v2191 = vld [vmem:[%s1770 + $0x88] sm:$0xf]
        %v2192 = vld [vmem:[%s1770 + $0x8c] sm:$0x1]
        %v2193 = vld [vmem:[%s1770 + $0x90] sm:$0xf]
        %v2194 = vld [vmem:[%s1770 + $0x94] sm:$0xf]
        %v2195 = vld [vmem:[%s1770 + $0x98] sm:$0x1]
        %v2196 = vld [vmem:[%s1770 + $0x9c] sm:$0xf]
        %v2197 = vld [vmem:[%s1770 + $0xa0] sm:$0xf]
        %v2198 = vld [vmem:[%s1770 + $0xa4] sm:$0x1]
        %v2199 = vld [vmem:[%s1770 + $0xa8] sm:$0xf]
        %v2200 = vld [vmem:[%s1770 + $0xac] sm:$0xf]
        %v2201 = vld [vmem:[%s1770 + $0xb0] sm:$0x1]
        %v2202 = vld [vmem:[%s1770 + $0xb4] sm:$0xf]
        %v2203 = vld [vmem:[%s1770 + $0xb8] sm:$0xf]
        %v2204 = vld [vmem:[%s1770 + $0xbc] sm:$0x1]
        %v2206 = vshrl.u32 %v2157, 16
        %v2208 = vrot.slane %v2206, 4
        %v2209 = vshll.u32 %v2157, 16
        %v2211 = vrot.slane %v2209, 5
        %v2212 = vor.u32 %v2208, %v2211
        %v2213 = vrot.slane %v2212, 4
        %v2215 = vshll.u32 %v2158, 16
        %v2217 = vrot.slane %v2215, 5
        %v2218 = vsel %vm305, %v2213, %v2217
        %v2219 = vshrl.u32 %v2158, 16
        %v2221 = vrot.slane %v2219, 4
        %v2222 = vor.u32 %v2221, %v2217
        %v2223 = vrot.slane %v2222, 4
        %v2225 = vshll.u32 %v2159, 16
        %v2227 = vrot.slane %v2225, 5
        %v2228 = vsel %vm305, %v2223, %v2227
        %v2230 = vshrl.u32 %v2160, 16
        %v2232 = vrot.slane %v2230, 4
        %v2233 = vshll.u32 %v2160, 16
        %v2235 = vrot.slane %v2233, 5
        %v2236 = vor.u32 %v2232, %v2235
        %v2237 = vrot.slane %v2236, 4
        %v2239 = vshll.u32 %v2161, 16
        %v2241 = vrot.slane %v2239, 5
        %v2242 = vsel %vm305, %v2237, %v2241
        %v2243 = vshrl.u32 %v2161, 16
        %v2245 = vrot.slane %v2243, 4
        %v2246 = vor.u32 %v2245, %v2241
        %v2247 = vrot.slane %v2246, 4
        %v2249 = vshll.u32 %v2162, 16
        %v2251 = vrot.slane %v2249, 5
        %v2252 = vsel %vm305, %v2247, %v2251
        %v2254 = vshrl.u32 %v2163, 16
        %v2256 = vrot.slane %v2254, 4
        %v2257 = vshll.u32 %v2163, 16
        %v2259 = vrot.slane %v2257, 5
        %v2260 = vor.u32 %v2256, %v2259
        %v2261 = vrot.slane %v2260, 4
        %v2263 = vshll.u32 %v2164, 16
        %v2265 = vrot.slane %v2263, 5
        %v2266 = vsel %vm305, %v2261, %v2265
        %v2267 = vshrl.u32 %v2164, 16
        %v2269 = vrot.slane %v2267, 4
        %v2270 = vor.u32 %v2269, %v2265
        %v2271 = vrot.slane %v2270, 4
        %v2273 = vshll.u32 %v2165, 16
        %v2275 = vrot.slane %v2273, 5
        %v2276 = vsel %vm305, %v2271, %v2275
        %v2278 = vshrl.u32 %v2166, 16
        %v2280 = vrot.slane %v2278, 4
        %v2281 = vshll.u32 %v2166, 16
        %v2283 = vrot.slane %v2281, 5
        %v2284 = vor.u32 %v2280, %v2283
        %v2285 = vrot.slane %v2284, 4
        %v2287 = vshll.u32 %v2167, 16
        %v2289 = vrot.slane %v2287, 5
        %v2290 = vsel %vm305, %v2285, %v2289
        %v2291 = vshrl.u32 %v2167, 16
        %v2293 = vrot.slane %v2291, 4
        %v2294 = vor.u32 %v2293, %v2289
        %v2295 = vrot.slane %v2294, 4
        %v2297 = vshll.u32 %v2168, 16
        %v2299 = vrot.slane %v2297, 5
        %v2300 = vsel %vm305, %v2295, %v2299
        %v2302 = vshrl.u32 %v2169, 16
        %v2304 = vrot.slane %v2302, 4
        %v2305 = vshll.u32 %v2169, 16
        %v2307 = vrot.slane %v2305, 5
        %v2308 = vor.u32 %v2304, %v2307
        %v2309 = vrot.slane %v2308, 4
        %v2311 = vshll.u32 %v2170, 16
        %v2313 = vrot.slane %v2311, 5
        %v2314 = vsel %vm305, %v2309, %v2313
        %v2315 = vshrl.u32 %v2170, 16
        %v2317 = vrot.slane %v2315, 4
        %v2318 = vor.u32 %v2317, %v2313
        %v2319 = vrot.slane %v2318, 4
        %v2321 = vshll.u32 %v2171, 16
        %v2323 = vrot.slane %v2321, 5
        %v2324 = vsel %vm305, %v2319, %v2323
        %v2326 = vshrl.u32 %v2172, 16
        %v2328 = vrot.slane %v2326, 4
        %v2329 = vshll.u32 %v2172, 16
        %v2331 = vrot.slane %v2329, 5
        %v2332 = vor.u32 %v2328, %v2331
        %v2333 = vrot.slane %v2332, 4
        %v2335 = vshll.u32 %v2173, 16
        %v2337 = vrot.slane %v2335, 5
        %v2338 = vsel %vm305, %v2333, %v2337
        %v2339 = vshrl.u32 %v2173, 16
        %v2341 = vrot.slane %v2339, 4
        %v2342 = vor.u32 %v2341, %v2337
        %v2343 = vrot.slane %v2342, 4
        %v2345 = vshll.u32 %v2174, 16
        %v2347 = vrot.slane %v2345, 5
        %v2348 = vsel %vm305, %v2343, %v2347
        %v2350 = vshrl.u32 %v2175, 16
        %v2352 = vrot.slane %v2350, 4
        %v2353 = vshll.u32 %v2175, 16
        %v2355 = vrot.slane %v2353, 5
        %v2356 = vor.u32 %v2352, %v2355
        %v2357 = vrot.slane %v2356, 4
        %v2359 = vshll.u32 %v2176, 16
        %v2361 = vrot.slane %v2359, 5
        %v2362 = vsel %vm305, %v2357, %v2361
        %v2363 = vshrl.u32 %v2176, 16
        %v2365 = vrot.slane %v2363, 4
        %v2366 = vor.u32 %v2365, %v2361
        %v2367 = vrot.slane %v2366, 4
        %v2369 = vshll.u32 %v2177, 16
        %v2371 = vrot.slane %v2369, 5
        %v2372 = vsel %vm305, %v2367, %v2371
        %v2374 = vshrl.u32 %v2178, 16
        %v2376 = vrot.slane %v2374, 4
        %v2377 = vshll.u32 %v2178, 16
        %v2379 = vrot.slane %v2377, 5
        %v2380 = vor.u32 %v2376, %v2379
        %v2381 = vrot.slane %v2380, 4
        %v2383 = vshll.u32 %v2179, 16
        %v2385 = vrot.slane %v2383, 5
        %v2386 = vsel %vm305, %v2381, %v2385
        %v2387 = vshrl.u32 %v2179, 16
        %v2389 = vrot.slane %v2387, 4
        %v2390 = vor.u32 %v2389, %v2385
        %v2391 = vrot.slane %v2390, 4
        %v2393 = vshll.u32 %v2180, 16
        %v2395 = vrot.slane %v2393, 5
        %v2396 = vsel %vm305, %v2391, %v2395
        %v2398 = vshrl.u32 %v2181, 16
        %v2400 = vrot.slane %v2398, 4
        %v2401 = vshll.u32 %v2181, 16
        %v2403 = vrot.slane %v2401, 5
        %v2404 = vor.u32 %v2400, %v2403
        %v2405 = vrot.slane %v2404, 4
        %v2407 = vshll.u32 %v2182, 16
        %v2409 = vrot.slane %v2407, 5
        %v2410 = vsel %vm305, %v2405, %v2409
        %v2411 = vshrl.u32 %v2182, 16
        %v2413 = vrot.slane %v2411, 4
        %v2414 = vor.u32 %v2413, %v2409
        %v2415 = vrot.slane %v2414, 4
        %v2417 = vshll.u32 %v2183, 16
        %v2419 = vrot.slane %v2417, 5
        %v2420 = vsel %vm305, %v2415, %v2419
        %v2422 = vshrl.u32 %v2184, 16
        %v2424 = vrot.slane %v2422, 4
        %v2425 = vshll.u32 %v2184, 16
        %v2427 = vrot.slane %v2425, 5
        %v2428 = vor.u32 %v2424, %v2427
        %v2429 = vrot.slane %v2428, 4
        %v2431 = vshll.u32 %v2185, 16
        %v2433 = vrot.slane %v2431, 5
        %v2434 = vsel %vm305, %v2429, %v2433
        %v2435 = vshrl.u32 %v2185, 16
        %v2437 = vrot.slane %v2435, 4
        %v2438 = vor.u32 %v2437, %v2433
        %v2439 = vrot.slane %v2438, 4
        %v2441 = vshll.u32 %v2186, 16
        %v2443 = vrot.slane %v2441, 5
        %v2444 = vsel %vm305, %v2439, %v2443
        %v2446 = vshrl.u32 %v2187, 16
        %v2448 = vrot.slane %v2446, 4
        %v2449 = vshll.u32 %v2187, 16
        %v2451 = vrot.slane %v2449, 5
        %v2452 = vor.u32 %v2448, %v2451
        %v2453 = vrot.slane %v2452, 4
        %v2455 = vshll.u32 %v2188, 16
        %v2457 = vrot.slane %v2455, 5
        %v2458 = vsel %vm305, %v2453, %v2457
        %v2459 = vshrl.u32 %v2188, 16
        %v2461 = vrot.slane %v2459, 4
        %v2462 = vor.u32 %v2461, %v2457
        %v2463 = vrot.slane %v2462, 4
        %v2465 = vshll.u32 %v2189, 16
        %v2467 = vrot.slane %v2465, 5
        %v2468 = vsel %vm305, %v2463, %v2467
        %v2470 = vshrl.u32 %v2190, 16
        %v2472 = vrot.slane %v2470, 4
        %v2473 = vshll.u32 %v2190, 16
        %v2475 = vrot.slane %v2473, 5
        %v2476 = vor.u32 %v2472, %v2475
        %v2477 = vrot.slane %v2476, 4
        %v2479 = vshll.u32 %v2191, 16
        %v2481 = vrot.slane %v2479, 5
        %v2482 = vsel %vm305, %v2477, %v2481
        %v2483 = vshrl.u32 %v2191, 16
        %v2485 = vrot.slane %v2483, 4
        %v2486 = vor.u32 %v2485, %v2481
        %v2487 = vrot.slane %v2486, 4
        %v2489 = vshll.u32 %v2192, 16
        %v2491 = vrot.slane %v2489, 5
        %v2492 = vsel %vm305, %v2487, %v2491
        %v2494 = vshrl.u32 %v2193, 16
        %v2496 = vrot.slane %v2494, 4
        %v2497 = vshll.u32 %v2193, 16
        %v2499 = vrot.slane %v2497, 5
        %v2500 = vor.u32 %v2496, %v2499
        %v2501 = vrot.slane %v2500, 4
        %v2503 = vshll.u32 %v2194, 16
        %v2505 = vrot.slane %v2503, 5
        %v2506 = vsel %vm305, %v2501, %v2505
        %v2507 = vshrl.u32 %v2194, 16
        %v2509 = vrot.slane %v2507, 4
        %v2510 = vor.u32 %v2509, %v2505
        %v2511 = vrot.slane %v2510, 4
        %v2513 = vshll.u32 %v2195, 16
        %v2515 = vrot.slane %v2513, 5
        %v2516 = vsel %vm305, %v2511, %v2515
        %v2518 = vshrl.u32 %v2196, 16
        %v2520 = vrot.slane %v2518, 4
        %v2521 = vshll.u32 %v2196, 16
        %v2523 = vrot.slane %v2521, 5
        %v2524 = vor.u32 %v2520, %v2523
        %v2525 = vrot.slane %v2524, 4
        %v2527 = vshll.u32 %v2197, 16
        %v2529 = vrot.slane %v2527, 5
        %v2530 = vsel %vm305, %v2525, %v2529
        %v2531 = vshrl.u32 %v2197, 16
        %v2533 = vrot.slane %v2531, 4
        %v2534 = vor.u32 %v2533, %v2529
        %v2535 = vrot.slane %v2534, 4
        %v2537 = vshll.u32 %v2198, 16
        %v2539 = vrot.slane %v2537, 5
        %v2540 = vsel %vm305, %v2535, %v2539
        %v2542 = vshrl.u32 %v2199, 16
        %v2544 = vrot.slane %v2542, 4
        %v2545 = vshll.u32 %v2199, 16
        %v2547 = vrot.slane %v2545, 5
        %v2548 = vor.u32 %v2544, %v2547
        %v2549 = vrot.slane %v2548, 4
        %v2551 = vshll.u32 %v2200, 16
        %v2553 = vrot.slane %v2551, 5
        %v2554 = vsel %vm305, %v2549, %v2553
        %v2555 = vshrl.u32 %v2200, 16
        %v2557 = vrot.slane %v2555, 4
        %v2558 = vor.u32 %v2557, %v2553
        %v2559 = vrot.slane %v2558, 4
        %v2561 = vshll.u32 %v2201, 16
        %v2563 = vrot.slane %v2561, 5
        %v2564 = vsel %vm305, %v2559, %v2563
        %v2566 = vshrl.u32 %v2202, 16
        %v2568 = vrot.slane %v2566, 4
        %v2569 = vshll.u32 %v2202, 16
        %v2571 = vrot.slane %v2569, 5
        %v2572 = vor.u32 %v2568, %v2571
        %v2573 = vrot.slane %v2572, 4
        %v2575 = vshll.u32 %v2203, 16
        %v2577 = vrot.slane %v2575, 5
        %v2578 = vsel %vm305, %v2573, %v2577
        %v2579 = vshrl.u32 %v2203, 16
        %v2581 = vrot.slane %v2579, 4
        %v2582 = vor.u32 %v2581, %v2577
        %v2583 = vrot.slane %v2582, 4
        %v2585 = vshll.u32 %v2204, 16
        %v2587 = vrot.slane %v2585, 5
        %v2588 = vsel %vm305, %v2583, %v2587
        %s2589 = scalar_lea.vmem %s1, 256
        %v2590 = vld [vmem:[%s2589] sm:$0xf]
        %v2591 = vld [vmem:[%s2589 + $0x4] sm:$0xf]
        %v2592 = vld [vmem:[%s2589 + $0x8] sm:$0xf]
        %v2593 = vld [vmem:[%s2589 + $0xc] sm:$0xf]
        %v2594 = vld [vmem:[%s2589 + $0x10] sm:$0xf]
        %v2595 = vld [vmem:[%s2589 + $0x14] sm:$0xf]
        %v2596 = vld [vmem:[%s2589 + $0x18] sm:$0xf]
        %v2597 = vld [vmem:[%s2589 + $0x1c] sm:$0xf]
        %v2598 = vld [vmem:[%s2589 + $0x20] sm:$0xf]
        %v2599 = vld [vmem:[%s2589 + $0x24] sm:$0xf]
        %v2600 = vld [vmem:[%s2589 + $0x28] sm:$0xf]
        %v2601 = vld [vmem:[%s2589 + $0x2c] sm:$0xf]
        %v2602 = vld [vmem:[%s2589 + $0x30] sm:$0xf]
        %v2603 = vld [vmem:[%s2589 + $0x34] sm:$0xf]
        %v2604 = vld [vmem:[%s2589 + $0x38] sm:$0xf]
        %v2605 = vld [vmem:[%s2589 + $0x3c] sm:$0xf]
        %v2606 = vunpack.c.l.b16 %v2218
        %v2607 = vunpack.c.l.b16 %v2228
        %v2608 = vunpack.c.l.b16 %v2242
        %v2609 = vunpack.c.l.b16 %v2252
        %v2610 = vunpack.c.l.b16 %v2266
        %v2611 = vunpack.c.l.b16 %v2276
        %v2612 = vunpack.c.l.b16 %v2290
        %v2613 = vunpack.c.l.b16 %v2300
        %v2614 = vunpack.c.l.b16 %v2314
        %v2615 = vunpack.c.l.b16 %v2324
        %v2616 = vunpack.c.l.b16 %v2338
        %v2617 = vunpack.c.l.b16 %v2348
        %v2618 = vunpack.c.l.b16 %v2362
        %v2619 = vunpack.c.l.b16 %v2372
        %v2620 = vunpack.c.l.b16 %v2386
        %v2621 = vunpack.c.l.b16 %v2396
        %v2622 = vunpack.c.l.b16 %v2410
        %v2623 = vunpack.c.l.b16 %v2420
        %v2624 = vunpack.c.l.b16 %v2434
        %v2625 = vunpack.c.l.b16 %v2444
        %v2626 = vunpack.c.l.b16 %v2458
        %v2627 = vunpack.c.l.b16 %v2468
        %v2628 = vunpack.c.l.b16 %v2482
        %v2629 = vunpack.c.l.b16 %v2492
        %v2630 = vunpack.c.l.b16 %v2506
        %v2631 = vunpack.c.l.b16 %v2516
        %v2632 = vunpack.c.l.b16 %v2530
        %v2633 = vunpack.c.l.b16 %v2540
        %v2634 = vunpack.c.l.b16 %v2554
        %v2635 = vunpack.c.l.b16 %v2564
        %v2636 = vunpack.c.l.b16 %v2578
        %v2637 = vunpack.c.l.b16 %v2588
        %v2638 = vpack.c.b16 %v2607, %v2606
        %v2639 = vpack.c.b16 %v2609, %v2608
        %v2640 = vpack.c.b16 %v2611, %v2610
        %v2641 = vpack.c.b16 %v2613, %v2612
        %v2642 = vpack.c.b16 %v2615, %v2614
        %v2643 = vpack.c.b16 %v2617, %v2616
        %v2644 = vpack.c.b16 %v2619, %v2618
        %v2645 = vpack.c.b16 %v2621, %v2620
        %v2646 = vpack.c.b16 %v2623, %v2622
        %v2647 = vpack.c.b16 %v2625, %v2624
        %v2648 = vpack.c.b16 %v2627, %v2626
        %v2649 = vpack.c.b16 %v2629, %v2628
        %v2650 = vpack.c.b16 %v2631, %v2630
        %v2651 = vpack.c.b16 %v2633, %v2632
        %v2652 = vpack.c.b16 %v2635, %v2634
        %v2653 = vpack.c.b16 %v2637, %v2636
        %v2686 = vunpack.c.l.b16 %v2590
        %v2687 = vunpack.c.l.b16 %v2591
        %v2688 = vunpack.c.l.b16 %v2592
        %v2689 = vunpack.c.l.b16 %v2593
        %v2690 = vunpack.c.l.b16 %v2594
        %v2691 = vunpack.c.l.b16 %v2595
        %v2692 = vunpack.c.l.b16 %v2596
        %v2693 = vunpack.c.l.b16 %v2597
        %v2694 = vunpack.c.l.b16 %v2598
        %v2695 = vunpack.c.l.b16 %v2599
        %v2696 = vunpack.c.l.b16 %v2600
        %v2697 = vunpack.c.l.b16 %v2601
        %v2698 = vunpack.c.l.b16 %v2602
        %v2699 = vunpack.c.l.b16 %v2603
        %v2700 = vunpack.c.l.b16 %v2604
        %v2701 = vunpack.c.l.b16 %v2605
        %v2702 = vpack.c.b16 %v2687, %v2686
        %v2703 = vpack.c.b16 %v2689, %v2688
        %v2704 = vpack.c.b16 %v2691, %v2690
        %v2705 = vpack.c.b16 %v2693, %v2692
        %v2706 = vpack.c.b16 %v2695, %v2694
        %v2707 = vpack.c.b16 %v2697, %v2696
        %v2708 = vpack.c.b16 %v2699, %v2698
        %v2709 = vpack.c.b16 %v2701, %v2700
        %2718 = vmatprep.subr.bf16.mxu0 0
        %2719 = vmatpush1.bf16.msra.mxu0 %v2702
        %2720 = vmatprep.subr.bf16.mxu0 0
        %2721 = vmatpush1.bf16.msra.mxu0 %v2703
        %2722 = vmatprep.subr.bf16.mxu0 0
        %2723 = vmatpush1.bf16.msra.mxu0 %v2704
        %2724 = vmatprep.subr.bf16.mxu0 0
        %2725 = vmatpush1.bf16.msra.mxu0 %v2705
        %2726 = vmatprep.subr.bf16.mxu0 0
        %2727 = vmatpush1.bf16.msra.mxu0 %v2706
        %2728 = vmatprep.subr.bf16.mxu0 0
        %2729 = vmatpush1.bf16.msra.mxu0 %v2707
        %2730 = vmatprep.subr.bf16.mxu0 0
        %2731 = vmatpush1.bf16.msra.mxu0 %v2708
        %2732 = vmatprep.subr.bf16.mxu0 0
        %2733 = vmatpush1.bf16.msra.mxu0 %v2709
        %2734 = vmatprep.subr.bf16.mxu0 0
        %2735 = vmatpush1.bf16.msra.mxu0 0
        %2736 = vmatprep.subr.bf16.mxu0 0
        %2737 = vmatpush1.bf16.msra.mxu0 0
        %2738 = vmatprep.subr.bf16.mxu0 0
        %2739 = vmatpush1.bf16.msra.mxu0 0
        %2740 = vmatprep.subr.bf16.mxu0 0
        %2741 = vmatpush1.bf16.msra.mxu0 0
        %2742 = vmatprep.subr.bf16.mxu0 0
        %2743 = vmatpush1.bf16.msra.mxu0 0
        %2744 = vmatprep.subr.bf16.mxu0 0
        %2745 = vmatpush1.bf16.msra.mxu0 0
        %2746 = vmatprep.subr.bf16.mxu0 0
        %2747 = vmatpush1.bf16.msra.mxu0 0
        %2748 = vmatprep.subr.bf16.mxu0 0
        %2749 = vmatpush1.bf16.msra.mxu0 0
        %2750 = vmatprep.mubr.bf16.mxu0 0
        %2751 = vmatmul.mubr.bf16.gmra.mrb[0].mxu0 %v2638
        %v2752 = vpop.f32.mrb[0].mxu0
        %v2753 = vadd.f32 0.0, %v2752
        %v2754 = vpop.f32.mrb[0].mxu0
        %v2755 = vpop.f32.mrb[0].mxu0
        %v2756 = vadd.f32 0.0, %v2755
        %v2757 = vpop.f32.mrb[0].mxu0
        %2758 = vmatprep.mubr.bf16.mxu0 0
        %2759 = vmatmul.mubr.bf16.gmra.mrb[0].mxu0 %v2639
        %v2760 = vpop.f32.mrb[0].mxu0
        %v2761 = vadd.f32 0.0, %v2760
        %v2762 = vpop.f32.mrb[0].mxu0
        %v2763 = vpop.f32.mrb[0].mxu0
        %v2764 = vadd.f32 0.0, %v2763
        %v2765 = vpop.f32.mrb[0].mxu0
        %2766 = vmatprep.mubr.bf16.mxu0 0
        %2767 = vmatmul.mubr.bf16.gmra.mrb[0].mxu0 %v2640
        %v2768 = vpop.f32.mrb[0].mxu0
        %v2769 = vadd.f32 0.0, %v2768
        %v2770 = vpop.f32.mrb[0].mxu0
        %v2771 = vpop.f32.mrb[0].mxu0
        %v2772 = vadd.f32 0.0, %v2771
        %v2773 = vpop.f32.mrb[0].mxu0
        %2774 = vmatprep.mubr.bf16.mxu0 0
        %2775 = vmatmul.mubr.bf16.gmra.mrb[0].mxu0 %v2641
        %v2776 = vpop.f32.mrb[0].mxu0
        %v2777 = vadd.f32 0.0, %v2776
        %v2778 = vpop.f32.mrb[0].mxu0
        %v2779 = vpop.f32.mrb[0].mxu0
        %v2780 = vadd.f32 0.0, %v2779
        %v2781 = vpop.f32.mrb[0].mxu0
        %2782 = vmatprep.mubr.bf16.mxu0 0
        %2783 = vmatmul.mubr.bf16.gmra.mrb[0].mxu0 %v2642
        %v2784 = vpop.f32.mrb[0].mxu0
        %v2785 = vadd.f32 0.0, %v2784
        %v2786 = vpop.f32.mrb[0].mxu0
        %v2787 = vpop.f32.mrb[0].mxu0
        %v2788 = vadd.f32 0.0, %v2787
        %v2789 = vpop.f32.mrb[0].mxu0
        %2790 = vmatprep.mubr.bf16.mxu0 0
        %2791 = vmatmul.mubr.bf16.gmra.mrb[0].mxu0 %v2643
        %v2792 = vpop.f32.mrb[0].mxu0
        %v2793 = vadd.f32 0.0, %v2792
        %v2794 = vpop.f32.mrb[0].mxu0
        %v2795 = vpop.f32.mrb[0].mxu0
        %v2796 = vadd.f32 0.0, %v2795
        %v2797 = vpop.f32.mrb[0].mxu0
        %2798 = vmatprep.mubr.bf16.mxu0 0
        %2799 = vmatmul.mubr.bf16.gmra.mrb[0].mxu0 %v2644
        %v2800 = vpop.f32.mrb[0].mxu0
        %v2801 = vadd.f32 0.0, %v2800
        %v2802 = vpop.f32.mrb[0].mxu0
        %v2803 = vpop.f32.mrb[0].mxu0
        %v2804 = vadd.f32 0.0, %v2803
        %v2805 = vpop.f32.mrb[0].mxu0
        %2806 = vmatprep.mubr.bf16.mxu0 0
        %2807 = vmatmul.mubr.bf16.gmra.mrb[0].mxu0 %v2645
        %v2808 = vpop.f32.mrb[0].mxu0
        %v2809 = vadd.f32 0.0, %v2808
        %v2810 = vpop.f32.mrb[0].mxu0
        %v2811 = vpop.f32.mrb[0].mxu0
        %v2812 = vadd.f32 0.0, %v2811
        %v2813 = vpop.f32.mrb[0].mxu0
        %2814 = vmatprep.mubr.bf16.mxu0 0
        %2815 = vmatmul.mubr.bf16.gmra.mrb[0].mxu0 %v2646
        %v2816 = vpop.f32.mrb[0].mxu0
        %v2817 = vadd.f32 0.0, %v2816
        %v2818 = vpop.f32.mrb[0].mxu0
        %v2819 = vpop.f32.mrb[0].mxu0
        %v2820 = vadd.f32 0.0, %v2819
        %v2821 = vpop.f32.mrb[0].mxu0
        %2822 = vmatprep.mubr.bf16.mxu0 0
        %2823 = vmatmul.mubr.bf16.gmra.mrb[0].mxu0 %v2647
        %v2824 = vpop.f32.mrb[0].mxu0
        %v2825 = vadd.f32 0.0, %v2824
        %v2826 = vpop.f32.mrb[0].mxu0
        %v2827 = vpop.f32.mrb[0].mxu0
        %v2828 = vadd.f32 0.0, %v2827
        %v2829 = vpop.f32.mrb[0].mxu0
        %2830 = vmatprep.mubr.bf16.mxu0 0
        %2831 = vmatmul.mubr.bf16.gmra.mrb[0].mxu0 %v2648
        %v2832 = vpop.f32.mrb[0].mxu0
        %v2833 = vadd.f32 0.0, %v2832
        %v2834 = vpop.f32.mrb[0].mxu0
        %v2835 = vpop.f32.mrb[0].mxu0
        %v2836 = vadd.f32 0.0, %v2835
        %v2837 = vpop.f32.mrb[0].mxu0
        %2838 = vmatprep.mubr.bf16.mxu0 0
        %2839 = vmatmul.mubr.bf16.gmra.mrb[0].mxu0 %v2649
        %v2840 = vpop.f32.mrb[0].mxu0
        %v2841 = vadd.f32 0.0, %v2840
        %v2842 = vpop.f32.mrb[0].mxu0
        %v2843 = vpop.f32.mrb[0].mxu0
        %v2844 = vadd.f32 0.0, %v2843
        %v2845 = vpop.f32.mrb[0].mxu0
        %2846 = vmatprep.mubr.bf16.mxu0 0
        %2847 = vmatmul.mubr.bf16.gmra.mrb[0].mxu0 %v2650
        %v2848 = vpop.f32.mrb[0].mxu0
        %v2849 = vadd.f32 0.0, %v2848
        %v2850 = vpop.f32.mrb[0].mxu0
        %v2851 = vpop.f32.mrb[0].mxu0
        %v2852 = vadd.f32 0.0, %v2851
        %v2853 = vpop.f32.mrb[0].mxu0
        %2854 = vmatprep.mubr.bf16.mxu0 0
        %2855 = vmatmul.mubr.bf16.gmra.mrb[0].mxu0 %v2651
        %v2856 = vpop.f32.mrb[0].mxu0
        %v2857 = vadd.f32 0.0, %v2856
        %v2858 = vpop.f32.mrb[0].mxu0
        %v2859 = vpop.f32.mrb[0].mxu0
        %v2860 = vadd.f32 0.0, %v2859
        %v2861 = vpop.f32.mrb[0].mxu0
        %2862 = vmatprep.mubr.bf16.mxu0 0
        %2863 = vmatmul.mubr.bf16.gmra.mrb[0].mxu0 %v2652
        %v2864 = vpop.f32.mrb[0].mxu0
        %v2865 = vadd.f32 0.0, %v2864
        %v2866 = vpop.f32.mrb[0].mxu0
        %v2867 = vpop.f32.mrb[0].mxu0
        %v2868 = vadd.f32 0.0, %v2867
        %v2869 = vpop.f32.mrb[0].mxu0
        %2870 = vmatprep.mubr.bf16.mxu0 0
        %2871 = vmatmul.mubr.bf16.gmra.mrb[0].mxu0 %v2653
        %v2872 = vpop.f32.mrb[0].mxu0
        %v2873 = vadd.f32 0.0, %v2872
        %v2874 = vpop.f32.mrb[0].mxu0
        %v2875 = vpop.f32.mrb[0].mxu0
        %v2876 = vadd.f32 0.0, %v2875
        %v2877 = vpop.f32.mrb[0].mxu0
        %2878 = vdwg.mxu0
        %v2879 = vadd.f32 %v2125, %v2753
        %v2880 = vadd.f32 %v2126, %v2756
        %v2881 = vadd.f32 %v2127, %v2761
        %v2882 = vadd.f32 %v2128, %v2764
        %v2883 = vadd.f32 %v2129, %v2769
        %v2884 = vadd.f32 %v2130, %v2772
        %v2885 = vadd.f32 %v2131, %v2777
        %v2886 = vadd.f32 %v2132, %v2780
        %v2887 = vadd.f32 %v2133, %v2785
        %v2888 = vadd.f32 %v2134, %v2788
        %v2889 = vadd.f32 %v2135, %v2793
        %v2890 = vadd.f32 %v2136, %v2796
        %v2891 = vadd.f32 %v2137, %v2801
        %v2892 = vadd.f32 %v2138, %v2804
        %v2893 = vadd.f32 %v2139, %v2809
        %v2894 = vadd.f32 %v2140, %v2812
        %v2895 = vadd.f32 %v2141, %v2817
        %v2896 = vadd.f32 %v2142, %v2820
        %v2897 = vadd.f32 %v2143, %v2825
        %v2898 = vadd.f32 %v2144, %v2828
        %v2899 = vadd.f32 %v2145, %v2833
        %v2900 = vadd.f32 %v2146, %v2836
        %v2901 = vadd.f32 %v2147, %v2841
        %v2902 = vadd.f32 %v2148, %v2844
        %v2903 = vadd.f32 %v2149, %v2849
        %v2904 = vadd.f32 %v2150, %v2852
        %v2905 = vadd.f32 %v2151, %v2857
        %v2906 = vadd.f32 %v2152, %v2860
        %v2907 = vadd.f32 %v2153, %v2865
        %v2908 = vadd.f32 %v2154, %v2868
        %v2909 = vadd.f32 %v2155, %v2873
        %v2910 = vadd.f32 %v2156, %v2876
        %v2911 = vld [vmem:[%s1770] sm:$0xe]
        %v2912 = vld [vmem:[%s1770 + $0xc] sm:$0xe]
        %v2913 = vld [vmem:[%s1770 + $0x18] sm:$0xe]
        %v2914 = vld [vmem:[%s1770 + $0x24] sm:$0xe]
        %v2915 = vld [vmem:[%s1770 + $0x30] sm:$0xe]
        %v2916 = vld [vmem:[%s1770 + $0x3c] sm:$0xe]
        %v2917 = vld [vmem:[%s1770 + $0x48] sm:$0xe]
        %v2918 = vld [vmem:[%s1770 + $0x54] sm:$0xe]
        %v2919 = vld [vmem:[%s1770 + $0x60] sm:$0xe]
        %v2920 = vld [vmem:[%s1770 + $0x6c] sm:$0xe]
        %v2921 = vld [vmem:[%s1770 + $0x78] sm:$0xe]
        %v2922 = vld [vmem:[%s1770 + $0x84] sm:$0xe]
        %v2923 = vld [vmem:[%s1770 + $0x90] sm:$0xe]
        %v2924 = vld [vmem:[%s1770 + $0x9c] sm:$0xe]
        %v2925 = vld [vmem:[%s1770 + $0xa8] sm:$0xe]
        %v2926 = vld [vmem:[%s1770 + $0xb4] sm:$0xe]
        %v2975 = vrot.slane %v2911, 5
        %v2976 = vrot.slane %v2975, 4
        %v2977 = vrot.slane %v2158, 5
        %v2978 = vsel %vm1335, %v2976, %v2977
        %v2979 = vrot.slane %v2977, 4
        %v2980 = vrot.slane %v2159, 5
        %v2981 = vsel %vm1335, %v2979, %v2980
        %v2982 = vrot.slane %v2912, 5
        %v2983 = vrot.slane %v2982, 4
        %v2984 = vrot.slane %v2161, 5
        %v2985 = vsel %vm1335, %v2983, %v2984
        %v2986 = vrot.slane %v2984, 4
        %v2987 = vrot.slane %v2162, 5
        %v2988 = vsel %vm1335, %v2986, %v2987
        %v2989 = vrot.slane %v2913, 5
        %v2990 = vrot.slane %v2989, 4
        %v2991 = vrot.slane %v2164, 5
        %v2992 = vsel %vm1335, %v2990, %v2991
        %v2993 = vrot.slane %v2991, 4
        %v2994 = vrot.slane %v2165, 5
        %v2995 = vsel %vm1335, %v2993, %v2994
        %v2996 = vrot.slane %v2914, 5
        %v2997 = vrot.slane %v2996, 4
        %v2998 = vrot.slane %v2167, 5
        %v2999 = vsel %vm1335, %v2997, %v2998
        %v3000 = vrot.slane %v2998, 4
        %v3001 = vrot.slane %v2168, 5
        %v3002 = vsel %vm1335, %v3000, %v3001
        %v3003 = vrot.slane %v2915, 5
        %v3004 = vrot.slane %v3003, 4
        %v3005 = vrot.slane %v2170, 5
        %v3006 = vsel %vm1335, %v3004, %v3005
        %v3007 = vrot.slane %v3005, 4
        %v3008 = vrot.slane %v2171, 5
        %v3009 = vsel %vm1335, %v3007, %v3008
        %v3010 = vrot.slane %v2916, 5
        %v3011 = vrot.slane %v3010, 4
        %v3012 = vrot.slane %v2173, 5
        %v3013 = vsel %vm1335, %v3011, %v3012
        %v3014 = vrot.slane %v3012, 4
        %v3015 = vrot.slane %v2174, 5
        %v3016 = vsel %vm1335, %v3014, %v3015
        %v3017 = vrot.slane %v2917, 5
        %v3018 = vrot.slane %v3017, 4
        %v3019 = vrot.slane %v2176, 5
        %v3020 = vsel %vm1335, %v3018, %v3019
        %v3021 = vrot.slane %v3019, 4
        %v3022 = vrot.slane %v2177, 5
        %v3023 = vsel %vm1335, %v3021, %v3022
        %v3024 = vrot.slane %v2918, 5
        %v3025 = vrot.slane %v3024, 4
        %v3026 = vrot.slane %v2179, 5
        %v3027 = vsel %vm1335, %v3025, %v3026
        %v3028 = vrot.slane %v3026, 4
        %v3029 = vrot.slane %v2180, 5
        %v3030 = vsel %vm1335, %v3028, %v3029
        %v3031 = vrot.slane %v2919, 5
        %v3032 = vrot.slane %v3031, 4
        %v3033 = vrot.slane %v2182, 5
        %v3034 = vsel %vm1335, %v3032, %v3033
        %v3035 = vrot.slane %v3033, 4
        %v3036 = vrot.slane %v2183, 5
        %v3037 = vsel %vm1335, %v3035, %v3036
        %v3038 = vrot.slane %v2920, 5
        %v3039 = vrot.slane %v3038, 4
        %v3040 = vrot.slane %v2185, 5
        %v3041 = vsel %vm1335, %v3039, %v3040
        %v3042 = vrot.slane %v3040, 4
        %v3043 = vrot.slane %v2186, 5
        %v3044 = vsel %vm1335, %v3042, %v3043
        %v3045 = vrot.slane %v2921, 5
        %v3046 = vrot.slane %v3045, 4
        %v3047 = vrot.slane %v2188, 5
        %v3048 = vsel %vm1335, %v3046, %v3047
        %v3049 = vrot.slane %v3047, 4
        %v3050 = vrot.slane %v2189, 5
        %v3051 = vsel %vm1335, %v3049, %v3050
        %v3052 = vrot.slane %v2922, 5
        %v3053 = vrot.slane %v3052, 4
        %v3054 = vrot.slane %v2191, 5
        %v3055 = vsel %vm1335, %v3053, %v3054
        %v3056 = vrot.slane %v3054, 4
        %v3057 = vrot.slane %v2192, 5
        %v3058 = vsel %vm1335, %v3056, %v3057
        %v3059 = vrot.slane %v2923, 5
        %v3060 = vrot.slane %v3059, 4
        %v3061 = vrot.slane %v2194, 5
        %v3062 = vsel %vm1335, %v3060, %v3061
        %v3063 = vrot.slane %v3061, 4
        %v3064 = vrot.slane %v2195, 5
        %v3065 = vsel %vm1335, %v3063, %v3064
        %v3066 = vrot.slane %v2924, 5
        %v3067 = vrot.slane %v3066, 4
        %v3068 = vrot.slane %v2197, 5
        %v3069 = vsel %vm1335, %v3067, %v3068
        %v3070 = vrot.slane %v3068, 4
        %v3071 = vrot.slane %v2198, 5
        %v3072 = vsel %vm1335, %v3070, %v3071
        %v3073 = vrot.slane %v2925, 5
        %v3074 = vrot.slane %v3073, 4
        %v3075 = vrot.slane %v2200, 5
        %v3076 = vsel %vm1335, %v3074, %v3075
        %v3077 = vrot.slane %v3075, 4
        %v3078 = vrot.slane %v2201, 5
        %v3079 = vsel %vm1335, %v3077, %v3078
        %v3080 = vrot.slane %v2926, 5
        %v3081 = vrot.slane %v3080, 4
        %v3082 = vrot.slane %v2203, 5
        %v3083 = vsel %vm1335, %v3081, %v3082
        %v3084 = vrot.slane %v3082, 4
        %v3085 = vrot.slane %v2204, 5
        %v3086 = vsel %vm1335, %v3084, %v3085
        %s3087 = scalar_lea.vmem %s1, 320
        %v3088 = vld [vmem:[%s3087] sm:$0xf]
        %v3089 = vld [vmem:[%s3087 + $0x4] sm:$0xf]
        %v3090 = vld [vmem:[%s3087 + $0x8] sm:$0xf]
        %v3091 = vld [vmem:[%s3087 + $0xc] sm:$0xf]
        %v3092 = vld [vmem:[%s3087 + $0x10] sm:$0xf]
        %v3093 = vld [vmem:[%s3087 + $0x14] sm:$0xf]
        %v3094 = vld [vmem:[%s3087 + $0x18] sm:$0xf]
        %v3095 = vld [vmem:[%s3087 + $0x1c] sm:$0xf]
        %v3096 = vld [vmem:[%s3087 + $0x20] sm:$0xf]
        %v3097 = vld [vmem:[%s3087 + $0x24] sm:$0xf]
        %v3098 = vld [vmem:[%s3087 + $0x28] sm:$0xf]
        %v3099 = vld [vmem:[%s3087 + $0x2c] sm:$0xf]
        %v3100 = vld [vmem:[%s3087 + $0x30] sm:$0xf]
        %v3101 = vld [vmem:[%s3087 + $0x34] sm:$0xf]
        %v3102 = vld [vmem:[%s3087 + $0x38] sm:$0xf]
        %v3103 = vld [vmem:[%s3087 + $0x3c] sm:$0xf]
        %v3104 = vunpack.c.l.b16 %v2978
        %v3105 = vunpack.c.l.b16 %v2981
        %v3106 = vunpack.c.l.b16 %v2985
        %v3107 = vunpack.c.l.b16 %v2988
        %v3108 = vunpack.c.l.b16 %v2992
        %v3109 = vunpack.c.l.b16 %v2995
        %v3110 = vunpack.c.l.b16 %v2999
        %v3111 = vunpack.c.l.b16 %v3002
        %v3112 = vunpack.c.l.b16 %v3006
        %v3113 = vunpack.c.l.b16 %v3009
        %v3114 = vunpack.c.l.b16 %v3013
        %v3115 = vunpack.c.l.b16 %v3016
        %v3116 = vunpack.c.l.b16 %v3020
        %v3117 = vunpack.c.l.b16 %v3023
        %v3118 = vunpack.c.l.b16 %v3027
        %v3119 = vunpack.c.l.b16 %v3030
        %v3120 = vunpack.c.l.b16 %v3034
        %v3121 = vunpack.c.l.b16 %v3037
        %v3122 = vunpack.c.l.b16 %v3041
        %v3123 = vunpack.c.l.b16 %v3044
        %v3124 = vunpack.c.l.b16 %v3048
        %v3125 = vunpack.c.l.b16 %v3051
        %v3126 = vunpack.c.l.b16 %v3055
        %v3127 = vunpack.c.l.b16 %v3058
        %v3128 = vunpack.c.l.b16 %v3062
        %v3129 = vunpack.c.l.b16 %v3065
        %v3130 = vunpack.c.l.b16 %v3069
        %v3131 = vunpack.c.l.b16 %v3072
        %v3132 = vunpack.c.l.b16 %v3076
        %v3133 = vunpack.c.l.b16 %v3079
        %v3134 = vunpack.c.l.b16 %v3083
        %v3135 = vunpack.c.l.b16 %v3086
        %v3136 = vpack.c.b16 %v3105, %v3104
        %v3137 = vpack.c.b16 %v3107, %v3106
        %v3138 = vpack.c.b16 %v3109, %v3108
        %v3139 = vpack.c.b16 %v3111, %v3110
        %v3140 = vpack.c.b16 %v3113, %v3112
        %v3141 = vpack.c.b16 %v3115, %v3114
        %v3142 = vpack.c.b16 %v3117, %v3116
        %v3143 = vpack.c.b16 %v3119, %v3118
        %v3144 = vpack.c.b16 %v3121, %v3120
        %v3145 = vpack.c.b16 %v3123, %v3122
        %v3146 = vpack.c.b16 %v3125, %v3124
        %v3147 = vpack.c.b16 %v3127, %v3126
        %v3148 = vpack.c.b16 %v3129, %v3128
        %v3149 = vpack.c.b16 %v3131, %v3130
        %v3150 = vpack.c.b16 %v3133, %v3132
        %v3151 = vpack.c.b16 %v3135, %v3134
        %v3184 = vunpack.c.l.b16 %v3088
        %v3185 = vunpack.c.l.b16 %v3089
        %v3186 = vunpack.c.l.b16 %v3090
        %v3187 = vunpack.c.l.b16 %v3091
        %v3188 = vunpack.c.l.b16 %v3092
        %v3189 = vunpack.c.l.b16 %v3093
        %v3190 = vunpack.c.l.b16 %v3094
        %v3191 = vunpack.c.l.b16 %v3095
        %v3192 = vunpack.c.l.b16 %v3096
        %v3193 = vunpack.c.l.b16 %v3097
        %v3194 = vunpack.c.l.b16 %v3098
        %v3195 = vunpack.c.l.b16 %v3099
        %v3196 = vunpack.c.l.b16 %v3100
        %v3197 = vunpack.c.l.b16 %v3101
        %v3198 = vunpack.c.l.b16 %v3102
        %v3199 = vunpack.c.l.b16 %v3103
        %v3200 = vpack.c.b16 %v3185, %v3184
        %v3201 = vpack.c.b16 %v3187, %v3186
        %v3202 = vpack.c.b16 %v3189, %v3188
        %v3203 = vpack.c.b16 %v3191, %v3190
        %v3204 = vpack.c.b16 %v3193, %v3192
        %v3205 = vpack.c.b16 %v3195, %v3194
        %v3206 = vpack.c.b16 %v3197, %v3196
        %v3207 = vpack.c.b16 %v3199, %v3198
        %3216 = vmatprep.subr.bf16.mxu0 0
        %3217 = vmatpush1.bf16.msra.mxu0 %v3200
        %3218 = vmatprep.subr.bf16.mxu0 0
        %3219 = vmatpush1.bf16.msra.mxu0 %v3201
        %3220 = vmatprep.subr.bf16.mxu0 0
        %3221 = vmatpush1.bf16.msra.mxu0 %v3202
        %3222 = vmatprep.subr.bf16.mxu0 0
        %3223 = vmatpush1.bf16.msra.mxu0 %v3203
        %3224 = vmatprep.subr.bf16.mxu0 0
        %3225 = vmatpush1.bf16.msra.mxu0 %v3204
        %3226 = vmatprep.subr.bf16.mxu0 0
        %3227 = vmatpush1.bf16.msra.mxu0 %v3205
        %3228 = vmatprep.subr.bf16.mxu0 0
        %3229 = vmatpush1.bf16.msra.mxu0 %v3206
        %3230 = vmatprep.subr.bf16.mxu0 0
        %3231 = vmatpush1.bf16.msra.mxu0 %v3207
        %3232 = vmatprep.subr.bf16.mxu0 0
        %3233 = vmatpush1.bf16.msra.mxu0 0
        %3234 = vmatprep.subr.bf16.mxu0 0
        %3235 = vmatpush1.bf16.msra.mxu0 0
        %3236 = vmatprep.subr.bf16.mxu0 0
        %3237 = vmatpush1.bf16.msra.mxu0 0
        %3238 = vmatprep.subr.bf16.mxu0 0
        %3239 = vmatpush1.bf16.msra.mxu0 0
        %3240 = vmatprep.subr.bf16.mxu0 0
        %3241 = vmatpush1.bf16.msra.mxu0 0
        %3242 = vmatprep.subr.bf16.mxu0 0
        %3243 = vmatpush1.bf16.msra.mxu0 0
        %3244 = vmatprep.subr.bf16.mxu0 0
        %3245 = vmatpush1.bf16.msra.mxu0 0
        %3246 = vmatprep.subr.bf16.mxu0 0
        %3247 = vmatpush1.bf16.msra.mxu0 0
        %3248 = vmatprep.mubr.bf16.mxu0 0
        %3249 = vmatmul.mubr.bf16.gmra.mrb[0].mxu0 %v3136
        %v3250 = vpop.f32.mrb[0].mxu0
        %v3251 = vadd.f32 0.0, %v3250
        %v3252 = vpop.f32.mrb[0].mxu0
        %v3253 = vpop.f32.mrb[0].mxu0
        %v3254 = vadd.f32 0.0, %v3253
        %v3255 = vpop.f32.mrb[0].mxu0
        %3256 = vmatprep.mubr.bf16.mxu0 0
        %3257 = vmatmul.mubr.bf16.gmra.mrb[0].mxu0 %v3137
        %v3258 = vpop.f32.mrb[0].mxu0
        %v3259 = vadd.f32 0.0, %v3258
        %v3260 = vpop.f32.mrb[0].mxu0
        %v3261 = vpop.f32.mrb[0].mxu0
        %v3262 = vadd.f32 0.0, %v3261
        %v3263 = vpop.f32.mrb[0].mxu0
        %3264 = vmatprep.mubr.bf16.mxu0 0
        %3265 = vmatmul.mubr.bf16.gmra.mrb[0].mxu0 %v3138
        %v3266 = vpop.f32.mrb[0].mxu0
        %v3267 = vadd.f32 0.0, %v3266
        %v3268 = vpop.f32.mrb[0].mxu0
        %v3269 = vpop.f32.mrb[0].mxu0
        %v3270 = vadd.f32 0.0, %v3269
        %v3271 = vpop.f32.mrb[0].mxu0
        %3272 = vmatprep.mubr.bf16.mxu0 0
        %3273 = vmatmul.mubr.bf16.gmra.mrb[0].mxu0 %v3139
        %v3274 = vpop.f32.mrb[0].mxu0
        %v3275 = vadd.f32 0.0, %v3274
        %v3276 = vpop.f32.mrb[0].mxu0
        %v3277 = vpop.f32.mrb[0].mxu0
        %v3278 = vadd.f32 0.0, %v3277
        %v3279 = vpop.f32.mrb[0].mxu0
        %3280 = vmatprep.mubr.bf16.mxu0 0
        %3281 = vmatmul.mubr.bf16.gmra.mrb[0].mxu0 %v3140
        %v3282 = vpop.f32.mrb[0].mxu0
        %v3283 = vadd.f32 0.0, %v3282
        %v3284 = vpop.f32.mrb[0].mxu0
        %v3285 = vpop.f32.mrb[0].mxu0
        %v3286 = vadd.f32 0.0, %v3285
        %v3287 = vpop.f32.mrb[0].mxu0
        %3288 = vmatprep.mubr.bf16.mxu0 0
        %3289 = vmatmul.mubr.bf16.gmra.mrb[0].mxu0 %v3141
        %v3290 = vpop.f32.mrb[0].mxu0
        %v3291 = vadd.f32 0.0, %v3290
        %v3292 = vpop.f32.mrb[0].mxu0
        %v3293 = vpop.f32.mrb[0].mxu0
        %v3294 = vadd.f32 0.0, %v3293
        %v3295 = vpop.f32.mrb[0].mxu0
        %3296 = vmatprep.mubr.bf16.mxu0 0
        %3297 = vmatmul.mubr.bf16.gmra.mrb[0].mxu0 %v3142
        %v3298 = vpop.f32.mrb[0].mxu0
        %v3299 = vadd.f32 0.0, %v3298
        %v3300 = vpop.f32.mrb[0].mxu0
        %v3301 = vpop.f32.mrb[0].mxu0
        %v3302 = vadd.f32 0.0, %v3301
        %v3303 = vpop.f32.mrb[0].mxu0
        %3304 = vmatprep.mubr.bf16.mxu0 0
        %3305 = vmatmul.mubr.bf16.gmra.mrb[0].mxu0 %v3143
        %v3306 = vpop.f32.mrb[0].mxu0
        %v3307 = vadd.f32 0.0, %v3306
        %v3308 = vpop.f32.mrb[0].mxu0
        %v3309 = vpop.f32.mrb[0].mxu0
        %v3310 = vadd.f32 0.0, %v3309
        %v3311 = vpop.f32.mrb[0].mxu0
        %3312 = vmatprep.mubr.bf16.mxu0 0
        %3313 = vmatmul.mubr.bf16.gmra.mrb[0].mxu0 %v3144
        %v3314 = vpop.f32.mrb[0].mxu0
        %v3315 = vadd.f32 0.0, %v3314
        %v3316 = vpop.f32.mrb[0].mxu0
        %v3317 = vpop.f32.mrb[0].mxu0
        %v3318 = vadd.f32 0.0, %v3317
        %v3319 = vpop.f32.mrb[0].mxu0
        %3320 = vmatprep.mubr.bf16.mxu0 0
        %3321 = vmatmul.mubr.bf16.gmra.mrb[0].mxu0 %v3145
        %v3322 = vpop.f32.mrb[0].mxu0
        %v3323 = vadd.f32 0.0, %v3322
        %v3324 = vpop.f32.mrb[0].mxu0
        %v3325 = vpop.f32.mrb[0].mxu0
        %v3326 = vadd.f32 0.0, %v3325
        %v3327 = vpop.f32.mrb[0].mxu0
        %3328 = vmatprep.mubr.bf16.mxu0 0
        %3329 = vmatmul.mubr.bf16.gmra.mrb[0].mxu0 %v3146
        %v3330 = vpop.f32.mrb[0].mxu0
        %v3331 = vadd.f32 0.0, %v3330
        %v3332 = vpop.f32.mrb[0].mxu0
        %v3333 = vpop.f32.mrb[0].mxu0
        %v3334 = vadd.f32 0.0, %v3333
        %v3335 = vpop.f32.mrb[0].mxu0
        %3336 = vmatprep.mubr.bf16.mxu0 0
        %3337 = vmatmul.mubr.bf16.gmra.mrb[0].mxu0 %v3147
        %v3338 = vpop.f32.mrb[0].mxu0
        %v3339 = vadd.f32 0.0, %v3338
        %v3340 = vpop.f32.mrb[0].mxu0
        %v3341 = vpop.f32.mrb[0].mxu0
        %v3342 = vadd.f32 0.0, %v3341
        %v3343 = vpop.f32.mrb[0].mxu0
        %3344 = vmatprep.mubr.bf16.mxu0 0
        %3345 = vmatmul.mubr.bf16.gmra.mrb[0].mxu0 %v3148
        %v3346 = vpop.f32.mrb[0].mxu0
        %v3347 = vadd.f32 0.0, %v3346
        %v3348 = vpop.f32.mrb[0].mxu0
        %v3349 = vpop.f32.mrb[0].mxu0
        %v3350 = vadd.f32 0.0, %v3349
        %v3351 = vpop.f32.mrb[0].mxu0
        %3352 = vmatprep.mubr.bf16.mxu0 0
        %3353 = vmatmul.mubr.bf16.gmra.mrb[0].mxu0 %v3149
        %v3354 = vpop.f32.mrb[0].mxu0
        %v3355 = vadd.f32 0.0, %v3354
        %v3356 = vpop.f32.mrb[0].mxu0
        %v3357 = vpop.f32.mrb[0].mxu0
        %v3358 = vadd.f32 0.0, %v3357
        %v3359 = vpop.f32.mrb[0].mxu0
        %3360 = vmatprep.mubr.bf16.mxu0 0
        %3361 = vmatmul.mubr.bf16.gmra.mrb[0].mxu0 %v3150
        %v3362 = vpop.f32.mrb[0].mxu0
        %v3363 = vadd.f32 0.0, %v3362
        %v3364 = vpop.f32.mrb[0].mxu0
        %v3365 = vpop.f32.mrb[0].mxu0
        %v3366 = vadd.f32 0.0, %v3365
        %v3367 = vpop.f32.mrb[0].mxu0
        %3368 = vmatprep.mubr.bf16.mxu0 0
        %3369 = vmatmul.mubr.bf16.gmra.mrb[0].mxu0 %v3151
        %v3370 = vpop.f32.mrb[0].mxu0
        %v3371 = vadd.f32 0.0, %v3370
        %v3372 = vpop.f32.mrb[0].mxu0
        %v3373 = vpop.f32.mrb[0].mxu0
        %v3374 = vadd.f32 0.0, %v3373
        %v3375 = vpop.f32.mrb[0].mxu0
        %3376 = vdwg.mxu0
        %v3377 = vadd.f32 %v2879, %v3251
        %v3378 = vadd.f32 %v2880, %v3254
        %v3379 = vadd.f32 %v2881, %v3259
        %v3380 = vadd.f32 %v2882, %v3262
        %v3381 = vadd.f32 %v2883, %v3267
        %v3382 = vadd.f32 %v2884, %v3270
        %v3383 = vadd.f32 %v2885, %v3275
        %v3384 = vadd.f32 %v2886, %v3278
        %v3385 = vadd.f32 %v2887, %v3283
        %v3386 = vadd.f32 %v2888, %v3286
        %v3387 = vadd.f32 %v2889, %v3291
        %v3388 = vadd.f32 %v2890, %v3294
        %v3389 = vadd.f32 %v2891, %v3299
        %v3390 = vadd.f32 %v2892, %v3302
        %v3391 = vadd.f32 %v2893, %v3307
        %v3392 = vadd.f32 %v2894, %v3310
        %v3393 = vadd.f32 %v2895, %v3315
        %v3394 = vadd.f32 %v2896, %v3318
        %v3395 = vadd.f32 %v2897, %v3323
        %v3396 = vadd.f32 %v2898, %v3326
        %v3397 = vadd.f32 %v2899, %v3331
        %v3398 = vadd.f32 %v2900, %v3334
        %v3399 = vadd.f32 %v2901, %v3339
        %v3400 = vadd.f32 %v2902, %v3342
        %v3401 = vadd.f32 %v2903, %v3347
        %v3402 = vadd.f32 %v2904, %v3350
        %v3403 = vadd.f32 %v2905, %v3355
        %v3404 = vadd.f32 %v2906, %v3358
        %v3405 = vadd.f32 %v2907, %v3363
        %v3406 = vadd.f32 %v2908, %v3366
        %v3407 = vadd.f32 %v2909, %v3371
        %v3408 = vadd.f32 %v2910, %v3374
        %s3409 = scalar_lea.vmem %s237, 24
        %v3410 = vld [vmem:[%s3409] sm:$0xf]
        %v3411 = vld [vmem:[%s3409 + $0x4] sm:$0xf]
        %v3412 = vld [vmem:[%s3409 + $0xc] sm:$0xf]
        %v3413 = vld [vmem:[%s3409 + $0x10] sm:$0xf]
        %v3414 = vld [vmem:[%s3409 + $0x18] sm:$0xf]
        %v3415 = vld [vmem:[%s3409 + $0x1c] sm:$0xf]
        %v3416 = vld [vmem:[%s3409 + $0x24] sm:$0xf]
        %v3417 = vld [vmem:[%s3409 + $0x28] sm:$0xf]
        %v3418 = vld [vmem:[%s3409 + $0x30] sm:$0xf]
        %v3419 = vld [vmem:[%s3409 + $0x34] sm:$0xf]
        %v3420 = vld [vmem:[%s3409 + $0x3c] sm:$0xf]
        %v3421 = vld [vmem:[%s3409 + $0x40] sm:$0xf]
        %v3422 = vld [vmem:[%s3409 + $0x48] sm:$0xf]
        %v3423 = vld [vmem:[%s3409 + $0x4c] sm:$0xf]
        %v3424 = vld [vmem:[%s3409 + $0x54] sm:$0xf]
        %v3425 = vld [vmem:[%s3409 + $0x58] sm:$0xf]
        %v3426 = vld [vmem:[%s3409 + $0x60] sm:$0xf]
        %v3427 = vld [vmem:[%s3409 + $0x64] sm:$0xf]
        %v3428 = vld [vmem:[%s3409 + $0x6c] sm:$0xf]
        %v3429 = vld [vmem:[%s3409 + $0x70] sm:$0xf]
        %v3430 = vld [vmem:[%s3409 + $0x78] sm:$0xf]
        %v3431 = vld [vmem:[%s3409 + $0x7c] sm:$0xf]
        %v3432 = vld [vmem:[%s3409 + $0x84] sm:$0xf]
        %v3433 = vld [vmem:[%s3409 + $0x88] sm:$0xf]
        %v3434 = vld [vmem:[%s3409 + $0x90] sm:$0xf]
        %v3435 = vld [vmem:[%s3409 + $0x94] sm:$0xf]
        %v3436 = vld [vmem:[%s3409 + $0x9c] sm:$0xf]
        %v3437 = vld [vmem:[%s3409 + $0xa0] sm:$0xf]
        %v3438 = vld [vmem:[%s3409 + $0xa8] sm:$0xf]
        %v3439 = vld [vmem:[%s3409 + $0xac] sm:$0xf]
        %v3440 = vld [vmem:[%s3409 + $0xb4] sm:$0xf]
        %v3441 = vld [vmem:[%s3409 + $0xb8] sm:$0xf]
        %s3442 = scalar_lea.vmem %s1, 384
        %v3443 = vld [vmem:[%s3442] sm:$0xf]
        %v3444 = vld [vmem:[%s3442 + $0x4] sm:$0xf]
        %v3445 = vld [vmem:[%s3442 + $0x8] sm:$0xf]
        %v3446 = vld [vmem:[%s3442 + $0xc] sm:$0xf]
        %v3447 = vld [vmem:[%s3442 + $0x10] sm:$0xf]
        %v3448 = vld [vmem:[%s3442 + $0x14] sm:$0xf]
        %v3449 = vld [vmem:[%s3442 + $0x18] sm:$0xf]
        %v3450 = vld [vmem:[%s3442 + $0x1c] sm:$0xf]
        %v3451 = vld [vmem:[%s3442 + $0x20] sm:$0xf]
        %v3452 = vld [vmem:[%s3442 + $0x24] sm:$0xf]
        %v3453 = vld [vmem:[%s3442 + $0x28] sm:$0xf]
        %v3454 = vld [vmem:[%s3442 + $0x2c] sm:$0xf]
        %v3455 = vld [vmem:[%s3442 + $0x30] sm:$0xf]
        %v3456 = vld [vmem:[%s3442 + $0x34] sm:$0xf]
        %v3457 = vld [vmem:[%s3442 + $0x38] sm:$0xf]
        %v3458 = vld [vmem:[%s3442 + $0x3c] sm:$0xf]
        %v3491 = vunpack.c.l.b16 %v3410
        %v3492 = vunpack.c.l.b16 %v3411
        %v3493 = vunpack.c.l.b16 %v3412
        %v3494 = vunpack.c.l.b16 %v3413
        %v3495 = vunpack.c.l.b16 %v3414
        %v3496 = vunpack.c.l.b16 %v3415
        %v3497 = vunpack.c.l.b16 %v3416
        %v3498 = vunpack.c.l.b16 %v3417
        %v3499 = vunpack.c.l.b16 %v3418
        %v3500 = vunpack.c.l.b16 %v3419
        %v3501 = vunpack.c.l.b16 %v3420
        %v3502 = vunpack.c.l.b16 %v3421
        %v3503 = vunpack.c.l.b16 %v3422
        %v3504 = vunpack.c.l.b16 %v3423
        %v3505 = vunpack.c.l.b16 %v3424
        %v3506 = vunpack.c.l.b16 %v3425
        %v3507 = vunpack.c.l.b16 %v3426
        %v3508 = vunpack.c.l.b16 %v3427
        %v3509 = vunpack.c.l.b16 %v3428
        %v3510 = vunpack.c.l.b16 %v3429
        %v3511 = vunpack.c.l.b16 %v3430
        %v3512 = vunpack.c.l.b16 %v3431
        %v3513 = vunpack.c.l.b16 %v3432
        %v3514 = vunpack.c.l.b16 %v3433
        %v3515 = vunpack.c.l.b16 %v3434
        %v3516 = vunpack.c.l.b16 %v3435
        %v3517 = vunpack.c.l.b16 %v3436
        %v3518 = vunpack.c.l.b16 %v3437
        %v3519 = vunpack.c.l.b16 %v3438
        %v3520 = vunpack.c.l.b16 %v3439
        %v3521 = vunpack.c.l.b16 %v3440
        %v3522 = vunpack.c.l.b16 %v3441
        %v3523 = vpack.c.b16 %v3492, %v3491
        %v3524 = vpack.c.b16 %v3494, %v3493
        %v3525 = vpack.c.b16 %v3496, %v3495
        %v3526 = vpack.c.b16 %v3498, %v3497
        %v3527 = vpack.c.b16 %v3500, %v3499
        %v3528 = vpack.c.b16 %v3502, %v3501
        %v3529 = vpack.c.b16 %v3504, %v3503
        %v3530 = vpack.c.b16 %v3506, %v3505
        %v3531 = vpack.c.b16 %v3508, %v3507
        %v3532 = vpack.c.b16 %v3510, %v3509
        %v3533 = vpack.c.b16 %v3512, %v3511
        %v3534 = vpack.c.b16 %v3514, %v3513
        %v3535 = vpack.c.b16 %v3516, %v3515
        %v3536 = vpack.c.b16 %v3518, %v3517
        %v3537 = vpack.c.b16 %v3520, %v3519
        %v3538 = vpack.c.b16 %v3522, %v3521
        %v3571 = vunpack.c.l.b16 %v3443
        %v3572 = vunpack.c.l.b16 %v3444
        %v3573 = vunpack.c.l.b16 %v3445
        %v3574 = vunpack.c.l.b16 %v3446
        %v3575 = vunpack.c.l.b16 %v3447
        %v3576 = vunpack.c.l.b16 %v3448
        %v3577 = vunpack.c.l.b16 %v3449
        %v3578 = vunpack.c.l.b16 %v3450
        %v3579 = vunpack.c.l.b16 %v3451
        %v3580 = vunpack.c.l.b16 %v3452
        %v3581 = vunpack.c.l.b16 %v3453
        %v3582 = vunpack.c.l.b16 %v3454
        %v3583 = vunpack.c.l.b16 %v3455
        %v3584 = vunpack.c.l.b16 %v3456
        %v3585 = vunpack.c.l.b16 %v3457
        %v3586 = vunpack.c.l.b16 %v3458
        %v3587 = vpack.c.b16 %v3572, %v3571
        %v3588 = vpack.c.b16 %v3574, %v3573
        %v3589 = vpack.c.b16 %v3576, %v3575
        %v3590 = vpack.c.b16 %v3578, %v3577
        %v3591 = vpack.c.b16 %v3580, %v3579
        %v3592 = vpack.c.b16 %v3582, %v3581
        %v3593 = vpack.c.b16 %v3584, %v3583
        %v3594 = vpack.c.b16 %v3586, %v3585
        %3603 = vmatprep.subr.bf16.mxu0 0
        %3604 = vmatpush1.bf16.msra.mxu0 %v3587
        %3605 = vmatprep.subr.bf16.mxu0 0
        %3606 = vmatpush1.bf16.msra.mxu0 %v3588
        %3607 = vmatprep.subr.bf16.mxu0 0
        %3608 = vmatpush1.bf16.msra.mxu0 %v3589
        %3609 = vmatprep.subr.bf16.mxu0 0
        %3610 = vmatpush1.bf16.msra.mxu0 %v3590
        %3611 = vmatprep.subr.bf16.mxu0 0
        %3612 = vmatpush1.bf16.msra.mxu0 %v3591
        %3613 = vmatprep.subr.bf16.mxu0 0
        %3614 = vmatpush1.bf16.msra.mxu0 %v3592
        %3615 = vmatprep.subr.bf16.mxu0 0
        %3616 = vmatpush1.bf16.msra.mxu0 %v3593
        %3617 = vmatprep.subr.bf16.mxu0 0
        %3618 = vmatpush1.bf16.msra.mxu0 %v3594
        %3619 = vmatprep.subr.bf16.mxu0 0
        %3620 = vmatpush1.bf16.msra.mxu0 0
        %3621 = vmatprep.subr.bf16.mxu0 0
        %3622 = vmatpush1.bf16.msra.mxu0 0
        %3623 = vmatprep.subr.bf16.mxu0 0
        %3624 = vmatpush1.bf16.msra.mxu0 0
        %3625 = vmatprep.subr.bf16.mxu0 0
        %3626 = vmatpush1.bf16.msra.mxu0 0
        %3627 = vmatprep.subr.bf16.mxu0 0
        %3628 = vmatpush1.bf16.msra.mxu0 0
        %3629 = vmatprep.subr.bf16.mxu0 0
        %3630 = vmatpush1.bf16.msra.mxu0 0
        %3631 = vmatprep.subr.bf16.mxu0 0
        %3632 = vmatpush1.bf16.msra.mxu0 0
        %3633 = vmatprep.subr.bf16.mxu0 0
        %3634 = vmatpush1.bf16.msra.mxu0 0
        %3635 = vmatprep.mubr.bf16.mxu0 0
        %3636 = vmatmul.mubr.bf16.gmra.mrb[0].mxu0 %v3523
        %v3637 = vpop.f32.mrb[0].mxu0
        %v3638 = vadd.f32 0.0, %v3637
        %v3639 = vpop.f32.mrb[0].mxu0
        %v3640 = vpop.f32.mrb[0].mxu0
        %v3641 = vadd.f32 0.0, %v3640
        %v3642 = vpop.f32.mrb[0].mxu0
        %3643 = vmatprep.mubr.bf16.mxu0 0
        %3644 = vmatmul.mubr.bf16.gmra.mrb[0].mxu0 %v3524
        %v3645 = vpop.f32.mrb[0].mxu0
        %v3646 = vadd.f32 0.0, %v3645
        %v3647 = vpop.f32.mrb[0].mxu0
        %v3648 = vpop.f32.mrb[0].mxu0
        %v3649 = vadd.f32 0.0, %v3648
        %v3650 = vpop.f32.mrb[0].mxu0
        %3651 = vmatprep.mubr.bf16.mxu0 0
        %3652 = vmatmul.mubr.bf16.gmra.mrb[0].mxu0 %v3525
        %v3653 = vpop.f32.mrb[0].mxu0
        %v3654 = vadd.f32 0.0, %v3653
        %v3655 = vpop.f32.mrb[0].mxu0
        %v3656 = vpop.f32.mrb[0].mxu0
        %v3657 = vadd.f32 0.0, %v3656
        %v3658 = vpop.f32.mrb[0].mxu0
        %3659 = vmatprep.mubr.bf16.mxu0 0
        %3660 = vmatmul.mubr.bf16.gmra.mrb[0].mxu0 %v3526
        %v3661 = vpop.f32.mrb[0].mxu0
        %v3662 = vadd.f32 0.0, %v3661
        %v3663 = vpop.f32.mrb[0].mxu0
        %v3664 = vpop.f32.mrb[0].mxu0
        %v3665 = vadd.f32 0.0, %v3664
        %v3666 = vpop.f32.mrb[0].mxu0
        %3667 = vmatprep.mubr.bf16.mxu0 0
        %3668 = vmatmul.mubr.bf16.gmra.mrb[0].mxu0 %v3527
        %v3669 = vpop.f32.mrb[0].mxu0
        %v3670 = vadd.f32 0.0, %v3669
        %v3671 = vpop.f32.mrb[0].mxu0
        %v3672 = vpop.f32.mrb[0].mxu0
        %v3673 = vadd.f32 0.0, %v3672
        %v3674 = vpop.f32.mrb[0].mxu0
        %3675 = vmatprep.mubr.bf16.mxu0 0
        %3676 = vmatmul.mubr.bf16.gmra.mrb[0].mxu0 %v3528
        %v3677 = vpop.f32.mrb[0].mxu0
        %v3678 = vadd.f32 0.0, %v3677
        %v3679 = vpop.f32.mrb[0].mxu0
        %v3680 = vpop.f32.mrb[0].mxu0
        %v3681 = vadd.f32 0.0, %v3680
        %v3682 = vpop.f32.mrb[0].mxu0
        %3683 = vmatprep.mubr.bf16.mxu0 0
        %3684 = vmatmul.mubr.bf16.gmra.mrb[0].mxu0 %v3529
        %v3685 = vpop.f32.mrb[0].mxu0
        %v3686 = vadd.f32 0.0, %v3685
        %v3687 = vpop.f32.mrb[0].mxu0
        %v3688 = vpop.f32.mrb[0].mxu0
        %v3689 = vadd.f32 0.0, %v3688
        %v3690 = vpop.f32.mrb[0].mxu0
        %3691 = vmatprep.mubr.bf16.mxu0 0
        %3692 = vmatmul.mubr.bf16.gmra.mrb[0].mxu0 %v3530
        %v3693 = vpop.f32.mrb[0].mxu0
        %v3694 = vadd.f32 0.0, %v3693
        %v3695 = vpop.f32.mrb[0].mxu0
        %v3696 = vpop.f32.mrb[0].mxu0
        %v3697 = vadd.f32 0.0, %v3696
        %v3698 = vpop.f32.mrb[0].mxu0
        %3699 = vmatprep.mubr.bf16.mxu0 0
        %3700 = vmatmul.mubr.bf16.gmra.mrb[0].mxu0 %v3531
        %v3701 = vpop.f32.mrb[0].mxu0
        %v3702 = vadd.f32 0.0, %v3701
        %v3703 = vpop.f32.mrb[0].mxu0
        %v3704 = vpop.f32.mrb[0].mxu0
        %v3705 = vadd.f32 0.0, %v3704
        %v3706 = vpop.f32.mrb[0].mxu0
        %3707 = vmatprep.mubr.bf16.mxu0 0
        %3708 = vmatmul.mubr.bf16.gmra.mrb[0].mxu0 %v3532
        %v3709 = vpop.f32.mrb[0].mxu0
        %v3710 = vadd.f32 0.0, %v3709
        %v3711 = vpop.f32.mrb[0].mxu0
        %v3712 = vpop.f32.mrb[0].mxu0
        %v3713 = vadd.f32 0.0, %v3712
        %v3714 = vpop.f32.mrb[0].mxu0
        %3715 = vmatprep.mubr.bf16.mxu0 0
        %3716 = vmatmul.mubr.bf16.gmra.mrb[0].mxu0 %v3533
        %v3717 = vpop.f32.mrb[0].mxu0
        %v3718 = vadd.f32 0.0, %v3717
        %v3719 = vpop.f32.mrb[0].mxu0
        %v3720 = vpop.f32.mrb[0].mxu0
        %v3721 = vadd.f32 0.0, %v3720
        %v3722 = vpop.f32.mrb[0].mxu0
        %3723 = vmatprep.mubr.bf16.mxu0 0
        %3724 = vmatmul.mubr.bf16.gmra.mrb[0].mxu0 %v3534
        %v3725 = vpop.f32.mrb[0].mxu0
        %v3726 = vadd.f32 0.0, %v3725
        %v3727 = vpop.f32.mrb[0].mxu0
        %v3728 = vpop.f32.mrb[0].mxu0
        %v3729 = vadd.f32 0.0, %v3728
        %v3730 = vpop.f32.mrb[0].mxu0
        %3731 = vmatprep.mubr.bf16.mxu0 0
        %3732 = vmatmul.mubr.bf16.gmra.mrb[0].mxu0 %v3535
        %v3733 = vpop.f32.mrb[0].mxu0
        %v3734 = vadd.f32 0.0, %v3733
        %v3735 = vpop.f32.mrb[0].mxu0
        %v3736 = vpop.f32.mrb[0].mxu0
        %v3737 = vadd.f32 0.0, %v3736
        %v3738 = vpop.f32.mrb[0].mxu0
        %3739 = vmatprep.mubr.bf16.mxu0 0
        %3740 = vmatmul.mubr.bf16.gmra.mrb[0].mxu0 %v3536
        %v3741 = vpop.f32.mrb[0].mxu0
        %v3742 = vadd.f32 0.0, %v3741
        %v3743 = vpop.f32.mrb[0].mxu0
        %v3744 = vpop.f32.mrb[0].mxu0
        %v3745 = vadd.f32 0.0, %v3744
        %v3746 = vpop.f32.mrb[0].mxu0
        %3747 = vmatprep.mubr.bf16.mxu0 0
        %3748 = vmatmul.mubr.bf16.gmra.mrb[0].mxu0 %v3537
        %v3749 = vpop.f32.mrb[0].mxu0
        %v3750 = vadd.f32 0.0, %v3749
        %v3751 = vpop.f32.mrb[0].mxu0
        %v3752 = vpop.f32.mrb[0].mxu0
        %v3753 = vadd.f32 0.0, %v3752
        %v3754 = vpop.f32.mrb[0].mxu0
        %3755 = vmatprep.mubr.bf16.mxu0 0
        %3756 = vmatmul.mubr.bf16.gmra.mrb[0].mxu0 %v3538
        %v3757 = vpop.f32.mrb[0].mxu0
        %v3758 = vadd.f32 0.0, %v3757
        %v3759 = vpop.f32.mrb[0].mxu0
        %v3760 = vpop.f32.mrb[0].mxu0
        %v3761 = vadd.f32 0.0, %v3760
        %v3762 = vpop.f32.mrb[0].mxu0
        %3763 = vdwg.mxu0
        %v3764 = vadd.f32 %v3377, %v3638
        %v3765 = vadd.f32 %v3378, %v3641
        %v3766 = vadd.f32 %v3379, %v3646
        %v3767 = vadd.f32 %v3380, %v3649
        %v3768 = vadd.f32 %v3381, %v3654
        %v3769 = vadd.f32 %v3382, %v3657
        %v3770 = vadd.f32 %v3383, %v3662
        %v3771 = vadd.f32 %v3384, %v3665
        %v3772 = vadd.f32 %v3385, %v3670
        %v3773 = vadd.f32 %v3386, %v3673
        %v3774 = vadd.f32 %v3387, %v3678
        %v3775 = vadd.f32 %v3388, %v3681
        %v3776 = vadd.f32 %v3389, %v3686
        %v3777 = vadd.f32 %v3390, %v3689
        %v3778 = vadd.f32 %v3391, %v3694
        %v3779 = vadd.f32 %v3392, %v3697
        %v3780 = vadd.f32 %v3393, %v3702
        %v3781 = vadd.f32 %v3394, %v3705
        %v3782 = vadd.f32 %v3395, %v3710
        %v3783 = vadd.f32 %v3396, %v3713
        %v3784 = vadd.f32 %v3397, %v3718
        %v3785 = vadd.f32 %v3398, %v3721
        %v3786 = vadd.f32 %v3399, %v3726
        %v3787 = vadd.f32 %v3400, %v3729
        %v3788 = vadd.f32 %v3401, %v3734
        %v3789 = vadd.f32 %v3402, %v3737
        %v3790 = vadd.f32 %v3403, %v3742
        %v3791 = vadd.f32 %v3404, %v3745
        %v3792 = vadd.f32 %v3405, %v3750
        %v3793 = vadd.f32 %v3406, %v3753
        %v3794 = vadd.f32 %v3407, %v3758
        %v3795 = vadd.f32 %v3408, %v3761
        %v3796 = vld [vmem:[%s3409] sm:$0xf]
        %v3797 = vld [vmem:[%s3409 + $0x4] sm:$0xf]
        %v3798 = vld [vmem:[%s3409 + $0x8] sm:$0x1]
        %v3799 = vld [vmem:[%s3409 + $0xc] sm:$0xf]
        %v3800 = vld [vmem:[%s3409 + $0x10] sm:$0xf]
        %v3801 = vld [vmem:[%s3409 + $0x14] sm:$0x1]
        %v3802 = vld [vmem:[%s3409 + $0x18] sm:$0xf]
        %v3803 = vld [vmem:[%s3409 + $0x1c] sm:$0xf]
        %v3804 = vld [vmem:[%s3409 + $0x20] sm:$0x1]
        %v3805 = vld [vmem:[%s3409 + $0x24] sm:$0xf]
        %v3806 = vld [vmem:[%s3409 + $0x28] sm:$0xf]
        %v3807 = vld [vmem:[%s3409 + $0x2c] sm:$0x1]
        %v3808 = vld [vmem:[%s3409 + $0x30] sm:$0xf]
        %v3809 = vld [vmem:[%s3409 + $0x34] sm:$0xf]
        %v3810 = vld [vmem:[%s3409 + $0x38] sm:$0x1]
        %v3811 = vld [vmem:[%s3409 + $0x3c] sm:$0xf]
        %v3812 = vld [vmem:[%s3409 + $0x40] sm:$0xf]
        %v3813 = vld [vmem:[%s3409 + $0x44] sm:$0x1]
        %v3814 = vld [vmem:[%s3409 + $0x48] sm:$0xf]
        %v3815 = vld [vmem:[%s3409 + $0x4c] sm:$0xf]
        %v3816 = vld [vmem:[%s3409 + $0x50] sm:$0x1]
        %v3817 = vld [vmem:[%s3409 + $0x54] sm:$0xf]
        %v3818 = vld [vmem:[%s3409 + $0x58] sm:$0xf]
        %v3819 = vld [vmem:[%s3409 + $0x5c] sm:$0x1]
        %v3820 = vld [vmem:[%s3409 + $0x60] sm:$0xf]
        %v3821 = vld [vmem:[%s3409 + $0x64] sm:$0xf]
        %v3822 = vld [vmem:[%s3409 + $0x68] sm:$0x1]
        %v3823 = vld [vmem:[%s3409 + $0x6c] sm:$0xf]
        %v3824 = vld [vmem:[%s3409 + $0x70] sm:$0xf]
        %v3825 = vld [vmem:[%s3409 + $0x74] sm:$0x1]
        %v3826 = vld [vmem:[%s3409 + $0x78] sm:$0xf]
        %v3827 = vld [vmem:[%s3409 + $0x7c] sm:$0xf]
        %v3828 = vld [vmem:[%s3409 + $0x80] sm:$0x1]
        %v3829 = vld [vmem:[%s3409 + $0x84] sm:$0xf]
        %v3830 = vld [vmem:[%s3409 + $0x88] sm:$0xf]
        %v3831 = vld [vmem:[%s3409 + $0x8c] sm:$0x1]
        %v3832 = vld [vmem:[%s3409 + $0x90] sm:$0xf]
        %v3833 = vld [vmem:[%s3409 + $0x94] sm:$0xf]
        %v3834 = vld [vmem:[%s3409 + $0x98] sm:$0x1]
        %v3835 = vld [vmem:[%s3409 + $0x9c] sm:$0xf]
        %v3836 = vld [vmem:[%s3409 + $0xa0] sm:$0xf]
        %v3837 = vld [vmem:[%s3409 + $0xa4] sm:$0x1]
        %v3838 = vld [vmem:[%s3409 + $0xa8] sm:$0xf]
        %v3839 = vld [vmem:[%s3409 + $0xac] sm:$0xf]
        %v3840 = vld [vmem:[%s3409 + $0xb0] sm:$0x1]
        %v3841 = vld [vmem:[%s3409 + $0xb4] sm:$0xf]
        %v3842 = vld [vmem:[%s3409 + $0xb8] sm:$0xf]
        %v3843 = vld [vmem:[%s3409 + $0xbc] sm:$0x1]
        %v3845 = vshrl.u32 %v3796, 16
        %v3847 = vrot.slane %v3845, 4
        %v3848 = vshll.u32 %v3796, 16
        %v3850 = vrot.slane %v3848, 5
        %v3851 = vor.u32 %v3847, %v3850
        %v3852 = vrot.slane %v3851, 4
        %v3854 = vshll.u32 %v3797, 16
        %v3856 = vrot.slane %v3854, 5
        %v3857 = vsel %vm305, %v3852, %v3856
        %v3858 = vshrl.u32 %v3797, 16
        %v3860 = vrot.slane %v3858, 4
        %v3861 = vor.u32 %v3860, %v3856
        %v3862 = vrot.slane %v3861, 4
        %v3864 = vshll.u32 %v3798, 16
        %v3866 = vrot.slane %v3864, 5
        %v3867 = vsel %vm305, %v3862, %v3866
        %v3869 = vshrl.u32 %v3799, 16
        %v3871 = vrot.slane %v3869, 4
        %v3872 = vshll.u32 %v3799, 16
        %v3874 = vrot.slane %v3872, 5
        %v3875 = vor.u32 %v3871, %v3874
        %v3876 = vrot.slane %v3875, 4
        %v3878 = vshll.u32 %v3800, 16
        %v3880 = vrot.slane %v3878, 5
        %v3881 = vsel %vm305, %v3876, %v3880
        %v3882 = vshrl.u32 %v3800, 16
        %v3884 = vrot.slane %v3882, 4
        %v3885 = vor.u32 %v3884, %v3880
        %v3886 = vrot.slane %v3885, 4
        %v3888 = vshll.u32 %v3801, 16
        %v3890 = vrot.slane %v3888, 5
        %v3891 = vsel %vm305, %v3886, %v3890
        %v3893 = vshrl.u32 %v3802, 16
        %v3895 = vrot.slane %v3893, 4
        %v3896 = vshll.u32 %v3802, 16
        %v3898 = vrot.slane %v3896, 5
        %v3899 = vor.u32 %v3895, %v3898
        %v3900 = vrot.slane %v3899, 4
        %v3902 = vshll.u32 %v3803, 16
        %v3904 = vrot.slane %v3902, 5
        %v3905 = vsel %vm305, %v3900, %v3904
        %v3906 = vshrl.u32 %v3803, 16
        %v3908 = vrot.slane %v3906, 4
        %v3909 = vor.u32 %v3908, %v3904
        %v3910 = vrot.slane %v3909, 4
        %v3912 = vshll.u32 %v3804, 16
        %v3914 = vrot.slane %v3912, 5
        %v3915 = vsel %vm305, %v3910, %v3914
        %v3917 = vshrl.u32 %v3805, 16
        %v3919 = vrot.slane %v3917, 4
        %v3920 = vshll.u32 %v3805, 16
        %v3922 = vrot.slane %v3920, 5
        %v3923 = vor.u32 %v3919, %v3922
        %v3924 = vrot.slane %v3923, 4
        %v3926 = vshll.u32 %v3806, 16
        %v3928 = vrot.slane %v3926, 5
        %v3929 = vsel %vm305, %v3924, %v3928
        %v3930 = vshrl.u32 %v3806, 16
        %v3932 = vrot.slane %v3930, 4
        %v3933 = vor.u32 %v3932, %v3928
        %v3934 = vrot.slane %v3933, 4
        %v3936 = vshll.u32 %v3807, 16
        %v3938 = vrot.slane %v3936, 5
        %v3939 = vsel %vm305, %v3934, %v3938
        %v3941 = vshrl.u32 %v3808, 16
        %v3943 = vrot.slane %v3941, 4
        %v3944 = vshll.u32 %v3808, 16
        %v3946 = vrot.slane %v3944, 5
        %v3947 = vor.u32 %v3943, %v3946
        %v3948 = vrot.slane %v3947, 4
        %v3950 = vshll.u32 %v3809, 16
        %v3952 = vrot.slane %v3950, 5
        %v3953 = vsel %vm305, %v3948, %v3952
        %v3954 = vshrl.u32 %v3809, 16
        %v3956 = vrot.slane %v3954, 4
        %v3957 = vor.u32 %v3956, %v3952
        %v3958 = vrot.slane %v3957, 4
        %v3960 = vshll.u32 %v3810, 16
        %v3962 = vrot.slane %v3960, 5
        %v3963 = vsel %vm305, %v3958, %v3962
        %v3965 = vshrl.u32 %v3811, 16
        %v3967 = vrot.slane %v3965, 4
        %v3968 = vshll.u32 %v3811, 16
        %v3970 = vrot.slane %v3968, 5
        %v3971 = vor.u32 %v3967, %v3970
        %v3972 = vrot.slane %v3971, 4
        %v3974 = vshll.u32 %v3812, 16
        %v3976 = vrot.slane %v3974, 5
        %v3977 = vsel %vm305, %v3972, %v3976
        %v3978 = vshrl.u32 %v3812, 16
        %v3980 = vrot.slane %v3978, 4
        %v3981 = vor.u32 %v3980, %v3976
        %v3982 = vrot.slane %v3981, 4
        %v3984 = vshll.u32 %v3813, 16
        %v3986 = vrot.slane %v3984, 5
        %v3987 = vsel %vm305, %v3982, %v3986
        %v3989 = vshrl.u32 %v3814, 16
        %v3991 = vrot.slane %v3989, 4
        %v3992 = vshll.u32 %v3814, 16
        %v3994 = vrot.slane %v3992, 5
        %v3995 = vor.u32 %v3991, %v3994
        %v3996 = vrot.slane %v3995, 4
        %v3998 = vshll.u32 %v3815, 16
        %v4000 = vrot.slane %v3998, 5
        %v4001 = vsel %vm305, %v3996, %v4000
        %v4002 = vshrl.u32 %v3815, 16
        %v4004 = vrot.slane %v4002, 4
        %v4005 = vor.u32 %v4004, %v4000
        %v4006 = vrot.slane %v4005, 4
        %v4008 = vshll.u32 %v3816, 16
        %v4010 = vrot.slane %v4008, 5
        %v4011 = vsel %vm305, %v4006, %v4010
        %v4013 = vshrl.u32 %v3817, 16
        %v4015 = vrot.slane %v4013, 4
        %v4016 = vshll.u32 %v3817, 16
        %v4018 = vrot.slane %v4016, 5
        %v4019 = vor.u32 %v4015, %v4018
        %v4020 = vrot.slane %v4019, 4
        %v4022 = vshll.u32 %v3818, 16
        %v4024 = vrot.slane %v4022, 5
        %v4025 = vsel %vm305, %v4020, %v4024
        %v4026 = vshrl.u32 %v3818, 16
        %v4028 = vrot.slane %v4026, 4
        %v4029 = vor.u32 %v4028, %v4024
        %v4030 = vrot.slane %v4029, 4
        %v4032 = vshll.u32 %v3819, 16
        %v4034 = vrot.slane %v4032, 5
        %v4035 = vsel %vm305, %v4030, %v4034
        %v4037 = vshrl.u32 %v3820, 16
        %v4039 = vrot.slane %v4037, 4
        %v4040 = vshll.u32 %v3820, 16
        %v4042 = vrot.slane %v4040, 5
        %v4043 = vor.u32 %v4039, %v4042
        %v4044 = vrot.slane %v4043, 4
        %v4046 = vshll.u32 %v3821, 16
        %v4048 = vrot.slane %v4046, 5
        %v4049 = vsel %vm305, %v4044, %v4048
        %v4050 = vshrl.u32 %v3821, 16
        %v4052 = vrot.slane %v4050, 4
        %v4053 = vor.u32 %v4052, %v4048
        %v4054 = vrot.slane %v4053, 4
        %v4056 = vshll.u32 %v3822, 16
        %v4058 = vrot.slane %v4056, 5
        %v4059 = vsel %vm305, %v4054, %v4058
        %v4061 = vshrl.u32 %v3823, 16
        %v4063 = vrot.slane %v4061, 4
        %v4064 = vshll.u32 %v3823, 16
        %v4066 = vrot.slane %v4064, 5
        %v4067 = vor.u32 %v4063, %v4066
        %v4068 = vrot.slane %v4067, 4
        %v4070 = vshll.u32 %v3824, 16
        %v4072 = vrot.slane %v4070, 5
        %v4073 = vsel %vm305, %v4068, %v4072
        %v4074 = vshrl.u32 %v3824, 16
        %v4076 = vrot.slane %v4074, 4
        %v4077 = vor.u32 %v4076, %v4072
        %v4078 = vrot.slane %v4077, 4
        %v4080 = vshll.u32 %v3825, 16
        %v4082 = vrot.slane %v4080, 5
        %v4083 = vsel %vm305, %v4078, %v4082
        %v4085 = vshrl.u32 %v3826, 16
        %v4087 = vrot.slane %v4085, 4
        %v4088 = vshll.u32 %v3826, 16
        %v4090 = vrot.slane %v4088, 5
        %v4091 = vor.u32 %v4087, %v4090
        %v4092 = vrot.slane %v4091, 4
        %v4094 = vshll.u32 %v3827, 16
        %v4096 = vrot.slane %v4094, 5
        %v4097 = vsel %vm305, %v4092, %v4096
        %v4098 = vshrl.u32 %v3827, 16
        %v4100 = vrot.slane %v4098, 4
        %v4101 = vor.u32 %v4100, %v4096
        %v4102 = vrot.slane %v4101, 4
        %v4104 = vshll.u32 %v3828, 16
        %v4106 = vrot.slane %v4104, 5
        %v4107 = vsel %vm305, %v4102, %v4106
        %v4109 = vshrl.u32 %v3829, 16
        %v4111 = vrot.slane %v4109, 4
        %v4112 = vshll.u32 %v3829, 16
        %v4114 = vrot.slane %v4112, 5
        %v4115 = vor.u32 %v4111, %v4114
        %v4116 = vrot.slane %v4115, 4
        %v4118 = vshll.u32 %v3830, 16
        %v4120 = vrot.slane %v4118, 5
        %v4121 = vsel %vm305, %v4116, %v4120
        %v4122 = vshrl.u32 %v3830, 16
        %v4124 = vrot.slane %v4122, 4
        %v4125 = vor.u32 %v4124, %v4120
        %v4126 = vrot.slane %v4125, 4
        %v4128 = vshll.u32 %v3831, 16
        %v4130 = vrot.slane %v4128, 5
        %v4131 = vsel %vm305, %v4126, %v4130
        %v4133 = vshrl.u32 %v3832, 16
        %v4135 = vrot.slane %v4133, 4
        %v4136 = vshll.u32 %v3832, 16
        %v4138 = vrot.slane %v4136, 5
        %v4139 = vor.u32 %v4135, %v4138
        %v4140 = vrot.slane %v4139, 4
        %v4142 = vshll.u32 %v3833, 16
        %v4144 = vrot.slane %v4142, 5
        %v4145 = vsel %vm305, %v4140, %v4144
        %v4146 = vshrl.u32 %v3833, 16
        %v4148 = vrot.slane %v4146, 4
        %v4149 = vor.u32 %v4148, %v4144
        %v4150 = vrot.slane %v4149, 4
        %v4152 = vshll.u32 %v3834, 16
        %v4154 = vrot.slane %v4152, 5
        %v4155 = vsel %vm305, %v4150, %v4154
        %v4157 = vshrl.u32 %v3835, 16
        %v4159 = vrot.slane %v4157, 4
        %v4160 = vshll.u32 %v3835, 16
        %v4162 = vrot.slane %v4160, 5
        %v4163 = vor.u32 %v4159, %v4162
        %v4164 = vrot.slane %v4163, 4
        %v4166 = vshll.u32 %v3836, 16
        %v4168 = vrot.slane %v4166, 5
        %v4169 = vsel %vm305, %v4164, %v4168
        %v4170 = vshrl.u32 %v3836, 16
        %v4172 = vrot.slane %v4170, 4
        %v4173 = vor.u32 %v4172, %v4168
        %v4174 = vrot.slane %v4173, 4
        %v4176 = vshll.u32 %v3837, 16
        %v4178 = vrot.slane %v4176, 5
        %v4179 = vsel %vm305, %v4174, %v4178
        %v4181 = vshrl.u32 %v3838, 16
        %v4183 = vrot.slane %v4181, 4
        %v4184 = vshll.u32 %v3838, 16
        %v4186 = vrot.slane %v4184, 5
        %v4187 = vor.u32 %v4183, %v4186
        %v4188 = vrot.slane %v4187, 4
        %v4190 = vshll.u32 %v3839, 16
        %v4192 = vrot.slane %v4190, 5
        %v4193 = vsel %vm305, %v4188, %v4192
        %v4194 = vshrl.u32 %v3839, 16
        %v4196 = vrot.slane %v4194, 4
        %v4197 = vor.u32 %v4196, %v4192
        %v4198 = vrot.slane %v4197, 4
        %v4200 = vshll.u32 %v3840, 16
        %v4202 = vrot.slane %v4200, 5
        %v4203 = vsel %vm305, %v4198, %v4202
        %v4205 = vshrl.u32 %v3841, 16
        %v4207 = vrot.slane %v4205, 4
        %v4208 = vshll.u32 %v3841, 16
        %v4210 = vrot.slane %v4208, 5
        %v4211 = vor.u32 %v4207, %v4210
        %v4212 = vrot.slane %v4211, 4
        %v4214 = vshll.u32 %v3842, 16
        %v4216 = vrot.slane %v4214, 5
        %v4217 = vsel %vm305, %v4212, %v4216
        %v4218 = vshrl.u32 %v3842, 16
        %v4220 = vrot.slane %v4218, 4
        %v4221 = vor.u32 %v4220, %v4216
        %v4222 = vrot.slane %v4221, 4
        %v4224 = vshll.u32 %v3843, 16
        %v4226 = vrot.slane %v4224, 5
        %v4227 = vsel %vm305, %v4222, %v4226
        %s4228 = scalar_lea.vmem %s1, 448
        %v4229 = vld [vmem:[%s4228] sm:$0xf]
        %v4230 = vld [vmem:[%s4228 + $0x4] sm:$0xf]
        %v4231 = vld [vmem:[%s4228 + $0x8] sm:$0xf]
        %v4232 = vld [vmem:[%s4228 + $0xc] sm:$0xf]
        %v4233 = vld [vmem:[%s4228 + $0x10] sm:$0xf]
        %v4234 = vld [vmem:[%s4228 + $0x14] sm:$0xf]
        %v4235 = vld [vmem:[%s4228 + $0x18] sm:$0xf]
        %v4236 = vld [vmem:[%s4228 + $0x1c] sm:$0xf]
        %v4237 = vld [vmem:[%s4228 + $0x20] sm:$0xf]
        %v4238 = vld [vmem:[%s4228 + $0x24] sm:$0xf]
        %v4239 = vld [vmem:[%s4228 + $0x28] sm:$0xf]
        %v4240 = vld [vmem:[%s4228 + $0x2c] sm:$0xf]
        %v4241 = vld [vmem:[%s4228 + $0x30] sm:$0xf]
        %v4242 = vld [vmem:[%s4228 + $0x34] sm:$0xf]
        %v4243 = vld [vmem:[%s4228 + $0x38] sm:$0xf]
        %v4244 = vld [vmem:[%s4228 + $0x3c] sm:$0xf]
        %v4245 = vunpack.c.l.b16 %v3857
        %v4246 = vunpack.c.l.b16 %v3867
        %v4247 = vunpack.c.l.b16 %v3881
        %v4248 = vunpack.c.l.b16 %v3891
        %v4249 = vunpack.c.l.b16 %v3905
        %v4250 = vunpack.c.l.b16 %v3915
        %v4251 = vunpack.c.l.b16 %v3929
        %v4252 = vunpack.c.l.b16 %v3939
        %v4253 = vunpack.c.l.b16 %v3953
        %v4254 = vunpack.c.l.b16 %v3963
        %v4255 = vunpack.c.l.b16 %v3977
        %v4256 = vunpack.c.l.b16 %v3987
        %v4257 = vunpack.c.l.b16 %v4001
        %v4258 = vunpack.c.l.b16 %v4011
        %v4259 = vunpack.c.l.b16 %v4025
        %v4260 = vunpack.c.l.b16 %v4035
        %v4261 = vunpack.c.l.b16 %v4049
        %v4262 = vunpack.c.l.b16 %v4059
        %v4263 = vunpack.c.l.b16 %v4073
        %v4264 = vunpack.c.l.b16 %v4083
        %v4265 = vunpack.c.l.b16 %v4097
        %v4266 = vunpack.c.l.b16 %v4107
        %v4267 = vunpack.c.l.b16 %v4121
        %v4268 = vunpack.c.l.b16 %v4131
        %v4269 = vunpack.c.l.b16 %v4145
        %v4270 = vunpack.c.l.b16 %v4155
        %v4271 = vunpack.c.l.b16 %v4169
        %v4272 = vunpack.c.l.b16 %v4179
        %v4273 = vunpack.c.l.b16 %v4193
        %v4274 = vunpack.c.l.b16 %v4203
        %v4275 = vunpack.c.l.b16 %v4217
        %v4276 = vunpack.c.l.b16 %v4227
        %v4277 = vpack.c.b16 %v4246, %v4245
        %v4278 = vpack.c.b16 %v4248, %v4247
        %v4279 = vpack.c.b16 %v4250, %v4249
        %v4280 = vpack.c.b16 %v4252, %v4251
        %v4281 = vpack.c.b16 %v4254, %v4253
        %v4282 = vpack.c.b16 %v4256, %v4255
        %v4283 = vpack.c.b16 %v4258, %v4257
        %v4284 = vpack.c.b16 %v4260, %v4259
        %v4285 = vpack.c.b16 %v4262, %v4261
        %v4286 = vpack.c.b16 %v4264, %v4263
        %v4287 = vpack.c.b16 %v4266, %v4265
        %v4288 = vpack.c.b16 %v4268, %v4267
        %v4289 = vpack.c.b16 %v4270, %v4269
        %v4290 = vpack.c.b16 %v4272, %v4271
        %v4291 = vpack.c.b16 %v4274, %v4273
        %v4292 = vpack.c.b16 %v4276, %v4275
        %v4325 = vunpack.c.l.b16 %v4229
        %v4326 = vunpack.c.l.b16 %v4230
        %v4327 = vunpack.c.l.b16 %v4231
        %v4328 = vunpack.c.l.b16 %v4232
        %v4329 = vunpack.c.l.b16 %v4233
        %v4330 = vunpack.c.l.b16 %v4234
        %v4331 = vunpack.c.l.b16 %v4235
        %v4332 = vunpack.c.l.b16 %v4236
        %v4333 = vunpack.c.l.b16 %v4237
        %v4334 = vunpack.c.l.b16 %v4238
        %v4335 = vunpack.c.l.b16 %v4239
        %v4336 = vunpack.c.l.b16 %v4240
        %v4337 = vunpack.c.l.b16 %v4241
        %v4338 = vunpack.c.l.b16 %v4242
        %v4339 = vunpack.c.l.b16 %v4243
        %v4340 = vunpack.c.l.b16 %v4244
        %v4341 = vpack.c.b16 %v4326, %v4325
        %v4342 = vpack.c.b16 %v4328, %v4327
        %v4343 = vpack.c.b16 %v4330, %v4329
        %v4344 = vpack.c.b16 %v4332, %v4331
        %v4345 = vpack.c.b16 %v4334, %v4333
        %v4346 = vpack.c.b16 %v4336, %v4335
        %v4347 = vpack.c.b16 %v4338, %v4337
        %v4348 = vpack.c.b16 %v4340, %v4339
        %4357 = vmatprep.subr.bf16.mxu0 0
        %4358 = vmatpush1.bf16.msra.mxu0 %v4341
        %4359 = vmatprep.subr.bf16.mxu0 0
        %4360 = vmatpush1.bf16.msra.mxu0 %v4342
        %4361 = vmatprep.subr.bf16.mxu0 0
        %4362 = vmatpush1.bf16.msra.mxu0 %v4343
        %4363 = vmatprep.subr.bf16.mxu0 0
        %4364 = vmatpush1.bf16.msra.mxu0 %v4344
        %4365 = vmatprep.subr.bf16.mxu0 0
        %4366 = vmatpush1.bf16.msra.mxu0 %v4345
        %4367 = vmatprep.subr.bf16.mxu0 0
        %4368 = vmatpush1.bf16.msra.mxu0 %v4346
        %4369 = vmatprep.subr.bf16.mxu0 0
        %4370 = vmatpush1.bf16.msra.mxu0 %v4347
        %4371 = vmatprep.subr.bf16.mxu0 0
        %4372 = vmatpush1.bf16.msra.mxu0 %v4348
        %4373 = vmatprep.subr.bf16.mxu0 0
        %4374 = vmatpush1.bf16.msra.mxu0 0
        %4375 = vmatprep.subr.bf16.mxu0 0
        %4376 = vmatpush1.bf16.msra.mxu0 0
        %4377 = vmatprep.subr.bf16.mxu0 0
        %4378 = vmatpush1.bf16.msra.mxu0 0
        %4379 = vmatprep.subr.bf16.mxu0 0
        %4380 = vmatpush1.bf16.msra.mxu0 0
        %4381 = vmatprep.subr.bf16.mxu0 0
        %4382 = vmatpush1.bf16.msra.mxu0 0
        %4383 = vmatprep.subr.bf16.mxu0 0
        %4384 = vmatpush1.bf16.msra.mxu0 0
        %4385 = vmatprep.subr.bf16.mxu0 0
        %4386 = vmatpush1.bf16.msra.mxu0 0
        %4387 = vmatprep.subr.bf16.mxu0 0
        %4388 = vmatpush1.bf16.msra.mxu0 0
        %4389 = vmatprep.mubr.bf16.mxu0 0
        %4390 = vmatmul.mubr.bf16.gmra.mrb[0].mxu0 %v4277
        %v4391 = vpop.f32.mrb[0].mxu0
        %v4392 = vadd.f32 0.0, %v4391
        %v4393 = vpop.f32.mrb[0].mxu0
        %v4394 = vpop.f32.mrb[0].mxu0
        %v4395 = vadd.f32 0.0, %v4394
        %v4396 = vpop.f32.mrb[0].mxu0
        %4397 = vmatprep.mubr.bf16.mxu0 0
        %4398 = vmatmul.mubr.bf16.gmra.mrb[0].mxu0 %v4278
        %v4399 = vpop.f32.mrb[0].mxu0
        %v4400 = vadd.f32 0.0, %v4399
        %v4401 = vpop.f32.mrb[0].mxu0
        %v4402 = vpop.f32.mrb[0].mxu0
        %v4403 = vadd.f32 0.0, %v4402
        %v4404 = vpop.f32.mrb[0].mxu0
        %4405 = vmatprep.mubr.bf16.mxu0 0
        %4406 = vmatmul.mubr.bf16.gmra.mrb[0].mxu0 %v4279
        %v4407 = vpop.f32.mrb[0].mxu0
        %v4408 = vadd.f32 0.0, %v4407
        %v4409 = vpop.f32.mrb[0].mxu0
        %v4410 = vpop.f32.mrb[0].mxu0
        %v4411 = vadd.f32 0.0, %v4410
        %v4412 = vpop.f32.mrb[0].mxu0
        %4413 = vmatprep.mubr.bf16.mxu0 0
        %4414 = vmatmul.mubr.bf16.gmra.mrb[0].mxu0 %v4280
        %v4415 = vpop.f32.mrb[0].mxu0
        %v4416 = vadd.f32 0.0, %v4415
        %v4417 = vpop.f32.mrb[0].mxu0
        %v4418 = vpop.f32.mrb[0].mxu0
        %v4419 = vadd.f32 0.0, %v4418
        %v4420 = vpop.f32.mrb[0].mxu0
        %4421 = vmatprep.mubr.bf16.mxu0 0
        %4422 = vmatmul.mubr.bf16.gmra.mrb[0].mxu0 %v4281
        %v4423 = vpop.f32.mrb[0].mxu0
        %v4424 = vadd.f32 0.0, %v4423
        %v4425 = vpop.f32.mrb[0].mxu0
        %v4426 = vpop.f32.mrb[0].mxu0
        %v4427 = vadd.f32 0.0, %v4426
        %v4428 = vpop.f32.mrb[0].mxu0
        %4429 = vmatprep.mubr.bf16.mxu0 0
        %4430 = vmatmul.mubr.bf16.gmra.mrb[0].mxu0 %v4282
        %v4431 = vpop.f32.mrb[0].mxu0
        %v4432 = vadd.f32 0.0, %v4431
        %v4433 = vpop.f32.mrb[0].mxu0
        %v4434 = vpop.f32.mrb[0].mxu0
        %v4435 = vadd.f32 0.0, %v4434
        %v4436 = vpop.f32.mrb[0].mxu0
        %4437 = vmatprep.mubr.bf16.mxu0 0
        %4438 = vmatmul.mubr.bf16.gmra.mrb[0].mxu0 %v4283
        %v4439 = vpop.f32.mrb[0].mxu0
        %v4440 = vadd.f32 0.0, %v4439
        %v4441 = vpop.f32.mrb[0].mxu0
        %v4442 = vpop.f32.mrb[0].mxu0
        %v4443 = vadd.f32 0.0, %v4442
        %v4444 = vpop.f32.mrb[0].mxu0
        %4445 = vmatprep.mubr.bf16.mxu0 0
        %4446 = vmatmul.mubr.bf16.gmra.mrb[0].mxu0 %v4284
        %v4447 = vpop.f32.mrb[0].mxu0
        %v4448 = vadd.f32 0.0, %v4447
        %v4449 = vpop.f32.mrb[0].mxu0
        %v4450 = vpop.f32.mrb[0].mxu0
        %v4451 = vadd.f32 0.0, %v4450
        %v4452 = vpop.f32.mrb[0].mxu0
        %4453 = vmatprep.mubr.bf16.mxu0 0
        %4454 = vmatmul.mubr.bf16.gmra.mrb[0].mxu0 %v4285
        %v4455 = vpop.f32.mrb[0].mxu0
        %v4456 = vadd.f32 0.0, %v4455
        %v4457 = vpop.f32.mrb[0].mxu0
        %v4458 = vpop.f32.mrb[0].mxu0
        %v4459 = vadd.f32 0.0, %v4458
        %v4460 = vpop.f32.mrb[0].mxu0
        %4461 = vmatprep.mubr.bf16.mxu0 0
        %4462 = vmatmul.mubr.bf16.gmra.mrb[0].mxu0 %v4286
        %v4463 = vpop.f32.mrb[0].mxu0
        %v4464 = vadd.f32 0.0, %v4463
        %v4465 = vpop.f32.mrb[0].mxu0
        %v4466 = vpop.f32.mrb[0].mxu0
        %v4467 = vadd.f32 0.0, %v4466
        %v4468 = vpop.f32.mrb[0].mxu0
        %4469 = vmatprep.mubr.bf16.mxu0 0
        %4470 = vmatmul.mubr.bf16.gmra.mrb[0].mxu0 %v4287
        %v4471 = vpop.f32.mrb[0].mxu0
        %v4472 = vadd.f32 0.0, %v4471
        %v4473 = vpop.f32.mrb[0].mxu0
        %v4474 = vpop.f32.mrb[0].mxu0
        %v4475 = vadd.f32 0.0, %v4474
        %v4476 = vpop.f32.mrb[0].mxu0
        %4477 = vmatprep.mubr.bf16.mxu0 0
        %4478 = vmatmul.mubr.bf16.gmra.mrb[0].mxu0 %v4288
        %v4479 = vpop.f32.mrb[0].mxu0
        %v4480 = vadd.f32 0.0, %v4479
        %v4481 = vpop.f32.mrb[0].mxu0
        %v4482 = vpop.f32.mrb[0].mxu0
        %v4483 = vadd.f32 0.0, %v4482
        %v4484 = vpop.f32.mrb[0].mxu0
        %4485 = vmatprep.mubr.bf16.mxu0 0
        %4486 = vmatmul.mubr.bf16.gmra.mrb[0].mxu0 %v4289
        %v4487 = vpop.f32.mrb[0].mxu0
        %v4488 = vadd.f32 0.0, %v4487
        %v4489 = vpop.f32.mrb[0].mxu0
        %v4490 = vpop.f32.mrb[0].mxu0
        %v4491 = vadd.f32 0.0, %v4490
        %v4492 = vpop.f32.mrb[0].mxu0
        %4493 = vmatprep.mubr.bf16.mxu0 0
        %4494 = vmatmul.mubr.bf16.gmra.mrb[0].mxu0 %v4290
        %v4495 = vpop.f32.mrb[0].mxu0
        %v4496 = vadd.f32 0.0, %v4495
        %v4497 = vpop.f32.mrb[0].mxu0
        %v4498 = vpop.f32.mrb[0].mxu0
        %v4499 = vadd.f32 0.0, %v4498
        %v4500 = vpop.f32.mrb[0].mxu0
        %4501 = vmatprep.mubr.bf16.mxu0 0
        %4502 = vmatmul.mubr.bf16.gmra.mrb[0].mxu0 %v4291
        %v4503 = vpop.f32.mrb[0].mxu0
        %v4504 = vadd.f32 0.0, %v4503
        %v4505 = vpop.f32.mrb[0].mxu0
        %v4506 = vpop.f32.mrb[0].mxu0
        %v4507 = vadd.f32 0.0, %v4506
        %v4508 = vpop.f32.mrb[0].mxu0
        %4509 = vmatprep.mubr.bf16.mxu0 0
        %4510 = vmatmul.mubr.bf16.gmra.mrb[0].mxu0 %v4292
        %v4511 = vpop.f32.mrb[0].mxu0
        %v4512 = vadd.f32 0.0, %v4511
        %v4513 = vpop.f32.mrb[0].mxu0
        %v4514 = vpop.f32.mrb[0].mxu0
        %v4515 = vadd.f32 0.0, %v4514
        %v4516 = vpop.f32.mrb[0].mxu0
        %4517 = vdwg.mxu0
        %v4518 = vadd.f32 %v3764, %v4392
        %v4519 = vadd.f32 %v3765, %v4395
        %v4520 = vadd.f32 %v3766, %v4400
        %v4521 = vadd.f32 %v3767, %v4403
        %v4522 = vadd.f32 %v3768, %v4408
        %v4523 = vadd.f32 %v3769, %v4411
        %v4524 = vadd.f32 %v3770, %v4416
        %v4525 = vadd.f32 %v3771, %v4419
        %v4526 = vadd.f32 %v3772, %v4424
        %v4527 = vadd.f32 %v3773, %v4427
        %v4528 = vadd.f32 %v3774, %v4432
        %v4529 = vadd.f32 %v3775, %v4435
        %v4530 = vadd.f32 %v3776, %v4440
        %v4531 = vadd.f32 %v3777, %v4443
        %v4532 = vadd.f32 %v3778, %v4448
        %v4533 = vadd.f32 %v3779, %v4451
        %v4534 = vadd.f32 %v3780, %v4456
        %v4535 = vadd.f32 %v3781, %v4459
        %v4536 = vadd.f32 %v3782, %v4464
        %v4537 = vadd.f32 %v3783, %v4467
        %v4538 = vadd.f32 %v3784, %v4472
        %v4539 = vadd.f32 %v3785, %v4475
        %v4540 = vadd.f32 %v3786, %v4480
        %v4541 = vadd.f32 %v3787, %v4483
        %v4542 = vadd.f32 %v3788, %v4488
        %v4543 = vadd.f32 %v3789, %v4491
        %v4544 = vadd.f32 %v3790, %v4496
        %v4545 = vadd.f32 %v3791, %v4499
        %v4546 = vadd.f32 %v3792, %v4504
        %v4547 = vadd.f32 %v3793, %v4507
        %v4548 = vadd.f32 %v3794, %v4512
        %v4549 = vadd.f32 %v3795, %v4515
        %v4550 = vld [vmem:[%s3409] sm:$0xe]
        %v4551 = vld [vmem:[%s3409 + $0xc] sm:$0xe]
        %v4552 = vld [vmem:[%s3409 + $0x18] sm:$0xe]
        %v4553 = vld [vmem:[%s3409 + $0x24] sm:$0xe]
        %v4554 = vld [vmem:[%s3409 + $0x30] sm:$0xe]
        %v4555 = vld [vmem:[%s3409 + $0x3c] sm:$0xe]
        %v4556 = vld [vmem:[%s3409 + $0x48] sm:$0xe]
        %v4557 = vld [vmem:[%s3409 + $0x54] sm:$0xe]
        %v4558 = vld [vmem:[%s3409 + $0x60] sm:$0xe]
        %v4559 = vld [vmem:[%s3409 + $0x6c] sm:$0xe]
        %v4560 = vld [vmem:[%s3409 + $0x78] sm:$0xe]
        %v4561 = vld [vmem:[%s3409 + $0x84] sm:$0xe]
        %v4562 = vld [vmem:[%s3409 + $0x90] sm:$0xe]
        %v4563 = vld [vmem:[%s3409 + $0x9c] sm:$0xe]
        %v4564 = vld [vmem:[%s3409 + $0xa8] sm:$0xe]
        %v4565 = vld [vmem:[%s3409 + $0xb4] sm:$0xe]
        %v4614 = vrot.slane %v4550, 5
        %v4615 = vrot.slane %v4614, 4
        %v4616 = vrot.slane %v3797, 5
        %v4617 = vsel %vm1335, %v4615, %v4616
        %v4618 = vrot.slane %v4616, 4
        %v4619 = vrot.slane %v3798, 5
        %v4620 = vsel %vm1335, %v4618, %v4619
        %v4621 = vrot.slane %v4551, 5
        %v4622 = vrot.slane %v4621, 4
        %v4623 = vrot.slane %v3800, 5
        %v4624 = vsel %vm1335, %v4622, %v4623
        %v4625 = vrot.slane %v4623, 4
        %v4626 = vrot.slane %v3801, 5
        %v4627 = vsel %vm1335, %v4625, %v4626
        %v4628 = vrot.slane %v4552, 5
        %v4629 = vrot.slane %v4628, 4
        %v4630 = vrot.slane %v3803, 5
        %v4631 = vsel %vm1335, %v4629, %v4630
        %v4632 = vrot.slane %v4630, 4
        %v4633 = vrot.slane %v3804, 5
        %v4634 = vsel %vm1335, %v4632, %v4633
        %v4635 = vrot.slane %v4553, 5
        %v4636 = vrot.slane %v4635, 4
        %v4637 = vrot.slane %v3806, 5
        %v4638 = vsel %vm1335, %v4636, %v4637
        %v4639 = vrot.slane %v4637, 4
        %v4640 = vrot.slane %v3807, 5
        %v4641 = vsel %vm1335, %v4639, %v4640
        %v4642 = vrot.slane %v4554, 5
        %v4643 = vrot.slane %v4642, 4
        %v4644 = vrot.slane %v3809, 5
        %v4645 = vsel %vm1335, %v4643, %v4644
        %v4646 = vrot.slane %v4644, 4
        %v4647 = vrot.slane %v3810, 5
        %v4648 = vsel %vm1335, %v4646, %v4647
        %v4649 = vrot.slane %v4555, 5
        %v4650 = vrot.slane %v4649, 4
        %v4651 = vrot.slane %v3812, 5
        %v4652 = vsel %vm1335, %v4650, %v4651
        %v4653 = vrot.slane %v4651, 4
        %v4654 = vrot.slane %v3813, 5
        %v4655 = vsel %vm1335, %v4653, %v4654
        %v4656 = vrot.slane %v4556, 5
        %v4657 = vrot.slane %v4656, 4
        %v4658 = vrot.slane %v3815, 5
        %v4659 = vsel %vm1335, %v4657, %v4658
        %v4660 = vrot.slane %v4658, 4
        %v4661 = vrot.slane %v3816, 5
        %v4662 = vsel %vm1335, %v4660, %v4661
        %v4663 = vrot.slane %v4557, 5
        %v4664 = vrot.slane %v4663, 4
        %v4665 = vrot.slane %v3818, 5
        %v4666 = vsel %vm1335, %v4664, %v4665
        %v4667 = vrot.slane %v4665, 4
        %v4668 = vrot.slane %v3819, 5
        %v4669 = vsel %vm1335, %v4667, %v4668
        %v4670 = vrot.slane %v4558, 5
        %v4671 = vrot.slane %v4670, 4
        %v4672 = vrot.slane %v3821, 5
        %v4673 = vsel %vm1335, %v4671, %v4672
        %v4674 = vrot.slane %v4672, 4
        %v4675 = vrot.slane %v3822, 5
        %v4676 = vsel %vm1335, %v4674, %v4675
        %v4677 = vrot.slane %v4559, 5
        %v4678 = vrot.slane %v4677, 4
        %v4679 = vrot.slane %v3824, 5
        %v4680 = vsel %vm1335, %v4678, %v4679
        %v4681 = vrot.slane %v4679, 4
        %v4682 = vrot.slane %v3825, 5
        %v4683 = vsel %vm1335, %v4681, %v4682
        %v4684 = vrot.slane %v4560, 5
        %v4685 = vrot.slane %v4684, 4
        %v4686 = vrot.slane %v3827, 5
        %v4687 = vsel %vm1335, %v4685, %v4686
        %v4688 = vrot.slane %v4686, 4
        %v4689 = vrot.slane %v3828, 5
        %v4690 = vsel %vm1335, %v4688, %v4689
        %v4691 = vrot.slane %v4561, 5
        %v4692 = vrot.slane %v4691, 4
        %v4693 = vrot.slane %v3830, 5
        %v4694 = vsel %vm1335, %v4692, %v4693
        %v4695 = vrot.slane %v4693, 4
        %v4696 = vrot.slane %v3831, 5
        %v4697 = vsel %vm1335, %v4695, %v4696
        %v4698 = vrot.slane %v4562, 5
        %v4699 = vrot.slane %v4698, 4
        %v4700 = vrot.slane %v3833, 5
        %v4701 = vsel %vm1335, %v4699, %v4700
        %v4702 = vrot.slane %v4700, 4
        %v4703 = vrot.slane %v3834, 5
        %v4704 = vsel %vm1335, %v4702, %v4703
        %v4705 = vrot.slane %v4563, 5
        %v4706 = vrot.slane %v4705, 4
        %v4707 = vrot.slane %v3836, 5
        %v4708 = vsel %vm1335, %v4706, %v4707
        %v4709 = vrot.slane %v4707, 4
        %v4710 = vrot.slane %v3837, 5
        %v4711 = vsel %vm1335, %v4709, %v4710
        %v4712 = vrot.slane %v4564, 5
        %v4713 = vrot.slane %v4712, 4
        %v4714 = vrot.slane %v3839, 5
        %v4715 = vsel %vm1335, %v4713, %v4714
        %v4716 = vrot.slane %v4714, 4
        %v4717 = vrot.slane %v3840, 5
        %v4718 = vsel %vm1335, %v4716, %v4717
        %v4719 = vrot.slane %v4565, 5
        %v4720 = vrot.slane %v4719, 4
        %v4721 = vrot.slane %v3842, 5
        %v4722 = vsel %vm1335, %v4720, %v4721
        %v4723 = vrot.slane %v4721, 4
        %v4724 = vrot.slane %v3843, 5
        %v4725 = vsel %vm1335, %v4723, %v4724
        %s4726 = scalar_lea.vmem %s1, 512
        %v4727 = vld [vmem:[%s4726] sm:$0xf]
        %v4728 = vld [vmem:[%s4726 + $0x4] sm:$0xf]
        %v4729 = vld [vmem:[%s4726 + $0x8] sm:$0xf]
        %v4730 = vld [vmem:[%s4726 + $0xc] sm:$0xf]
        %v4731 = vld [vmem:[%s4726 + $0x10] sm:$0xf]
        %v4732 = vld [vmem:[%s4726 + $0x14] sm:$0xf]
        %v4733 = vld [vmem:[%s4726 + $0x18] sm:$0xf]
        %v4734 = vld [vmem:[%s4726 + $0x1c] sm:$0xf]
        %v4735 = vld [vmem:[%s4726 + $0x20] sm:$0xf]
        %v4736 = vld [vmem:[%s4726 + $0x24] sm:$0xf]
        %v4737 = vld [vmem:[%s4726 + $0x28] sm:$0xf]
        %v4738 = vld [vmem:[%s4726 + $0x2c] sm:$0xf]
        %v4739 = vld [vmem:[%s4726 + $0x30] sm:$0xf]
        %v4740 = vld [vmem:[%s4726 + $0x34] sm:$0xf]
        %v4741 = vld [vmem:[%s4726 + $0x38] sm:$0xf]
        %v4742 = vld [vmem:[%s4726 + $0x3c] sm:$0xf]
        %v4743 = vunpack.c.l.b16 %v4617
        %v4744 = vunpack.c.l.b16 %v4620
        %v4745 = vunpack.c.l.b16 %v4624
        %v4746 = vunpack.c.l.b16 %v4627
        %v4747 = vunpack.c.l.b16 %v4631
        %v4748 = vunpack.c.l.b16 %v4634
        %v4749 = vunpack.c.l.b16 %v4638
        %v4750 = vunpack.c.l.b16 %v4641
        %v4751 = vunpack.c.l.b16 %v4645
        %v4752 = vunpack.c.l.b16 %v4648
        %v4753 = vunpack.c.l.b16 %v4652
        %v4754 = vunpack.c.l.b16 %v4655
        %v4755 = vunpack.c.l.b16 %v4659
        %v4756 = vunpack.c.l.b16 %v4662
        %v4757 = vunpack.c.l.b16 %v4666
        %v4758 = vunpack.c.l.b16 %v4669
        %v4759 = vunpack.c.l.b16 %v4673
        %v4760 = vunpack.c.l.b16 %v4676
        %v4761 = vunpack.c.l.b16 %v4680
        %v4762 = vunpack.c.l.b16 %v4683
        %v4763 = vunpack.c.l.b16 %v4687
        %v4764 = vunpack.c.l.b16 %v4690
        %v4765 = vunpack.c.l.b16 %v4694
        %v4766 = vunpack.c.l.b16 %v4697
        %v4767 = vunpack.c.l.b16 %v4701
        %v4768 = vunpack.c.l.b16 %v4704
        %v4769 = vunpack.c.l.b16 %v4708
        %v4770 = vunpack.c.l.b16 %v4711
        %v4771 = vunpack.c.l.b16 %v4715
        %v4772 = vunpack.c.l.b16 %v4718
        %v4773 = vunpack.c.l.b16 %v4722
        %v4774 = vunpack.c.l.b16 %v4725
        %v4775 = vpack.c.b16 %v4744, %v4743
        %v4776 = vpack.c.b16 %v4746, %v4745
        %v4777 = vpack.c.b16 %v4748, %v4747
        %v4778 = vpack.c.b16 %v4750, %v4749
        %v4779 = vpack.c.b16 %v4752, %v4751
        %v4780 = vpack.c.b16 %v4754, %v4753
        %v4781 = vpack.c.b16 %v4756, %v4755
        %v4782 = vpack.c.b16 %v4758, %v4757
        %v4783 = vpack.c.b16 %v4760, %v4759
        %v4784 = vpack.c.b16 %v4762, %v4761
        %v4785 = vpack.c.b16 %v4764, %v4763
        %v4786 = vpack.c.b16 %v4766, %v4765
        %v4787 = vpack.c.b16 %v4768, %v4767
        %v4788 = vpack.c.b16 %v4770, %v4769
        %v4789 = vpack.c.b16 %v4772, %v4771
        %v4790 = vpack.c.b16 %v4774, %v4773
        %v4823 = vunpack.c.l.b16 %v4727
        %v4824 = vunpack.c.l.b16 %v4728
        %v4825 = vunpack.c.l.b16 %v4729
        %v4826 = vunpack.c.l.b16 %v4730
        %v4827 = vunpack.c.l.b16 %v4731
        %v4828 = vunpack.c.l.b16 %v4732
        %v4829 = vunpack.c.l.b16 %v4733
        %v4830 = vunpack.c.l.b16 %v4734
        %v4831 = vunpack.c.l.b16 %v4735
        %v4832 = vunpack.c.l.b16 %v4736
        %v4833 = vunpack.c.l.b16 %v4737
        %v4834 = vunpack.c.l.b16 %v4738
        %v4835 = vunpack.c.l.b16 %v4739
        %v4836 = vunpack.c.l.b16 %v4740
        %v4837 = vunpack.c.l.b16 %v4741
        %v4838 = vunpack.c.l.b16 %v4742
        %v4839 = vpack.c.b16 %v4824, %v4823
        %v4840 = vpack.c.b16 %v4826, %v4825
        %v4841 = vpack.c.b16 %v4828, %v4827
        %v4842 = vpack.c.b16 %v4830, %v4829
        %v4843 = vpack.c.b16 %v4832, %v4831
        %v4844 = vpack.c.b16 %v4834, %v4833
        %v4845 = vpack.c.b16 %v4836, %v4835
        %v4846 = vpack.c.b16 %v4838, %v4837
        %4855 = vmatprep.subr.bf16.mxu0 0
        %4856 = vmatpush1.bf16.msra.mxu0 %v4839
        %4857 = vmatprep.subr.bf16.mxu0 0
        %4858 = vmatpush1.bf16.msra.mxu0 %v4840
        %4859 = vmatprep.subr.bf16.mxu0 0
        %4860 = vmatpush1.bf16.msra.mxu0 %v4841
        %4861 = vmatprep.subr.bf16.mxu0 0
        %4862 = vmatpush1.bf16.msra.mxu0 %v4842
        %4863 = vmatprep.subr.bf16.mxu0 0
        %4864 = vmatpush1.bf16.msra.mxu0 %v4843
        %4865 = vmatprep.subr.bf16.mxu0 0
        %4866 = vmatpush1.bf16.msra.mxu0 %v4844
        %4867 = vmatprep.subr.bf16.mxu0 0
        %4868 = vmatpush1.bf16.msra.mxu0 %v4845
        %4869 = vmatprep.subr.bf16.mxu0 0
        %4870 = vmatpush1.bf16.msra.mxu0 %v4846
        %4871 = vmatprep.subr.bf16.mxu0 0
        %4872 = vmatpush1.bf16.msra.mxu0 0
        %4873 = vmatprep.subr.bf16.mxu0 0
        %4874 = vmatpush1.bf16.msra.mxu0 0
        %4875 = vmatprep.subr.bf16.mxu0 0
        %4876 = vmatpush1.bf16.msra.mxu0 0
        %4877 = vmatprep.subr.bf16.mxu0 0
        %4878 = vmatpush1.bf16.msra.mxu0 0
        %4879 = vmatprep.subr.bf16.mxu0 0
        %4880 = vmatpush1.bf16.msra.mxu0 0
        %4881 = vmatprep.subr.bf16.mxu0 0
        %4882 = vmatpush1.bf16.msra.mxu0 0
        %4883 = vmatprep.subr.bf16.mxu0 0
        %4884 = vmatpush1.bf16.msra.mxu0 0
        %4885 = vmatprep.subr.bf16.mxu0 0
        %4886 = vmatpush1.bf16.msra.mxu0 0
        %4887 = vmatprep.mubr.bf16.mxu0 0
        %4888 = vmatmul.mubr.bf16.gmra.mrb[0].mxu0 %v4775
        %v4889 = vpop.f32.mrb[0].mxu0
        %v4890 = vadd.f32 0.0, %v4889
        %v4891 = vpop.f32.mrb[0].mxu0
        %v4892 = vpop.f32.mrb[0].mxu0
        %v4893 = vadd.f32 0.0, %v4892
        %v4894 = vpop.f32.mrb[0].mxu0
        %4895 = vmatprep.mubr.bf16.mxu0 0
        %4896 = vmatmul.mubr.bf16.gmra.mrb[0].mxu0 %v4776
        %v4897 = vpop.f32.mrb[0].mxu0
        %v4898 = vadd.f32 0.0, %v4897
        %v4899 = vpop.f32.mrb[0].mxu0
        %v4900 = vpop.f32.mrb[0].mxu0
        %v4901 = vadd.f32 0.0, %v4900
        %v4902 = vpop.f32.mrb[0].mxu0
        %4903 = vmatprep.mubr.bf16.mxu0 0
        %4904 = vmatmul.mubr.bf16.gmra.mrb[0].mxu0 %v4777
        %v4905 = vpop.f32.mrb[0].mxu0
        %v4906 = vadd.f32 0.0, %v4905
        %v4907 = vpop.f32.mrb[0].mxu0
        %v4908 = vpop.f32.mrb[0].mxu0
        %v4909 = vadd.f32 0.0, %v4908
        %v4910 = vpop.f32.mrb[0].mxu0
        %4911 = vmatprep.mubr.bf16.mxu0 0
        %4912 = vmatmul.mubr.bf16.gmra.mrb[0].mxu0 %v4778
        %v4913 = vpop.f32.mrb[0].mxu0
        %v4914 = vadd.f32 0.0, %v4913
        %v4915 = vpop.f32.mrb[0].mxu0
        %v4916 = vpop.f32.mrb[0].mxu0
        %v4917 = vadd.f32 0.0, %v4916
        %v4918 = vpop.f32.mrb[0].mxu0
        %4919 = vmatprep.mubr.bf16.mxu0 0
        %4920 = vmatmul.mubr.bf16.gmra.mrb[0].mxu0 %v4779
        %v4921 = vpop.f32.mrb[0].mxu0
        %v4922 = vadd.f32 0.0, %v4921
        %v4923 = vpop.f32.mrb[0].mxu0
        %v4924 = vpop.f32.mrb[0].mxu0
        %v4925 = vadd.f32 0.0, %v4924
        %v4926 = vpop.f32.mrb[0].mxu0
        %4927 = vmatprep.mubr.bf16.mxu0 0
        %4928 = vmatmul.mubr.bf16.gmra.mrb[0].mxu0 %v4780
        %v4929 = vpop.f32.mrb[0].mxu0
        %v4930 = vadd.f32 0.0, %v4929
        %v4931 = vpop.f32.mrb[0].mxu0
        %v4932 = vpop.f32.mrb[0].mxu0
        %v4933 = vadd.f32 0.0, %v4932
        %v4934 = vpop.f32.mrb[0].mxu0
        %4935 = vmatprep.mubr.bf16.mxu0 0
        %4936 = vmatmul.mubr.bf16.gmra.mrb[0].mxu0 %v4781
        %v4937 = vpop.f32.mrb[0].mxu0
        %v4938 = vadd.f32 0.0, %v4937
        %v4939 = vpop.f32.mrb[0].mxu0
        %v4940 = vpop.f32.mrb[0].mxu0
        %v4941 = vadd.f32 0.0, %v4940
        %v4942 = vpop.f32.mrb[0].mxu0
        %4943 = vmatprep.mubr.bf16.mxu0 0
        %4944 = vmatmul.mubr.bf16.gmra.mrb[0].mxu0 %v4782
        %v4945 = vpop.f32.mrb[0].mxu0
        %v4946 = vadd.f32 0.0, %v4945
        %v4947 = vpop.f32.mrb[0].mxu0
        %v4948 = vpop.f32.mrb[0].mxu0
        %v4949 = vadd.f32 0.0, %v4948
        %v4950 = vpop.f32.mrb[0].mxu0
        %4951 = vmatprep.mubr.bf16.mxu0 0
        %4952 = vmatmul.mubr.bf16.gmra.mrb[0].mxu0 %v4783
        %v4953 = vpop.f32.mrb[0].mxu0
        %v4954 = vadd.f32 0.0, %v4953
        %v4955 = vpop.f32.mrb[0].mxu0
        %v4956 = vpop.f32.mrb[0].mxu0
        %v4957 = vadd.f32 0.0, %v4956
        %v4958 = vpop.f32.mrb[0].mxu0
        %4959 = vmatprep.mubr.bf16.mxu0 0
        %4960 = vmatmul.mubr.bf16.gmra.mrb[0].mxu0 %v4784
        %v4961 = vpop.f32.mrb[0].mxu0
        %v4962 = vadd.f32 0.0, %v4961
        %v4963 = vpop.f32.mrb[0].mxu0
        %v4964 = vpop.f32.mrb[0].mxu0
        %v4965 = vadd.f32 0.0, %v4964
        %v4966 = vpop.f32.mrb[0].mxu0
        %4967 = vmatprep.mubr.bf16.mxu0 0
        %4968 = vmatmul.mubr.bf16.gmra.mrb[0].mxu0 %v4785
        %v4969 = vpop.f32.mrb[0].mxu0
        %v4970 = vadd.f32 0.0, %v4969
        %v4971 = vpop.f32.mrb[0].mxu0
        %v4972 = vpop.f32.mrb[0].mxu0
        %v4973 = vadd.f32 0.0, %v4972
        %v4974 = vpop.f32.mrb[0].mxu0
        %4975 = vmatprep.mubr.bf16.mxu0 0
        %4976 = vmatmul.mubr.bf16.gmra.mrb[0].mxu0 %v4786
        %v4977 = vpop.f32.mrb[0].mxu0
        %v4978 = vadd.f32 0.0, %v4977
        %v4979 = vpop.f32.mrb[0].mxu0
        %v4980 = vpop.f32.mrb[0].mxu0
        %v4981 = vadd.f32 0.0, %v4980
        %v4982 = vpop.f32.mrb[0].mxu0
        %4983 = vmatprep.mubr.bf16.mxu0 0
        %4984 = vmatmul.mubr.bf16.gmra.mrb[0].mxu0 %v4787
        %v4985 = vpop.f32.mrb[0].mxu0
        %v4986 = vadd.f32 0.0, %v4985
        %v4987 = vpop.f32.mrb[0].mxu0
        %v4988 = vpop.f32.mrb[0].mxu0
        %v4989 = vadd.f32 0.0, %v4988
        %v4990 = vpop.f32.mrb[0].mxu0
        %4991 = vmatprep.mubr.bf16.mxu0 0
        %4992 = vmatmul.mubr.bf16.gmra.mrb[0].mxu0 %v4788
        %v4993 = vpop.f32.mrb[0].mxu0
        %v4994 = vadd.f32 0.0, %v4993
        %v4995 = vpop.f32.mrb[0].mxu0
        %v4996 = vpop.f32.mrb[0].mxu0
        %v4997 = vadd.f32 0.0, %v4996
        %v4998 = vpop.f32.mrb[0].mxu0
        %4999 = vmatprep.mubr.bf16.mxu0 0
        %5000 = vmatmul.mubr.bf16.gmra.mrb[0].mxu0 %v4789
        %v5001 = vpop.f32.mrb[0].mxu0
        %v5002 = vadd.f32 0.0, %v5001
        %v5003 = vpop.f32.mrb[0].mxu0
        %v5004 = vpop.f32.mrb[0].mxu0
        %v5005 = vadd.f32 0.0, %v5004
        %v5006 = vpop.f32.mrb[0].mxu0
        %5007 = vmatprep.mubr.bf16.mxu0 0
        %5008 = vmatmul.mubr.bf16.gmra.mrb[0].mxu0 %v4790
        %v5009 = vpop.f32.mrb[0].mxu0
        %v5010 = vadd.f32 0.0, %v5009
        %v5011 = vpop.f32.mrb[0].mxu0
        %v5012 = vpop.f32.mrb[0].mxu0
        %v5013 = vadd.f32 0.0, %v5012
        %v5014 = vpop.f32.mrb[0].mxu0
        %5015 = vdwg.mxu0
        %v5016 = vadd.f32 %v4518, %v4890
        %v5017 = vadd.f32 %v4519, %v4893
        %v5018 = vadd.f32 %v4520, %v4898
        %v5019 = vadd.f32 %v4521, %v4901
        %v5020 = vadd.f32 %v4522, %v4906
        %v5021 = vadd.f32 %v4523, %v4909
        %v5022 = vadd.f32 %v4524, %v4914
        %v5023 = vadd.f32 %v4525, %v4917
        %v5024 = vadd.f32 %v4526, %v4922
        %v5025 = vadd.f32 %v4527, %v4925
        %v5026 = vadd.f32 %v4528, %v4930
        %v5027 = vadd.f32 %v4529, %v4933
        %v5028 = vadd.f32 %v4530, %v4938
        %v5029 = vadd.f32 %v4531, %v4941
        %v5030 = vadd.f32 %v4532, %v4946
        %v5031 = vadd.f32 %v4533, %v4949
        %v5032 = vadd.f32 %v4534, %v4954
        %v5033 = vadd.f32 %v4535, %v4957
        %v5034 = vadd.f32 %v4536, %v4962
        %v5035 = vadd.f32 %v4537, %v4965
        %v5036 = vadd.f32 %v4538, %v4970
        %v5037 = vadd.f32 %v4539, %v4973
        %v5038 = vadd.f32 %v4540, %v4978
        %v5039 = vadd.f32 %v4541, %v4981
        %v5040 = vadd.f32 %v4542, %v4986
        %v5041 = vadd.f32 %v4543, %v4989
        %v5042 = vadd.f32 %v4544, %v4994
        %v5043 = vadd.f32 %v4545, %v4997
        %v5044 = vadd.f32 %v4546, %v5002
        %v5045 = vadd.f32 %v4547, %v5005
        %v5046 = vadd.f32 %v4548, %v5010
        %v5047 = vadd.f32 %v4549, %v5013
        %v5048 = vld [vmem:[%s2] sm:$0x1]
        %v5050 = vlaneseq
        %v5051 = vshrl.u32 %v5050, 7
        %v5052 = vsub.s32 0, %v5051
        %v5053 = vrot.slane %v5048, %v5052
        %v5055 = vadd.f32 %v5016, %v5053
        %v5056 = vadd.f32 %v5017, %v5053
        %v5057 = vadd.f32 %v5018, %v5053
        %v5058 = vadd.f32 %v5019, %v5053
        %v5059 = vadd.f32 %v5020, %v5053
        %v5060 = vadd.f32 %v5021, %v5053
        %v5061 = vadd.f32 %v5022, %v5053
        %v5062 = vadd.f32 %v5023, %v5053
        %v5063 = vadd.f32 %v5024, %v5053
        %v5064 = vadd.f32 %v5025, %v5053
        %v5065 = vadd.f32 %v5026, %v5053
        %v5066 = vadd.f32 %v5027, %v5053
        %v5067 = vadd.f32 %v5028, %v5053
        %v5068 = vadd.f32 %v5029, %v5053
        %v5069 = vadd.f32 %v5030, %v5053
        %v5070 = vadd.f32 %v5031, %v5053
        %v5071 = vadd.f32 %v5032, %v5053
        %v5072 = vadd.f32 %v5033, %v5053
        %v5073 = vadd.f32 %v5034, %v5053
        %v5074 = vadd.f32 %v5035, %v5053
        %v5075 = vadd.f32 %v5036, %v5053
        %v5076 = vadd.f32 %v5037, %v5053
        %v5077 = vadd.f32 %v5038, %v5053
        %v5078 = vadd.f32 %v5039, %v5053
        %v5079 = vadd.f32 %v5040, %v5053
        %v5080 = vadd.f32 %v5041, %v5053
        %v5081 = vadd.f32 %v5042, %v5053
        %v5082 = vadd.f32 %v5043, %v5053
        %v5083 = vadd.f32 %v5044, %v5053
        %v5084 = vadd.f32 %v5045, %v5053
        %v5085 = vadd.f32 %v5046, %v5053
        %v5086 = vadd.f32 %v5047, %v5053
        %v5087 = vmax.f32 %v5055, 0.0
        %v5088 = vmax.f32 %v5056, 0.0
        %v5089 = vmax.f32 %v5057, 0.0
        %v5090 = vmax.f32 %v5058, 0.0
        %v5091 = vmax.f32 %v5059, 0.0
        %v5092 = vmax.f32 %v5060, 0.0
        %v5093 = vmax.f32 %v5061, 0.0
        %v5094 = vmax.f32 %v5062, 0.0
        %v5095 = vmax.f32 %v5063, 0.0
        %v5096 = vmax.f32 %v5064, 0.0
        %v5097 = vmax.f32 %v5065, 0.0
        %v5098 = vmax.f32 %v5066, 0.0
        %v5099 = vmax.f32 %v5067, 0.0
        %v5100 = vmax.f32 %v5068, 0.0
        %v5101 = vmax.f32 %v5069, 0.0
        %v5102 = vmax.f32 %v5070, 0.0
        %v5103 = vmax.f32 %v5071, 0.0
        %v5104 = vmax.f32 %v5072, 0.0
        %v5105 = vmax.f32 %v5073, 0.0
        %v5106 = vmax.f32 %v5074, 0.0
        %v5107 = vmax.f32 %v5075, 0.0
        %v5108 = vmax.f32 %v5076, 0.0
        %v5109 = vmax.f32 %v5077, 0.0
        %v5110 = vmax.f32 %v5078, 0.0
        %v5111 = vmax.f32 %v5079, 0.0
        %v5112 = vmax.f32 %v5080, 0.0
        %v5113 = vmax.f32 %v5081, 0.0
        %v5114 = vmax.f32 %v5082, 0.0
        %v5115 = vmax.f32 %v5083, 0.0
        %v5116 = vmax.f32 %v5084, 0.0
        %v5117 = vmax.f32 %v5085, 0.0
        %v5118 = vmax.f32 %v5086, 0.0
        %5119 = vst [vmem:[#allocation2] sm:$0xff] 0.0
        %5120 = vst [vmem:[#allocation2 + $0x8] sm:$0xff] 0.0
        %5121 = vst [vmem:[#allocation2 + $0x10] sm:$0x3] 0.0
        %5122 = vst [vmem:[#allocation2 + $0x18] sm:$0xff] 0.0
        %5123 = vst [vmem:[#allocation2 + $0x20] sm:$0xff] 0.0
        %5124 = vst [vmem:[#allocation2 + $0x28] sm:$0x3] 0.0
        %5125 = vst [vmem:[#allocation2 + $0x30] sm:$0xff] 0.0
        %5126 = vst [vmem:[#allocation2 + $0x38] sm:$0xff] 0.0
        %5127 = vst [vmem:[#allocation2 + $0x40] sm:$0x3] 0.0
        %5128 = vst [vmem:[#allocation2 + $0x48] sm:$0xff] 0.0
        %5129 = vst [vmem:[#allocation2 + $0x50] sm:$0xff] 0.0
        %5130 = vst [vmem:[#allocation2 + $0x58] sm:$0x3] 0.0
        %5131 = vst [vmem:[#allocation2 + $0x60] sm:$0xff] 0.0
        %5132 = vst [vmem:[#allocation2 + $0x68] sm:$0xff] 0.0
        %5133 = vst [vmem:[#allocation2 + $0x70] sm:$0x3] 0.0
        %5134 = vst [vmem:[#allocation2 + $0x78] sm:$0xff] 0.0
        %5135 = vst [vmem:[#allocation2 + $0x80] sm:$0xff] 0.0
        %5136 = vst [vmem:[#allocation2 + $0x88] sm:$0x3] 0.0
        %5137 = vst [vmem:[#allocation2 + $0x90] sm:$0xff] 0.0
        %5138 = vst [vmem:[#allocation2 + $0x98] sm:$0xff] 0.0
        %5139 = vst [vmem:[#allocation2 + $0xa0] sm:$0x3] 0.0
        %5140 = vst [vmem:[#allocation2 + $0xa8] sm:$0xff] 0.0
        %5141 = vst [vmem:[#allocation2 + $0xb0] sm:$0xff] 0.0
        %5142 = vst [vmem:[#allocation2 + $0xb8] sm:$0x3] 0.0
        %5143 = vst [vmem:[#allocation2 + $0xc0] sm:$0xff] 0.0
        %5144 = vst [vmem:[#allocation2 + $0xc8] sm:$0xff] 0.0
        %5145 = vst [vmem:[#allocation2 + $0xd0] sm:$0x3] 0.0
        %5146 = vst [vmem:[#allocation2 + $0xd8] sm:$0xff] 0.0
        %5147 = vst [vmem:[#allocation2 + $0xe0] sm:$0xff] 0.0
        %5148 = vst [vmem:[#allocation2 + $0xe8] sm:$0x3] 0.0
        %5149 = vst [vmem:[#allocation2 + $0xf0] sm:$0xff] 0.0
        %5150 = vst [vmem:[#allocation2 + $0xf8] sm:$0xff] 0.0
        %5151 = vst [vmem:[#allocation2 + $0x100] sm:$0x3] 0.0
        %5152 = vst [vmem:[#allocation2 + $0x108] sm:$0xff] 0.0
        %5153 = vst [vmem:[#allocation2 + $0x110] sm:$0xff] 0.0
        %5154 = vst [vmem:[#allocation2 + $0x118] sm:$0x3] 0.0
        %5155 = vst [vmem:[#allocation2 + $0x120] sm:$0xff] 0.0
        %5156 = vst [vmem:[#allocation2 + $0x128] sm:$0xff] 0.0
        %5157 = vst [vmem:[#allocation2 + $0x130] sm:$0x3] 0.0
        %5158 = vst [vmem:[#allocation2 + $0x138] sm:$0xff] 0.0
        %5159 = vst [vmem:[#allocation2 + $0x140] sm:$0xff] 0.0
        %5160 = vst [vmem:[#allocation2 + $0x148] sm:$0x3] 0.0
        %5161 = vst [vmem:[#allocation2 + $0x150] sm:$0xff] 0.0
        %5162 = vst [vmem:[#allocation2 + $0x158] sm:$0xff] 0.0
        %5163 = vst [vmem:[#allocation2 + $0x160] sm:$0x3] 0.0
        %5164 = vst [vmem:[#allocation2 + $0x168] sm:$0xff] 0.0
        %5165 = vst [vmem:[#allocation2 + $0x170] sm:$0xff] 0.0
        %5166 = vst [vmem:[#allocation2 + $0x178] sm:$0x3] 0.0
        %5167 = vst [vmem:[#allocation2 + $0x180] sm:$0xff] 0.0
        %5168 = vst [vmem:[#allocation2 + $0x188] sm:$0xff] 0.0
        %5169 = vst [vmem:[#allocation2 + $0x190] sm:$0x3] 0.0
        %5170 = vst [vmem:[#allocation2 + $0x198] sm:$0xff] 0.0
        %5171 = vst [vmem:[#allocation2 + $0x1a0] sm:$0xff] 0.0
        %5172 = vst [vmem:[#allocation2 + $0x1a8] sm:$0x3] 0.0
        %s5173 = scalar_lea.vmem [#allocation2], 24
        %5174 = vst [vmem:[%s5173 + $0x1] sm:$0xff] %v5087
        %5175 = vst [vmem:[%s5173 + $0x9] sm:$0xff] %v5088
        %5176 = vst [vmem:[%s5173 + $0x19] sm:$0xff] %v5089
        %5177 = vst [vmem:[%s5173 + $0x21] sm:$0xff] %v5090
        %5178 = vst [vmem:[%s5173 + $0x31] sm:$0xff] %v5091
        %5179 = vst [vmem:[%s5173 + $0x39] sm:$0xff] %v5092
        %5180 = vst [vmem:[%s5173 + $0x49] sm:$0xff] %v5093
        %5181 = vst [vmem:[%s5173 + $0x51] sm:$0xff] %v5094
        %5182 = vst [vmem:[%s5173 + $0x61] sm:$0xff] %v5095
        %5183 = vst [vmem:[%s5173 + $0x69] sm:$0xff] %v5096
        %5184 = vst [vmem:[%s5173 + $0x79] sm:$0xff] %v5097
        %5185 = vst [vmem:[%s5173 + $0x81] sm:$0xff] %v5098
        %5186 = vst [vmem:[%s5173 + $0x91] sm:$0xff] %v5099
        %5187 = vst [vmem:[%s5173 + $0x99] sm:$0xff] %v5100
        %5188 = vst [vmem:[%s5173 + $0xa9] sm:$0xff] %v5101
        %5189 = vst [vmem:[%s5173 + $0xb1] sm:$0xff] %v5102
        %5190 = vst [vmem:[%s5173 + $0xc1] sm:$0xff] %v5103
        %5191 = vst [vmem:[%s5173 + $0xc9] sm:$0xff] %v5104
        %5192 = vst [vmem:[%s5173 + $0xd9] sm:$0xff] %v5105
        %5193 = vst [vmem:[%s5173 + $0xe1] sm:$0xff] %v5106
        %5194 = vst [vmem:[%s5173 + $0xf1] sm:$0xff] %v5107
        %5195 = vst [vmem:[%s5173 + $0xf9] sm:$0xff] %v5108
        %5196 = vst [vmem:[%s5173 + $0x109] sm:$0xff] %v5109
        %5197 = vst [vmem:[%s5173 + $0x111] sm:$0xff] %v5110
        %5198 = vst [vmem:[%s5173 + $0x121] sm:$0xff] %v5111
        %5199 = vst [vmem:[%s5173 + $0x129] sm:$0xff] %v5112
        %5200 = vst [vmem:[%s5173 + $0x139] sm:$0xff] %v5113
        %5201 = vst [vmem:[%s5173 + $0x141] sm:$0xff] %v5114
        %5202 = vst [vmem:[%s5173 + $0x151] sm:$0xff] %v5115
        %5203 = vst [vmem:[%s5173 + $0x159] sm:$0xff] %v5116
        %5204 = vst [vmem:[%s5173 + $0x169] sm:$0xff] %v5117
        %5205 = vst [vmem:[%s5173 + $0x171] sm:$0xff] %v5118
        %v5206 = vld [vmem:[#allocation2] sm:$0xff]
        %v5207 = vld [vmem:[#allocation2 + $0x8] sm:$0xff]
        %v5208 = vld [vmem:[#allocation2 + $0x18] sm:$0xff]
        %v5209 = vld [vmem:[#allocation2 + $0x20] sm:$0xff]
        %v5210 = vld [vmem:[#allocation2 + $0x30] sm:$0xff]
        %v5211 = vld [vmem:[#allocation2 + $0x38] sm:$0xff]
        %v5212 = vld [vmem:[#allocation2 + $0x48] sm:$0xff]
        %v5213 = vld [vmem:[#allocation2 + $0x50] sm:$0xff]
        %v5214 = vld [vmem:[#allocation2 + $0x60] sm:$0xff]
        %v5215 = vld [vmem:[#allocation2 + $0x68] sm:$0xff]
        %v5216 = vld [vmem:[#allocation2 + $0x78] sm:$0xff]
        %v5217 = vld [vmem:[#allocation2 + $0x80] sm:$0xff]
        %v5218 = vld [vmem:[#allocation2 + $0x90] sm:$0xff]
        %v5219 = vld [vmem:[#allocation2 + $0x98] sm:$0xff]
        %v5220 = vld [vmem:[#allocation2 + $0xa8] sm:$0xff]
        %v5221 = vld [vmem:[#allocation2 + $0xb0] sm:$0xff]
        %v5222 = vld [vmem:[#allocation2 + $0xc0] sm:$0xff]
        %v5223 = vld [vmem:[#allocation2 + $0xc8] sm:$0xff]
        %v5224 = vld [vmem:[#allocation2 + $0xd8] sm:$0xff]
        %v5225 = vld [vmem:[#allocation2 + $0xe0] sm:$0xff]
        %v5226 = vld [vmem:[#allocation2 + $0xf0] sm:$0xff]
        %v5227 = vld [vmem:[#allocation2 + $0xf8] sm:$0xff]
        %v5228 = vld [vmem:[#allocation2 + $0x108] sm:$0xff]
        %v5229 = vld [vmem:[#allocation2 + $0x110] sm:$0xff]
        %v5230 = vld [vmem:[#allocation2 + $0x120] sm:$0xff]
        %v5231 = vld [vmem:[#allocation2 + $0x128] sm:$0xff]
        %v5232 = vld [vmem:[#allocation2 + $0x138] sm:$0xff]
        %v5233 = vld [vmem:[#allocation2 + $0x140] sm:$0xff]
        %v5234 = vld [vmem:[#allocation2 + $0x150] sm:$0xff]
        %v5235 = vld [vmem:[#allocation2 + $0x158] sm:$0xff]
        %v5236 = vld [vmem:[#allocation2 + $0x168] sm:$0xff]
        %v5237 = vld [vmem:[#allocation2 + $0x170] sm:$0xff]
        %v5238 = vpack.c.bf16 %v5207, %v5206
        %v5239 = vpack.c.bf16 %v5209, %v5208
        %v5240 = vpack.c.bf16 %v5211, %v5210
        %v5241 = vpack.c.bf16 %v5213, %v5212
        %v5242 = vpack.c.bf16 %v5215, %v5214
        %v5243 = vpack.c.bf16 %v5217, %v5216
        %v5244 = vpack.c.bf16 %v5219, %v5218
        %v5245 = vpack.c.bf16 %v5221, %v5220
        %v5246 = vpack.c.bf16 %v5223, %v5222
        %v5247 = vpack.c.bf16 %v5225, %v5224
        %v5248 = vpack.c.bf16 %v5227, %v5226
        %v5249 = vpack.c.bf16 %v5229, %v5228
        %v5250 = vpack.c.bf16 %v5231, %v5230
        %v5251 = vpack.c.bf16 %v5233, %v5232
        %v5252 = vpack.c.bf16 %v5235, %v5234
        %v5253 = vpack.c.bf16 %v5237, %v5236
        %v5254 = vld [vmem:[#allocation3] sm:$0xf]
        %v5255 = vld [vmem:[#allocation3 + $0x4] sm:$0xf]
        %v5256 = vld [vmem:[#allocation3 + $0x8] sm:$0xf]
        %v5257 = vld [vmem:[#allocation3 + $0xc] sm:$0xf]
        %v5258 = vld [vmem:[#allocation3 + $0x10] sm:$0xf]
        %v5259 = vld [vmem:[#allocation3 + $0x14] sm:$0xf]
        %v5260 = vld [vmem:[#allocation3 + $0x18] sm:$0xf]
        %v5261 = vld [vmem:[#allocation3 + $0x1c] sm:$0xf]
        %v5262 = vld [vmem:[#allocation3 + $0x20] sm:$0xf]
        %v5263 = vld [vmem:[#allocation3 + $0x24] sm:$0xf]
        %v5264 = vld [vmem:[#allocation3 + $0x28] sm:$0xf]
        %v5265 = vld [vmem:[#allocation3 + $0x2c] sm:$0xf]
        %v5266 = vld [vmem:[#allocation3 + $0x30] sm:$0xf]
        %v5267 = vld [vmem:[#allocation3 + $0x34] sm:$0xf]
        %v5268 = vld [vmem:[#allocation3 + $0x38] sm:$0xf]
        %v5269 = vld [vmem:[#allocation3 + $0x3c] sm:$0xf]
        %v5270 = vld [vmem:[#allocation2 + $0x1] sm:$0xff]
        %v5271 = vld [vmem:[#allocation2 + $0x9] sm:$0xff]
        %v5272 = vld [vmem:[#allocation2 + $0x19] sm:$0xff]
        %v5273 = vld [vmem:[#allocation2 + $0x21] sm:$0xff]
        %v5274 = vld [vmem:[#allocation2 + $0x31] sm:$0xff]
        %v5275 = vld [vmem:[#allocation2 + $0x39] sm:$0xff]
        %v5276 = vld [vmem:[#allocation2 + $0x49] sm:$0xff]
        %v5277 = vld [vmem:[#allocation2 + $0x51] sm:$0xff]
        %v5278 = vld [vmem:[#allocation2 + $0x61] sm:$0xff]
        %v5279 = vld [vmem:[#allocation2 + $0x69] sm:$0xff]
        %v5280 = vld [vmem:[#allocation2 + $0x79] sm:$0xff]
        %v5281 = vld [vmem:[#allocation2 + $0x81] sm:$0xff]
        %v5282 = vld [vmem:[#allocation2 + $0x91] sm:$0xff]
        %v5283 = vld [vmem:[#allocation2 + $0x99] sm:$0xff]
        %v5284 = vld [vmem:[#allocation2 + $0xa9] sm:$0xff]
        %v5285 = vld [vmem:[#allocation2 + $0xb1] sm:$0xff]
        %v5286 = vld [vmem:[#allocation2 + $0xc1] sm:$0xff]
        %v5287 = vld [vmem:[#allocation2 + $0xc9] sm:$0xff]
        %v5288 = vld [vmem:[#allocation2 + $0xd9] sm:$0xff]
        %v5289 = vld [vmem:[#allocation2 + $0xe1] sm:$0xff]
        %v5290 = vld [vmem:[#allocation2 + $0xf1] sm:$0xff]
        %v5291 = vld [vmem:[#allocation2 + $0xf9] sm:$0xff]
        %v5292 = vld [vmem:[#allocation2 + $0x109] sm:$0xff]
        %v5293 = vld [vmem:[#allocation2 + $0x111] sm:$0xff]
        %v5294 = vld [vmem:[#allocation2 + $0x121] sm:$0xff]
        %v5295 = vld [vmem:[#allocation2 + $0x129] sm:$0xff]
        %v5296 = vld [vmem:[#allocation2 + $0x139] sm:$0xff]
        %v5297 = vld [vmem:[#allocation2 + $0x141] sm:$0xff]
        %v5298 = vld [vmem:[#allocation2 + $0x151] sm:$0xff]
        %v5299 = vld [vmem:[#allocation2 + $0x159] sm:$0xff]
        %v5300 = vld [vmem:[#allocation2 + $0x169] sm:$0xff]
        %v5301 = vld [vmem:[#allocation2 + $0x171] sm:$0xff]
        %v5302 = vpack.c.bf16 %v5271, %v5270
        %v5303 = vpack.c.bf16 %v5273, %v5272
        %v5304 = vpack.c.bf16 %v5275, %v5274
        %v5305 = vpack.c.bf16 %v5277, %v5276
        %v5306 = vpack.c.bf16 %v5279, %v5278
        %v5307 = vpack.c.bf16 %v5281, %v5280
        %v5308 = vpack.c.bf16 %v5283, %v5282
        %v5309 = vpack.c.bf16 %v5285, %v5284
        %v5310 = vpack.c.bf16 %v5287, %v5286
        %v5311 = vpack.c.bf16 %v5289, %v5288
        %v5312 = vpack.c.bf16 %v5291, %v5290
        %v5313 = vpack.c.bf16 %v5293, %v5292
        %v5314 = vpack.c.bf16 %v5295, %v5294
        %v5315 = vpack.c.bf16 %v5297, %v5296
        %v5316 = vpack.c.bf16 %v5299, %v5298
        %v5317 = vpack.c.bf16 %v5301, %v5300
        %s5318 = scalar_lea.vmem [#allocation3], 64
        %v5319 = vld [vmem:[%s5318] sm:$0xf]
        %v5320 = vld [vmem:[%s5318 + $0x4] sm:$0xf]
        %v5321 = vld [vmem:[%s5318 + $0x8] sm:$0xf]
        %v5322 = vld [vmem:[%s5318 + $0xc] sm:$0xf]
        %v5323 = vld [vmem:[%s5318 + $0x10] sm:$0xf]
        %v5324 = vld [vmem:[%s5318 + $0x14] sm:$0xf]
        %v5325 = vld [vmem:[%s5318 + $0x18] sm:$0xf]
        %v5326 = vld [vmem:[%s5318 + $0x1c] sm:$0xf]
        %v5327 = vld [vmem:[%s5318 + $0x20] sm:$0xf]
        %v5328 = vld [vmem:[%s5318 + $0x24] sm:$0xf]
        %v5329 = vld [vmem:[%s5318 + $0x28] sm:$0xf]
        %v5330 = vld [vmem:[%s5318 + $0x2c] sm:$0xf]
        %v5331 = vld [vmem:[%s5318 + $0x30] sm:$0xf]
        %v5332 = vld [vmem:[%s5318 + $0x34] sm:$0xf]
        %v5333 = vld [vmem:[%s5318 + $0x38] sm:$0xf]
        %v5334 = vld [vmem:[%s5318 + $0x3c] sm:$0xf]
        %v5351 = vunpack.c.l.b16 %v5319
        %v5352 = vunpack.c.l.b16 %v5320
        %v5353 = vunpack.c.l.b16 %v5321
        %v5354 = vunpack.c.l.b16 %v5322
        %v5355 = vunpack.c.l.b16 %v5323
        %v5356 = vunpack.c.l.b16 %v5324
        %v5357 = vunpack.c.l.b16 %v5325
        %v5358 = vunpack.c.l.b16 %v5326
        %v5359 = vunpack.c.l.b16 %v5327
        %v5360 = vunpack.c.l.b16 %v5328
        %v5361 = vunpack.c.l.b16 %v5329
        %v5362 = vunpack.c.l.b16 %v5330
        %v5363 = vunpack.c.l.b16 %v5331
        %v5364 = vunpack.c.l.b16 %v5332
        %v5365 = vunpack.c.l.b16 %v5333
        %v5366 = vunpack.c.l.b16 %v5334
        %v5367 = vpack.c.b16 %v5352, %v5351
        %v5368 = vpack.c.b16 %v5354, %v5353
        %v5369 = vpack.c.b16 %v5356, %v5355
        %v5370 = vpack.c.b16 %v5358, %v5357
        %v5371 = vpack.c.b16 %v5360, %v5359
        %v5372 = vpack.c.b16 %v5362, %v5361
        %v5373 = vpack.c.b16 %v5364, %v5363
        %v5374 = vpack.c.b16 %v5366, %v5365
        %5383 = vmatprep.subr.bf16.mxu0 0
        %5384 = vmatpush1.bf16.msra.mxu0 %v5367
        %5385 = vmatprep.subr.bf16.mxu0 0
        %5386 = vmatpush1.bf16.msra.mxu0 %v5368
        %5387 = vmatprep.subr.bf16.mxu0 0
        %5388 = vmatpush1.bf16.msra.mxu0 %v5369
        %5389 = vmatprep.subr.bf16.mxu0 0
        %5390 = vmatpush1.bf16.msra.mxu0 %v5370
        %5391 = vmatprep.subr.bf16.mxu0 0
        %5392 = vmatpush1.bf16.msra.mxu0 %v5371
        %5393 = vmatprep.subr.bf16.mxu0 0
        %5394 = vmatpush1.bf16.msra.mxu0 %v5372
        %5395 = vmatprep.subr.bf16.mxu0 0
        %5396 = vmatpush1.bf16.msra.mxu0 %v5373
        %5397 = vmatprep.subr.bf16.mxu0 0
        %5398 = vmatpush1.bf16.msra.mxu0 %v5374
        %5399 = vmatprep.subr.bf16.mxu0 0
        %5400 = vmatpush1.bf16.msra.mxu0 0
        %5401 = vmatprep.subr.bf16.mxu0 0
        %5402 = vmatpush1.bf16.msra.mxu0 0
        %5403 = vmatprep.subr.bf16.mxu0 0
        %5404 = vmatpush1.bf16.msra.mxu0 0
        %5405 = vmatprep.subr.bf16.mxu0 0
        %5406 = vmatpush1.bf16.msra.mxu0 0
        %5407 = vmatprep.subr.bf16.mxu0 0
        %5408 = vmatpush1.bf16.msra.mxu0 0
        %5409 = vmatprep.subr.bf16.mxu0 0
        %5410 = vmatpush1.bf16.msra.mxu0 0
        %5411 = vmatprep.subr.bf16.mxu0 0
        %5412 = vmatpush1.bf16.msra.mxu0 0
        %5413 = vmatprep.subr.bf16.mxu0 0
        %5414 = vmatpush1.bf16.msra.mxu0 0
        %5415 = vmatprep.mubr.bf16.mxu0 0
        %5416 = vmatmul.mubr.bf16.gmra.mrb[0].mxu0 %v5302
        %v5417 = vpop.f32.mrb[0].mxu0
        %v5418 = vadd.f32 0.0, %v5417
        %v5419 = vpop.f32.mrb[0].mxu0
        %v5420 = vpop.f32.mrb[0].mxu0
        %v5421 = vadd.f32 0.0, %v5420
        %v5422 = vpop.f32.mrb[0].mxu0
        %5423 = vmatprep.mubr.bf16.mxu0 0
        %5424 = vmatmul.mubr.bf16.gmra.mrb[0].mxu0 %v5303
        %v5425 = vpop.f32.mrb[0].mxu0
        %v5426 = vadd.f32 0.0, %v5425
        %v5427 = vpop.f32.mrb[0].mxu0
        %v5428 = vpop.f32.mrb[0].mxu0
        %v5429 = vadd.f32 0.0, %v5428
        %v5430 = vpop.f32.mrb[0].mxu0
        %5431 = vmatprep.mubr.bf16.mxu0 0
        %5432 = vmatmul.mubr.bf16.gmra.mrb[0].mxu0 %v5304
        %v5433 = vpop.f32.mrb[0].mxu0
        %v5434 = vadd.f32 0.0, %v5433
        %v5435 = vpop.f32.mrb[0].mxu0
        %v5436 = vpop.f32.mrb[0].mxu0
        %v5437 = vadd.f32 0.0, %v5436
        %v5438 = vpop.f32.mrb[0].mxu0
        %5439 = vmatprep.mubr.bf16.mxu0 0
        %5440 = vmatmul.mubr.bf16.gmra.mrb[0].mxu0 %v5305
        %v5441 = vpop.f32.mrb[0].mxu0
        %v5442 = vadd.f32 0.0, %v5441
        %v5443 = vpop.f32.mrb[0].mxu0
        %v5444 = vpop.f32.mrb[0].mxu0
        %v5445 = vadd.f32 0.0, %v5444
        %v5446 = vpop.f32.mrb[0].mxu0
        %5447 = vmatprep.mubr.bf16.mxu0 0
        %5448 = vmatmul.mubr.bf16.gmra.mrb[0].mxu0 %v5306
        %v5449 = vpop.f32.mrb[0].mxu0
        %v5450 = vadd.f32 0.0, %v5449
        %v5451 = vpop.f32.mrb[0].mxu0
        %v5452 = vpop.f32.mrb[0].mxu0
        %v5453 = vadd.f32 0.0, %v5452
        %v5454 = vpop.f32.mrb[0].mxu0
        %5455 = vmatprep.mubr.bf16.mxu0 0
        %5456 = vmatmul.mubr.bf16.gmra.mrb[0].mxu0 %v5307
        %v5457 = vpop.f32.mrb[0].mxu0
        %v5458 = vadd.f32 0.0, %v5457
        %v5459 = vpop.f32.mrb[0].mxu0
        %v5460 = vpop.f32.mrb[0].mxu0
        %v5461 = vadd.f32 0.0, %v5460
        %v5462 = vpop.f32.mrb[0].mxu0
        %5463 = vmatprep.mubr.bf16.mxu0 0
        %5464 = vmatmul.mubr.bf16.gmra.mrb[0].mxu0 %v5308
        %v5465 = vpop.f32.mrb[0].mxu0
        %v5466 = vadd.f32 0.0, %v5465
        %v5467 = vpop.f32.mrb[0].mxu0
        %v5468 = vpop.f32.mrb[0].mxu0
        %v5469 = vadd.f32 0.0, %v5468
        %v5470 = vpop.f32.mrb[0].mxu0
        %5471 = vmatprep.mubr.bf16.mxu0 0
        %5472 = vmatmul.mubr.bf16.gmra.mrb[0].mxu0 %v5309
        %v5473 = vpop.f32.mrb[0].mxu0
        %v5474 = vadd.f32 0.0, %v5473
        %v5475 = vpop.f32.mrb[0].mxu0
        %v5476 = vpop.f32.mrb[0].mxu0
        %v5477 = vadd.f32 0.0, %v5476
        %v5478 = vpop.f32.mrb[0].mxu0
        %5479 = vmatprep.mubr.bf16.mxu0 0
        %5480 = vmatmul.mubr.bf16.gmra.mrb[0].mxu0 %v5310
        %v5481 = vpop.f32.mrb[0].mxu0
        %v5482 = vadd.f32 0.0, %v5481
        %v5483 = vpop.f32.mrb[0].mxu0
        %v5484 = vpop.f32.mrb[0].mxu0
        %v5485 = vadd.f32 0.0, %v5484
        %v5486 = vpop.f32.mrb[0].mxu0
        %5487 = vmatprep.mubr.bf16.mxu0 0
        %5488 = vmatmul.mubr.bf16.gmra.mrb[0].mxu0 %v5311
        %v5489 = vpop.f32.mrb[0].mxu0
        %v5490 = vadd.f32 0.0, %v5489
        %v5491 = vpop.f32.mrb[0].mxu0
        %v5492 = vpop.f32.mrb[0].mxu0
        %v5493 = vadd.f32 0.0, %v5492
        %v5494 = vpop.f32.mrb[0].mxu0
        %5495 = vmatprep.mubr.bf16.mxu0 0
        %5496 = vmatmul.mubr.bf16.gmra.mrb[0].mxu0 %v5312
        %v5497 = vpop.f32.mrb[0].mxu0
        %v5498 = vadd.f32 0.0, %v5497
        %v5499 = vpop.f32.mrb[0].mxu0
        %v5500 = vpop.f32.mrb[0].mxu0
        %v5501 = vadd.f32 0.0, %v5500
        %v5502 = vpop.f32.mrb[0].mxu0
        %5503 = vmatprep.mubr.bf16.mxu0 0
        %5504 = vmatmul.mubr.bf16.gmra.mrb[0].mxu0 %v5313
        %v5505 = vpop.f32.mrb[0].mxu0
        %v5506 = vadd.f32 0.0, %v5505
        %v5507 = vpop.f32.mrb[0].mxu0
        %v5508 = vpop.f32.mrb[0].mxu0
        %v5509 = vadd.f32 0.0, %v5508
        %v5510 = vpop.f32.mrb[0].mxu0
        %5511 = vmatprep.mubr.bf16.mxu0 0
        %5512 = vmatmul.mubr.bf16.gmra.mrb[0].mxu0 %v5314
        %v5513 = vpop.f32.mrb[0].mxu0
        %v5514 = vadd.f32 0.0, %v5513
        %v5515 = vpop.f32.mrb[0].mxu0
        %v5516 = vpop.f32.mrb[0].mxu0
        %v5517 = vadd.f32 0.0, %v5516
        %v5518 = vpop.f32.mrb[0].mxu0
        %5519 = vmatprep.mubr.bf16.mxu0 0
        %5520 = vmatmul.mubr.bf16.gmra.mrb[0].mxu0 %v5315
        %v5521 = vpop.f32.mrb[0].mxu0
        %v5522 = vadd.f32 0.0, %v5521
        %v5523 = vpop.f32.mrb[0].mxu0
        %v5524 = vpop.f32.mrb[0].mxu0
        %v5525 = vadd.f32 0.0, %v5524
        %v5526 = vpop.f32.mrb[0].mxu0
        %5527 = vmatprep.mubr.bf16.mxu0 0
        %5528 = vmatmul.mubr.bf16.gmra.mrb[0].mxu0 %v5316
        %v5529 = vpop.f32.mrb[0].mxu0
        %v5530 = vadd.f32 0.0, %v5529
        %v5531 = vpop.f32.mrb[0].mxu0
        %v5532 = vpop.f32.mrb[0].mxu0
        %v5533 = vadd.f32 0.0, %v5532
        %v5534 = vpop.f32.mrb[0].mxu0
        %5535 = vmatprep.mubr.bf16.mxu0 0
        %5536 = vmatmul.mubr.bf16.gmra.mrb[0].mxu0 %v5317
        %v5537 = vpop.f32.mrb[0].mxu0
        %v5538 = vadd.f32 0.0, %v5537
        %v5539 = vpop.f32.mrb[0].mxu0
        %v5540 = vpop.f32.mrb[0].mxu0
        %v5541 = vadd.f32 0.0, %v5540
        %v5542 = vpop.f32.mrb[0].mxu0
        %5543 = vdwg.mxu0
        %v5560 = vunpack.c.l.b16 %v5254
        %v5561 = vunpack.c.l.b16 %v5255
        %v5562 = vunpack.c.l.b16 %v5256
        %v5563 = vunpack.c.l.b16 %v5257
        %v5564 = vunpack.c.l.b16 %v5258
        %v5565 = vunpack.c.l.b16 %v5259
        %v5566 = vunpack.c.l.b16 %v5260
        %v5567 = vunpack.c.l.b16 %v5261
        %v5568 = vunpack.c.l.b16 %v5262
        %v5569 = vunpack.c.l.b16 %v5263
        %v5570 = vunpack.c.l.b16 %v5264
        %v5571 = vunpack.c.l.b16 %v5265
        %v5572 = vunpack.c.l.b16 %v5266
        %v5573 = vunpack.c.l.b16 %v5267
        %v5574 = vunpack.c.l.b16 %v5268
        %v5575 = vunpack.c.l.b16 %v5269
        %v5576 = vpack.c.b16 %v5561, %v5560
        %v5577 = vpack.c.b16 %v5563, %v5562
        %v5578 = vpack.c.b16 %v5565, %v5564
        %v5579 = vpack.c.b16 %v5567, %v5566
        %v5580 = vpack.c.b16 %v5569, %v5568
        %v5581 = vpack.c.b16 %v5571, %v5570
        %v5582 = vpack.c.b16 %v5573, %v5572
        %v5583 = vpack.c.b16 %v5575, %v5574
        %5592 = vmatprep.subr.bf16.mxu0 0
        %5593 = vmatpush1.bf16.msra.mxu0 %v5576
        %5594 = vmatprep.subr.bf16.mxu0 0
        %5595 = vmatpush1.bf16.msra.mxu0 %v5577
        %5596 = vmatprep.subr.bf16.mxu0 0
        %5597 = vmatpush1.bf16.msra.mxu0 %v5578
        %5598 = vmatprep.subr.bf16.mxu0 0
        %5599 = vmatpush1.bf16.msra.mxu0 %v5579
        %5600 = vmatprep.subr.bf16.mxu0 0
        %5601 = vmatpush1.bf16.msra.mxu0 %v5580
        %5602 = vmatprep.subr.bf16.mxu0 0
        %5603 = vmatpush1.bf16.msra.mxu0 %v5581
        %5604 = vmatprep.subr.bf16.mxu0 0
        %5605 = vmatpush1.bf16.msra.mxu0 %v5582
        %5606 = vmatprep.subr.bf16.mxu0 0
        %5607 = vmatpush1.bf16.msra.mxu0 %v5583
        %5608 = vmatprep.subr.bf16.mxu0 0
        %5609 = vmatpush1.bf16.msra.mxu0 0
        %5610 = vmatprep.subr.bf16.mxu0 0
        %5611 = vmatpush1.bf16.msra.mxu0 0
        %5612 = vmatprep.subr.bf16.mxu0 0
        %5613 = vmatpush1.bf16.msra.mxu0 0
        %5614 = vmatprep.subr.bf16.mxu0 0
        %5615 = vmatpush1.bf16.msra.mxu0 0
        %5616 = vmatprep.subr.bf16.mxu0 0
        %5617 = vmatpush1.bf16.msra.mxu0 0
        %5618 = vmatprep.subr.bf16.mxu0 0
        %5619 = vmatpush1.bf16.msra.mxu0 0
        %5620 = vmatprep.subr.bf16.mxu0 0
        %5621 = vmatpush1.bf16.msra.mxu0 0
        %5622 = vmatprep.subr.bf16.mxu0 0
        %5623 = vmatpush1.bf16.msra.mxu0 0
        %5624 = vmatprep.mubr.bf16.mxu0 0
        %5625 = vmatmul.mubr.bf16.gmra.mrb[0].mxu0 %v5238
        %v5626 = vpop.f32.mrb[0].mxu0
        %v5627 = vadd.f32 %v5418, %v5626
        %v5628 = vpop.f32.mrb[0].mxu0
        %v5629 = vpop.f32.mrb[0].mxu0
        %v5630 = vadd.f32 %v5421, %v5629
        %v5631 = vpop.f32.mrb[0].mxu0
        %5632 = vmatprep.mubr.bf16.mxu0 0
        %5633 = vmatmul.mubr.bf16.gmra.mrb[0].mxu0 %v5239
        %v5634 = vpop.f32.mrb[0].mxu0
        %v5635 = vadd.f32 %v5426, %v5634
        %v5636 = vpop.f32.mrb[0].mxu0
        %v5637 = vpop.f32.mrb[0].mxu0
        %v5638 = vadd.f32 %v5429, %v5637
        %v5639 = vpop.f32.mrb[0].mxu0
        %5640 = vmatprep.mubr.bf16.mxu0 0
        %5641 = vmatmul.mubr.bf16.gmra.mrb[0].mxu0 %v5240
        %v5642 = vpop.f32.mrb[0].mxu0
        %v5643 = vadd.f32 %v5434, %v5642
        %v5644 = vpop.f32.mrb[0].mxu0
        %v5645 = vpop.f32.mrb[0].mxu0
        %v5646 = vadd.f32 %v5437, %v5645
        %v5647 = vpop.f32.mrb[0].mxu0
        %5648 = vmatprep.mubr.bf16.mxu0 0
        %5649 = vmatmul.mubr.bf16.gmra.mrb[0].mxu0 %v5241
        %v5650 = vpop.f32.mrb[0].mxu0
        %v5651 = vadd.f32 %v5442, %v5650
        %v5652 = vpop.f32.mrb[0].mxu0
        %v5653 = vpop.f32.mrb[0].mxu0
        %v5654 = vadd.f32 %v5445, %v5653
        %v5655 = vpop.f32.mrb[0].mxu0
        %5656 = vmatprep.mubr.bf16.mxu0 0
        %5657 = vmatmul.mubr.bf16.gmra.mrb[0].mxu0 %v5242
        %v5658 = vpop.f32.mrb[0].mxu0
        %v5659 = vadd.f32 %v5450, %v5658
        %v5660 = vpop.f32.mrb[0].mxu0
        %v5661 = vpop.f32.mrb[0].mxu0
        %v5662 = vadd.f32 %v5453, %v5661
        %v5663 = vpop.f32.mrb[0].mxu0
        %5664 = vmatprep.mubr.bf16.mxu0 0
        %5665 = vmatmul.mubr.bf16.gmra.mrb[0].mxu0 %v5243
        %v5666 = vpop.f32.mrb[0].mxu0
        %v5667 = vadd.f32 %v5458, %v5666
        %v5668 = vpop.f32.mrb[0].mxu0
        %v5669 = vpop.f32.mrb[0].mxu0
        %v5670 = vadd.f32 %v5461, %v5669
        %v5671 = vpop.f32.mrb[0].mxu0
        %5672 = vmatprep.mubr.bf16.mxu0 0
        %5673 = vmatmul.mubr.bf16.gmra.mrb[0].mxu0 %v5244
        %v5674 = vpop.f32.mrb[0].mxu0
        %v5675 = vadd.f32 %v5466, %v5674
        %v5676 = vpop.f32.mrb[0].mxu0
        %v5677 = vpop.f32.mrb[0].mxu0
        %v5678 = vadd.f32 %v5469, %v5677
        %v5679 = vpop.f32.mrb[0].mxu0
        %5680 = vmatprep.mubr.bf16.mxu0 0
        %5681 = vmatmul.mubr.bf16.gmra.mrb[0].mxu0 %v5245
        %v5682 = vpop.f32.mrb[0].mxu0
        %v5683 = vadd.f32 %v5474, %v5682
        %v5684 = vpop.f32.mrb[0].mxu0
        %v5685 = vpop.f32.mrb[0].mxu0
        %v5686 = vadd.f32 %v5477, %v5685
        %v5687 = vpop.f32.mrb[0].mxu0
        %5688 = vmatprep.mubr.bf16.mxu0 0
        %5689 = vmatmul.mubr.bf16.gmra.mrb[0].mxu0 %v5246
        %v5690 = vpop.f32.mrb[0].mxu0
        %v5691 = vadd.f32 %v5482, %v5690
        %v5692 = vpop.f32.mrb[0].mxu0
        %v5693 = vpop.f32.mrb[0].mxu0
        %v5694 = vadd.f32 %v5485, %v5693
        %v5695 = vpop.f32.mrb[0].mxu0
        %5696 = vmatprep.mubr.bf16.mxu0 0
        %5697 = vmatmul.mubr.bf16.gmra.mrb[0].mxu0 %v5247
        %v5698 = vpop.f32.mrb[0].mxu0
        %v5699 = vadd.f32 %v5490, %v5698
        %v5700 = vpop.f32.mrb[0].mxu0
        %v5701 = vpop.f32.mrb[0].mxu0
        %v5702 = vadd.f32 %v5493, %v5701
        %v5703 = vpop.f32.mrb[0].mxu0
        %5704 = vmatprep.mubr.bf16.mxu0 0
        %5705 = vmatmul.mubr.bf16.gmra.mrb[0].mxu0 %v5248
        %v5706 = vpop.f32.mrb[0].mxu0
        %v5707 = vadd.f32 %v5498, %v5706
        %v5708 = vpop.f32.mrb[0].mxu0
        %v5709 = vpop.f32.mrb[0].mxu0
        %v5710 = vadd.f32 %v5501, %v5709
        %v5711 = vpop.f32.mrb[0].mxu0
        %5712 = vmatprep.mubr.bf16.mxu0 0
        %5713 = vmatmul.mubr.bf16.gmra.mrb[0].mxu0 %v5249
        %v5714 = vpop.f32.mrb[0].mxu0
        %v5715 = vadd.f32 %v5506, %v5714
        %v5716 = vpop.f32.mrb[0].mxu0
        %v5717 = vpop.f32.mrb[0].mxu0
        %v5718 = vadd.f32 %v5509, %v5717
        %v5719 = vpop.f32.mrb[0].mxu0
        %5720 = vmatprep.mubr.bf16.mxu0 0
        %5721 = vmatmul.mubr.bf16.gmra.mrb[0].mxu0 %v5250
        %v5722 = vpop.f32.mrb[0].mxu0
        %v5723 = vadd.f32 %v5514, %v5722
        %v5724 = vpop.f32.mrb[0].mxu0
        %v5725 = vpop.f32.mrb[0].mxu0
        %v5726 = vadd.f32 %v5517, %v5725
        %v5727 = vpop.f32.mrb[0].mxu0
        %5728 = vmatprep.mubr.bf16.mxu0 0
        %5729 = vmatmul.mubr.bf16.gmra.mrb[0].mxu0 %v5251
        %v5730 = vpop.f32.mrb[0].mxu0
        %v5731 = vadd.f32 %v5522, %v5730
        %v5732 = vpop.f32.mrb[0].mxu0
        %v5733 = vpop.f32.mrb[0].mxu0
        %v5734 = vadd.f32 %v5525, %v5733
        %v5735 = vpop.f32.mrb[0].mxu0
        %5736 = vmatprep.mubr.bf16.mxu0 0
        %5737 = vmatmul.mubr.bf16.gmra.mrb[0].mxu0 %v5252
        %v5738 = vpop.f32.mrb[0].mxu0
        %v5739 = vadd.f32 %v5530, %v5738
        %v5740 = vpop.f32.mrb[0].mxu0
        %v5741 = vpop.f32.mrb[0].mxu0
        %v5742 = vadd.f32 %v5533, %v5741
        %v5743 = vpop.f32.mrb[0].mxu0
        %5744 = vmatprep.mubr.bf16.mxu0 0
        %5745 = vmatmul.mubr.bf16.gmra.mrb[0].mxu0 %v5253
        %v5746 = vpop.f32.mrb[0].mxu0
        %v5747 = vadd.f32 %v5538, %v5746
        %v5748 = vpop.f32.mrb[0].mxu0
        %v5749 = vpop.f32.mrb[0].mxu0
        %v5750 = vadd.f32 %v5541, %v5749
        %v5751 = vpop.f32.mrb[0].mxu0
        %5752 = vdwg.mxu0
        %v5753 = vld [vmem:[#allocation2 + $0x2] sm:$0xff]
        %v5754 = vld [vmem:[#allocation2 + $0xa] sm:$0xff]
        %v5755 = vld [vmem:[#allocation2 + $0x1a] sm:$0xff]
        %v5756 = vld [vmem:[#allocation2 + $0x22] sm:$0xff]
        %v5757 = vld [vmem:[#allocation2 + $0x32] sm:$0xff]
        %v5758 = vld [vmem:[#allocation2 + $0x3a] sm:$0xff]
        %v5759 = vld [vmem:[#allocation2 + $0x4a] sm:$0xff]
        %v5760 = vld [vmem:[#allocation2 + $0x52] sm:$0xff]
        %v5761 = vld [vmem:[#allocation2 + $0x62] sm:$0xff]
        %v5762 = vld [vmem:[#allocation2 + $0x6a] sm:$0xff]
        %v5763 = vld [vmem:[#allocation2 + $0x7a] sm:$0xff]
        %v5764 = vld [vmem:[#allocation2 + $0x82] sm:$0xff]
        %v5765 = vld [vmem:[#allocation2 + $0x92] sm:$0xff]
        %v5766 = vld [vmem:[#allocation2 + $0x9a] sm:$0xff]
        %v5767 = vld [vmem:[#allocation2 + $0xaa] sm:$0xff]
        %v5768 = vld [vmem:[#allocation2 + $0xb2] sm:$0xff]
        %v5769 = vld [vmem:[#allocation2 + $0xc2] sm:$0xff]
        %v5770 = vld [vmem:[#allocation2 + $0xca] sm:$0xff]
        %v5771 = vld [vmem:[#allocation2 + $0xda] sm:$0xff]
        %v5772 = vld [vmem:[#allocation2 + $0xe2] sm:$0xff]
        %v5773 = vld [vmem:[#allocation2 + $0xf2] sm:$0xff]
        %v5774 = vld [vmem:[#allocation2 + $0xfa] sm:$0xff]
        %v5775 = vld [vmem:[#allocation2 + $0x10a] sm:$0xff]
        %v5776 = vld [vmem:[#allocation2 + $0x112] sm:$0xff]
        %v5777 = vld [vmem:[#allocation2 + $0x122] sm:$0xff]
        %v5778 = vld [vmem:[#allocation2 + $0x12a] sm:$0xff]
        %v5779 = vld [vmem:[#allocation2 + $0x13a] sm:$0xff]
        %v5780 = vld [vmem:[#allocation2 + $0x142] sm:$0xff]
        %v5781 = vld [vmem:[#allocation2 + $0x152] sm:$0xff]
        %v5782 = vld [vmem:[#allocation2 + $0x15a] sm:$0xff]
        %v5783 = vld [vmem:[#allocation2 + $0x16a] sm:$0xff]
        %v5784 = vld [vmem:[#allocation2 + $0x172] sm:$0xff]
        %v5785 = vpack.c.bf16 %v5754, %v5753
        %v5786 = vpack.c.bf16 %v5756, %v5755
        %v5787 = vpack.c.bf16 %v5758, %v5757
        %v5788 = vpack.c.bf16 %v5760, %v5759
        %v5789 = vpack.c.bf16 %v5762, %v5761
        %v5790 = vpack.c.bf16 %v5764, %v5763
        %v5791 = vpack.c.bf16 %v5766, %v5765
        %v5792 = vpack.c.bf16 %v5768, %v5767
        %v5793 = vpack.c.bf16 %v5770, %v5769
        %v5794 = vpack.c.bf16 %v5772, %v5771
        %v5795 = vpack.c.bf16 %v5774, %v5773
        %v5796 = vpack.c.bf16 %v5776, %v5775
        %v5797 = vpack.c.bf16 %v5778, %v5777
        %v5798 = vpack.c.bf16 %v5780, %v5779
        %v5799 = vpack.c.bf16 %v5782, %v5781
        %v5800 = vpack.c.bf16 %v5784, %v5783
        %s5801 = scalar_lea.vmem [#allocation3], 128
        %v5802 = vld [vmem:[%s5801] sm:$0xf]
        %v5803 = vld [vmem:[%s5801 + $0x4] sm:$0xf]
        %v5804 = vld [vmem:[%s5801 + $0x8] sm:$0xf]
        %v5805 = vld [vmem:[%s5801 + $0xc] sm:$0xf]
        %v5806 = vld [vmem:[%s5801 + $0x10] sm:$0xf]
        %v5807 = vld [vmem:[%s5801 + $0x14] sm:$0xf]
        %v5808 = vld [vmem:[%s5801 + $0x18] sm:$0xf]
        %v5809 = vld [vmem:[%s5801 + $0x1c] sm:$0xf]
        %v5810 = vld [vmem:[%s5801 + $0x20] sm:$0xf]
        %v5811 = vld [vmem:[%s5801 + $0x24] sm:$0xf]
        %v5812 = vld [vmem:[%s5801 + $0x28] sm:$0xf]
        %v5813 = vld [vmem:[%s5801 + $0x2c] sm:$0xf]
        %v5814 = vld [vmem:[%s5801 + $0x30] sm:$0xf]
        %v5815 = vld [vmem:[%s5801 + $0x34] sm:$0xf]
        %v5816 = vld [vmem:[%s5801 + $0x38] sm:$0xf]
        %v5817 = vld [vmem:[%s5801 + $0x3c] sm:$0xf]
        %v5834 = vunpack.c.l.b16 %v5802
        %v5835 = vunpack.c.l.b16 %v5803
        %v5836 = vunpack.c.l.b16 %v5804
        %v5837 = vunpack.c.l.b16 %v5805
        %v5838 = vunpack.c.l.b16 %v5806
        %v5839 = vunpack.c.l.b16 %v5807
        %v5840 = vunpack.c.l.b16 %v5808
        %v5841 = vunpack.c.l.b16 %v5809
        %v5842 = vunpack.c.l.b16 %v5810
        %v5843 = vunpack.c.l.b16 %v5811
        %v5844 = vunpack.c.l.b16 %v5812
        %v5845 = vunpack.c.l.b16 %v5813
        %v5846 = vunpack.c.l.b16 %v5814
        %v5847 = vunpack.c.l.b16 %v5815
        %v5848 = vunpack.c.l.b16 %v5816
        %v5849 = vunpack.c.l.b16 %v5817
        %v5850 = vpack.c.b16 %v5835, %v5834
        %v5851 = vpack.c.b16 %v5837, %v5836
        %v5852 = vpack.c.b16 %v5839, %v5838
        %v5853 = vpack.c.b16 %v5841, %v5840
        %v5854 = vpack.c.b16 %v5843, %v5842
        %v5855 = vpack.c.b16 %v5845, %v5844
        %v5856 = vpack.c.b16 %v5847, %v5846
        %v5857 = vpack.c.b16 %v5849, %v5848
        %5866 = vmatprep.subr.bf16.mxu0 0
        %5867 = vmatpush1.bf16.msra.mxu0 %v5850
        %5868 = vmatprep.subr.bf16.mxu0 0
        %5869 = vmatpush1.bf16.msra.mxu0 %v5851
        %5870 = vmatprep.subr.bf16.mxu0 0
        %5871 = vmatpush1.bf16.msra.mxu0 %v5852
        %5872 = vmatprep.subr.bf16.mxu0 0
        %5873 = vmatpush1.bf16.msra.mxu0 %v5853
        %5874 = vmatprep.subr.bf16.mxu0 0
        %5875 = vmatpush1.bf16.msra.mxu0 %v5854
        %5876 = vmatprep.subr.bf16.mxu0 0
        %5877 = vmatpush1.bf16.msra.mxu0 %v5855
        %5878 = vmatprep.subr.bf16.mxu0 0
        %5879 = vmatpush1.bf16.msra.mxu0 %v5856
        %5880 = vmatprep.subr.bf16.mxu0 0
        %5881 = vmatpush1.bf16.msra.mxu0 %v5857
        %5882 = vmatprep.subr.bf16.mxu0 0
        %5883 = vmatpush1.bf16.msra.mxu0 0
        %5884 = vmatprep.subr.bf16.mxu0 0
        %5885 = vmatpush1.bf16.msra.mxu0 0
        %5886 = vmatprep.subr.bf16.mxu0 0
        %5887 = vmatpush1.bf16.msra.mxu0 0
        %5888 = vmatprep.subr.bf16.mxu0 0
        %5889 = vmatpush1.bf16.msra.mxu0 0
        %5890 = vmatprep.subr.bf16.mxu0 0
        %5891 = vmatpush1.bf16.msra.mxu0 0
        %5892 = vmatprep.subr.bf16.mxu0 0
        %5893 = vmatpush1.bf16.msra.mxu0 0
        %5894 = vmatprep.subr.bf16.mxu0 0
        %5895 = vmatpush1.bf16.msra.mxu0 0
        %5896 = vmatprep.subr.bf16.mxu0 0
        %5897 = vmatpush1.bf16.msra.mxu0 0
        %5898 = vmatprep.mubr.bf16.mxu0 0
        %5899 = vmatmul.mubr.bf16.gmra.mrb[0].mxu0 %v5785
        %v5900 = vpop.f32.mrb[0].mxu0
        %v5901 = vadd.f32 0.0, %v5900
        %v5902 = vpop.f32.mrb[0].mxu0
        %v5903 = vpop.f32.mrb[0].mxu0
        %v5904 = vadd.f32 0.0, %v5903
        %v5905 = vpop.f32.mrb[0].mxu0
        %5906 = vmatprep.mubr.bf16.mxu0 0
        %5907 = vmatmul.mubr.bf16.gmra.mrb[0].mxu0 %v5786
        %v5908 = vpop.f32.mrb[0].mxu0
        %v5909 = vadd.f32 0.0, %v5908
        %v5910 = vpop.f32.mrb[0].mxu0
        %v5911 = vpop.f32.mrb[0].mxu0
        %v5912 = vadd.f32 0.0, %v5911
        %v5913 = vpop.f32.mrb[0].mxu0
        %5914 = vmatprep.mubr.bf16.mxu0 0
        %5915 = vmatmul.mubr.bf16.gmra.mrb[0].mxu0 %v5787
        %v5916 = vpop.f32.mrb[0].mxu0
        %v5917 = vadd.f32 0.0, %v5916
        %v5918 = vpop.f32.mrb[0].mxu0
        %v5919 = vpop.f32.mrb[0].mxu0
        %v5920 = vadd.f32 0.0, %v5919
        %v5921 = vpop.f32.mrb[0].mxu0
        %5922 = vmatprep.mubr.bf16.mxu0 0
        %5923 = vmatmul.mubr.bf16.gmra.mrb[0].mxu0 %v5788
        %v5924 = vpop.f32.mrb[0].mxu0
        %v5925 = vadd.f32 0.0, %v5924
        %v5926 = vpop.f32.mrb[0].mxu0
        %v5927 = vpop.f32.mrb[0].mxu0
        %v5928 = vadd.f32 0.0, %v5927
        %v5929 = vpop.f32.mrb[0].mxu0
        %5930 = vmatprep.mubr.bf16.mxu0 0
        %5931 = vmatmul.mubr.bf16.gmra.mrb[0].mxu0 %v5789
        %v5932 = vpop.f32.mrb[0].mxu0
        %v5933 = vadd.f32 0.0, %v5932
        %v5934 = vpop.f32.mrb[0].mxu0
        %v5935 = vpop.f32.mrb[0].mxu0
        %v5936 = vadd.f32 0.0, %v5935
        %v5937 = vpop.f32.mrb[0].mxu0
        %5938 = vmatprep.mubr.bf16.mxu0 0
        %5939 = vmatmul.mubr.bf16.gmra.mrb[0].mxu0 %v5790
        %v5940 = vpop.f32.mrb[0].mxu0
        %v5941 = vadd.f32 0.0, %v5940
        %v5942 = vpop.f32.mrb[0].mxu0
        %v5943 = vpop.f32.mrb[0].mxu0
        %v5944 = vadd.f32 0.0, %v5943
        %v5945 = vpop.f32.mrb[0].mxu0
        %5946 = vmatprep.mubr.bf16.mxu0 0
        %5947 = vmatmul.mubr.bf16.gmra.mrb[0].mxu0 %v5791
        %v5948 = vpop.f32.mrb[0].mxu0
        %v5949 = vadd.f32 0.0, %v5948
        %v5950 = vpop.f32.mrb[0].mxu0
        %v5951 = vpop.f32.mrb[0].mxu0
        %v5952 = vadd.f32 0.0, %v5951
        %v5953 = vpop.f32.mrb[0].mxu0
        %5954 = vmatprep.mubr.bf16.mxu0 0
        %5955 = vmatmul.mubr.bf16.gmra.mrb[0].mxu0 %v5792
        %v5956 = vpop.f32.mrb[0].mxu0
        %v5957 = vadd.f32 0.0, %v5956
        %v5958 = vpop.f32.mrb[0].mxu0
        %v5959 = vpop.f32.mrb[0].mxu0
        %v5960 = vadd.f32 0.0, %v5959
        %v5961 = vpop.f32.mrb[0].mxu0
        %5962 = vmatprep.mubr.bf16.mxu0 0
        %5963 = vmatmul.mubr.bf16.gmra.mrb[0].mxu0 %v5793
        %v5964 = vpop.f32.mrb[0].mxu0
        %v5965 = vadd.f32 0.0, %v5964
        %v5966 = vpop.f32.mrb[0].mxu0
        %v5967 = vpop.f32.mrb[0].mxu0
        %v5968 = vadd.f32 0.0, %v5967
        %v5969 = vpop.f32.mrb[0].mxu0
        %5970 = vmatprep.mubr.bf16.mxu0 0
        %5971 = vmatmul.mubr.bf16.gmra.mrb[0].mxu0 %v5794
        %v5972 = vpop.f32.mrb[0].mxu0
        %v5973 = vadd.f32 0.0, %v5972
        %v5974 = vpop.f32.mrb[0].mxu0
        %v5975 = vpop.f32.mrb[0].mxu0
        %v5976 = vadd.f32 0.0, %v5975
        %v5977 = vpop.f32.mrb[0].mxu0
        %5978 = vmatprep.mubr.bf16.mxu0 0
        %5979 = vmatmul.mubr.bf16.gmra.mrb[0].mxu0 %v5795
        %v5980 = vpop.f32.mrb[0].mxu0
        %v5981 = vadd.f32 0.0, %v5980
        %v5982 = vpop.f32.mrb[0].mxu0
        %v5983 = vpop.f32.mrb[0].mxu0
        %v5984 = vadd.f32 0.0, %v5983
        %v5985 = vpop.f32.mrb[0].mxu0
        %5986 = vmatprep.mubr.bf16.mxu0 0
        %5987 = vmatmul.mubr.bf16.gmra.mrb[0].mxu0 %v5796
        %v5988 = vpop.f32.mrb[0].mxu0
        %v5989 = vadd.f32 0.0, %v5988
        %v5990 = vpop.f32.mrb[0].mxu0
        %v5991 = vpop.f32.mrb[0].mxu0
        %v5992 = vadd.f32 0.0, %v5991
        %v5993 = vpop.f32.mrb[0].mxu0
        %5994 = vmatprep.mubr.bf16.mxu0 0
        %5995 = vmatmul.mubr.bf16.gmra.mrb[0].mxu0 %v5797
        %v5996 = vpop.f32.mrb[0].mxu0
        %v5997 = vadd.f32 0.0, %v5996
        %v5998 = vpop.f32.mrb[0].mxu0
        %v5999 = vpop.f32.mrb[0].mxu0
        %v6000 = vadd.f32 0.0, %v5999
        %v6001 = vpop.f32.mrb[0].mxu0
        %6002 = vmatprep.mubr.bf16.mxu0 0
        %6003 = vmatmul.mubr.bf16.gmra.mrb[0].mxu0 %v5798
        %v6004 = vpop.f32.mrb[0].mxu0
        %v6005 = vadd.f32 0.0, %v6004
        %v6006 = vpop.f32.mrb[0].mxu0
        %v6007 = vpop.f32.mrb[0].mxu0
        %v6008 = vadd.f32 0.0, %v6007
        %v6009 = vpop.f32.mrb[0].mxu0
        %6010 = vmatprep.mubr.bf16.mxu0 0
        %6011 = vmatmul.mubr.bf16.gmra.mrb[0].mxu0 %v5799
        %v6012 = vpop.f32.mrb[0].mxu0
        %v6013 = vadd.f32 0.0, %v6012
        %v6014 = vpop.f32.mrb[0].mxu0
        %v6015 = vpop.f32.mrb[0].mxu0
        %v6016 = vadd.f32 0.0, %v6015
        %v6017 = vpop.f32.mrb[0].mxu0
        %6018 = vmatprep.mubr.bf16.mxu0 0
        %6019 = vmatmul.mubr.bf16.gmra.mrb[0].mxu0 %v5800
        %v6020 = vpop.f32.mrb[0].mxu0
        %v6021 = vadd.f32 0.0, %v6020
        %v6022 = vpop.f32.mrb[0].mxu0
        %v6023 = vpop.f32.mrb[0].mxu0
        %v6024 = vadd.f32 0.0, %v6023
        %v6025 = vpop.f32.mrb[0].mxu0
        %6026 = vdwg.mxu0
        %v6027 = vadd.f32 %v5627, %v5901
        %v6028 = vadd.f32 %v5630, %v5904
        %v6029 = vadd.f32 %v5635, %v5909
        %v6030 = vadd.f32 %v5638, %v5912
        %v6031 = vadd.f32 %v5643, %v5917
        %v6032 = vadd.f32 %v5646, %v5920
        %v6033 = vadd.f32 %v5651, %v5925
        %v6034 = vadd.f32 %v5654, %v5928
        %v6035 = vadd.f32 %v5659, %v5933
        %v6036 = vadd.f32 %v5662, %v5936
        %v6037 = vadd.f32 %v5667, %v5941
        %v6038 = vadd.f32 %v5670, %v5944
        %v6039 = vadd.f32 %v5675, %v5949
        %v6040 = vadd.f32 %v5678, %v5952
        %v6041 = vadd.f32 %v5683, %v5957
        %v6042 = vadd.f32 %v5686, %v5960
        %v6043 = vadd.f32 %v5691, %v5965
        %v6044 = vadd.f32 %v5694, %v5968
        %v6045 = vadd.f32 %v5699, %v5973
        %v6046 = vadd.f32 %v5702, %v5976
        %v6047 = vadd.f32 %v5707, %v5981
        %v6048 = vadd.f32 %v5710, %v5984
        %v6049 = vadd.f32 %v5715, %v5989
        %v6050 = vadd.f32 %v5718, %v5992
        %v6051 = vadd.f32 %v5723, %v5997
        %v6052 = vadd.f32 %v5726, %v6000
        %v6053 = vadd.f32 %v5731, %v6005
        %v6054 = vadd.f32 %v5734, %v6008
        %v6055 = vadd.f32 %v5739, %v6013
        %v6056 = vadd.f32 %v5742, %v6016
        %v6057 = vadd.f32 %v5747, %v6021
        %v6058 = vadd.f32 %v5750, %v6024
        %v6059 = vld [vmem:[%s5173] sm:$0xff]
        %v6060 = vld [vmem:[%s5173 + $0x8] sm:$0xff]
        %v6061 = vld [vmem:[%s5173 + $0x18] sm:$0xff]
        %v6062 = vld [vmem:[%s5173 + $0x20] sm:$0xff]
        %v6063 = vld [vmem:[%s5173 + $0x30] sm:$0xff]
        %v6064 = vld [vmem:[%s5173 + $0x38] sm:$0xff]
        %v6065 = vld [vmem:[%s5173 + $0x48] sm:$0xff]
        %v6066 = vld [vmem:[%s5173 + $0x50] sm:$0xff]
        %v6067 = vld [vmem:[%s5173 + $0x60] sm:$0xff]
        %v6068 = vld [vmem:[%s5173 + $0x68] sm:$0xff]
        %v6069 = vld [vmem:[%s5173 + $0x78] sm:$0xff]
        %v6070 = vld [vmem:[%s5173 + $0x80] sm:$0xff]
        %v6071 = vld [vmem:[%s5173 + $0x90] sm:$0xff]
        %v6072 = vld [vmem:[%s5173 + $0x98] sm:$0xff]
        %v6073 = vld [vmem:[%s5173 + $0xa8] sm:$0xff]
        %v6074 = vld [vmem:[%s5173 + $0xb0] sm:$0xff]
        %v6075 = vld [vmem:[%s5173 + $0xc0] sm:$0xff]
        %v6076 = vld [vmem:[%s5173 + $0xc8] sm:$0xff]
        %v6077 = vld [vmem:[%s5173 + $0xd8] sm:$0xff]
        %v6078 = vld [vmem:[%s5173 + $0xe0] sm:$0xff]
        %v6079 = vld [vmem:[%s5173 + $0xf0] sm:$0xff]
        %v6080 = vld [vmem:[%s5173 + $0xf8] sm:$0xff]
        %v6081 = vld [vmem:[%s5173 + $0x108] sm:$0xff]
        %v6082 = vld [vmem:[%s5173 + $0x110] sm:$0xff]
        %v6083 = vld [vmem:[%s5173 + $0x120] sm:$0xff]
        %v6084 = vld [vmem:[%s5173 + $0x128] sm:$0xff]
        %v6085 = vld [vmem:[%s5173 + $0x138] sm:$0xff]
        %v6086 = vld [vmem:[%s5173 + $0x140] sm:$0xff]
        %v6087 = vld [vmem:[%s5173 + $0x150] sm:$0xff]
        %v6088 = vld [vmem:[%s5173 + $0x158] sm:$0xff]
        %v6089 = vld [vmem:[%s5173 + $0x168] sm:$0xff]
        %v6090 = vld [vmem:[%s5173 + $0x170] sm:$0xff]
        %v6091 = vpack.c.bf16 %v6060, %v6059
        %v6092 = vpack.c.bf16 %v6062, %v6061
        %v6093 = vpack.c.bf16 %v6064, %v6063
        %v6094 = vpack.c.bf16 %v6066, %v6065
        %v6095 = vpack.c.bf16 %v6068, %v6067
        %v6096 = vpack.c.bf16 %v6070, %v6069
        %v6097 = vpack.c.bf16 %v6072, %v6071
        %v6098 = vpack.c.bf16 %v6074, %v6073
        %v6099 = vpack.c.bf16 %v6076, %v6075
        %v6100 = vpack.c.bf16 %v6078, %v6077
        %v6101 = vpack.c.bf16 %v6080, %v6079
        %v6102 = vpack.c.bf16 %v6082, %v6081
        %v6103 = vpack.c.bf16 %v6084, %v6083
        %v6104 = vpack.c.bf16 %v6086, %v6085
        %v6105 = vpack.c.bf16 %v6088, %v6087
        %v6106 = vpack.c.bf16 %v6090, %v6089
        %s6107 = scalar_lea.vmem [#allocation3], 192
        %v6108 = vld [vmem:[%s6107] sm:$0xf]
        %v6109 = vld [vmem:[%s6107 + $0x4] sm:$0xf]
        %v6110 = vld [vmem:[%s6107 + $0x8] sm:$0xf]
        %v6111 = vld [vmem:[%s6107 + $0xc] sm:$0xf]
        %v6112 = vld [vmem:[%s6107 + $0x10] sm:$0xf]
        %v6113 = vld [vmem:[%s6107 + $0x14] sm:$0xf]
        %v6114 = vld [vmem:[%s6107 + $0x18] sm:$0xf]
        %v6115 = vld [vmem:[%s6107 + $0x1c] sm:$0xf]
        %v6116 = vld [vmem:[%s6107 + $0x20] sm:$0xf]
        %v6117 = vld [vmem:[%s6107 + $0x24] sm:$0xf]
        %v6118 = vld [vmem:[%s6107 + $0x28] sm:$0xf]
        %v6119 = vld [vmem:[%s6107 + $0x2c] sm:$0xf]
        %v6120 = vld [vmem:[%s6107 + $0x30] sm:$0xf]
        %v6121 = vld [vmem:[%s6107 + $0x34] sm:$0xf]
        %v6122 = vld [vmem:[%s6107 + $0x38] sm:$0xf]
        %v6123 = vld [vmem:[%s6107 + $0x3c] sm:$0xf]
        %v6140 = vunpack.c.l.b16 %v6108
        %v6141 = vunpack.c.l.b16 %v6109
        %v6142 = vunpack.c.l.b16 %v6110
        %v6143 = vunpack.c.l.b16 %v6111
        %v6144 = vunpack.c.l.b16 %v6112
        %v6145 = vunpack.c.l.b16 %v6113
        %v6146 = vunpack.c.l.b16 %v6114
        %v6147 = vunpack.c.l.b16 %v6115
        %v6148 = vunpack.c.l.b16 %v6116
        %v6149 = vunpack.c.l.b16 %v6117
        %v6150 = vunpack.c.l.b16 %v6118
        %v6151 = vunpack.c.l.b16 %v6119
        %v6152 = vunpack.c.l.b16 %v6120
        %v6153 = vunpack.c.l.b16 %v6121
        %v6154 = vunpack.c.l.b16 %v6122
        %v6155 = vunpack.c.l.b16 %v6123
        %v6156 = vpack.c.b16 %v6141, %v6140
        %v6157 = vpack.c.b16 %v6143, %v6142
        %v6158 = vpack.c.b16 %v6145, %v6144
        %v6159 = vpack.c.b16 %v6147, %v6146
        %v6160 = vpack.c.b16 %v6149, %v6148
        %v6161 = vpack.c.b16 %v6151, %v6150
        %v6162 = vpack.c.b16 %v6153, %v6152
        %v6163 = vpack.c.b16 %v6155, %v6154
        %6172 = vmatprep.subr.bf16.mxu0 0
        %6173 = vmatpush1.bf16.msra.mxu0 %v6156
        %6174 = vmatprep.subr.bf16.mxu0 0
        %6175 = vmatpush1.bf16.msra.mxu0 %v6157
        %6176 = vmatprep.subr.bf16.mxu0 0
        %6177 = vmatpush1.bf16.msra.mxu0 %v6158
        %6178 = vmatprep.subr.bf16.mxu0 0
        %6179 = vmatpush1.bf16.msra.mxu0 %v6159
        %6180 = vmatprep.subr.bf16.mxu0 0
        %6181 = vmatpush1.bf16.msra.mxu0 %v6160
        %6182 = vmatprep.subr.bf16.mxu0 0
        %6183 = vmatpush1.bf16.msra.mxu0 %v6161
        %6184 = vmatprep.subr.bf16.mxu0 0
        %6185 = vmatpush1.bf16.msra.mxu0 %v6162
        %6186 = vmatprep.subr.bf16.mxu0 0
        %6187 = vmatpush1.bf16.msra.mxu0 %v6163
        %6188 = vmatprep.subr.bf16.mxu0 0
        %6189 = vmatpush1.bf16.msra.mxu0 0
        %6190 = vmatprep.subr.bf16.mxu0 0
        %6191 = vmatpush1.bf16.msra.mxu0 0
        %6192 = vmatprep.subr.bf16.mxu0 0
        %6193 = vmatpush1.bf16.msra.mxu0 0
        %6194 = vmatprep.subr.bf16.mxu0 0
        %6195 = vmatpush1.bf16.msra.mxu0 0
        %6196 = vmatprep.subr.bf16.mxu0 0
        %6197 = vmatpush1.bf16.msra.mxu0 0
        %6198 = vmatprep.subr.bf16.mxu0 0
        %6199 = vmatpush1.bf16.msra.mxu0 0
        %6200 = vmatprep.subr.bf16.mxu0 0
        %6201 = vmatpush1.bf16.msra.mxu0 0
        %6202 = vmatprep.subr.bf16.mxu0 0
        %6203 = vmatpush1.bf16.msra.mxu0 0
        %6204 = vmatprep.mubr.bf16.mxu0 0
        %6205 = vmatmul.mubr.bf16.gmra.mrb[0].mxu0 %v6091
        %v6206 = vpop.f32.mrb[0].mxu0
        %v6207 = vadd.f32 0.0, %v6206
        %v6208 = vpop.f32.mrb[0].mxu0
        %v6209 = vpop.f32.mrb[0].mxu0
        %v6210 = vadd.f32 0.0, %v6209
        %v6211 = vpop.f32.mrb[0].mxu0
        %6212 = vmatprep.mubr.bf16.mxu0 0
        %6213 = vmatmul.mubr.bf16.gmra.mrb[0].mxu0 %v6092
        %v6214 = vpop.f32.mrb[0].mxu0
        %v6215 = vadd.f32 0.0, %v6214
        %v6216 = vpop.f32.mrb[0].mxu0
        %v6217 = vpop.f32.mrb[0].mxu0
        %v6218 = vadd.f32 0.0, %v6217
        %v6219 = vpop.f32.mrb[0].mxu0
        %6220 = vmatprep.mubr.bf16.mxu0 0
        %6221 = vmatmul.mubr.bf16.gmra.mrb[0].mxu0 %v6093
        %v6222 = vpop.f32.mrb[0].mxu0
        %v6223 = vadd.f32 0.0, %v6222
        %v6224 = vpop.f32.mrb[0].mxu0
        %v6225 = vpop.f32.mrb[0].mxu0
        %v6226 = vadd.f32 0.0, %v6225
        %v6227 = vpop.f32.mrb[0].mxu0
        %6228 = vmatprep.mubr.bf16.mxu0 0
        %6229 = vmatmul.mubr.bf16.gmra.mrb[0].mxu0 %v6094
        %v6230 = vpop.f32.mrb[0].mxu0
        %v6231 = vadd.f32 0.0, %v6230
        %v6232 = vpop.f32.mrb[0].mxu0
        %v6233 = vpop.f32.mrb[0].mxu0
        %v6234 = vadd.f32 0.0, %v6233
        %v6235 = vpop.f32.mrb[0].mxu0
        %6236 = vmatprep.mubr.bf16.mxu0 0
        %6237 = vmatmul.mubr.bf16.gmra.mrb[0].mxu0 %v6095
        %v6238 = vpop.f32.mrb[0].mxu0
        %v6239 = vadd.f32 0.0, %v6238
        %v6240 = vpop.f32.mrb[0].mxu0
        %v6241 = vpop.f32.mrb[0].mxu0
        %v6242 = vadd.f32 0.0, %v6241
        %v6243 = vpop.f32.mrb[0].mxu0
        %6244 = vmatprep.mubr.bf16.mxu0 0
        %6245 = vmatmul.mubr.bf16.gmra.mrb[0].mxu0 %v6096
        %v6246 = vpop.f32.mrb[0].mxu0
        %v6247 = vadd.f32 0.0, %v6246
        %v6248 = vpop.f32.mrb[0].mxu0
        %v6249 = vpop.f32.mrb[0].mxu0
        %v6250 = vadd.f32 0.0, %v6249
        %v6251 = vpop.f32.mrb[0].mxu0
        %6252 = vmatprep.mubr.bf16.mxu0 0
        %6253 = vmatmul.mubr.bf16.gmra.mrb[0].mxu0 %v6097
        %v6254 = vpop.f32.mrb[0].mxu0
        %v6255 = vadd.f32 0.0, %v6254
        %v6256 = vpop.f32.mrb[0].mxu0
        %v6257 = vpop.f32.mrb[0].mxu0
        %v6258 = vadd.f32 0.0, %v6257
        %v6259 = vpop.f32.mrb[0].mxu0
        %6260 = vmatprep.mubr.bf16.mxu0 0
        %6261 = vmatmul.mubr.bf16.gmra.mrb[0].mxu0 %v6098
        %v6262 = vpop.f32.mrb[0].mxu0
        %v6263 = vadd.f32 0.0, %v6262
        %v6264 = vpop.f32.mrb[0].mxu0
        %v6265 = vpop.f32.mrb[0].mxu0
        %v6266 = vadd.f32 0.0, %v6265
        %v6267 = vpop.f32.mrb[0].mxu0
        %6268 = vmatprep.mubr.bf16.mxu0 0
        %6269 = vmatmul.mubr.bf16.gmra.mrb[0].mxu0 %v6099
        %v6270 = vpop.f32.mrb[0].mxu0
        %v6271 = vadd.f32 0.0, %v6270
        %v6272 = vpop.f32.mrb[0].mxu0
        %v6273 = vpop.f32.mrb[0].mxu0
        %v6274 = vadd.f32 0.0, %v6273
        %v6275 = vpop.f32.mrb[0].mxu0
        %6276 = vmatprep.mubr.bf16.mxu0 0
        %6277 = vmatmul.mubr.bf16.gmra.mrb[0].mxu0 %v6100
        %v6278 = vpop.f32.mrb[0].mxu0
        %v6279 = vadd.f32 0.0, %v6278
        %v6280 = vpop.f32.mrb[0].mxu0
        %v6281 = vpop.f32.mrb[0].mxu0
        %v6282 = vadd.f32 0.0, %v6281
        %v6283 = vpop.f32.mrb[0].mxu0
        %6284 = vmatprep.mubr.bf16.mxu0 0
        %6285 = vmatmul.mubr.bf16.gmra.mrb[0].mxu0 %v6101
        %v6286 = vpop.f32.mrb[0].mxu0
        %v6287 = vadd.f32 0.0, %v6286
        %v6288 = vpop.f32.mrb[0].mxu0
        %v6289 = vpop.f32.mrb[0].mxu0
        %v6290 = vadd.f32 0.0, %v6289
        %v6291 = vpop.f32.mrb[0].mxu0
        %6292 = vmatprep.mubr.bf16.mxu0 0
        %6293 = vmatmul.mubr.bf16.gmra.mrb[0].mxu0 %v6102
        %v6294 = vpop.f32.mrb[0].mxu0
        %v6295 = vadd.f32 0.0, %v6294
        %v6296 = vpop.f32.mrb[0].mxu0
        %v6297 = vpop.f32.mrb[0].mxu0
        %v6298 = vadd.f32 0.0, %v6297
        %v6299 = vpop.f32.mrb[0].mxu0
        %6300 = vmatprep.mubr.bf16.mxu0 0
        %6301 = vmatmul.mubr.bf16.gmra.mrb[0].mxu0 %v6103
        %v6302 = vpop.f32.mrb[0].mxu0
        %v6303 = vadd.f32 0.0, %v6302
        %v6304 = vpop.f32.mrb[0].mxu0
        %v6305 = vpop.f32.mrb[0].mxu0
        %v6306 = vadd.f32 0.0, %v6305
        %v6307 = vpop.f32.mrb[0].mxu0
        %6308 = vmatprep.mubr.bf16.mxu0 0
        %6309 = vmatmul.mubr.bf16.gmra.mrb[0].mxu0 %v6104
        %v6310 = vpop.f32.mrb[0].mxu0
        %v6311 = vadd.f32 0.0, %v6310
        %v6312 = vpop.f32.mrb[0].mxu0
        %v6313 = vpop.f32.mrb[0].mxu0
        %v6314 = vadd.f32 0.0, %v6313
        %v6315 = vpop.f32.mrb[0].mxu0
        %6316 = vmatprep.mubr.bf16.mxu0 0
        %6317 = vmatmul.mubr.bf16.gmra.mrb[0].mxu0 %v6105
        %v6318 = vpop.f32.mrb[0].mxu0
        %v6319 = vadd.f32 0.0, %v6318
        %v6320 = vpop.f32.mrb[0].mxu0
        %v6321 = vpop.f32.mrb[0].mxu0
        %v6322 = vadd.f32 0.0, %v6321
        %v6323 = vpop.f32.mrb[0].mxu0
        %6324 = vmatprep.mubr.bf16.mxu0 0
        %6325 = vmatmul.mubr.bf16.gmra.mrb[0].mxu0 %v6106
        %v6326 = vpop.f32.mrb[0].mxu0
        %v6327 = vadd.f32 0.0, %v6326
        %v6328 = vpop.f32.mrb[0].mxu0
        %v6329 = vpop.f32.mrb[0].mxu0
        %v6330 = vadd.f32 0.0, %v6329
        %v6331 = vpop.f32.mrb[0].mxu0
        %6332 = vdwg.mxu0
        %v6333 = vadd.f32 %v6027, %v6207
        %v6334 = vadd.f32 %v6028, %v6210
        %v6335 = vadd.f32 %v6029, %v6215
        %v6336 = vadd.f32 %v6030, %v6218
        %v6337 = vadd.f32 %v6031, %v6223
        %v6338 = vadd.f32 %v6032, %v6226
        %v6339 = vadd.f32 %v6033, %v6231
        %v6340 = vadd.f32 %v6034, %v6234
        %v6341 = vadd.f32 %v6035, %v6239
        %v6342 = vadd.f32 %v6036, %v6242
        %v6343 = vadd.f32 %v6037, %v6247
        %v6344 = vadd.f32 %v6038, %v6250
        %v6345 = vadd.f32 %v6039, %v6255
        %v6346 = vadd.f32 %v6040, %v6258
        %v6347 = vadd.f32 %v6041, %v6263
        %v6348 = vadd.f32 %v6042, %v6266
        %v6349 = vadd.f32 %v6043, %v6271
        %v6350 = vadd.f32 %v6044, %v6274
        %v6351 = vadd.f32 %v6045, %v6279
        %v6352 = vadd.f32 %v6046, %v6282
        %v6353 = vadd.f32 %v6047, %v6287
        %v6354 = vadd.f32 %v6048, %v6290
        %v6355 = vadd.f32 %v6049, %v6295
        %v6356 = vadd.f32 %v6050, %v6298
        %v6357 = vadd.f32 %v6051, %v6303
        %v6358 = vadd.f32 %v6052, %v6306
        %v6359 = vadd.f32 %v6053, %v6311
        %v6360 = vadd.f32 %v6054, %v6314
        %v6361 = vadd.f32 %v6055, %v6319
        %v6362 = vadd.f32 %v6056, %v6322
        %v6363 = vadd.f32 %v6057, %v6327
        %v6364 = vadd.f32 %v6058, %v6330
        %v6365 = vld [vmem:[%s5173 + $0x1] sm:$0xff]
        %v6366 = vld [vmem:[%s5173 + $0x9] sm:$0xff]
        %v6367 = vld [vmem:[%s5173 + $0x19] sm:$0xff]
        %v6368 = vld [vmem:[%s5173 + $0x21] sm:$0xff]
        %v6369 = vld [vmem:[%s5173 + $0x31] sm:$0xff]
        %v6370 = vld [vmem:[%s5173 + $0x39] sm:$0xff]
        %v6371 = vld [vmem:[%s5173 + $0x49] sm:$0xff]
        %v6372 = vld [vmem:[%s5173 + $0x51] sm:$0xff]
        %v6373 = vld [vmem:[%s5173 + $0x61] sm:$0xff]
        %v6374 = vld [vmem:[%s5173 + $0x69] sm:$0xff]
        %v6375 = vld [vmem:[%s5173 + $0x79] sm:$0xff]
        %v6376 = vld [vmem:[%s5173 + $0x81] sm:$0xff]
        %v6377 = vld [vmem:[%s5173 + $0x91] sm:$0xff]
        %v6378 = vld [vmem:[%s5173 + $0x99] sm:$0xff]
        %v6379 = vld [vmem:[%s5173 + $0xa9] sm:$0xff]
        %v6380 = vld [vmem:[%s5173 + $0xb1] sm:$0xff]
        %v6381 = vld [vmem:[%s5173 + $0xc1] sm:$0xff]
        %v6382 = vld [vmem:[%s5173 + $0xc9] sm:$0xff]
        %v6383 = vld [vmem:[%s5173 + $0xd9] sm:$0xff]
        %v6384 = vld [vmem:[%s5173 + $0xe1] sm:$0xff]
        %v6385 = vld [vmem:[%s5173 + $0xf1] sm:$0xff]
        %v6386 = vld [vmem:[%s5173 + $0xf9] sm:$0xff]
        %v6387 = vld [vmem:[%s5173 + $0x109] sm:$0xff]
        %v6388 = vld [vmem:[%s5173 + $0x111] sm:$0xff]
        %v6389 = vld [vmem:[%s5173 + $0x121] sm:$0xff]
        %v6390 = vld [vmem:[%s5173 + $0x129] sm:$0xff]
        %v6391 = vld [vmem:[%s5173 + $0x139] sm:$0xff]
        %v6392 = vld [vmem:[%s5173 + $0x141] sm:$0xff]
        %v6393 = vld [vmem:[%s5173 + $0x151] sm:$0xff]
        %v6394 = vld [vmem:[%s5173 + $0x159] sm:$0xff]
        %v6395 = vld [vmem:[%s5173 + $0x169] sm:$0xff]
        %v6396 = vld [vmem:[%s5173 + $0x171] sm:$0xff]
        %v6397 = vpack.c.bf16 %v6366, %v6365
        %v6398 = vpack.c.bf16 %v6368, %v6367
        %v6399 = vpack.c.bf16 %v6370, %v6369
        %v6400 = vpack.c.bf16 %v6372, %v6371
        %v6401 = vpack.c.bf16 %v6374, %v6373
        %v6402 = vpack.c.bf16 %v6376, %v6375
        %v6403 = vpack.c.bf16 %v6378, %v6377
        %v6404 = vpack.c.bf16 %v6380, %v6379
        %v6405 = vpack.c.bf16 %v6382, %v6381
        %v6406 = vpack.c.bf16 %v6384, %v6383
        %v6407 = vpack.c.bf16 %v6386, %v6385
        %v6408 = vpack.c.bf16 %v6388, %v6387
        %v6409 = vpack.c.bf16 %v6390, %v6389
        %v6410 = vpack.c.bf16 %v6392, %v6391
        %v6411 = vpack.c.bf16 %v6394, %v6393
        %v6412 = vpack.c.bf16 %v6396, %v6395
        %s6413 = scalar_lea.vmem [#allocation3], 256
        %v6414 = vld [vmem:[%s6413] sm:$0xf]
        %v6415 = vld [vmem:[%s6413 + $0x4] sm:$0xf]
        %v6416 = vld [vmem:[%s6413 + $0x8] sm:$0xf]
        %v6417 = vld [vmem:[%s6413 + $0xc] sm:$0xf]
        %v6418 = vld [vmem:[%s6413 + $0x10] sm:$0xf]
        %v6419 = vld [vmem:[%s6413 + $0x14] sm:$0xf]
        %v6420 = vld [vmem:[%s6413 + $0x18] sm:$0xf]
        %v6421 = vld [vmem:[%s6413 + $0x1c] sm:$0xf]
        %v6422 = vld [vmem:[%s6413 + $0x20] sm:$0xf]
        %v6423 = vld [vmem:[%s6413 + $0x24] sm:$0xf]
        %v6424 = vld [vmem:[%s6413 + $0x28] sm:$0xf]
        %v6425 = vld [vmem:[%s6413 + $0x2c] sm:$0xf]
        %v6426 = vld [vmem:[%s6413 + $0x30] sm:$0xf]
        %v6427 = vld [vmem:[%s6413 + $0x34] sm:$0xf]
        %v6428 = vld [vmem:[%s6413 + $0x38] sm:$0xf]
        %v6429 = vld [vmem:[%s6413 + $0x3c] sm:$0xf]
        %v6446 = vunpack.c.l.b16 %v6414
        %v6447 = vunpack.c.l.b16 %v6415
        %v6448 = vunpack.c.l.b16 %v6416
        %v6449 = vunpack.c.l.b16 %v6417
        %v6450 = vunpack.c.l.b16 %v6418
        %v6451 = vunpack.c.l.b16 %v6419
        %v6452 = vunpack.c.l.b16 %v6420
        %v6453 = vunpack.c.l.b16 %v6421
        %v6454 = vunpack.c.l.b16 %v6422
        %v6455 = vunpack.c.l.b16 %v6423
        %v6456 = vunpack.c.l.b16 %v6424
        %v6457 = vunpack.c.l.b16 %v6425
        %v6458 = vunpack.c.l.b16 %v6426
        %v6459 = vunpack.c.l.b16 %v6427
        %v6460 = vunpack.c.l.b16 %v6428
        %v6461 = vunpack.c.l.b16 %v6429
        %v6462 = vpack.c.b16 %v6447, %v6446
        %v6463 = vpack.c.b16 %v6449, %v6448
        %v6464 = vpack.c.b16 %v6451, %v6450
        %v6465 = vpack.c.b16 %v6453, %v6452
        %v6466 = vpack.c.b16 %v6455, %v6454
        %v6467 = vpack.c.b16 %v6457, %v6456
        %v6468 = vpack.c.b16 %v6459, %v6458
        %v6469 = vpack.c.b16 %v6461, %v6460
        %6478 = vmatprep.subr.bf16.mxu0 0
        %6479 = vmatpush1.bf16.msra.mxu0 %v6462
        %6480 = vmatprep.subr.bf16.mxu0 0
        %6481 = vmatpush1.bf16.msra.mxu0 %v6463
        %6482 = vmatprep.subr.bf16.mxu0 0
        %6483 = vmatpush1.bf16.msra.mxu0 %v6464
        %6484 = vmatprep.subr.bf16.mxu0 0
        %6485 = vmatpush1.bf16.msra.mxu0 %v6465
        %6486 = vmatprep.subr.bf16.mxu0 0
        %6487 = vmatpush1.bf16.msra.mxu0 %v6466
        %6488 = vmatprep.subr.bf16.mxu0 0
        %6489 = vmatpush1.bf16.msra.mxu0 %v6467
        %6490 = vmatprep.subr.bf16.mxu0 0
        %6491 = vmatpush1.bf16.msra.mxu0 %v6468
        %6492 = vmatprep.subr.bf16.mxu0 0
        %6493 = vmatpush1.bf16.msra.mxu0 %v6469
        %6494 = vmatprep.subr.bf16.mxu0 0
        %6495 = vmatpush1.bf16.msra.mxu0 0
        %6496 = vmatprep.subr.bf16.mxu0 0
        %6497 = vmatpush1.bf16.msra.mxu0 0
        %6498 = vmatprep.subr.bf16.mxu0 0
        %6499 = vmatpush1.bf16.msra.mxu0 0
        %6500 = vmatprep.subr.bf16.mxu0 0
        %6501 = vmatpush1.bf16.msra.mxu0 0
        %6502 = vmatprep.subr.bf16.mxu0 0
        %6503 = vmatpush1.bf16.msra.mxu0 0
        %6504 = vmatprep.subr.bf16.mxu0 0
        %6505 = vmatpush1.bf16.msra.mxu0 0
        %6506 = vmatprep.subr.bf16.mxu0 0
        %6507 = vmatpush1.bf16.msra.mxu0 0
        %6508 = vmatprep.subr.bf16.mxu0 0
        %6509 = vmatpush1.bf16.msra.mxu0 0
        %6510 = vmatprep.mubr.bf16.mxu0 0
        %6511 = vmatmul.mubr.bf16.gmra.mrb[0].mxu0 %v6397
        %v6512 = vpop.f32.mrb[0].mxu0
        %v6513 = vadd.f32 0.0, %v6512
        %v6514 = vpop.f32.mrb[0].mxu0
        %v6515 = vpop.f32.mrb[0].mxu0
        %v6516 = vadd.f32 0.0, %v6515
        %v6517 = vpop.f32.mrb[0].mxu0
        %6518 = vmatprep.mubr.bf16.mxu0 0
        %6519 = vmatmul.mubr.bf16.gmra.mrb[0].mxu0 %v6398
        %v6520 = vpop.f32.mrb[0].mxu0
        %v6521 = vadd.f32 0.0, %v6520
        %v6522 = vpop.f32.mrb[0].mxu0
        %v6523 = vpop.f32.mrb[0].mxu0
        %v6524 = vadd.f32 0.0, %v6523
        %v6525 = vpop.f32.mrb[0].mxu0
        %6526 = vmatprep.mubr.bf16.mxu0 0
        %6527 = vmatmul.mubr.bf16.gmra.mrb[0].mxu0 %v6399
        %v6528 = vpop.f32.mrb[0].mxu0
        %v6529 = vadd.f32 0.0, %v6528
        %v6530 = vpop.f32.mrb[0].mxu0
        %v6531 = vpop.f32.mrb[0].mxu0
        %v6532 = vadd.f32 0.0, %v6531
        %v6533 = vpop.f32.mrb[0].mxu0
        %6534 = vmatprep.mubr.bf16.mxu0 0
        %6535 = vmatmul.mubr.bf16.gmra.mrb[0].mxu0 %v6400
        %v6536 = vpop.f32.mrb[0].mxu0
        %v6537 = vadd.f32 0.0, %v6536
        %v6538 = vpop.f32.mrb[0].mxu0
        %v6539 = vpop.f32.mrb[0].mxu0
        %v6540 = vadd.f32 0.0, %v6539
        %v6541 = vpop.f32.mrb[0].mxu0
        %6542 = vmatprep.mubr.bf16.mxu0 0
        %6543 = vmatmul.mubr.bf16.gmra.mrb[0].mxu0 %v6401
        %v6544 = vpop.f32.mrb[0].mxu0
        %v6545 = vadd.f32 0.0, %v6544
        %v6546 = vpop.f32.mrb[0].mxu0
        %v6547 = vpop.f32.mrb[0].mxu0
        %v6548 = vadd.f32 0.0, %v6547
        %v6549 = vpop.f32.mrb[0].mxu0
        %6550 = vmatprep.mubr.bf16.mxu0 0
        %6551 = vmatmul.mubr.bf16.gmra.mrb[0].mxu0 %v6402
        %v6552 = vpop.f32.mrb[0].mxu0
        %v6553 = vadd.f32 0.0, %v6552
        %v6554 = vpop.f32.mrb[0].mxu0
        %v6555 = vpop.f32.mrb[0].mxu0
        %v6556 = vadd.f32 0.0, %v6555
        %v6557 = vpop.f32.mrb[0].mxu0
        %6558 = vmatprep.mubr.bf16.mxu0 0
        %6559 = vmatmul.mubr.bf16.gmra.mrb[0].mxu0 %v6403
        %v6560 = vpop.f32.mrb[0].mxu0
        %v6561 = vadd.f32 0.0, %v6560
        %v6562 = vpop.f32.mrb[0].mxu0
        %v6563 = vpop.f32.mrb[0].mxu0
        %v6564 = vadd.f32 0.0, %v6563
        %v6565 = vpop.f32.mrb[0].mxu0
        %6566 = vmatprep.mubr.bf16.mxu0 0
        %6567 = vmatmul.mubr.bf16.gmra.mrb[0].mxu0 %v6404
        %v6568 = vpop.f32.mrb[0].mxu0
        %v6569 = vadd.f32 0.0, %v6568
        %v6570 = vpop.f32.mrb[0].mxu0
        %v6571 = vpop.f32.mrb[0].mxu0
        %v6572 = vadd.f32 0.0, %v6571
        %v6573 = vpop.f32.mrb[0].mxu0
        %6574 = vmatprep.mubr.bf16.mxu0 0
        %6575 = vmatmul.mubr.bf16.gmra.mrb[0].mxu0 %v6405
        %v6576 = vpop.f32.mrb[0].mxu0
        %v6577 = vadd.f32 0.0, %v6576
        %v6578 = vpop.f32.mrb[0].mxu0
        %v6579 = vpop.f32.mrb[0].mxu0
        %v6580 = vadd.f32 0.0, %v6579
        %v6581 = vpop.f32.mrb[0].mxu0
        %6582 = vmatprep.mubr.bf16.mxu0 0
        %6583 = vmatmul.mubr.bf16.gmra.mrb[0].mxu0 %v6406
        %v6584 = vpop.f32.mrb[0].mxu0
        %v6585 = vadd.f32 0.0, %v6584
        %v6586 = vpop.f32.mrb[0].mxu0
        %v6587 = vpop.f32.mrb[0].mxu0
        %v6588 = vadd.f32 0.0, %v6587
        %v6589 = vpop.f32.mrb[0].mxu0
        %6590 = vmatprep.mubr.bf16.mxu0 0
        %6591 = vmatmul.mubr.bf16.gmra.mrb[0].mxu0 %v6407
        %v6592 = vpop.f32.mrb[0].mxu0
        %v6593 = vadd.f32 0.0, %v6592
        %v6594 = vpop.f32.mrb[0].mxu0
        %v6595 = vpop.f32.mrb[0].mxu0
        %v6596 = vadd.f32 0.0, %v6595
        %v6597 = vpop.f32.mrb[0].mxu0
        %6598 = vmatprep.mubr.bf16.mxu0 0
        %6599 = vmatmul.mubr.bf16.gmra.mrb[0].mxu0 %v6408
        %v6600 = vpop.f32.mrb[0].mxu0
        %v6601 = vadd.f32 0.0, %v6600
        %v6602 = vpop.f32.mrb[0].mxu0
        %v6603 = vpop.f32.mrb[0].mxu0
        %v6604 = vadd.f32 0.0, %v6603
        %v6605 = vpop.f32.mrb[0].mxu0
        %6606 = vmatprep.mubr.bf16.mxu0 0
        %6607 = vmatmul.mubr.bf16.gmra.mrb[0].mxu0 %v6409
        %v6608 = vpop.f32.mrb[0].mxu0
        %v6609 = vadd.f32 0.0, %v6608
        %v6610 = vpop.f32.mrb[0].mxu0
        %v6611 = vpop.f32.mrb[0].mxu0
        %v6612 = vadd.f32 0.0, %v6611
        %v6613 = vpop.f32.mrb[0].mxu0
        %6614 = vmatprep.mubr.bf16.mxu0 0
        %6615 = vmatmul.mubr.bf16.gmra.mrb[0].mxu0 %v6410
        %v6616 = vpop.f32.mrb[0].mxu0
        %v6617 = vadd.f32 0.0, %v6616
        %v6618 = vpop.f32.mrb[0].mxu0
        %v6619 = vpop.f32.mrb[0].mxu0
        %v6620 = vadd.f32 0.0, %v6619
        %v6621 = vpop.f32.mrb[0].mxu0
        %6622 = vmatprep.mubr.bf16.mxu0 0
        %6623 = vmatmul.mubr.bf16.gmra.mrb[0].mxu0 %v6411
        %v6624 = vpop.f32.mrb[0].mxu0
        %v6625 = vadd.f32 0.0, %v6624
        %v6626 = vpop.f32.mrb[0].mxu0
        %v6627 = vpop.f32.mrb[0].mxu0
        %v6628 = vadd.f32 0.0, %v6627
        %v6629 = vpop.f32.mrb[0].mxu0
        %6630 = vmatprep.mubr.bf16.mxu0 0
        %6631 = vmatmul.mubr.bf16.gmra.mrb[0].mxu0 %v6412
        %v6632 = vpop.f32.mrb[0].mxu0
        %v6633 = vadd.f32 0.0, %v6632
        %v6634 = vpop.f32.mrb[0].mxu0
        %v6635 = vpop.f32.mrb[0].mxu0
        %v6636 = vadd.f32 0.0, %v6635
        %v6637 = vpop.f32.mrb[0].mxu0
        %6638 = vdwg.mxu0
        %v6639 = vadd.f32 %v6333, %v6513
        %v6640 = vadd.f32 %v6334, %v6516
        %v6641 = vadd.f32 %v6335, %v6521
        %v6642 = vadd.f32 %v6336, %v6524
        %v6643 = vadd.f32 %v6337, %v6529
        %v6644 = vadd.f32 %v6338, %v6532
        %v6645 = vadd.f32 %v6339, %v6537
        %v6646 = vadd.f32 %v6340, %v6540
        %v6647 = vadd.f32 %v6341, %v6545
        %v6648 = vadd.f32 %v6342, %v6548
        %v6649 = vadd.f32 %v6343, %v6553
        %v6650 = vadd.f32 %v6344, %v6556
        %v6651 = vadd.f32 %v6345, %v6561
        %v6652 = vadd.f32 %v6346, %v6564
        %v6653 = vadd.f32 %v6347, %v6569
        %v6654 = vadd.f32 %v6348, %v6572
        %v6655 = vadd.f32 %v6349, %v6577
        %v6656 = vadd.f32 %v6350, %v6580
        %v6657 = vadd.f32 %v6351, %v6585
        %v6658 = vadd.f32 %v6352, %v6588
        %v6659 = vadd.f32 %v6353, %v6593
        %v6660 = vadd.f32 %v6354, %v6596
        %v6661 = vadd.f32 %v6355, %v6601
        %v6662 = vadd.f32 %v6356, %v6604
        %v6663 = vadd.f32 %v6357, %v6609
        %v6664 = vadd.f32 %v6358, %v6612
        %v6665 = vadd.f32 %v6359, %v6617
        %v6666 = vadd.f32 %v6360, %v6620
        %v6667 = vadd.f32 %v6361, %v6625
        %v6668 = vadd.f32 %v6362, %v6628
        %v6669 = vadd.f32 %v6363, %v6633
        %v6670 = vadd.f32 %v6364, %v6636
        %v6671 = vld [vmem:[%s5173 + $0x2] sm:$0xff]
        %v6672 = vld [vmem:[%s5173 + $0xa] sm:$0xff]
        %v6673 = vld [vmem:[%s5173 + $0x1a] sm:$0xff]
        %v6674 = vld [vmem:[%s5173 + $0x22] sm:$0xff]
        %v6675 = vld [vmem:[%s5173 + $0x32] sm:$0xff]
        %v6676 = vld [vmem:[%s5173 + $0x3a] sm:$0xff]
        %v6677 = vld [vmem:[%s5173 + $0x4a] sm:$0xff]
        %v6678 = vld [vmem:[%s5173 + $0x52] sm:$0xff]
        %v6679 = vld [vmem:[%s5173 + $0x62] sm:$0xff]
        %v6680 = vld [vmem:[%s5173 + $0x6a] sm:$0xff]
        %v6681 = vld [vmem:[%s5173 + $0x7a] sm:$0xff]
        %v6682 = vld [vmem:[%s5173 + $0x82] sm:$0xff]
        %v6683 = vld [vmem:[%s5173 + $0x92] sm:$0xff]
        %v6684 = vld [vmem:[%s5173 + $0x9a] sm:$0xff]
        %v6685 = vld [vmem:[%s5173 + $0xaa] sm:$0xff]
        %v6686 = vld [vmem:[%s5173 + $0xb2] sm:$0xff]
        %v6687 = vld [vmem:[%s5173 + $0xc2] sm:$0xff]
        %v6688 = vld [vmem:[%s5173 + $0xca] sm:$0xff]
        %v6689 = vld [vmem:[%s5173 + $0xda] sm:$0xff]
        %v6690 = vld [vmem:[%s5173 + $0xe2] sm:$0xff]
        %v6691 = vld [vmem:[%s5173 + $0xf2] sm:$0xff]
        %v6692 = vld [vmem:[%s5173 + $0xfa] sm:$0xff]
        %v6693 = vld [vmem:[%s5173 + $0x10a] sm:$0xff]
        %v6694 = vld [vmem:[%s5173 + $0x112] sm:$0xff]
        %v6695 = vld [vmem:[%s5173 + $0x122] sm:$0xff]
        %v6696 = vld [vmem:[%s5173 + $0x12a] sm:$0xff]
        %v6697 = vld [vmem:[%s5173 + $0x13a] sm:$0xff]
        %v6698 = vld [vmem:[%s5173 + $0x142] sm:$0xff]
        %v6699 = vld [vmem:[%s5173 + $0x152] sm:$0xff]
        %v6700 = vld [vmem:[%s5173 + $0x15a] sm:$0xff]
        %v6701 = vld [vmem:[%s5173 + $0x16a] sm:$0xff]
        %v6702 = vld [vmem:[%s5173 + $0x172] sm:$0xff]
        %v6703 = vpack.c.bf16 %v6672, %v6671
        %v6704 = vpack.c.bf16 %v6674, %v6673
        %v6705 = vpack.c.bf16 %v6676, %v6675
        %v6706 = vpack.c.bf16 %v6678, %v6677
        %v6707 = vpack.c.bf16 %v6680, %v6679
        %v6708 = vpack.c.bf16 %v6682, %v6681
        %v6709 = vpack.c.bf16 %v6684, %v6683
        %v6710 = vpack.c.bf16 %v6686, %v6685
        %v6711 = vpack.c.bf16 %v6688, %v6687
        %v6712 = vpack.c.bf16 %v6690, %v6689
        %v6713 = vpack.c.bf16 %v6692, %v6691
        %v6714 = vpack.c.bf16 %v6694, %v6693
        %v6715 = vpack.c.bf16 %v6696, %v6695
        %v6716 = vpack.c.bf16 %v6698, %v6697
        %v6717 = vpack.c.bf16 %v6700, %v6699
        %v6718 = vpack.c.bf16 %v6702, %v6701
        %s6719 = scalar_lea.vmem [#allocation3], 320
        %v6720 = vld [vmem:[%s6719] sm:$0xf]
        %v6721 = vld [vmem:[%s6719 + $0x4] sm:$0xf]
        %v6722 = vld [vmem:[%s6719 + $0x8] sm:$0xf]
        %v6723 = vld [vmem:[%s6719 + $0xc] sm:$0xf]
        %v6724 = vld [vmem:[%s6719 + $0x10] sm:$0xf]
        %v6725 = vld [vmem:[%s6719 + $0x14] sm:$0xf]
        %v6726 = vld [vmem:[%s6719 + $0x18] sm:$0xf]
        %v6727 = vld [vmem:[%s6719 + $0x1c] sm:$0xf]
        %v6728 = vld [vmem:[%s6719 + $0x20] sm:$0xf]
        %v6729 = vld [vmem:[%s6719 + $0x24] sm:$0xf]
        %v6730 = vld [vmem:[%s6719 + $0x28] sm:$0xf]
        %v6731 = vld [vmem:[%s6719 + $0x2c] sm:$0xf]
        %v6732 = vld [vmem:[%s6719 + $0x30] sm:$0xf]
        %v6733 = vld [vmem:[%s6719 + $0x34] sm:$0xf]
        %v6734 = vld [vmem:[%s6719 + $0x38] sm:$0xf]
        %v6735 = vld [vmem:[%s6719 + $0x3c] sm:$0xf]
        %v6752 = vunpack.c.l.b16 %v6720
        %v6753 = vunpack.c.l.b16 %v6721
        %v6754 = vunpack.c.l.b16 %v6722
        %v6755 = vunpack.c.l.b16 %v6723
        %v6756 = vunpack.c.l.b16 %v6724
        %v6757 = vunpack.c.l.b16 %v6725
        %v6758 = vunpack.c.l.b16 %v6726
        %v6759 = vunpack.c.l.b16 %v6727
        %v6760 = vunpack.c.l.b16 %v6728
        %v6761 = vunpack.c.l.b16 %v6729
        %v6762 = vunpack.c.l.b16 %v6730
        %v6763 = vunpack.c.l.b16 %v6731
        %v6764 = vunpack.c.l.b16 %v6732
        %v6765 = vunpack.c.l.b16 %v6733
        %v6766 = vunpack.c.l.b16 %v6734
        %v6767 = vunpack.c.l.b16 %v6735
        %v6768 = vpack.c.b16 %v6753, %v6752
        %v6769 = vpack.c.b16 %v6755, %v6754
        %v6770 = vpack.c.b16 %v6757, %v6756
        %v6771 = vpack.c.b16 %v6759, %v6758
        %v6772 = vpack.c.b16 %v6761, %v6760
        %v6773 = vpack.c.b16 %v6763, %v6762
        %v6774 = vpack.c.b16 %v6765, %v6764
        %v6775 = vpack.c.b16 %v6767, %v6766
        %6784 = vmatprep.subr.bf16.mxu0 0
        %6785 = vmatpush1.bf16.msra.mxu0 %v6768
        %6786 = vmatprep.subr.bf16.mxu0 0
        %6787 = vmatpush1.bf16.msra.mxu0 %v6769
        %6788 = vmatprep.subr.bf16.mxu0 0
        %6789 = vmatpush1.bf16.msra.mxu0 %v6770
        %6790 = vmatprep.subr.bf16.mxu0 0
        %6791 = vmatpush1.bf16.msra.mxu0 %v6771
        %6792 = vmatprep.subr.bf16.mxu0 0
        %6793 = vmatpush1.bf16.msra.mxu0 %v6772
        %6794 = vmatprep.subr.bf16.mxu0 0
        %6795 = vmatpush1.bf16.msra.mxu0 %v6773
        %6796 = vmatprep.subr.bf16.mxu0 0
        %6797 = vmatpush1.bf16.msra.mxu0 %v6774
        %6798 = vmatprep.subr.bf16.mxu0 0
        %6799 = vmatpush1.bf16.msra.mxu0 %v6775
        %6800 = vmatprep.subr.bf16.mxu0 0
        %6801 = vmatpush1.bf16.msra.mxu0 0
        %6802 = vmatprep.subr.bf16.mxu0 0
        %6803 = vmatpush1.bf16.msra.mxu0 0
        %6804 = vmatprep.subr.bf16.mxu0 0
        %6805 = vmatpush1.bf16.msra.mxu0 0
        %6806 = vmatprep.subr.bf16.mxu0 0
        %6807 = vmatpush1.bf16.msra.mxu0 0
        %6808 = vmatprep.subr.bf16.mxu0 0
        %6809 = vmatpush1.bf16.msra.mxu0 0
        %6810 = vmatprep.subr.bf16.mxu0 0
        %6811 = vmatpush1.bf16.msra.mxu0 0
        %6812 = vmatprep.subr.bf16.mxu0 0
        %6813 = vmatpush1.bf16.msra.mxu0 0
        %6814 = vmatprep.subr.bf16.mxu0 0
        %6815 = vmatpush1.bf16.msra.mxu0 0
        %6816 = vmatprep.mubr.bf16.mxu0 0
        %6817 = vmatmul.mubr.bf16.gmra.mrb[0].mxu0 %v6703
        %v6818 = vpop.f32.mrb[0].mxu0
        %v6819 = vadd.f32 0.0, %v6818
        %v6820 = vpop.f32.mrb[0].mxu0
        %v6821 = vpop.f32.mrb[0].mxu0
        %v6822 = vadd.f32 0.0, %v6821
        %v6823 = vpop.f32.mrb[0].mxu0
        %6824 = vmatprep.mubr.bf16.mxu0 0
        %6825 = vmatmul.mubr.bf16.gmra.mrb[0].mxu0 %v6704
        %v6826 = vpop.f32.mrb[0].mxu0
        %v6827 = vadd.f32 0.0, %v6826
        %v6828 = vpop.f32.mrb[0].mxu0
        %v6829 = vpop.f32.mrb[0].mxu0
        %v6830 = vadd.f32 0.0, %v6829
        %v6831 = vpop.f32.mrb[0].mxu0
        %6832 = vmatprep.mubr.bf16.mxu0 0
        %6833 = vmatmul.mubr.bf16.gmra.mrb[0].mxu0 %v6705
        %v6834 = vpop.f32.mrb[0].mxu0
        %v6835 = vadd.f32 0.0, %v6834
        %v6836 = vpop.f32.mrb[0].mxu0
        %v6837 = vpop.f32.mrb[0].mxu0
        %v6838 = vadd.f32 0.0, %v6837
        %v6839 = vpop.f32.mrb[0].mxu0
        %6840 = vmatprep.mubr.bf16.mxu0 0
        %6841 = vmatmul.mubr.bf16.gmra.mrb[0].mxu0 %v6706
        %v6842 = vpop.f32.mrb[0].mxu0
        %v6843 = vadd.f32 0.0, %v6842
        %v6844 = vpop.f32.mrb[0].mxu0
        %v6845 = vpop.f32.mrb[0].mxu0
        %v6846 = vadd.f32 0.0, %v6845
        %v6847 = vpop.f32.mrb[0].mxu0
        %6848 = vmatprep.mubr.bf16.mxu0 0
        %6849 = vmatmul.mubr.bf16.gmra.mrb[0].mxu0 %v6707
        %v6850 = vpop.f32.mrb[0].mxu0
        %v6851 = vadd.f32 0.0, %v6850
        %v6852 = vpop.f32.mrb[0].mxu0
        %v6853 = vpop.f32.mrb[0].mxu0
        %v6854 = vadd.f32 0.0, %v6853
        %v6855 = vpop.f32.mrb[0].mxu0
        %6856 = vmatprep.mubr.bf16.mxu0 0
        %6857 = vmatmul.mubr.bf16.gmra.mrb[0].mxu0 %v6708
        %v6858 = vpop.f32.mrb[0].mxu0
        %v6859 = vadd.f32 0.0, %v6858
        %v6860 = vpop.f32.mrb[0].mxu0
        %v6861 = vpop.f32.mrb[0].mxu0
        %v6862 = vadd.f32 0.0, %v6861
        %v6863 = vpop.f32.mrb[0].mxu0
        %6864 = vmatprep.mubr.bf16.mxu0 0
        %6865 = vmatmul.mubr.bf16.gmra.mrb[0].mxu0 %v6709
        %v6866 = vpop.f32.mrb[0].mxu0
        %v6867 = vadd.f32 0.0, %v6866
        %v6868 = vpop.f32.mrb[0].mxu0
        %v6869 = vpop.f32.mrb[0].mxu0
        %v6870 = vadd.f32 0.0, %v6869
        %v6871 = vpop.f32.mrb[0].mxu0
        %6872 = vmatprep.mubr.bf16.mxu0 0
        %6873 = vmatmul.mubr.bf16.gmra.mrb[0].mxu0 %v6710
        %v6874 = vpop.f32.mrb[0].mxu0
        %v6875 = vadd.f32 0.0, %v6874
        %v6876 = vpop.f32.mrb[0].mxu0
        %v6877 = vpop.f32.mrb[0].mxu0
        %v6878 = vadd.f32 0.0, %v6877
        %v6879 = vpop.f32.mrb[0].mxu0
        %6880 = vmatprep.mubr.bf16.mxu0 0
        %6881 = vmatmul.mubr.bf16.gmra.mrb[0].mxu0 %v6711
        %v6882 = vpop.f32.mrb[0].mxu0
        %v6883 = vadd.f32 0.0, %v6882
        %v6884 = vpop.f32.mrb[0].mxu0
        %v6885 = vpop.f32.mrb[0].mxu0
        %v6886 = vadd.f32 0.0, %v6885
        %v6887 = vpop.f32.mrb[0].mxu0
        %6888 = vmatprep.mubr.bf16.mxu0 0
        %6889 = vmatmul.mubr.bf16.gmra.mrb[0].mxu0 %v6712
        %v6890 = vpop.f32.mrb[0].mxu0
        %v6891 = vadd.f32 0.0, %v6890
        %v6892 = vpop.f32.mrb[0].mxu0
        %v6893 = vpop.f32.mrb[0].mxu0
        %v6894 = vadd.f32 0.0, %v6893
        %v6895 = vpop.f32.mrb[0].mxu0
        %6896 = vmatprep.mubr.bf16.mxu0 0
        %6897 = vmatmul.mubr.bf16.gmra.mrb[0].mxu0 %v6713
        %v6898 = vpop.f32.mrb[0].mxu0
        %v6899 = vadd.f32 0.0, %v6898
        %v6900 = vpop.f32.mrb[0].mxu0
        %v6901 = vpop.f32.mrb[0].mxu0
        %v6902 = vadd.f32 0.0, %v6901
        %v6903 = vpop.f32.mrb[0].mxu0
        %6904 = vmatprep.mubr.bf16.mxu0 0
        %6905 = vmatmul.mubr.bf16.gmra.mrb[0].mxu0 %v6714
        %v6906 = vpop.f32.mrb[0].mxu0
        %v6907 = vadd.f32 0.0, %v6906
        %v6908 = vpop.f32.mrb[0].mxu0
        %v6909 = vpop.f32.mrb[0].mxu0
        %v6910 = vadd.f32 0.0, %v6909
        %v6911 = vpop.f32.mrb[0].mxu0
        %6912 = vmatprep.mubr.bf16.mxu0 0
        %6913 = vmatmul.mubr.bf16.gmra.mrb[0].mxu0 %v6715
        %v6914 = vpop.f32.mrb[0].mxu0
        %v6915 = vadd.f32 0.0, %v6914
        %v6916 = vpop.f32.mrb[0].mxu0
        %v6917 = vpop.f32.mrb[0].mxu0
        %v6918 = vadd.f32 0.0, %v6917
        %v6919 = vpop.f32.mrb[0].mxu0
        %6920 = vmatprep.mubr.bf16.mxu0 0
        %6921 = vmatmul.mubr.bf16.gmra.mrb[0].mxu0 %v6716
        %v6922 = vpop.f32.mrb[0].mxu0
        %v6923 = vadd.f32 0.0, %v6922
        %v6924 = vpop.f32.mrb[0].mxu0
        %v6925 = vpop.f32.mrb[0].mxu0
        %v6926 = vadd.f32 0.0, %v6925
        %v6927 = vpop.f32.mrb[0].mxu0
        %6928 = vmatprep.mubr.bf16.mxu0 0
        %6929 = vmatmul.mubr.bf16.gmra.mrb[0].mxu0 %v6717
        %v6930 = vpop.f32.mrb[0].mxu0
        %v6931 = vadd.f32 0.0, %v6930
        %v6932 = vpop.f32.mrb[0].mxu0
        %v6933 = vpop.f32.mrb[0].mxu0
        %v6934 = vadd.f32 0.0, %v6933
        %v6935 = vpop.f32.mrb[0].mxu0
        %6936 = vmatprep.mubr.bf16.mxu0 0
        %6937 = vmatmul.mubr.bf16.gmra.mrb[0].mxu0 %v6718
        %v6938 = vpop.f32.mrb[0].mxu0
        %v6939 = vadd.f32 0.0, %v6938
        %v6940 = vpop.f32.mrb[0].mxu0
        %v6941 = vpop.f32.mrb[0].mxu0
        %v6942 = vadd.f32 0.0, %v6941
        %v6943 = vpop.f32.mrb[0].mxu0
        %6944 = vdwg.mxu0
        %v6945 = vadd.f32 %v6639, %v6819
        %v6946 = vadd.f32 %v6640, %v6822
        %v6947 = vadd.f32 %v6641, %v6827
        %v6948 = vadd.f32 %v6642, %v6830
        %v6949 = vadd.f32 %v6643, %v6835
        %v6950 = vadd.f32 %v6644, %v6838
        %v6951 = vadd.f32 %v6645, %v6843
        %v6952 = vadd.f32 %v6646, %v6846
        %v6953 = vadd.f32 %v6647, %v6851
        %v6954 = vadd.f32 %v6648, %v6854
        %v6955 = vadd.f32 %v6649, %v6859
        %v6956 = vadd.f32 %v6650, %v6862
        %v6957 = vadd.f32 %v6651, %v6867
        %v6958 = vadd.f32 %v6652, %v6870
        %v6959 = vadd.f32 %v6653, %v6875
        %v6960 = vadd.f32 %v6654, %v6878
        %v6961 = vadd.f32 %v6655, %v6883
        %v6962 = vadd.f32 %v6656, %v6886
        %v6963 = vadd.f32 %v6657, %v6891
        %v6964 = vadd.f32 %v6658, %v6894
        %v6965 = vadd.f32 %v6659, %v6899
        %v6966 = vadd.f32 %v6660, %v6902
        %v6967 = vadd.f32 %v6661, %v6907
        %v6968 = vadd.f32 %v6662, %v6910
        %v6969 = vadd.f32 %v6663, %v6915
        %v6970 = vadd.f32 %v6664, %v6918
        %v6971 = vadd.f32 %v6665, %v6923
        %v6972 = vadd.f32 %v6666, %v6926
        %v6973 = vadd.f32 %v6667, %v6931
        %v6974 = vadd.f32 %v6668, %v6934
        %v6975 = vadd.f32 %v6669, %v6939
        %v6976 = vadd.f32 %v6670, %v6942
        %s6977 = scalar_lea.vmem [#allocation2], 48
        %v6978 = vld [vmem:[%s6977] sm:$0xff]
        %v6979 = vld [vmem:[%s6977 + $0x8] sm:$0xff]
        %v6980 = vld [vmem:[%s6977 + $0x18] sm:$0xff]
        %v6981 = vld [vmem:[%s6977 + $0x20] sm:$0xff]
        %v6982 = vld [vmem:[%s6977 + $0x30] sm:$0xff]
        %v6983 = vld [vmem:[%s6977 + $0x38] sm:$0xff]
        %v6984 = vld [vmem:[%s6977 + $0x48] sm:$0xff]
        %v6985 = vld [vmem:[%s6977 + $0x50] sm:$0xff]
        %v6986 = vld [vmem:[%s6977 + $0x60] sm:$0xff]
        %v6987 = vld [vmem:[%s6977 + $0x68] sm:$0xff]
        %v6988 = vld [vmem:[%s6977 + $0x78] sm:$0xff]
        %v6989 = vld [vmem:[%s6977 + $0x80] sm:$0xff]
        %v6990 = vld [vmem:[%s6977 + $0x90] sm:$0xff]
        %v6991 = vld [vmem:[%s6977 + $0x98] sm:$0xff]
        %v6992 = vld [vmem:[%s6977 + $0xa8] sm:$0xff]
        %v6993 = vld [vmem:[%s6977 + $0xb0] sm:$0xff]
        %v6994 = vld [vmem:[%s6977 + $0xc0] sm:$0xff]
        %v6995 = vld [vmem:[%s6977 + $0xc8] sm:$0xff]
        %v6996 = vld [vmem:[%s6977 + $0xd8] sm:$0xff]
        %v6997 = vld [vmem:[%s6977 + $0xe0] sm:$0xff]
        %v6998 = vld [vmem:[%s6977 + $0xf0] sm:$0xff]
        %v6999 = vld [vmem:[%s6977 + $0xf8] sm:$0xff]
        %v7000 = vld [vmem:[%s6977 + $0x108] sm:$0xff]
        %v7001 = vld [vmem:[%s6977 + $0x110] sm:$0xff]
        %v7002 = vld [vmem:[%s6977 + $0x120] sm:$0xff]
        %v7003 = vld [vmem:[%s6977 + $0x128] sm:$0xff]
        %v7004 = vld [vmem:[%s6977 + $0x138] sm:$0xff]
        %v7005 = vld [vmem:[%s6977 + $0x140] sm:$0xff]
        %v7006 = vld [vmem:[%s6977 + $0x150] sm:$0xff]
        %v7007 = vld [vmem:[%s6977 + $0x158] sm:$0xff]
        %v7008 = vld [vmem:[%s6977 + $0x168] sm:$0xff]
        %v7009 = vld [vmem:[%s6977 + $0x170] sm:$0xff]
        %v7010 = vpack.c.bf16 %v6979, %v6978
        %v7011 = vpack.c.bf16 %v6981, %v6980
        %v7012 = vpack.c.bf16 %v6983, %v6982
        %v7013 = vpack.c.bf16 %v6985, %v6984
        %v7014 = vpack.c.bf16 %v6987, %v6986
        %v7015 = vpack.c.bf16 %v6989, %v6988
        %v7016 = vpack.c.bf16 %v6991, %v6990
        %v7017 = vpack.c.bf16 %v6993, %v6992
        %v7018 = vpack.c.bf16 %v6995, %v6994
        %v7019 = vpack.c.bf16 %v6997, %v6996
        %v7020 = vpack.c.bf16 %v6999, %v6998
        %v7021 = vpack.c.bf16 %v7001, %v7000
        %v7022 = vpack.c.bf16 %v7003, %v7002
        %v7023 = vpack.c.bf16 %v7005, %v7004
        %v7024 = vpack.c.bf16 %v7007, %v7006
        %v7025 = vpack.c.bf16 %v7009, %v7008
        %s7026 = scalar_lea.vmem [#allocation3], 384
        %v7027 = vld [vmem:[%s7026] sm:$0xf]
        %v7028 = vld [vmem:[%s7026 + $0x4] sm:$0xf]
        %v7029 = vld [vmem:[%s7026 + $0x8] sm:$0xf]
        %v7030 = vld [vmem:[%s7026 + $0xc] sm:$0xf]
        %v7031 = vld [vmem:[%s7026 + $0x10] sm:$0xf]
        %v7032 = vld [vmem:[%s7026 + $0x14] sm:$0xf]
        %v7033 = vld [vmem:[%s7026 + $0x18] sm:$0xf]
        %v7034 = vld [vmem:[%s7026 + $0x1c] sm:$0xf]
        %v7035 = vld [vmem:[%s7026 + $0x20] sm:$0xf]
        %v7036 = vld [vmem:[%s7026 + $0x24] sm:$0xf]
        %v7037 = vld [vmem:[%s7026 + $0x28] sm:$0xf]
        %v7038 = vld [vmem:[%s7026 + $0x2c] sm:$0xf]
        %v7039 = vld [vmem:[%s7026 + $0x30] sm:$0xf]
        %v7040 = vld [vmem:[%s7026 + $0x34] sm:$0xf]
        %v7041 = vld [vmem:[%s7026 + $0x38] sm:$0xf]
        %v7042 = vld [vmem:[%s7026 + $0x3c] sm:$0xf]
        %v7059 = vunpack.c.l.b16 %v7027
        %v7060 = vunpack.c.l.b16 %v7028
        %v7061 = vunpack.c.l.b16 %v7029
        %v7062 = vunpack.c.l.b16 %v7030
        %v7063 = vunpack.c.l.b16 %v7031
        %v7064 = vunpack.c.l.b16 %v7032
        %v7065 = vunpack.c.l.b16 %v7033
        %v7066 = vunpack.c.l.b16 %v7034
        %v7067 = vunpack.c.l.b16 %v7035
        %v7068 = vunpack.c.l.b16 %v7036
        %v7069 = vunpack.c.l.b16 %v7037
        %v7070 = vunpack.c.l.b16 %v7038
        %v7071 = vunpack.c.l.b16 %v7039
        %v7072 = vunpack.c.l.b16 %v7040
        %v7073 = vunpack.c.l.b16 %v7041
        %v7074 = vunpack.c.l.b16 %v7042
        %v7075 = vpack.c.b16 %v7060, %v7059
        %v7076 = vpack.c.b16 %v7062, %v7061
        %v7077 = vpack.c.b16 %v7064, %v7063
        %v7078 = vpack.c.b16 %v7066, %v7065
        %v7079 = vpack.c.b16 %v7068, %v7067
        %v7080 = vpack.c.b16 %v7070, %v7069
        %v7081 = vpack.c.b16 %v7072, %v7071
        %v7082 = vpack.c.b16 %v7074, %v7073
        %7091 = vmatprep.subr.bf16.mxu0 0
        %7092 = vmatpush1.bf16.msra.mxu0 %v7075
        %7093 = vmatprep.subr.bf16.mxu0 0
        %7094 = vmatpush1.bf16.msra.mxu0 %v7076
        %7095 = vmatprep.subr.bf16.mxu0 0
        %7096 = vmatpush1.bf16.msra.mxu0 %v7077
        %7097 = vmatprep.subr.bf16.mxu0 0
        %7098 = vmatpush1.bf16.msra.mxu0 %v7078
        %7099 = vmatprep.subr.bf16.mxu0 0
        %7100 = vmatpush1.bf16.msra.mxu0 %v7079
        %7101 = vmatprep.subr.bf16.mxu0 0
        %7102 = vmatpush1.bf16.msra.mxu0 %v7080
        %7103 = vmatprep.subr.bf16.mxu0 0
        %7104 = vmatpush1.bf16.msra.mxu0 %v7081
        %7105 = vmatprep.subr.bf16.mxu0 0
        %7106 = vmatpush1.bf16.msra.mxu0 %v7082
        %7107 = vmatprep.subr.bf16.mxu0 0
        %7108 = vmatpush1.bf16.msra.mxu0 0
        %7109 = vmatprep.subr.bf16.mxu0 0
        %7110 = vmatpush1.bf16.msra.mxu0 0
        %7111 = vmatprep.subr.bf16.mxu0 0
        %7112 = vmatpush1.bf16.msra.mxu0 0
        %7113 = vmatprep.subr.bf16.mxu0 0
        %7114 = vmatpush1.bf16.msra.mxu0 0
        %7115 = vmatprep.subr.bf16.mxu0 0
        %7116 = vmatpush1.bf16.msra.mxu0 0
        %7117 = vmatprep.subr.bf16.mxu0 0
        %7118 = vmatpush1.bf16.msra.mxu0 0
        %7119 = vmatprep.subr.bf16.mxu0 0
        %7120 = vmatpush1.bf16.msra.mxu0 0
        %7121 = vmatprep.subr.bf16.mxu0 0
        %7122 = vmatpush1.bf16.msra.mxu0 0
        %7123 = vmatprep.mubr.bf16.mxu0 0
        %7124 = vmatmul.mubr.bf16.gmra.mrb[0].mxu0 %v7010
        %v7125 = vpop.f32.mrb[0].mxu0
        %v7126 = vadd.f32 0.0, %v7125
        %v7127 = vpop.f32.mrb[0].mxu0
        %v7128 = vpop.f32.mrb[0].mxu0
        %v7129 = vadd.f32 0.0, %v7128
        %v7130 = vpop.f32.mrb[0].mxu0
        %7131 = vmatprep.mubr.bf16.mxu0 0
        %7132 = vmatmul.mubr.bf16.gmra.mrb[0].mxu0 %v7011
        %v7133 = vpop.f32.mrb[0].mxu0
        %v7134 = vadd.f32 0.0, %v7133
        %v7135 = vpop.f32.mrb[0].mxu0
        %v7136 = vpop.f32.mrb[0].mxu0
        %v7137 = vadd.f32 0.0, %v7136
        %v7138 = vpop.f32.mrb[0].mxu0
        %7139 = vmatprep.mubr.bf16.mxu0 0
        %7140 = vmatmul.mubr.bf16.gmra.mrb[0].mxu0 %v7012
        %v7141 = vpop.f32.mrb[0].mxu0
        %v7142 = vadd.f32 0.0, %v7141
        %v7143 = vpop.f32.mrb[0].mxu0
        %v7144 = vpop.f32.mrb[0].mxu0
        %v7145 = vadd.f32 0.0, %v7144
        %v7146 = vpop.f32.mrb[0].mxu0
        %7147 = vmatprep.mubr.bf16.mxu0 0
        %7148 = vmatmul.mubr.bf16.gmra.mrb[0].mxu0 %v7013
        %v7149 = vpop.f32.mrb[0].mxu0
        %v7150 = vadd.f32 0.0, %v7149
        %v7151 = vpop.f32.mrb[0].mxu0
        %v7152 = vpop.f32.mrb[0].mxu0
        %v7153 = vadd.f32 0.0, %v7152
        %v7154 = vpop.f32.mrb[0].mxu0
        %7155 = vmatprep.mubr.bf16.mxu0 0
        %7156 = vmatmul.mubr.bf16.gmra.mrb[0].mxu0 %v7014
        %v7157 = vpop.f32.mrb[0].mxu0
        %v7158 = vadd.f32 0.0, %v7157
        %v7159 = vpop.f32.mrb[0].mxu0
        %v7160 = vpop.f32.mrb[0].mxu0
        %v7161 = vadd.f32 0.0, %v7160
        %v7162 = vpop.f32.mrb[0].mxu0
        %7163 = vmatprep.mubr.bf16.mxu0 0
        %7164 = vmatmul.mubr.bf16.gmra.mrb[0].mxu0 %v7015
        %v7165 = vpop.f32.mrb[0].mxu0
        %v7166 = vadd.f32 0.0, %v7165
        %v7167 = vpop.f32.mrb[0].mxu0
        %v7168 = vpop.f32.mrb[0].mxu0
        %v7169 = vadd.f32 0.0, %v7168
        %v7170 = vpop.f32.mrb[0].mxu0
        %7171 = vmatprep.mubr.bf16.mxu0 0
        %7172 = vmatmul.mubr.bf16.gmra.mrb[0].mxu0 %v7016
        %v7173 = vpop.f32.mrb[0].mxu0
        %v7174 = vadd.f32 0.0, %v7173
        %v7175 = vpop.f32.mrb[0].mxu0
        %v7176 = vpop.f32.mrb[0].mxu0
        %v7177 = vadd.f32 0.0, %v7176
        %v7178 = vpop.f32.mrb[0].mxu0
        %7179 = vmatprep.mubr.bf16.mxu0 0
        %7180 = vmatmul.mubr.bf16.gmra.mrb[0].mxu0 %v7017
        %v7181 = vpop.f32.mrb[0].mxu0
        %v7182 = vadd.f32 0.0, %v7181
        %v7183 = vpop.f32.mrb[0].mxu0
        %v7184 = vpop.f32.mrb[0].mxu0
        %v7185 = vadd.f32 0.0, %v7184
        %v7186 = vpop.f32.mrb[0].mxu0
        %7187 = vmatprep.mubr.bf16.mxu0 0
        %7188 = vmatmul.mubr.bf16.gmra.mrb[0].mxu0 %v7018
        %v7189 = vpop.f32.mrb[0].mxu0
        %v7190 = vadd.f32 0.0, %v7189
        %v7191 = vpop.f32.mrb[0].mxu0
        %v7192 = vpop.f32.mrb[0].mxu0
        %v7193 = vadd.f32 0.0, %v7192
        %v7194 = vpop.f32.mrb[0].mxu0
        %7195 = vmatprep.mubr.bf16.mxu0 0
        %7196 = vmatmul.mubr.bf16.gmra.mrb[0].mxu0 %v7019
        %v7197 = vpop.f32.mrb[0].mxu0
        %v7198 = vadd.f32 0.0, %v7197
        %v7199 = vpop.f32.mrb[0].mxu0
        %v7200 = vpop.f32.mrb[0].mxu0
        %v7201 = vadd.f32 0.0, %v7200
        %v7202 = vpop.f32.mrb[0].mxu0
        %7203 = vmatprep.mubr.bf16.mxu0 0
        %7204 = vmatmul.mubr.bf16.gmra.mrb[0].mxu0 %v7020
        %v7205 = vpop.f32.mrb[0].mxu0
        %v7206 = vadd.f32 0.0, %v7205
        %v7207 = vpop.f32.mrb[0].mxu0
        %v7208 = vpop.f32.mrb[0].mxu0
        %v7209 = vadd.f32 0.0, %v7208
        %v7210 = vpop.f32.mrb[0].mxu0
        %7211 = vmatprep.mubr.bf16.mxu0 0
        %7212 = vmatmul.mubr.bf16.gmra.mrb[0].mxu0 %v7021
        %v7213 = vpop.f32.mrb[0].mxu0
        %v7214 = vadd.f32 0.0, %v7213
        %v7215 = vpop.f32.mrb[0].mxu0
        %v7216 = vpop.f32.mrb[0].mxu0
        %v7217 = vadd.f32 0.0, %v7216
        %v7218 = vpop.f32.mrb[0].mxu0
        %7219 = vmatprep.mubr.bf16.mxu0 0
        %7220 = vmatmul.mubr.bf16.gmra.mrb[0].mxu0 %v7022
        %v7221 = vpop.f32.mrb[0].mxu0
        %v7222 = vadd.f32 0.0, %v7221
        %v7223 = vpop.f32.mrb[0].mxu0
        %v7224 = vpop.f32.mrb[0].mxu0
        %v7225 = vadd.f32 0.0, %v7224
        %v7226 = vpop.f32.mrb[0].mxu0
        %7227 = vmatprep.mubr.bf16.mxu0 0
        %7228 = vmatmul.mubr.bf16.gmra.mrb[0].mxu0 %v7023
        %v7229 = vpop.f32.mrb[0].mxu0
        %v7230 = vadd.f32 0.0, %v7229
        %v7231 = vpop.f32.mrb[0].mxu0
        %v7232 = vpop.f32.mrb[0].mxu0
        %v7233 = vadd.f32 0.0, %v7232
        %v7234 = vpop.f32.mrb[0].mxu0
        %7235 = vmatprep.mubr.bf16.mxu0 0
        %7236 = vmatmul.mubr.bf16.gmra.mrb[0].mxu0 %v7024
        %v7237 = vpop.f32.mrb[0].mxu0
        %v7238 = vadd.f32 0.0, %v7237
        %v7239 = vpop.f32.mrb[0].mxu0
        %v7240 = vpop.f32.mrb[0].mxu0
        %v7241 = vadd.f32 0.0, %v7240
        %v7242 = vpop.f32.mrb[0].mxu0
        %7243 = vmatprep.mubr.bf16.mxu0 0
        %7244 = vmatmul.mubr.bf16.gmra.mrb[0].mxu0 %v7025
        %v7245 = vpop.f32.mrb[0].mxu0
        %v7246 = vadd.f32 0.0, %v7245
        %v7247 = vpop.f32.mrb[0].mxu0
        %v7248 = vpop.f32.mrb[0].mxu0
        %v7249 = vadd.f32 0.0, %v7248
        %v7250 = vpop.f32.mrb[0].mxu0
        %7251 = vdwg.mxu0
        %v7252 = vadd.f32 %v6945, %v7126
        %v7253 = vadd.f32 %v6946, %v7129
        %v7254 = vadd.f32 %v6947, %v7134
        %v7255 = vadd.f32 %v6948, %v7137
        %v7256 = vadd.f32 %v6949, %v7142
        %v7257 = vadd.f32 %v6950, %v7145
        %v7258 = vadd.f32 %v6951, %v7150
        %v7259 = vadd.f32 %v6952, %v7153
        %v7260 = vadd.f32 %v6953, %v7158
        %v7261 = vadd.f32 %v6954, %v7161
        %v7262 = vadd.f32 %v6955, %v7166
        %v7263 = vadd.f32 %v6956, %v7169
        %v7264 = vadd.f32 %v6957, %v7174
        %v7265 = vadd.f32 %v6958, %v7177
        %v7266 = vadd.f32 %v6959, %v7182
        %v7267 = vadd.f32 %v6960, %v7185
        %v7268 = vadd.f32 %v6961, %v7190
        %v7269 = vadd.f32 %v6962, %v7193
        %v7270 = vadd.f32 %v6963, %v7198
        %v7271 = vadd.f32 %v6964, %v7201
        %v7272 = vadd.f32 %v6965, %v7206
        %v7273 = vadd.f32 %v6966, %v7209
        %v7274 = vadd.f32 %v6967, %v7214
        %v7275 = vadd.f32 %v6968, %v7217
        %v7276 = vadd.f32 %v6969, %v7222
        %v7277 = vadd.f32 %v6970, %v7225
        %v7278 = vadd.f32 %v6971, %v7230
        %v7279 = vadd.f32 %v6972, %v7233
        %v7280 = vadd.f32 %v6973, %v7238
        %v7281 = vadd.f32 %v6974, %v7241
        %v7282 = vadd.f32 %v6975, %v7246
        %v7283 = vadd.f32 %v6976, %v7249
        %v7284 = vld [vmem:[%s6977 + $0x1] sm:$0xff]
        %v7285 = vld [vmem:[%s6977 + $0x9] sm:$0xff]
        %v7286 = vld [vmem:[%s6977 + $0x19] sm:$0xff]
        %v7287 = vld [vmem:[%s6977 + $0x21] sm:$0xff]
        %v7288 = vld [vmem:[%s6977 + $0x31] sm:$0xff]
        %v7289 = vld [vmem:[%s6977 + $0x39] sm:$0xff]
        %v7290 = vld [vmem:[%s6977 + $0x49] sm:$0xff]
        %v7291 = vld [vmem:[%s6977 + $0x51] sm:$0xff]
        %v7292 = vld [vmem:[%s6977 + $0x61] sm:$0xff]
        %v7293 = vld [vmem:[%s6977 + $0x69] sm:$0xff]
        %v7294 = vld [vmem:[%s6977 + $0x79] sm:$0xff]
        %v7295 = vld [vmem:[%s6977 + $0x81] sm:$0xff]
        %v7296 = vld [vmem:[%s6977 + $0x91] sm:$0xff]
        %v7297 = vld [vmem:[%s6977 + $0x99] sm:$0xff]
        %v7298 = vld [vmem:[%s6977 + $0xa9] sm:$0xff]
        %v7299 = vld [vmem:[%s6977 + $0xb1] sm:$0xff]
        %v7300 = vld [vmem:[%s6977 + $0xc1] sm:$0xff]
        %v7301 = vld [vmem:[%s6977 + $0xc9] sm:$0xff]
        %v7302 = vld [vmem:[%s6977 + $0xd9] sm:$0xff]
        %v7303 = vld [vmem:[%s6977 + $0xe1] sm:$0xff]
        %v7304 = vld [vmem:[%s6977 + $0xf1] sm:$0xff]
        %v7305 = vld [vmem:[%s6977 + $0xf9] sm:$0xff]
        %v7306 = vld [vmem:[%s6977 + $0x109] sm:$0xff]
        %v7307 = vld [vmem:[%s6977 + $0x111] sm:$0xff]
        %v7308 = vld [vmem:[%s6977 + $0x121] sm:$0xff]
        %v7309 = vld [vmem:[%s6977 + $0x129] sm:$0xff]
        %v7310 = vld [vmem:[%s6977 + $0x139] sm:$0xff]
        %v7311 = vld [vmem:[%s6977 + $0x141] sm:$0xff]
        %v7312 = vld [vmem:[%s6977 + $0x151] sm:$0xff]
        %v7313 = vld [vmem:[%s6977 + $0x159] sm:$0xff]
        %v7314 = vld [vmem:[%s6977 + $0x169] sm:$0xff]
        %v7315 = vld [vmem:[%s6977 + $0x171] sm:$0xff]
        %v7316 = vpack.c.bf16 %v7285, %v7284
        %v7317 = vpack.c.bf16 %v7287, %v7286
        %v7318 = vpack.c.bf16 %v7289, %v7288
        %v7319 = vpack.c.bf16 %v7291, %v7290
        %v7320 = vpack.c.bf16 %v7293, %v7292
        %v7321 = vpack.c.bf16 %v7295, %v7294
        %v7322 = vpack.c.bf16 %v7297, %v7296
        %v7323 = vpack.c.bf16 %v7299, %v7298
        %v7324 = vpack.c.bf16 %v7301, %v7300
        %v7325 = vpack.c.bf16 %v7303, %v7302
        %v7326 = vpack.c.bf16 %v7305, %v7304
        %v7327 = vpack.c.bf16 %v7307, %v7306
        %v7328 = vpack.c.bf16 %v7309, %v7308
        %v7329 = vpack.c.bf16 %v7311, %v7310
        %v7330 = vpack.c.bf16 %v7313, %v7312
        %v7331 = vpack.c.bf16 %v7315, %v7314
        %s7332 = scalar_lea.vmem [#allocation3], 448
        %v7333 = vld [vmem:[%s7332] sm:$0xf]
        %v7334 = vld [vmem:[%s7332 + $0x4] sm:$0xf]
        %v7335 = vld [vmem:[%s7332 + $0x8] sm:$0xf]
        %v7336 = vld [vmem:[%s7332 + $0xc] sm:$0xf]
        %v7337 = vld [vmem:[%s7332 + $0x10] sm:$0xf]
        %v7338 = vld [vmem:[%s7332 + $0x14] sm:$0xf]
        %v7339 = vld [vmem:[%s7332 + $0x18] sm:$0xf]
        %v7340 = vld [vmem:[%s7332 + $0x1c] sm:$0xf]
        %v7341 = vld [vmem:[%s7332 + $0x20] sm:$0xf]
        %v7342 = vld [vmem:[%s7332 + $0x24] sm:$0xf]
        %v7343 = vld [vmem:[%s7332 + $0x28] sm:$0xf]
        %v7344 = vld [vmem:[%s7332 + $0x2c] sm:$0xf]
        %v7345 = vld [vmem:[%s7332 + $0x30] sm:$0xf]
        %v7346 = vld [vmem:[%s7332 + $0x34] sm:$0xf]
        %v7347 = vld [vmem:[%s7332 + $0x38] sm:$0xf]
        %v7348 = vld [vmem:[%s7332 + $0x3c] sm:$0xf]
        %v7365 = vunpack.c.l.b16 %v7333
        %v7366 = vunpack.c.l.b16 %v7334
        %v7367 = vunpack.c.l.b16 %v7335
        %v7368 = vunpack.c.l.b16 %v7336
        %v7369 = vunpack.c.l.b16 %v7337
        %v7370 = vunpack.c.l.b16 %v7338
        %v7371 = vunpack.c.l.b16 %v7339
        %v7372 = vunpack.c.l.b16 %v7340
        %v7373 = vunpack.c.l.b16 %v7341
        %v7374 = vunpack.c.l.b16 %v7342
        %v7375 = vunpack.c.l.b16 %v7343
        %v7376 = vunpack.c.l.b16 %v7344
        %v7377 = vunpack.c.l.b16 %v7345
        %v7378 = vunpack.c.l.b16 %v7346
        %v7379 = vunpack.c.l.b16 %v7347
        %v7380 = vunpack.c.l.b16 %v7348
        %v7381 = vpack.c.b16 %v7366, %v7365
        %v7382 = vpack.c.b16 %v7368, %v7367
        %v7383 = vpack.c.b16 %v7370, %v7369
        %v7384 = vpack.c.b16 %v7372, %v7371
        %v7385 = vpack.c.b16 %v7374, %v7373
        %v7386 = vpack.c.b16 %v7376, %v7375
        %v7387 = vpack.c.b16 %v7378, %v7377
        %v7388 = vpack.c.b16 %v7380, %v7379
        %7397 = vmatprep.subr.bf16.mxu0 0
        %7398 = vmatpush1.bf16.msra.mxu0 %v7381
        %7399 = vmatprep.subr.bf16.mxu0 0
        %7400 = vmatpush1.bf16.msra.mxu0 %v7382
        %7401 = vmatprep.subr.bf16.mxu0 0
        %7402 = vmatpush1.bf16.msra.mxu0 %v7383
        %7403 = vmatprep.subr.bf16.mxu0 0
        %7404 = vmatpush1.bf16.msra.mxu0 %v7384
        %7405 = vmatprep.subr.bf16.mxu0 0
        %7406 = vmatpush1.bf16.msra.mxu0 %v7385
        %7407 = vmatprep.subr.bf16.mxu0 0
        %7408 = vmatpush1.bf16.msra.mxu0 %v7386
        %7409 = vmatprep.subr.bf16.mxu0 0
        %7410 = vmatpush1.bf16.msra.mxu0 %v7387
        %7411 = vmatprep.subr.bf16.mxu0 0
        %7412 = vmatpush1.bf16.msra.mxu0 %v7388
        %7413 = vmatprep.subr.bf16.mxu0 0
        %7414 = vmatpush1.bf16.msra.mxu0 0
        %7415 = vmatprep.subr.bf16.mxu0 0
        %7416 = vmatpush1.bf16.msra.mxu0 0
        %7417 = vmatprep.subr.bf16.mxu0 0
        %7418 = vmatpush1.bf16.msra.mxu0 0
        %7419 = vmatprep.subr.bf16.mxu0 0
        %7420 = vmatpush1.bf16.msra.mxu0 0
        %7421 = vmatprep.subr.bf16.mxu0 0
        %7422 = vmatpush1.bf16.msra.mxu0 0
        %7423 = vmatprep.subr.bf16.mxu0 0
        %7424 = vmatpush1.bf16.msra.mxu0 0
        %7425 = vmatprep.subr.bf16.mxu0 0
        %7426 = vmatpush1.bf16.msra.mxu0 0
        %7427 = vmatprep.subr.bf16.mxu0 0
        %7428 = vmatpush1.bf16.msra.mxu0 0
        %7429 = vmatprep.mubr.bf16.mxu0 0
        %7430 = vmatmul.mubr.bf16.gmra.mrb[0].mxu0 %v7316
        %v7431 = vpop.f32.mrb[0].mxu0
        %v7432 = vadd.f32 0.0, %v7431
        %v7433 = vpop.f32.mrb[0].mxu0
        %v7434 = vpop.f32.mrb[0].mxu0
        %v7435 = vadd.f32 0.0, %v7434
        %v7436 = vpop.f32.mrb[0].mxu0
        %7437 = vmatprep.mubr.bf16.mxu0 0
        %7438 = vmatmul.mubr.bf16.gmra.mrb[0].mxu0 %v7317
        %v7439 = vpop.f32.mrb[0].mxu0
        %v7440 = vadd.f32 0.0, %v7439
        %v7441 = vpop.f32.mrb[0].mxu0
        %v7442 = vpop.f32.mrb[0].mxu0
        %v7443 = vadd.f32 0.0, %v7442
        %v7444 = vpop.f32.mrb[0].mxu0
        %7445 = vmatprep.mubr.bf16.mxu0 0
        %7446 = vmatmul.mubr.bf16.gmra.mrb[0].mxu0 %v7318
        %v7447 = vpop.f32.mrb[0].mxu0
        %v7448 = vadd.f32 0.0, %v7447
        %v7449 = vpop.f32.mrb[0].mxu0
        %v7450 = vpop.f32.mrb[0].mxu0
        %v7451 = vadd.f32 0.0, %v7450
        %v7452 = vpop.f32.mrb[0].mxu0
        %7453 = vmatprep.mubr.bf16.mxu0 0
        %7454 = vmatmul.mubr.bf16.gmra.mrb[0].mxu0 %v7319
        %v7455 = vpop.f32.mrb[0].mxu0
        %v7456 = vadd.f32 0.0, %v7455
        %v7457 = vpop.f32.mrb[0].mxu0
        %v7458 = vpop.f32.mrb[0].mxu0
        %v7459 = vadd.f32 0.0, %v7458
        %v7460 = vpop.f32.mrb[0].mxu0
        %7461 = vmatprep.mubr.bf16.mxu0 0
        %7462 = vmatmul.mubr.bf16.gmra.mrb[0].mxu0 %v7320
        %v7463 = vpop.f32.mrb[0].mxu0
        %v7464 = vadd.f32 0.0, %v7463
        %v7465 = vpop.f32.mrb[0].mxu0
        %v7466 = vpop.f32.mrb[0].mxu0
        %v7467 = vadd.f32 0.0, %v7466
        %v7468 = vpop.f32.mrb[0].mxu0
        %7469 = vmatprep.mubr.bf16.mxu0 0
        %7470 = vmatmul.mubr.bf16.gmra.mrb[0].mxu0 %v7321
        %v7471 = vpop.f32.mrb[0].mxu0
        %v7472 = vadd.f32 0.0, %v7471
        %v7473 = vpop.f32.mrb[0].mxu0
        %v7474 = vpop.f32.mrb[0].mxu0
        %v7475 = vadd.f32 0.0, %v7474
        %v7476 = vpop.f32.mrb[0].mxu0
        %7477 = vmatprep.mubr.bf16.mxu0 0
        %7478 = vmatmul.mubr.bf16.gmra.mrb[0].mxu0 %v7322
        %v7479 = vpop.f32.mrb[0].mxu0
        %v7480 = vadd.f32 0.0, %v7479
        %v7481 = vpop.f32.mrb[0].mxu0
        %v7482 = vpop.f32.mrb[0].mxu0
        %v7483 = vadd.f32 0.0, %v7482
        %v7484 = vpop.f32.mrb[0].mxu0
        %7485 = vmatprep.mubr.bf16.mxu0 0
        %7486 = vmatmul.mubr.bf16.gmra.mrb[0].mxu0 %v7323
        %v7487 = vpop.f32.mrb[0].mxu0
        %v7488 = vadd.f32 0.0, %v7487
        %v7489 = vpop.f32.mrb[0].mxu0
        %v7490 = vpop.f32.mrb[0].mxu0
        %v7491 = vadd.f32 0.0, %v7490
        %v7492 = vpop.f32.mrb[0].mxu0
        %7493 = vmatprep.mubr.bf16.mxu0 0
        %7494 = vmatmul.mubr.bf16.gmra.mrb[0].mxu0 %v7324
        %v7495 = vpop.f32.mrb[0].mxu0
        %v7496 = vadd.f32 0.0, %v7495
        %v7497 = vpop.f32.mrb[0].mxu0
        %v7498 = vpop.f32.mrb[0].mxu0
        %v7499 = vadd.f32 0.0, %v7498
        %v7500 = vpop.f32.mrb[0].mxu0
        %7501 = vmatprep.mubr.bf16.mxu0 0
        %7502 = vmatmul.mubr.bf16.gmra.mrb[0].mxu0 %v7325
        %v7503 = vpop.f32.mrb[0].mxu0
        %v7504 = vadd.f32 0.0, %v7503
        %v7505 = vpop.f32.mrb[0].mxu0
        %v7506 = vpop.f32.mrb[0].mxu0
        %v7507 = vadd.f32 0.0, %v7506
        %v7508 = vpop.f32.mrb[0].mxu0
        %7509 = vmatprep.mubr.bf16.mxu0 0
        %7510 = vmatmul.mubr.bf16.gmra.mrb[0].mxu0 %v7326
        %v7511 = vpop.f32.mrb[0].mxu0
        %v7512 = vadd.f32 0.0, %v7511
        %v7513 = vpop.f32.mrb[0].mxu0
        %v7514 = vpop.f32.mrb[0].mxu0
        %v7515 = vadd.f32 0.0, %v7514
        %v7516 = vpop.f32.mrb[0].mxu0
        %7517 = vmatprep.mubr.bf16.mxu0 0
        %7518 = vmatmul.mubr.bf16.gmra.mrb[0].mxu0 %v7327
        %v7519 = vpop.f32.mrb[0].mxu0
        %v7520 = vadd.f32 0.0, %v7519
        %v7521 = vpop.f32.mrb[0].mxu0
        %v7522 = vpop.f32.mrb[0].mxu0
        %v7523 = vadd.f32 0.0, %v7522
        %v7524 = vpop.f32.mrb[0].mxu0
        %7525 = vmatprep.mubr.bf16.mxu0 0
        %7526 = vmatmul.mubr.bf16.gmra.mrb[0].mxu0 %v7328
        %v7527 = vpop.f32.mrb[0].mxu0
        %v7528 = vadd.f32 0.0, %v7527
        %v7529 = vpop.f32.mrb[0].mxu0
        %v7530 = vpop.f32.mrb[0].mxu0
        %v7531 = vadd.f32 0.0, %v7530
        %v7532 = vpop.f32.mrb[0].mxu0
        %7533 = vmatprep.mubr.bf16.mxu0 0
        %7534 = vmatmul.mubr.bf16.gmra.mrb[0].mxu0 %v7329
        %v7535 = vpop.f32.mrb[0].mxu0
        %v7536 = vadd.f32 0.0, %v7535
        %v7537 = vpop.f32.mrb[0].mxu0
        %v7538 = vpop.f32.mrb[0].mxu0
        %v7539 = vadd.f32 0.0, %v7538
        %v7540 = vpop.f32.mrb[0].mxu0
        %7541 = vmatprep.mubr.bf16.mxu0 0
        %7542 = vmatmul.mubr.bf16.gmra.mrb[0].mxu0 %v7330
        %v7543 = vpop.f32.mrb[0].mxu0
        %v7544 = vadd.f32 0.0, %v7543
        %v7545 = vpop.f32.mrb[0].mxu0
        %v7546 = vpop.f32.mrb[0].mxu0
        %v7547 = vadd.f32 0.0, %v7546
        %v7548 = vpop.f32.mrb[0].mxu0
        %7549 = vmatprep.mubr.bf16.mxu0 0
        %7550 = vmatmul.mubr.bf16.gmra.mrb[0].mxu0 %v7331
        %v7551 = vpop.f32.mrb[0].mxu0
        %v7552 = vadd.f32 0.0, %v7551
        %v7553 = vpop.f32.mrb[0].mxu0
        %v7554 = vpop.f32.mrb[0].mxu0
        %v7555 = vadd.f32 0.0, %v7554
        %v7556 = vpop.f32.mrb[0].mxu0
        %7557 = vdwg.mxu0
        %v7558 = vadd.f32 %v7252, %v7432
        %v7559 = vadd.f32 %v7253, %v7435
        %v7560 = vadd.f32 %v7254, %v7440
        %v7561 = vadd.f32 %v7255, %v7443
        %v7562 = vadd.f32 %v7256, %v7448
        %v7563 = vadd.f32 %v7257, %v7451
        %v7564 = vadd.f32 %v7258, %v7456
        %v7565 = vadd.f32 %v7259, %v7459
        %v7566 = vadd.f32 %v7260, %v7464
        %v7567 = vadd.f32 %v7261, %v7467
        %v7568 = vadd.f32 %v7262, %v7472
        %v7569 = vadd.f32 %v7263, %v7475
        %v7570 = vadd.f32 %v7264, %v7480
        %v7571 = vadd.f32 %v7265, %v7483
        %v7572 = vadd.f32 %v7266, %v7488
        %v7573 = vadd.f32 %v7267, %v7491
        %v7574 = vadd.f32 %v7268, %v7496
        %v7575 = vadd.f32 %v7269, %v7499
        %v7576 = vadd.f32 %v7270, %v7504
        %v7577 = vadd.f32 %v7271, %v7507
        %v7578 = vadd.f32 %v7272, %v7512
        %v7579 = vadd.f32 %v7273, %v7515
        %v7580 = vadd.f32 %v7274, %v7520
        %v7581 = vadd.f32 %v7275, %v7523
        %v7582 = vadd.f32 %v7276, %v7528
        %v7583 = vadd.f32 %v7277, %v7531
        %v7584 = vadd.f32 %v7278, %v7536
        %v7585 = vadd.f32 %v7279, %v7539
        %v7586 = vadd.f32 %v7280, %v7544
        %v7587 = vadd.f32 %v7281, %v7547
        %v7588 = vadd.f32 %v7282, %v7552
        %v7589 = vadd.f32 %v7283, %v7555
        %v7590 = vld [vmem:[%s6977 + $0x2] sm:$0xff]
        %v7591 = vld [vmem:[%s6977 + $0xa] sm:$0xff]
        %v7592 = vld [vmem:[%s6977 + $0x1a] sm:$0xff]
        %v7593 = vld [vmem:[%s6977 + $0x22] sm:$0xff]
        %v7594 = vld [vmem:[%s6977 + $0x32] sm:$0xff]
        %v7595 = vld [vmem:[%s6977 + $0x3a] sm:$0xff]
        %v7596 = vld [vmem:[%s6977 + $0x4a] sm:$0xff]
        %v7597 = vld [vmem:[%s6977 + $0x52] sm:$0xff]
        %v7598 = vld [vmem:[%s6977 + $0x62] sm:$0xff]
        %v7599 = vld [vmem:[%s6977 + $0x6a] sm:$0xff]
        %v7600 = vld [vmem:[%s6977 + $0x7a] sm:$0xff]
        %v7601 = vld [vmem:[%s6977 + $0x82] sm:$0xff]
        %v7602 = vld [vmem:[%s6977 + $0x92] sm:$0xff]
        %v7603 = vld [vmem:[%s6977 + $0x9a] sm:$0xff]
        %v7604 = vld [vmem:[%s6977 + $0xaa] sm:$0xff]
        %v7605 = vld [vmem:[%s6977 + $0xb2] sm:$0xff]
        %v7606 = vld [vmem:[%s6977 + $0xc2] sm:$0xff]
        %v7607 = vld [vmem:[%s6977 + $0xca] sm:$0xff]
        %v7608 = vld [vmem:[%s6977 + $0xda] sm:$0xff]
        %v7609 = vld [vmem:[%s6977 + $0xe2] sm:$0xff]
        %v7610 = vld [vmem:[%s6977 + $0xf2] sm:$0xff]
        %v7611 = vld [vmem:[%s6977 + $0xfa] sm:$0xff]
        %v7612 = vld [vmem:[%s6977 + $0x10a] sm:$0xff]
        %v7613 = vld [vmem:[%s6977 + $0x112] sm:$0xff]
        %v7614 = vld [vmem:[%s6977 + $0x122] sm:$0xff]
        %v7615 = vld [vmem:[%s6977 + $0x12a] sm:$0xff]
        %v7616 = vld [vmem:[%s6977 + $0x13a] sm:$0xff]
        %v7617 = vld [vmem:[%s6977 + $0x142] sm:$0xff]
        %v7618 = vld [vmem:[%s6977 + $0x152] sm:$0xff]
        %v7619 = vld [vmem:[%s6977 + $0x15a] sm:$0xff]
        %v7620 = vld [vmem:[%s6977 + $0x16a] sm:$0xff]
        %v7621 = vld [vmem:[%s6977 + $0x172] sm:$0xff]
        %v7622 = vpack.c.bf16 %v7591, %v7590
        %v7623 = vpack.c.bf16 %v7593, %v7592
        %v7624 = vpack.c.bf16 %v7595, %v7594
        %v7625 = vpack.c.bf16 %v7597, %v7596
        %v7626 = vpack.c.bf16 %v7599, %v7598
        %v7627 = vpack.c.bf16 %v7601, %v7600
        %v7628 = vpack.c.bf16 %v7603, %v7602
        %v7629 = vpack.c.bf16 %v7605, %v7604
        %v7630 = vpack.c.bf16 %v7607, %v7606
        %v7631 = vpack.c.bf16 %v7609, %v7608
        %v7632 = vpack.c.bf16 %v7611, %v7610
        %v7633 = vpack.c.bf16 %v7613, %v7612
        %v7634 = vpack.c.bf16 %v7615, %v7614
        %v7635 = vpack.c.bf16 %v7617, %v7616
        %v7636 = vpack.c.bf16 %v7619, %v7618
        %v7637 = vpack.c.bf16 %v7621, %v7620
        %s7638 = scalar_lea.vmem [#allocation3], 512
        %v7639 = vld [vmem:[%s7638] sm:$0xf]
        %v7640 = vld [vmem:[%s7638 + $0x4] sm:$0xf]
        %v7641 = vld [vmem:[%s7638 + $0x8] sm:$0xf]
        %v7642 = vld [vmem:[%s7638 + $0xc] sm:$0xf]
        %v7643 = vld [vmem:[%s7638 + $0x10] sm:$0xf]
        %v7644 = vld [vmem:[%s7638 + $0x14] sm:$0xf]
        %v7645 = vld [vmem:[%s7638 + $0x18] sm:$0xf]
        %v7646 = vld [vmem:[%s7638 + $0x1c] sm:$0xf]
        %v7647 = vld [vmem:[%s7638 + $0x20] sm:$0xf]
        %v7648 = vld [vmem:[%s7638 + $0x24] sm:$0xf]
        %v7649 = vld [vmem:[%s7638 + $0x28] sm:$0xf]
        %v7650 = vld [vmem:[%s7638 + $0x2c] sm:$0xf]
        %v7651 = vld [vmem:[%s7638 + $0x30] sm:$0xf]
        %v7652 = vld [vmem:[%s7638 + $0x34] sm:$0xf]
        %v7653 = vld [vmem:[%s7638 + $0x38] sm:$0xf]
        %v7654 = vld [vmem:[%s7638 + $0x3c] sm:$0xf]
        %v7671 = vunpack.c.l.b16 %v7639
        %v7672 = vunpack.c.l.b16 %v7640
        %v7673 = vunpack.c.l.b16 %v7641
        %v7674 = vunpack.c.l.b16 %v7642
        %v7675 = vunpack.c.l.b16 %v7643
        %v7676 = vunpack.c.l.b16 %v7644
        %v7677 = vunpack.c.l.b16 %v7645
        %v7678 = vunpack.c.l.b16 %v7646
        %v7679 = vunpack.c.l.b16 %v7647
        %v7680 = vunpack.c.l.b16 %v7648
        %v7681 = vunpack.c.l.b16 %v7649
        %v7682 = vunpack.c.l.b16 %v7650
        %v7683 = vunpack.c.l.b16 %v7651
        %v7684 = vunpack.c.l.b16 %v7652
        %v7685 = vunpack.c.l.b16 %v7653
        %v7686 = vunpack.c.l.b16 %v7654
        %v7687 = vpack.c.b16 %v7672, %v7671
        %v7688 = vpack.c.b16 %v7674, %v7673
        %v7689 = vpack.c.b16 %v7676, %v7675
        %v7690 = vpack.c.b16 %v7678, %v7677
        %v7691 = vpack.c.b16 %v7680, %v7679
        %v7692 = vpack.c.b16 %v7682, %v7681
        %v7693 = vpack.c.b16 %v7684, %v7683
        %v7694 = vpack.c.b16 %v7686, %v7685
        %7703 = vmatprep.subr.bf16.mxu0 0
        %7704 = vmatpush1.bf16.msra.mxu0 %v7687
        %7705 = vmatprep.subr.bf16.mxu0 0
        %7706 = vmatpush1.bf16.msra.mxu0 %v7688
        %7707 = vmatprep.subr.bf16.mxu0 0
        %7708 = vmatpush1.bf16.msra.mxu0 %v7689
        %7709 = vmatprep.subr.bf16.mxu0 0
        %7710 = vmatpush1.bf16.msra.mxu0 %v7690
        %7711 = vmatprep.subr.bf16.mxu0 0
        %7712 = vmatpush1.bf16.msra.mxu0 %v7691
        %7713 = vmatprep.subr.bf16.mxu0 0
        %7714 = vmatpush1.bf16.msra.mxu0 %v7692
        %7715 = vmatprep.subr.bf16.mxu0 0
        %7716 = vmatpush1.bf16.msra.mxu0 %v7693
        %7717 = vmatprep.subr.bf16.mxu0 0
        %7718 = vmatpush1.bf16.msra.mxu0 %v7694
        %7719 = vmatprep.subr.bf16.mxu0 0
        %7720 = vmatpush1.bf16.msra.mxu0 0
        %7721 = vmatprep.subr.bf16.mxu0 0
        %7722 = vmatpush1.bf16.msra.mxu0 0
        %7723 = vmatprep.subr.bf16.mxu0 0
        %7724 = vmatpush1.bf16.msra.mxu0 0
        %7725 = vmatprep.subr.bf16.mxu0 0
        %7726 = vmatpush1.bf16.msra.mxu0 0
        %7727 = vmatprep.subr.bf16.mxu0 0
        %7728 = vmatpush1.bf16.msra.mxu0 0
        %7729 = vmatprep.subr.bf16.mxu0 0
        %7730 = vmatpush1.bf16.msra.mxu0 0
        %7731 = vmatprep.subr.bf16.mxu0 0
        %7732 = vmatpush1.bf16.msra.mxu0 0
        %7733 = vmatprep.subr.bf16.mxu0 0
        %7734 = vmatpush1.bf16.msra.mxu0 0
        %7735 = vmatprep.mubr.bf16.mxu0 0
        %7736 = vmatmul.mubr.bf16.gmra.mrb[0].mxu0 %v7622
        %v7737 = vpop.f32.mrb[0].mxu0
        %v7738 = vadd.f32 0.0, %v7737
        %v7739 = vpop.f32.mrb[0].mxu0
        %v7740 = vpop.f32.mrb[0].mxu0
        %v7741 = vadd.f32 0.0, %v7740
        %v7742 = vpop.f32.mrb[0].mxu0
        %7743 = vmatprep.mubr.bf16.mxu0 0
        %7744 = vmatmul.mubr.bf16.gmra.mrb[0].mxu0 %v7623
        %v7745 = vpop.f32.mrb[0].mxu0
        %v7746 = vadd.f32 0.0, %v7745
        %v7747 = vpop.f32.mrb[0].mxu0
        %v7748 = vpop.f32.mrb[0].mxu0
        %v7749 = vadd.f32 0.0, %v7748
        %v7750 = vpop.f32.mrb[0].mxu0
        %7751 = vmatprep.mubr.bf16.mxu0 0
        %7752 = vmatmul.mubr.bf16.gmra.mrb[0].mxu0 %v7624
        %v7753 = vpop.f32.mrb[0].mxu0
        %v7754 = vadd.f32 0.0, %v7753
        %v7755 = vpop.f32.mrb[0].mxu0
        %v7756 = vpop.f32.mrb[0].mxu0
        %v7757 = vadd.f32 0.0, %v7756
        %v7758 = vpop.f32.mrb[0].mxu0
        %7759 = vmatprep.mubr.bf16.mxu0 0
        %7760 = vmatmul.mubr.bf16.gmra.mrb[0].mxu0 %v7625
        %v7761 = vpop.f32.mrb[0].mxu0
        %v7762 = vadd.f32 0.0, %v7761
        %v7763 = vpop.f32.mrb[0].mxu0
        %v7764 = vpop.f32.mrb[0].mxu0
        %v7765 = vadd.f32 0.0, %v7764
        %v7766 = vpop.f32.mrb[0].mxu0
        %7767 = vmatprep.mubr.bf16.mxu0 0
        %7768 = vmatmul.mubr.bf16.gmra.mrb[0].mxu0 %v7626
        %v7769 = vpop.f32.mrb[0].mxu0
        %v7770 = vadd.f32 0.0, %v7769
        %v7771 = vpop.f32.mrb[0].mxu0
        %v7772 = vpop.f32.mrb[0].mxu0
        %v7773 = vadd.f32 0.0, %v7772
        %v7774 = vpop.f32.mrb[0].mxu0
        %7775 = vmatprep.mubr.bf16.mxu0 0
        %7776 = vmatmul.mubr.bf16.gmra.mrb[0].mxu0 %v7627
        %v7777 = vpop.f32.mrb[0].mxu0
        %v7778 = vadd.f32 0.0, %v7777
        %v7779 = vpop.f32.mrb[0].mxu0
        %v7780 = vpop.f32.mrb[0].mxu0
        %v7781 = vadd.f32 0.0, %v7780
        %v7782 = vpop.f32.mrb[0].mxu0
        %7783 = vmatprep.mubr.bf16.mxu0 0
        %7784 = vmatmul.mubr.bf16.gmra.mrb[0].mxu0 %v7628
        %v7785 = vpop.f32.mrb[0].mxu0
        %v7786 = vadd.f32 0.0, %v7785
        %v7787 = vpop.f32.mrb[0].mxu0
        %v7788 = vpop.f32.mrb[0].mxu0
        %v7789 = vadd.f32 0.0, %v7788
        %v7790 = vpop.f32.mrb[0].mxu0
        %7791 = vmatprep.mubr.bf16.mxu0 0
        %7792 = vmatmul.mubr.bf16.gmra.mrb[0].mxu0 %v7629
        %v7793 = vpop.f32.mrb[0].mxu0
        %v7794 = vadd.f32 0.0, %v7793
        %v7795 = vpop.f32.mrb[0].mxu0
        %v7796 = vpop.f32.mrb[0].mxu0
        %v7797 = vadd.f32 0.0, %v7796
        %v7798 = vpop.f32.mrb[0].mxu0
        %7799 = vmatprep.mubr.bf16.mxu0 0
        %7800 = vmatmul.mubr.bf16.gmra.mrb[0].mxu0 %v7630
        %v7801 = vpop.f32.mrb[0].mxu0
        %v7802 = vadd.f32 0.0, %v7801
        %v7803 = vpop.f32.mrb[0].mxu0
        %v7804 = vpop.f32.mrb[0].mxu0
        %v7805 = vadd.f32 0.0, %v7804
        %v7806 = vpop.f32.mrb[0].mxu0
        %7807 = vmatprep.mubr.bf16.mxu0 0
        %7808 = vmatmul.mubr.bf16.gmra.mrb[0].mxu0 %v7631
        %v7809 = vpop.f32.mrb[0].mxu0
        %v7810 = vadd.f32 0.0, %v7809
        %v7811 = vpop.f32.mrb[0].mxu0
        %v7812 = vpop.f32.mrb[0].mxu0
        %v7813 = vadd.f32 0.0, %v7812
        %v7814 = vpop.f32.mrb[0].mxu0
        %7815 = vmatprep.mubr.bf16.mxu0 0
        %7816 = vmatmul.mubr.bf16.gmra.mrb[0].mxu0 %v7632
        %v7817 = vpop.f32.mrb[0].mxu0
        %v7818 = vadd.f32 0.0, %v7817
        %v7819 = vpop.f32.mrb[0].mxu0
        %v7820 = vpop.f32.mrb[0].mxu0
        %v7821 = vadd.f32 0.0, %v7820
        %v7822 = vpop.f32.mrb[0].mxu0
        %7823 = vmatprep.mubr.bf16.mxu0 0
        %7824 = vmatmul.mubr.bf16.gmra.mrb[0].mxu0 %v7633
        %v7825 = vpop.f32.mrb[0].mxu0
        %v7826 = vadd.f32 0.0, %v7825
        %v7827 = vpop.f32.mrb[0].mxu0
        %v7828 = vpop.f32.mrb[0].mxu0
        %v7829 = vadd.f32 0.0, %v7828
        %v7830 = vpop.f32.mrb[0].mxu0
        %7831 = vmatprep.mubr.bf16.mxu0 0
        %7832 = vmatmul.mubr.bf16.gmra.mrb[0].mxu0 %v7634
        %v7833 = vpop.f32.mrb[0].mxu0
        %v7834 = vadd.f32 0.0, %v7833
        %v7835 = vpop.f32.mrb[0].mxu0
        %v7836 = vpop.f32.mrb[0].mxu0
        %v7837 = vadd.f32 0.0, %v7836
        %v7838 = vpop.f32.mrb[0].mxu0
        %7839 = vmatprep.mubr.bf16.mxu0 0
        %7840 = vmatmul.mubr.bf16.gmra.mrb[0].mxu0 %v7635
        %v7841 = vpop.f32.mrb[0].mxu0
        %v7842 = vadd.f32 0.0, %v7841
        %v7843 = vpop.f32.mrb[0].mxu0
        %v7844 = vpop.f32.mrb[0].mxu0
        %v7845 = vadd.f32 0.0, %v7844
        %v7846 = vpop.f32.mrb[0].mxu0
        %7847 = vmatprep.mubr.bf16.mxu0 0
        %7848 = vmatmul.mubr.bf16.gmra.mrb[0].mxu0 %v7636
        %v7849 = vpop.f32.mrb[0].mxu0
        %v7850 = vadd.f32 0.0, %v7849
        %v7851 = vpop.f32.mrb[0].mxu0
        %v7852 = vpop.f32.mrb[0].mxu0
        %v7853 = vadd.f32 0.0, %v7852
        %v7854 = vpop.f32.mrb[0].mxu0
        %7855 = vmatprep.mubr.bf16.mxu0 0
        %7856 = vmatmul.mubr.bf16.gmra.mrb[0].mxu0 %v7637
        %v7857 = vpop.f32.mrb[0].mxu0
        %v7858 = vadd.f32 0.0, %v7857
        %v7859 = vpop.f32.mrb[0].mxu0
        %v7860 = vpop.f32.mrb[0].mxu0
        %v7861 = vadd.f32 0.0, %v7860
        %v7862 = vpop.f32.mrb[0].mxu0
        %7863 = vdwg.mxu0
        %v7864 = vadd.f32 %v7558, %v7738
        %v7865 = vadd.f32 %v7559, %v7741
        %v7866 = vadd.f32 %v7560, %v7746
        %v7867 = vadd.f32 %v7561, %v7749
        %v7868 = vadd.f32 %v7562, %v7754
        %v7869 = vadd.f32 %v7563, %v7757
        %v7870 = vadd.f32 %v7564, %v7762
        %v7871 = vadd.f32 %v7565, %v7765
        %v7872 = vadd.f32 %v7566, %v7770
        %v7873 = vadd.f32 %v7567, %v7773
        %v7874 = vadd.f32 %v7568, %v7778
        %v7875 = vadd.f32 %v7569, %v7781
        %v7876 = vadd.f32 %v7570, %v7786
        %v7877 = vadd.f32 %v7571, %v7789
        %v7878 = vadd.f32 %v7572, %v7794
        %v7879 = vadd.f32 %v7573, %v7797
        %v7880 = vadd.f32 %v7574, %v7802
        %v7881 = vadd.f32 %v7575, %v7805
        %v7882 = vadd.f32 %v7576, %v7810
        %v7883 = vadd.f32 %v7577, %v7813
        %v7884 = vadd.f32 %v7578, %v7818
        %v7885 = vadd.f32 %v7579, %v7821
        %v7886 = vadd.f32 %v7580, %v7826
        %v7887 = vadd.f32 %v7581, %v7829
        %v7888 = vadd.f32 %v7582, %v7834
        %v7889 = vadd.f32 %v7583, %v7837
        %v7890 = vadd.f32 %v7584, %v7842
        %v7891 = vadd.f32 %v7585, %v7845
        %v7892 = vadd.f32 %v7586, %v7850
        %v7893 = vadd.f32 %v7587, %v7853
        %v7894 = vadd.f32 %v7588, %v7858
        %v7895 = vadd.f32 %v7589, %v7861
        %v7896 = vld [vmem:[%s1770] sm:$0xf]
        %v7897 = vld [vmem:[%s1770 + $0x4] sm:$0xf]
        %v7898 = vld [vmem:[%s1770 + $0x8] sm:$0x1]
        %v7899 = vld [vmem:[%s1770 + $0xc] sm:$0xf]
        %v7900 = vld [vmem:[%s1770 + $0x10] sm:$0xf]
        %v7901 = vld [vmem:[%s1770 + $0x14] sm:$0x1]
        %v7902 = vld [vmem:[%s1770 + $0x18] sm:$0xf]
        %v7903 = vld [vmem:[%s1770 + $0x1c] sm:$0xf]
        %v7904 = vld [vmem:[%s1770 + $0x20] sm:$0x1]
        %v7905 = vld [vmem:[%s1770 + $0x24] sm:$0xf]
        %v7906 = vld [vmem:[%s1770 + $0x28] sm:$0xf]
        %v7907 = vld [vmem:[%s1770 + $0x2c] sm:$0x1]
        %v7908 = vld [vmem:[%s1770 + $0x30] sm:$0xf]
        %v7909 = vld [vmem:[%s1770 + $0x34] sm:$0xf]
        %v7910 = vld [vmem:[%s1770 + $0x38] sm:$0x1]
        %v7911 = vld [vmem:[%s1770 + $0x3c] sm:$0xf]
        %v7912 = vld [vmem:[%s1770 + $0x40] sm:$0xf]
        %v7913 = vld [vmem:[%s1770 + $0x44] sm:$0x1]
        %v7914 = vld [vmem:[%s1770 + $0x48] sm:$0xf]
        %v7915 = vld [vmem:[%s1770 + $0x4c] sm:$0xf]
        %v7916 = vld [vmem:[%s1770 + $0x50] sm:$0x1]
        %v7917 = vld [vmem:[%s1770 + $0x54] sm:$0xf]
        %v7918 = vld [vmem:[%s1770 + $0x58] sm:$0xf]
        %v7919 = vld [vmem:[%s1770 + $0x5c] sm:$0x1]
        %v7920 = vld [vmem:[%s1770 + $0x60] sm:$0xf]
        %v7921 = vld [vmem:[%s1770 + $0x64] sm:$0xf]
        %v7922 = vld [vmem:[%s1770 + $0x68] sm:$0x1]
        %v7923 = vld [vmem:[%s1770 + $0x6c] sm:$0xf]
        %v7924 = vld [vmem:[%s1770 + $0x70] sm:$0xf]
        %v7925 = vld [vmem:[%s1770 + $0x74] sm:$0x1]
        %v7926 = vld [vmem:[%s1770 + $0x78] sm:$0xf]
        %v7927 = vld [vmem:[%s1770 + $0x7c] sm:$0xf]
        %v7928 = vld [vmem:[%s1770 + $0x80] sm:$0x1]
        %v7929 = vld [vmem:[%s1770 + $0x84] sm:$0xf]
        %v7930 = vld [vmem:[%s1770 + $0x88] sm:$0xf]
        %v7931 = vld [vmem:[%s1770 + $0x8c] sm:$0x1]
        %v7932 = vld [vmem:[%s1770 + $0x90] sm:$0xf]
        %v7933 = vld [vmem:[%s1770 + $0x94] sm:$0xf]
        %v7934 = vld [vmem:[%s1770 + $0x98] sm:$0x1]
        %v7935 = vld [vmem:[%s1770 + $0x9c] sm:$0xf]
        %v7936 = vld [vmem:[%s1770 + $0xa0] sm:$0xf]
        %v7937 = vld [vmem:[%s1770 + $0xa4] sm:$0x1]
        %v7938 = vld [vmem:[%s1770 + $0xa8] sm:$0xf]
        %v7939 = vld [vmem:[%s1770 + $0xac] sm:$0xf]
        %v7940 = vld [vmem:[%s1770 + $0xb0] sm:$0x1]
        %v7941 = vld [vmem:[%s1770 + $0xb4] sm:$0xf]
        %v7942 = vld [vmem:[%s1770 + $0xb8] sm:$0xf]
        %v7943 = vld [vmem:[%s1770 + $0xbc] sm:$0x1]
        %v7945 = vshrl.u32 %v7896, 16
        %v7947 = vrot.slane %v7945, 4
        %v7948 = vshll.u32 %v7896, 16
        %v7950 = vrot.slane %v7948, 5
        %v7951 = vor.u32 %v7947, %v7950
        %v7952 = vrot.slane %v7951, 4
        %v7954 = vshll.u32 %v7897, 16
        %v7956 = vrot.slane %v7954, 5
        %v7957 = vsel %vm305, %v7952, %v7956
        %v7958 = vshrl.u32 %v7897, 16
        %v7960 = vrot.slane %v7958, 4
        %v7961 = vor.u32 %v7960, %v7956
        %v7962 = vrot.slane %v7961, 4
        %v7964 = vshll.u32 %v7898, 16
        %v7966 = vrot.slane %v7964, 5
        %v7967 = vsel %vm305, %v7962, %v7966
        %v7969 = vshrl.u32 %v7899, 16
        %v7971 = vrot.slane %v7969, 4
        %v7972 = vshll.u32 %v7899, 16
        %v7974 = vrot.slane %v7972, 5
        %v7975 = vor.u32 %v7971, %v7974
        %v7976 = vrot.slane %v7975, 4
        %v7978 = vshll.u32 %v7900, 16
        %v7980 = vrot.slane %v7978, 5
        %v7981 = vsel %vm305, %v7976, %v7980
        %v7982 = vshrl.u32 %v7900, 16
        %v7984 = vrot.slane %v7982, 4
        %v7985 = vor.u32 %v7984, %v7980
        %v7986 = vrot.slane %v7985, 4
        %v7988 = vshll.u32 %v7901, 16
        %v7990 = vrot.slane %v7988, 5
        %v7991 = vsel %vm305, %v7986, %v7990
        %v7993 = vshrl.u32 %v7902, 16
        %v7995 = vrot.slane %v7993, 4
        %v7996 = vshll.u32 %v7902, 16
        %v7998 = vrot.slane %v7996, 5
        %v7999 = vor.u32 %v7995, %v7998
        %v8000 = vrot.slane %v7999, 4
        %v8002 = vshll.u32 %v7903, 16
        %v8004 = vrot.slane %v8002, 5
        %v8005 = vsel %vm305, %v8000, %v8004
        %v8006 = vshrl.u32 %v7903, 16
        %v8008 = vrot.slane %v8006, 4
        %v8009 = vor.u32 %v8008, %v8004
        %v8010 = vrot.slane %v8009, 4
        %v8012 = vshll.u32 %v7904, 16
        %v8014 = vrot.slane %v8012, 5
        %v8015 = vsel %vm305, %v8010, %v8014
        %v8017 = vshrl.u32 %v7905, 16
        %v8019 = vrot.slane %v8017, 4
        %v8020 = vshll.u32 %v7905, 16
        %v8022 = vrot.slane %v8020, 5
        %v8023 = vor.u32 %v8019, %v8022
        %v8024 = vrot.slane %v8023, 4
        %v8026 = vshll.u32 %v7906, 16
        %v8028 = vrot.slane %v8026, 5
        %v8029 = vsel %vm305, %v8024, %v8028
        %v8030 = vshrl.u32 %v7906, 16
        %v8032 = vrot.slane %v8030, 4
        %v8033 = vor.u32 %v8032, %v8028
        %v8034 = vrot.slane %v8033, 4
        %v8036 = vshll.u32 %v7907, 16
        %v8038 = vrot.slane %v8036, 5
        %v8039 = vsel %vm305, %v8034, %v8038
        %v8041 = vshrl.u32 %v7908, 16
        %v8043 = vrot.slane %v8041, 4
        %v8044 = vshll.u32 %v7908, 16
        %v8046 = vrot.slane %v8044, 5
        %v8047 = vor.u32 %v8043, %v8046
        %v8048 = vrot.slane %v8047, 4
        %v8050 = vshll.u32 %v7909, 16
        %v8052 = vrot.slane %v8050, 5
        %v8053 = vsel %vm305, %v8048, %v8052
        %v8054 = vshrl.u32 %v7909, 16
        %v8056 = vrot.slane %v8054, 4
        %v8057 = vor.u32 %v8056, %v8052
        %v8058 = vrot.slane %v8057, 4
        %v8060 = vshll.u32 %v7910, 16
        %v8062 = vrot.slane %v8060, 5
        %v8063 = vsel %vm305, %v8058, %v8062
        %v8065 = vshrl.u32 %v7911, 16
        %v8067 = vrot.slane %v8065, 4
        %v8068 = vshll.u32 %v7911, 16
        %v8070 = vrot.slane %v8068, 5
        %v8071 = vor.u32 %v8067, %v8070
        %v8072 = vrot.slane %v8071, 4
        %v8074 = vshll.u32 %v7912, 16
        %v8076 = vrot.slane %v8074, 5
        %v8077 = vsel %vm305, %v8072, %v8076
        %v8078 = vshrl.u32 %v7912, 16
        %v8080 = vrot.slane %v8078, 4
        %v8081 = vor.u32 %v8080, %v8076
        %v8082 = vrot.slane %v8081, 4
        %v8084 = vshll.u32 %v7913, 16
        %v8086 = vrot.slane %v8084, 5
        %v8087 = vsel %vm305, %v8082, %v8086
        %v8089 = vshrl.u32 %v7914, 16
        %v8091 = vrot.slane %v8089, 4
        %v8092 = vshll.u32 %v7914, 16
        %v8094 = vrot.slane %v8092, 5
        %v8095 = vor.u32 %v8091, %v8094
        %v8096 = vrot.slane %v8095, 4
        %v8098 = vshll.u32 %v7915, 16
        %v8100 = vrot.slane %v8098, 5
        %v8101 = vsel %vm305, %v8096, %v8100
        %v8102 = vshrl.u32 %v7915, 16
        %v8104 = vrot.slane %v8102, 4
        %v8105 = vor.u32 %v8104, %v8100
        %v8106 = vrot.slane %v8105, 4
        %v8108 = vshll.u32 %v7916, 16
        %v8110 = vrot.slane %v8108, 5
        %v8111 = vsel %vm305, %v8106, %v8110
        %v8113 = vshrl.u32 %v7917, 16
        %v8115 = vrot.slane %v8113, 4
        %v8116 = vshll.u32 %v7917, 16
        %v8118 = vrot.slane %v8116, 5
        %v8119 = vor.u32 %v8115, %v8118
        %v8120 = vrot.slane %v8119, 4
        %v8122 = vshll.u32 %v7918, 16
        %v8124 = vrot.slane %v8122, 5
        %v8125 = vsel %vm305, %v8120, %v8124
        %v8126 = vshrl.u32 %v7918, 16
        %v8128 = vrot.slane %v8126, 4
        %v8129 = vor.u32 %v8128, %v8124
        %v8130 = vrot.slane %v8129, 4
        %v8132 = vshll.u32 %v7919, 16
        %v8134 = vrot.slane %v8132, 5
        %v8135 = vsel %vm305, %v8130, %v8134
        %v8137 = vshrl.u32 %v7920, 16
        %v8139 = vrot.slane %v8137, 4
        %v8140 = vshll.u32 %v7920, 16
        %v8142 = vrot.slane %v8140, 5
        %v8143 = vor.u32 %v8139, %v8142
        %v8144 = vrot.slane %v8143, 4
        %v8146 = vshll.u32 %v7921, 16
        %v8148 = vrot.slane %v8146, 5
        %v8149 = vsel %vm305, %v8144, %v8148
        %v8150 = vshrl.u32 %v7921, 16
        %v8152 = vrot.slane %v8150, 4
        %v8153 = vor.u32 %v8152, %v8148
        %v8154 = vrot.slane %v8153, 4
        %v8156 = vshll.u32 %v7922, 16
        %v8158 = vrot.slane %v8156, 5
        %v8159 = vsel %vm305, %v8154, %v8158
        %v8161 = vshrl.u32 %v7923, 16
        %v8163 = vrot.slane %v8161, 4
        %v8164 = vshll.u32 %v7923, 16
        %v8166 = vrot.slane %v8164, 5
        %v8167 = vor.u32 %v8163, %v8166
        %v8168 = vrot.slane %v8167, 4
        %v8170 = vshll.u32 %v7924, 16
        %v8172 = vrot.slane %v8170, 5
        %v8173 = vsel %vm305, %v8168, %v8172
        %v8174 = vshrl.u32 %v7924, 16
        %v8176 = vrot.slane %v8174, 4
        %v8177 = vor.u32 %v8176, %v8172
        %v8178 = vrot.slane %v8177, 4
        %v8180 = vshll.u32 %v7925, 16
        %v8182 = vrot.slane %v8180, 5
        %v8183 = vsel %vm305, %v8178, %v8182
        %v8185 = vshrl.u32 %v7926, 16
        %v8187 = vrot.slane %v8185, 4
        %v8188 = vshll.u32 %v7926, 16
        %v8190 = vrot.slane %v8188, 5
        %v8191 = vor.u32 %v8187, %v8190
        %v8192 = vrot.slane %v8191, 4
        %v8194 = vshll.u32 %v7927, 16
        %v8196 = vrot.slane %v8194, 5
        %v8197 = vsel %vm305, %v8192, %v8196
        %v8198 = vshrl.u32 %v7927, 16
        %v8200 = vrot.slane %v8198, 4
        %v8201 = vor.u32 %v8200, %v8196
        %v8202 = vrot.slane %v8201, 4
        %v8204 = vshll.u32 %v7928, 16
        %v8206 = vrot.slane %v8204, 5
        %v8207 = vsel %vm305, %v8202, %v8206
        %v8209 = vshrl.u32 %v7929, 16
        %v8211 = vrot.slane %v8209, 4
        %v8212 = vshll.u32 %v7929, 16
        %v8214 = vrot.slane %v8212, 5
        %v8215 = vor.u32 %v8211, %v8214
        %v8216 = vrot.slane %v8215, 4
        %v8218 = vshll.u32 %v7930, 16
        %v8220 = vrot.slane %v8218, 5
        %v8221 = vsel %vm305, %v8216, %v8220
        %v8222 = vshrl.u32 %v7930, 16
        %v8224 = vrot.slane %v8222, 4
        %v8225 = vor.u32 %v8224, %v8220
        %v8226 = vrot.slane %v8225, 4
        %v8228 = vshll.u32 %v7931, 16
        %v8230 = vrot.slane %v8228, 5
        %v8231 = vsel %vm305, %v8226, %v8230
        %v8233 = vshrl.u32 %v7932, 16
        %v8235 = vrot.slane %v8233, 4
        %v8236 = vshll.u32 %v7932, 16
        %v8238 = vrot.slane %v8236, 5
        %v8239 = vor.u32 %v8235, %v8238
        %v8240 = vrot.slane %v8239, 4
        %v8242 = vshll.u32 %v7933, 16
        %v8244 = vrot.slane %v8242, 5
        %v8245 = vsel %vm305, %v8240, %v8244
        %v8246 = vshrl.u32 %v7933, 16
        %v8248 = vrot.slane %v8246, 4
        %v8249 = vor.u32 %v8248, %v8244
        %v8250 = vrot.slane %v8249, 4
        %v8252 = vshll.u32 %v7934, 16
        %v8254 = vrot.slane %v8252, 5
        %v8255 = vsel %vm305, %v8250, %v8254
        %v8257 = vshrl.u32 %v7935, 16
        %v8259 = vrot.slane %v8257, 4
        %v8260 = vshll.u32 %v7935, 16
        %v8262 = vrot.slane %v8260, 5
        %v8263 = vor.u32 %v8259, %v8262
        %v8264 = vrot.slane %v8263, 4
        %v8266 = vshll.u32 %v7936, 16
        %v8268 = vrot.slane %v8266, 5
        %v8269 = vsel %vm305, %v8264, %v8268
        %v8270 = vshrl.u32 %v7936, 16
        %v8272 = vrot.slane %v8270, 4
        %v8273 = vor.u32 %v8272, %v8268
        %v8274 = vrot.slane %v8273, 4
        %v8276 = vshll.u32 %v7937, 16
        %v8278 = vrot.slane %v8276, 5
        %v8279 = vsel %vm305, %v8274, %v8278
        %v8281 = vshrl.u32 %v7938, 16
        %v8283 = vrot.slane %v8281, 4
        %v8284 = vshll.u32 %v7938, 16
        %v8286 = vrot.slane %v8284, 5
        %v8287 = vor.u32 %v8283, %v8286
        %v8288 = vrot.slane %v8287, 4
        %v8290 = vshll.u32 %v7939, 16
        %v8292 = vrot.slane %v8290, 5
        %v8293 = vsel %vm305, %v8288, %v8292
        %v8294 = vshrl.u32 %v7939, 16
        %v8296 = vrot.slane %v8294, 4
        %v8297 = vor.u32 %v8296, %v8292
        %v8298 = vrot.slane %v8297, 4
        %v8300 = vshll.u32 %v7940, 16
        %v8302 = vrot.slane %v8300, 5
        %v8303 = vsel %vm305, %v8298, %v8302
        %v8305 = vshrl.u32 %v7941, 16
        %v8307 = vrot.slane %v8305, 4
        %v8308 = vshll.u32 %v7941, 16
        %v8310 = vrot.slane %v8308, 5
        %v8311 = vor.u32 %v8307, %v8310
        %v8312 = vrot.slane %v8311, 4
        %v8314 = vshll.u32 %v7942, 16
        %v8316 = vrot.slane %v8314, 5
        %v8317 = vsel %vm305, %v8312, %v8316
        %v8318 = vshrl.u32 %v7942, 16
        %v8320 = vrot.slane %v8318, 4
        %v8321 = vor.u32 %v8320, %v8316
        %v8322 = vrot.slane %v8321, 4
        %v8324 = vshll.u32 %v7943, 16
        %v8326 = vrot.slane %v8324, 5
        %v8327 = vsel %vm305, %v8322, %v8326
        %v8360 = vunpack.c.l.bf16 %v7957
        %v8361 = vunpack.c.l.bf16 %v7967
        %v8362 = vunpack.c.l.bf16 %v7981
        %v8363 = vunpack.c.l.bf16 %v7991
        %v8364 = vunpack.c.l.bf16 %v8005
        %v8365 = vunpack.c.l.bf16 %v8015
        %v8366 = vunpack.c.l.bf16 %v8029
        %v8367 = vunpack.c.l.bf16 %v8039
        %v8368 = vunpack.c.l.bf16 %v8053
        %v8369 = vunpack.c.l.bf16 %v8063
        %v8370 = vunpack.c.l.bf16 %v8077
        %v8371 = vunpack.c.l.bf16 %v8087
        %v8372 = vunpack.c.l.bf16 %v8101
        %v8373 = vunpack.c.l.bf16 %v8111
        %v8374 = vunpack.c.l.bf16 %v8125
        %v8375 = vunpack.c.l.bf16 %v8135
        %v8376 = vunpack.c.l.bf16 %v8149
        %v8377 = vunpack.c.l.bf16 %v8159
        %v8378 = vunpack.c.l.bf16 %v8173
        %v8379 = vunpack.c.l.bf16 %v8183
        %v8380 = vunpack.c.l.bf16 %v8197
        %v8381 = vunpack.c.l.bf16 %v8207
        %v8382 = vunpack.c.l.bf16 %v8221
        %v8383 = vunpack.c.l.bf16 %v8231
        %v8384 = vunpack.c.l.bf16 %v8245
        %v8385 = vunpack.c.l.bf16 %v8255
        %v8386 = vunpack.c.l.bf16 %v8269
        %v8387 = vunpack.c.l.bf16 %v8279
        %v8388 = vunpack.c.l.bf16 %v8293
        %v8389 = vunpack.c.l.bf16 %v8303
        %v8390 = vunpack.c.l.bf16 %v8317
        %v8391 = vunpack.c.l.bf16 %v8327
        %v8392 = vld [vmem:[%s4] sm:$0x1]
        %v8394 = vlaneseq
        %v8395 = vshrl.u32 %v8394, 7
        %v8396 = vsub.s32 0, %v8395
        %v8397 = vrot.slane %v8392, %v8396
        %v8399 = vadd.f32 %v7864, %v8397
        %v8400 = vadd.f32 %v7865, %v8397
        %v8401 = vadd.f32 %v7866, %v8397
        %v8402 = vadd.f32 %v7867, %v8397
        %v8403 = vadd.f32 %v7868, %v8397
        %v8404 = vadd.f32 %v7869, %v8397
        %v8405 = vadd.f32 %v7870, %v8397
        %v8406 = vadd.f32 %v7871, %v8397
        %v8407 = vadd.f32 %v7872, %v8397
        %v8408 = vadd.f32 %v7873, %v8397
        %v8409 = vadd.f32 %v7874, %v8397
        %v8410 = vadd.f32 %v7875, %v8397
        %v8411 = vadd.f32 %v7876, %v8397
        %v8412 = vadd.f32 %v7877, %v8397
        %v8413 = vadd.f32 %v7878, %v8397
        %v8414 = vadd.f32 %v7879, %v8397
        %v8415 = vadd.f32 %v7880, %v8397
        %v8416 = vadd.f32 %v7881, %v8397
        %v8417 = vadd.f32 %v7882, %v8397
        %v8418 = vadd.f32 %v7883, %v8397
        %v8419 = vadd.f32 %v7884, %v8397
        %v8420 = vadd.f32 %v7885, %v8397
        %v8421 = vadd.f32 %v7886, %v8397
        %v8422 = vadd.f32 %v7887, %v8397
        %v8423 = vadd.f32 %v7888, %v8397
        %v8424 = vadd.f32 %v7889, %v8397
        %v8425 = vadd.f32 %v7890, %v8397
        %v8426 = vadd.f32 %v7891, %v8397
        %v8427 = vadd.f32 %v7892, %v8397
        %v8428 = vadd.f32 %v7893, %v8397
        %v8429 = vadd.f32 %v7894, %v8397
        %v8430 = vadd.f32 %v7895, %v8397
        %v8431 = vadd.f32 %v8399, %v8360
        %v8432 = vadd.f32 %v8400, %v8361
        %v8433 = vadd.f32 %v8401, %v8362
        %v8434 = vadd.f32 %v8402, %v8363
        %v8435 = vadd.f32 %v8403, %v8364
        %v8436 = vadd.f32 %v8404, %v8365
        %v8437 = vadd.f32 %v8405, %v8366
        %v8438 = vadd.f32 %v8406, %v8367
        %v8439 = vadd.f32 %v8407, %v8368
        %v8440 = vadd.f32 %v8408, %v8369
        %v8441 = vadd.f32 %v8409, %v8370
        %v8442 = vadd.f32 %v8410, %v8371
        %v8443 = vadd.f32 %v8411, %v8372
        %v8444 = vadd.f32 %v8412, %v8373
        %v8445 = vadd.f32 %v8413, %v8374
        %v8446 = vadd.f32 %v8414, %v8375
        %v8447 = vadd.f32 %v8415, %v8376
        %v8448 = vadd.f32 %v8416, %v8377
        %v8449 = vadd.f32 %v8417, %v8378
        %v8450 = vadd.f32 %v8418, %v8379
        %v8451 = vadd.f32 %v8419, %v8380
        %v8452 = vadd.f32 %v8420, %v8381
        %v8453 = vadd.f32 %v8421, %v8382
        %v8454 = vadd.f32 %v8422, %v8383
        %v8455 = vadd.f32 %v8423, %v8384
        %v8456 = vadd.f32 %v8424, %v8385
        %v8457 = vadd.f32 %v8425, %v8386
        %v8458 = vadd.f32 %v8426, %v8387
        %v8459 = vadd.f32 %v8427, %v8388
        %v8460 = vadd.f32 %v8428, %v8389
        %v8461 = vadd.f32 %v8429, %v8390
        %v8462 = vadd.f32 %v8430, %v8391
        %v8463 = vmax.f32 %v8431, 0.0
        %v8464 = vmax.f32 %v8432, 0.0
        %v8465 = vmax.f32 %v8433, 0.0
        %v8466 = vmax.f32 %v8434, 0.0
        %v8467 = vmax.f32 %v8435, 0.0
        %v8468 = vmax.f32 %v8436, 0.0
        %v8469 = vmax.f32 %v8437, 0.0
        %v8470 = vmax.f32 %v8438, 0.0
        %v8471 = vmax.f32 %v8439, 0.0
        %v8472 = vmax.f32 %v8440, 0.0
        %v8473 = vmax.f32 %v8441, 0.0
        %v8474 = vmax.f32 %v8442, 0.0
        %v8475 = vmax.f32 %v8443, 0.0
        %v8476 = vmax.f32 %v8444, 0.0
        %v8477 = vmax.f32 %v8445, 0.0
        %v8478 = vmax.f32 %v8446, 0.0
        %v8479 = vmax.f32 %v8447, 0.0
        %v8480 = vmax.f32 %v8448, 0.0
        %v8481 = vmax.f32 %v8449, 0.0
        %v8482 = vmax.f32 %v8450, 0.0
        %v8483 = vmax.f32 %v8451, 0.0
        %v8484 = vmax.f32 %v8452, 0.0
        %v8485 = vmax.f32 %v8453, 0.0
        %v8486 = vmax.f32 %v8454, 0.0
        %v8487 = vmax.f32 %v8455, 0.0
        %v8488 = vmax.f32 %v8456, 0.0
        %v8489 = vmax.f32 %v8457, 0.0
        %v8490 = vmax.f32 %v8458, 0.0
        %v8491 = vmax.f32 %v8459, 0.0
        %v8492 = vmax.f32 %v8460, 0.0
        %v8493 = vmax.f32 %v8461, 0.0
        %v8494 = vmax.f32 %v8462, 0.0
        %8495 = vst [vmem:[%s232] sm:$0xff] %v8463
        %8496 = vst [vmem:[%s232 + $0x8] sm:$0xff] %v8464
        %8497 = vst [vmem:[%s232 + $0x10] sm:$0xff] %v8465
        %8498 = vst [vmem:[%s232 + $0x18] sm:$0xff] %v8466
        %8499 = vst [vmem:[%s232 + $0x20] sm:$0xff] %v8467
        %8500 = vst [vmem:[%s232 + $0x28] sm:$0xff] %v8468
        %8501 = vst [vmem:[%s232 + $0x30] sm:$0xff] %v8469
        %8502 = vst [vmem:[%s232 + $0x38] sm:$0xff] %v8470
        %8503 = vst [vmem:[%s232 + $0x40] sm:$0xff] %v8471
        %8504 = vst [vmem:[%s232 + $0x48] sm:$0xff] %v8472
        %8505 = vst [vmem:[%s232 + $0x50] sm:$0xff] %v8473
        %8506 = vst [vmem:[%s232 + $0x58] sm:$0xff] %v8474
        %8507 = vst [vmem:[%s232 + $0x60] sm:$0xff] %v8475
        %8508 = vst [vmem:[%s232 + $0x68] sm:$0xff] %v8476
        %8509 = vst [vmem:[%s232 + $0x70] sm:$0xff] %v8477
        %8510 = vst [vmem:[%s232 + $0x78] sm:$0xff] %v8478
        %8511 = vst [vmem:[%s232 + $0x80] sm:$0xff] %v8479
        %8512 = vst [vmem:[%s232 + $0x88] sm:$0xff] %v8480
        %8513 = vst [vmem:[%s232 + $0x90] sm:$0xff] %v8481
        %8514 = vst [vmem:[%s232 + $0x98] sm:$0xff] %v8482
        %8515 = vst [vmem:[%s232 + $0xa0] sm:$0xff] %v8483
        %8516 = vst [vmem:[%s232 + $0xa8] sm:$0xff] %v8484
        %8517 = vst [vmem:[%s232 + $0xb0] sm:$0xff] %v8485
        %8518 = vst [vmem:[%s232 + $0xb8] sm:$0xff] %v8486
        %8519 = vst [vmem:[%s232 + $0xc0] sm:$0xff] %v8487
        %8520 = vst [vmem:[%s232 + $0xc8] sm:$0xff] %v8488
        %8521 = vst [vmem:[%s232 + $0xd0] sm:$0xff] %v8489
        %8522 = vst [vmem:[%s232 + $0xd8] sm:$0xff] %v8490
        %8523 = vst [vmem:[%s232 + $0xe0] sm:$0xff] %v8491
        %8524 = vst [vmem:[%s232 + $0xe8] sm:$0xff] %v8492
        %8525 = vst [vmem:[%s232 + $0xf0] sm:$0xff] %v8493
        %8526 = vst [vmem:[%s232 + $0xf8] sm:$0xff] %v8494
        %s8527 = sand.u32 %s138, 1
        %s8528 = scalar_lea.sflag [#allocation5], %s8527
        %s8529 = sand.u32 %s138, 1
        %s8530 = smul.addr %s8529, 256
        %s8531 = scalar_lea.vmem [#allocation6], %s8530
        // Predicated region
        $region45: #{tpu_custom_call.1} parent=39 // pred_check
          %p8532 = pneg %p148
        $region46: #{tpu_custom_call.1} parent=39 // pred_check_branch
          %8534 = sbr.rel (%p8532) target = $region48
        $region47: #{tpu_custom_call.1} parent=39 // pred_region
          %s8536 = ssub.s32 4096, 4096
          %8537 = vsyncadd %s8528, %s8536
          %s8538 = smul.addr %s20, 32
          %s8539 = smul.addr %s8538, 128
          %s8540 = scalar_lea.hbm %s5, %s8539
          %s8541 = sshll.u32 %s8531, 4
          %s8542 = int_to_ptr.vmem [resolvable:$true] %s8541
          %8547 = dma.vmem_to_hbm [thread:$0]  %s8542, 4096, %s8540, %s8528, 128, 128, 8
        $region48: #{tpu_custom_call.1} parent=39 // pred_fallthru
          _
      $region40: #{tpu_custom_call.1} parent=5 // pred_fallthru
        _
      %p8548 = scmp.le.s32.totalorder 2, %s15
      // Predicated region
      $region49: #{tpu_custom_call.1} parent=5 // pred_check
        %p8549 = pneg %p8548
      $region50: #{tpu_custom_call.1} parent=5 // pred_check_branch
        %8551 = sbr.rel (%p8549) target = $region52
      $region51: #{tpu_custom_call.1} parent=5 // pred_region
        %s8552 = ssub.s32 %s15, 2
        // Predicated region
        $region53: #{tpu_custom_call.1} parent=51 // pred_check
          %p8553 = pneg %p154
        $region54: #{tpu_custom_call.1} parent=51 // pred_check_branch
          %8555 = sbr.rel (%p8553) target = $region56
        $region55: #{tpu_custom_call.1} parent=51 // pred_region
          %s8556 = sand.u32 %s139, 1
          %s8557 = scalar_lea.sflag [#allocation5], %s8556
          %s8558 = sand.u32 %s139, 1
          %s8559 = smul.addr %s8558, 256
          %s8560 = scalar_lea.vmem [#allocation6], %s8559
          %8561 = dma.done %s8557, 4096
        $region56: #{tpu_custom_call.1} parent=51 // pred_fallthru
          _
      $region52: #{tpu_custom_call.1} parent=5 // pred_fallthru
        _
    $region6: #{tpu_custom_call.1} parent=1 // loop_footer
      %s19 = sadd.s32 1, %s15
    $region7: #{tpu_custom_call.1} parent=1 // loop_footer_branch
      %14 = sbr.rel target = $region3
    $region8: #{tpu_custom_call.1} parent=1 // loop_exit
      _
    %8562 = vsyncpa [#allocation4], 1
    %s8563 = scalar_lea.sflag [#allocation4], 1
    %8564 = vsyncpa %s8563, 1
    %8565 = vsyncpa [#allocation5], 1
    %s8566 = scalar_lea.sflag [#allocation5], 1
    %8567 = vsyncpa %s8566, 1

</llo_original>
